<compile_context>
chip_gen: v7x
topology: tpu7x:2x2x1
jax: 0.10.0
libtpu: 0.0.40
codegen_flags: <defaults>
</compile_context>

<pallas_src>
import functools

import jax
import jax.numpy as jnp
from jax.experimental import pallas as pl
from jax.experimental.pallas import tpu as pltpu

# ---------------- model hyper-parameters (small, consistent w/ module) -------
BATCH = 2
SEQ = 8
INPUT_DIM = 16
HIDDEN_DIM = 32
NUM_LAYERS = 5          # 5 stacked BLSTM layers
OUTPUT_DIM = 1          # each of the 8 heads emits a single binary logit
NUM_HEADS = 8


# ------------------------------- Pallas kernel -------------------------------
def _blstm_kernel(x_ref,       # (B*T, D_in)        f32  (batch-major rows b*T+t)
                  w1_ref,      # (D_in, 4H)         f32  layer-1 input weights
                  wih_ref,     # (L-1, H, 4H)       f32  layers 2..L input weights
                  whh_ref,     # (L, H, 4H)         f32  recurrent weights
                  b_ref,       # (L, 1, 4H)         f32  fused gate bias
                  wout_ref,    # (H, NUM_HEADS*O)   f32  8 heads stacked
                  bout_ref,    # (1, NUM_HEADS*O)   f32
                  out_ref,     # (B, NUM_HEADS*O)   f32
                  *, batch, seq, hidden, num_layers):
    B, T, H = batch, seq, hidden
    G = 4 * H                      # fused gate width, gate order [i, f, g, o]

    def recurrence(gates, whh, collect):
        """Serial LSTM recurrence; `gates` are the pre-projected inputs (B,T,G)."""
        h = jnp.zeros((B, H), jnp.float32)
        c = jnp.zeros((B, H), jnp.float32)
        hs = []
        for t in range(T):                       # fully unrolled: T is static
            # only h @ W_hh is left on the serial critical path
            g = gates[:, t, :] + jnp.dot(h, whh,
                                         preferred_element_type=jnp.float32)
            sg = jax.nn.sigmoid(g)               # one full-vreg EUP pass: [i,f,.,o]
            th = jnp.tanh(g)                     # one full-vreg EUP pass: [.,.,g,.]
            i_g = sg[:, 0 * H:1 * H]
            f_g = sg[:, 1 * H:2 * H]
            g_g = th[:, 2 * H:3 * H]
            o_g = sg[:, 3 * H:4 * H]
            c = f_g * c + i_g * g_g
            h = o_g * jnp.tanh(c)
            if collect:
                hs.append(h)
        return h, hs

    # ---- layer 1: hoisted input projection over the whole sequence ----------
    gates = (jnp.dot(x_ref[...], w1_ref[...],
                     preferred_element_type=jnp.float32)
             + b_ref[0]).reshape(B, T, G)
    h_last, hs = recurrence(gates, whh_ref[0], num_layers > 1)

    # ---- layers 2..L: sequence stays in registers, one projection per layer --
    for layer in range(1, num_layers):
        seq_in = jnp.stack(hs, axis=1).reshape(B * T, H)     # batch-major rows
        gates = (jnp.dot(seq_in, wih_ref[layer - 1],
                         preferred_element_type=jnp.float32)
                 + b_ref[layer]).reshape(B, T, G)
        h_last, hs = recurrence(gates, whh_ref[layer],
                                layer < num_layers - 1)

    # ---- 8 sigmoid heads on the last hidden state of the last layer ----------
    logits = jnp.dot(h_last, wout_ref[...],
                     preferred_element_type=jnp.float32) + bout_ref[...]
    out_ref[...] = jax.nn.sigmoid(logits)


# ------------------------------- wrapper --------------------------------------
@jax.jit
def blstm_forward(x, w1_ih, wrest_ih, whh, b, wout, bout):
    """x: (B, T, D_in) batch-first, as in the PyTorch module."""
    B, T, D = x.shape
    L, H, G = whh.shape
    heads = wout.shape[-1]
    x_flat = x.reshape(B * T, D).astype(jnp.float32)   # free view, no transpose

    kernel = functools.partial(_blstm_kernel, batch=B, seq=T,
                               hidden=H, num_layers=L)

    flops = (2 * B * T * D * G                  # layer-1 input projection
             + (L - 1) * 2 * B * T * H * G      # layer 2..L input projections
             + L * T * 2 * B * H * G            # recurrent h @ W_hh matmuls
             + 2 * B * H * heads)               # output heads
    transcendentals = L * T * B * (2 * G + H) + B * heads
    bytes_accessed = 4 * (x_flat.size + w1_ih.size + wrest_ih.size + whh.size
                          + b.size + wout.size + bout.size + B * heads)

    vmem = pl.BlockSpec(memory_space=pltpu.MemorySpace.VMEM)
    out = pl.pallas_call(
        kernel,
        out_shape=jax.ShapeDtypeStruct((B, heads), jnp.float32),
        in_specs=[vmem] * 7,
        out_specs=vmem,
        cost_estimate=pl.CostEstimate(flops=flops,
                                      transcendentals=transcendentals,
                                      bytes_accessed=bytes_accessed),
    )(x_flat, w1_ih, wrest_ih, whh, b, wout, bout)

    # split stacked heads back into 8 separate (B, OUTPUT_DIM) outputs
    return tuple(out[:, i * OUTPUT_DIM:(i + 1) * OUTPUT_DIM]
                 for i in range(NUM_HEADS))


# --------------------------- pure-JAX reference --------------------------------
def _ref_forward(x, w1_ih, wrest_ih, whh, b, wout, bout):
    B, T, _ = x.shape
    H = HIDDEN_DIM

    def run_layer(seq, w_ih, w_hh, bias):     # seq: (B, T, D)
        h = jnp.zeros((B, H), jnp.float32)
        c = jnp.zeros((B, H), jnp.float32)
        outs = []
        for t in range(T):
            g = seq[:, t, :] @ w_ih + h @ w_hh + bias
            i_g = jax.nn.sigmoid(g[:, 0 * H:1 * H])
            f_g = jax.nn.sigmoid(g[:, 1 * H:2 * H])
            g_g = jnp.tanh(g[:, 2 * H:3 * H])
            o_g = jax.nn.sigmoid(g[:, 3 * H:4 * H])
            c = f_g * c + i_g * g_g
            h = o_g * jnp.tanh(c)
            outs.append(h)
        return jnp.stack(outs, axis=1), h     # (B, T, H), (B, H)

    seq, h_last = run_layer(x, w1_ih, whh[0], b[0])
    for layer in range(1, NUM_LAYERS):
        seq, h_last = run_layer(seq, wrest_ih[layer - 1], whh[layer], b[layer])
    out = jax.nn.sigmoid(h_last @ wout + bout)
    return tuple(out[:, i * OUTPUT_DIM:(i + 1) * OUTPUT_DIM]
                 for i in range(NUM_HEADS))


# ------------------------------- main ------------------------------------------
if __name__ == "__main__":
    key = jax.random.PRNGKey(0)
    keys = jax.random.split(key, 8)

    H4 = 4 * HIDDEN_DIM
    scale = 0.1
    # deterministic parameter init (posterior-mean style), gate order [i, f, g, o]
    w1_ih = scale * jax.random.normal(keys[0], (INPUT_DIM, H4), jnp.float32)
    wrest_ih = scale * jax.random.normal(keys[1], (NUM_LAYERS - 1, HIDDEN_DIM, H4),
                                         jnp.float32)
    whh = scale * jax.random.normal(keys[2], (NUM_LAYERS, HIDDEN_DIM, H4),
                                    jnp.float32)
    b = scale * jax.random.normal(keys[3], (NUM_LAYERS, 1, H4), jnp.float32)
    wout = scale * jax.random.normal(keys[4], (HIDDEN_DIM, NUM_HEADS * OUTPUT_DIM),
                                     jnp.float32)
    bout = scale * jax.random.normal(keys[5], (1, NUM_HEADS * OUTPUT_DIM),
                                     jnp.float32)

    x = jax.random.normal(keys[6], (BATCH, SEQ, INPUT_DIM), jnp.float32)

    outs = blstm_forward(x, w1_ih, wrest_ih, whh, b, wout, bout)
    outs = jax.block_until_ready(outs)

    # sanity check against pure-JAX reference
    ref_outs = _ref_forward(x, w1_ih, wrest_ih, whh, b, wout, bout)
    for o, r in zip(outs, ref_outs):
        assert o.shape == (BATCH, OUTPUT_DIM)
        assert jnp.allclose(o, r, atol=1e-4, rtol=1e-4), (o, r)

    print("KERNEL_OK")
</pallas_src>

<mosaic_0001>
module attributes {stable_mosaic.version = 11 : i64} {
  func.func @_blstm_kernel(%arg0: memref<16x16xf32, #tpu.memory_space<vmem>>, %arg1: memref<16x128xf32, #tpu.memory_space<vmem>>, %arg2: memref<4x32x128xf32, #tpu.memory_space<vmem>>, %arg3: memref<5x32x128xf32, #tpu.memory_space<vmem>>, %arg4: memref<5x1x128xf32, #tpu.memory_space<vmem>>, %arg5: memref<32x8xf32, #tpu.memory_space<vmem>>, %arg6: memref<1x8xf32, #tpu.memory_space<vmem>>, %arg7: memref<2x8xf32, #tpu.memory_space<vmem>>) attributes {dimension_semantics = [], scalar_prefetch = 0 : i64, scratch_operands = 0 : i64, tpu.core_type = #tpu.core_type<tc>} {
    %c0 = arith.constant 0 : index
    %c0_0 = arith.constant 0 : index
    %0 = vector.load %arg0[%c0, %c0_0] : memref<16x16xf32, #tpu.memory_space<vmem>>, vector<16x16xf32>
    %c0_1 = arith.constant 0 : index
    %c0_2 = arith.constant 0 : index
    %1 = vector.load %arg1[%c0_1, %c0_2] : memref<16x128xf32, #tpu.memory_space<vmem>>, vector<16x128xf32>
    %cst = arith.constant dense<0.000000e+00> : vector<16x128xf32>
    %2 = tpu.matmul %0, %1, %cst {dimension_numbers = #tpu.dot_dimension_numbers<[1], [0], [0], [1], [0, 0, 1, 1], [], []>} : vector<16x16xf32>, vector<16x128xf32>, vector<16x128xf32> -> vector<16x128xf32>
    %c0_3 = arith.constant 0 : index
    %c0_4 = arith.constant 0 : index
    %c0_5 = arith.constant 0 : index
    %3 = vector.load %arg4[%c0_3, %c0_4, %c0_5] : memref<5x1x128xf32, #tpu.memory_space<vmem>>, vector<1x1x128xf32>
    %4 = vector.shape_cast %3 : vector<1x1x128xf32> to vector<1x128xf32>
    %5 = vector.broadcast %4 : vector<1x128xf32> to vector<16x128xf32>
    %6 = arith.addf %2, %5 : vector<16x128xf32>
    %7 = vector.shape_cast %6 : vector<16x128xf32> to vector<2x8x128xf32>
    %c0_6 = arith.constant 0 : index
    %c0_7 = arith.constant 0 : index
    %c0_8 = arith.constant 0 : index
    %8 = vector.load %arg3[%c0_6, %c0_7, %c0_8] : memref<5x32x128xf32, #tpu.memory_space<vmem>>, vector<1x32x128xf32>
    %9 = vector.shape_cast %8 : vector<1x32x128xf32> to vector<32x128xf32>
    %cst_9 = arith.constant 0.000000e+00 : f32
    %10 = vector.broadcast %cst_9 : f32 to vector<2x32xf32>
    %cst_10 = arith.constant 0.000000e+00 : f32
    %11 = vector.broadcast %cst_10 : f32 to vector<2x32xf32>
    %12 = vector.extract_strided_slice %7 {offsets = [0, 0, 0], sizes = [2, 1, 128], strides = [1, 1, 1]} : vector<2x8x128xf32> to vector<2x1x128xf32>
    %13 = vector.shape_cast %12 : vector<2x1x128xf32> to vector<2x128xf32>
    %cst_11 = arith.constant dense<0.000000e+00> : vector<2x128xf32>
    %14 = tpu.matmul %10, %9, %cst_11 {dimension_numbers = #tpu.dot_dimension_numbers<[1], [0], [0], [1], [0, 0, 1, 1], [], []>} : vector<2x32xf32>, vector<32x128xf32>, vector<2x128xf32> -> vector<2x128xf32>
    %15 = arith.addf %13, %14 : vector<2x128xf32>
    %16 = arith.negf %15 : vector<2x128xf32>
    %17 = math.exp %16 : vector<2x128xf32>
    %cst_12 = arith.constant 1.000000e+00 : f32
    %18 = vector.broadcast %cst_12 : f32 to vector<2x128xf32>
    %19 = arith.addf %18, %17 : vector<2x128xf32>
    %20 = arith.divf %18, %19 : vector<2x128xf32>
    %21 = math.tanh %15 : vector<2x128xf32>
    %22 = vector.extract_strided_slice %20 {offsets = [0, 0], sizes = [2, 32], strides = [1, 1]} : vector<2x128xf32> to vector<2x32xf32>
    %23 = vector.extract_strided_slice %20 {offsets = [0, 32], sizes = [2, 32], strides = [1, 1]} : vector<2x128xf32> to vector<2x32xf32>
    %24 = vector.extract_strided_slice %21 {offsets = [0, 64], sizes = [2, 32], strides = [1, 1]} : vector<2x128xf32> to vector<2x32xf32>
    %25 = vector.extract_strided_slice %20 {offsets = [0, 96], sizes = [2, 32], strides = [1, 1]} : vector<2x128xf32> to vector<2x32xf32>
    %26 = arith.mulf %23, %11 : vector<2x32xf32>
    %27 = arith.mulf %22, %24 : vector<2x32xf32>
    %28 = arith.addf %26, %27 : vector<2x32xf32>
    %29 = math.tanh %28 : vector<2x32xf32>
    %30 = arith.mulf %25, %29 : vector<2x32xf32>
    %31 = vector.extract_strided_slice %7 {offsets = [0, 1, 0], sizes = [2, 1, 128], strides = [1, 1, 1]} : vector<2x8x128xf32> to vector<2x1x128xf32>
    %32 = vector.shape_cast %31 : vector<2x1x128xf32> to vector<2x128xf32>
    %cst_13 = arith.constant dense<0.000000e+00> : vector<2x128xf32>
    %33 = tpu.matmul %30, %9, %cst_13 {dimension_numbers = #tpu.dot_dimension_numbers<[1], [0], [0], [1], [0, 0, 1, 1], [], []>} : vector<2x32xf32>, vector<32x128xf32>, vector<2x128xf32> -> vector<2x128xf32>
    %34 = arith.addf %32, %33 : vector<2x128xf32>
    %35 = arith.negf %34 : vector<2x128xf32>
    %36 = math.exp %35 : vector<2x128xf32>
    %cst_14 = arith.constant 1.000000e+00 : f32
    %37 = vector.broadcast %cst_14 : f32 to vector<2x128xf32>
    %38 = arith.addf %37, %36 : vector<2x128xf32>
    %39 = arith.divf %37, %38 : vector<2x128xf32>
    %40 = math.tanh %34 : vector<2x128xf32>
    %41 = vector.extract_strided_slice %39 {offsets = [0, 0], sizes = [2, 32], strides = [1, 1]} : vector<2x128xf32> to vector<2x32xf32>
    %42 = vector.extract_strided_slice %39 {offsets = [0, 32], sizes = [2, 32], strides = [1, 1]} : vector<2x128xf32> to vector<2x32xf32>
    %43 = vector.extract_strided_slice %40 {offsets = [0, 64], sizes = [2, 32], strides = [1, 1]} : vector<2x128xf32> to vector<2x32xf32>
    %44 = vector.extract_strided_slice %39 {offsets = [0, 96], sizes = [2, 32], strides = [1, 1]} : vector<2x128xf32> to vector<2x32xf32>
    %45 = arith.mulf %42, %28 : vector<2x32xf32>
    %46 = arith.mulf %41, %43 : vector<2x32xf32>
    %47 = arith.addf %45, %46 : vector<2x32xf32>
    %48 = math.tanh %47 : vector<2x32xf32>
    %49 = arith.mulf %44, %48 : vector<2x32xf32>
    %50 = vector.extract_strided_slice %7 {offsets = [0, 2, 0], sizes = [2, 1, 128], strides = [1, 1, 1]} : vector<2x8x128xf32> to vector<2x1x128xf32>
    %51 = vector.shape_cast %50 : vector<2x1x128xf32> to vector<2x128xf32>
    %cst_15 = arith.constant dense<0.000000e+00> : vector<2x128xf32>
    %52 = tpu.matmul %49, %9, %cst_15 {dimension_numbers = #tpu.dot_dimension_numbers<[1], [0], [0], [1], [0, 0, 1, 1], [], []>} : vector<2x32xf32>, vector<32x128xf32>, vector<2x128xf32> -> vector<2x128xf32>
    %53 = arith.addf %51, %52 : vector<2x128xf32>
    %54 = arith.negf %53 : vector<2x128xf32>
    %55 = math.exp %54 : vector<2x128xf32>
    %cst_16 = arith.constant 1.000000e+00 : f32
    %56 = vector.broadcast %cst_16 : f32 to vector<2x128xf32>
    %57 = arith.addf %56, %55 : vector<2x128xf32>
    %58 = arith.divf %56, %57 : vector<2x128xf32>
    %59 = math.tanh %53 : vector<2x128xf32>
    %60 = vector.extract_strided_slice %58 {offsets = [0, 0], sizes = [2, 32], strides = [1, 1]} : vector<2x128xf32> to vector<2x32xf32>
    %61 = vector.extract_strided_slice %58 {offsets = [0, 32], sizes = [2, 32], strides = [1, 1]} : vector<2x128xf32> to vector<2x32xf32>
    %62 = vector.extract_strided_slice %59 {offsets = [0, 64], sizes = [2, 32], strides = [1, 1]} : vector<2x128xf32> to vector<2x32xf32>
    %63 = vector.extract_strided_slice %58 {offsets = [0, 96], sizes = [2, 32], strides = [1, 1]} : vector<2x128xf32> to vector<2x32xf32>
    %64 = arith.mulf %61, %47 : vector<2x32xf32>
    %65 = arith.mulf %60, %62 : vector<2x32xf32>
    %66 = arith.addf %64, %65 : vector<2x32xf32>
    %67 = math.tanh %66 : vector<2x32xf32>
    %68 = arith.mulf %63, %67 : vector<2x32xf32>
    %69 = vector.extract_strided_slice %7 {offsets = [0, 3, 0], sizes = [2, 1, 128], strides = [1, 1, 1]} : vector<2x8x128xf32> to vector<2x1x128xf32>
    %70 = vector.shape_cast %69 : vector<2x1x128xf32> to vector<2x128xf32>
    %cst_17 = arith.constant dense<0.000000e+00> : vector<2x128xf32>
    %71 = tpu.matmul %68, %9, %cst_17 {dimension_numbers = #tpu.dot_dimension_numbers<[1], [0], [0], [1], [0, 0, 1, 1], [], []>} : vector<2x32xf32>, vector<32x128xf32>, vector<2x128xf32> -> vector<2x128xf32>
    %72 = arith.addf %70, %71 : vector<2x128xf32>
    %73 = arith.negf %72 : vector<2x128xf32>
    %74 = math.exp %73 : vector<2x128xf32>
    %cst_18 = arith.constant 1.000000e+00 : f32
    %75 = vector.broadcast %cst_18 : f32 to vector<2x128xf32>
    %76 = arith.addf %75, %74 : vector<2x128xf32>
    %77 = arith.divf %75, %76 : vector<2x128xf32>
    %78 = math.tanh %72 : vector<2x128xf32>
    %79 = vector.extract_strided_slice %77 {offsets = [0, 0], sizes = [2, 32], strides = [1, 1]} : vector<2x128xf32> to vector<2x32xf32>
    %80 = vector.extract_strided_slice %77 {offsets = [0, 32], sizes = [2, 32], strides = [1, 1]} : vector<2x128xf32> to vector<2x32xf32>
    %81 = vector.extract_strided_slice %78 {offsets = [0, 64], sizes = [2, 32], strides = [1, 1]} : vector<2x128xf32> to vector<2x32xf32>
    %82 = vector.extract_strided_slice %77 {offsets = [0, 96], sizes = [2, 32], strides = [1, 1]} : vector<2x128xf32> to vector<2x32xf32>
    %83 = arith.mulf %80, %66 : vector<2x32xf32>
    %84 = arith.mulf %79, %81 : vector<2x32xf32>
    %85 = arith.addf %83, %84 : vector<2x32xf32>
    %86 = math.tanh %85 : vector<2x32xf32>
    %87 = arith.mulf %82, %86 : vector<2x32xf32>
    %88 = vector.extract_strided_slice %7 {offsets = [0, 4, 0], sizes = [2, 1, 128], strides = [1, 1, 1]} : vector<2x8x128xf32> to vector<2x1x128xf32>
    %89 = vector.shape_cast %88 : vector<2x1x128xf32> to vector<2x128xf32>
    %cst_19 = arith.constant dense<0.000000e+00> : vector<2x128xf32>
    %90 = tpu.matmul %87, %9, %cst_19 {dimension_numbers = #tpu.dot_dimension_numbers<[1], [0], [0], [1], [0, 0, 1, 1], [], []>} : vector<2x32xf32>, vector<32x128xf32>, vector<2x128xf32> -> vector<2x128xf32>
    %91 = arith.addf %89, %90 : vector<2x128xf32>
    %92 = arith.negf %91 : vector<2x128xf32>
    %93 = math.exp %92 : vector<2x128xf32>
    %cst_20 = arith.constant 1.000000e+00 : f32
    %94 = vector.broadcast %cst_20 : f32 to vector<2x128xf32>
    %95 = arith.addf %94, %93 : vector<2x128xf32>
    %96 = arith.divf %94, %95 : vector<2x128xf32>
    %97 = math.tanh %91 : vector<2x128xf32>
    %98 = vector.extract_strided_slice %96 {offsets = [0, 0], sizes = [2, 32], strides = [1, 1]} : vector<2x128xf32> to vector<2x32xf32>
    %99 = vector.extract_strided_slice %96 {offsets = [0, 32], sizes = [2, 32], strides = [1, 1]} : vector<2x128xf32> to vector<2x32xf32>
    %100 = vector.extract_strided_slice %97 {offsets = [0, 64], sizes = [2, 32], strides = [1, 1]} : vector<2x128xf32> to vector<2x32xf32>
    %101 = vector.extract_strided_slice %96 {offsets = [0, 96], sizes = [2, 32], strides = [1, 1]} : vector<2x128xf32> to vector<2x32xf32>
    %102 = arith.mulf %99, %85 : vector<2x32xf32>
    %103 = arith.mulf %98, %100 : vector<2x32xf32>
    %104 = arith.addf %102, %103 : vector<2x32xf32>
    %105 = math.tanh %104 : vector<2x32xf32>
    %106 = arith.mulf %101, %105 : vector<2x32xf32>
    %107 = vector.extract_strided_slice %7 {offsets = [0, 5, 0], sizes = [2, 1, 128], strides = [1, 1, 1]} : vector<2x8x128xf32> to vector<2x1x128xf32>
    %108 = vector.shape_cast %107 : vector<2x1x128xf32> to vector<2x128xf32>
    %cst_21 = arith.constant dense<0.000000e+00> : vector<2x128xf32>
    %109 = tpu.matmul %106, %9, %cst_21 {dimension_numbers = #tpu.dot_dimension_numbers<[1], [0], [0], [1], [0, 0, 1, 1], [], []>} : vector<2x32xf32>, vector<32x128xf32>, vector<2x128xf32> -> vector<2x128xf32>
    %110 = arith.addf %108, %109 : vector<2x128xf32>
    %111 = arith.negf %110 : vector<2x128xf32>
    %112 = math.exp %111 : vector<2x128xf32>
    %cst_22 = arith.constant 1.000000e+00 : f32
    %113 = vector.broadcast %cst_22 : f32 to vector<2x128xf32>
    %114 = arith.addf %113, %112 : vector<2x128xf32>
    %115 = arith.divf %113, %114 : vector<2x128xf32>
    %116 = math.tanh %110 : vector<2x128xf32>
    %117 = vector.extract_strided_slice %115 {offsets = [0, 0], sizes = [2, 32], strides = [1, 1]} : vector<2x128xf32> to vector<2x32xf32>
    %118 = vector.extract_strided_slice %115 {offsets = [0, 32], sizes = [2, 32], strides = [1, 1]} : vector<2x128xf32> to vector<2x32xf32>
    %119 = vector.extract_strided_slice %116 {offsets = [0, 64], sizes = [2, 32], strides = [1, 1]} : vector<2x128xf32> to vector<2x32xf32>
    %120 = vector.extract_strided_slice %115 {offsets = [0, 96], sizes = [2, 32], strides = [1, 1]} : vector<2x128xf32> to vector<2x32xf32>
    %121 = arith.mulf %118, %104 : vector<2x32xf32>
    %122 = arith.mulf %117, %119 : vector<2x32xf32>
    %123 = arith.addf %121, %122 : vector<2x32xf32>
    %124 = math.tanh %123 : vector<2x32xf32>
    %125 = arith.mulf %120, %124 : vector<2x32xf32>
    %126 = vector.extract_strided_slice %7 {offsets = [0, 6, 0], sizes = [2, 1, 128], strides = [1, 1, 1]} : vector<2x8x128xf32> to vector<2x1x128xf32>
    %127 = vector.shape_cast %126 : vector<2x1x128xf32> to vector<2x128xf32>
    %cst_23 = arith.constant dense<0.000000e+00> : vector<2x128xf32>
    %128 = tpu.matmul %125, %9, %cst_23 {dimension_numbers = #tpu.dot_dimension_numbers<[1], [0], [0], [1], [0, 0, 1, 1], [], []>} : vector<2x32xf32>, vector<32x128xf32>, vector<2x128xf32> -> vector<2x128xf32>
    %129 = arith.addf %127, %128 : vector<2x128xf32>
    %130 = arith.negf %129 : vector<2x128xf32>
    %131 = math.exp %130 : vector<2x128xf32>
    %cst_24 = arith.constant 1.000000e+00 : f32
    %132 = vector.broadcast %cst_24 : f32 to vector<2x128xf32>
    %133 = arith.addf %132, %131 : vector<2x128xf32>
    %134 = arith.divf %132, %133 : vector<2x128xf32>
    %135 = math.tanh %129 : vector<2x128xf32>
    %136 = vector.extract_strided_slice %134 {offsets = [0, 0], sizes = [2, 32], strides = [1, 1]} : vector<2x128xf32> to vector<2x32xf32>
    %137 = vector.extract_strided_slice %134 {offsets = [0, 32], sizes = [2, 32], strides = [1, 1]} : vector<2x128xf32> to vector<2x32xf32>
    %138 = vector.extract_strided_slice %135 {offsets = [0, 64], sizes = [2, 32], strides = [1, 1]} : vector<2x128xf32> to vector<2x32xf32>
    %139 = vector.extract_strided_slice %134 {offsets = [0, 96], sizes = [2, 32], strides = [1, 1]} : vector<2x128xf32> to vector<2x32xf32>
    %140 = arith.mulf %137, %123 : vector<2x32xf32>
    %141 = arith.mulf %136, %138 : vector<2x32xf32>
    %142 = arith.addf %140, %141 : vector<2x32xf32>
    %143 = math.tanh %142 : vector<2x32xf32>
    %144 = arith.mulf %139, %143 : vector<2x32xf32>
    %145 = vector.extract_strided_slice %7 {offsets = [0, 7, 0], sizes = [2, 1, 128], strides = [1, 1, 1]} : vector<2x8x128xf32> to vector<2x1x128xf32>
    %146 = vector.shape_cast %145 : vector<2x1x128xf32> to vector<2x128xf32>
    %cst_25 = arith.constant dense<0.000000e+00> : vector<2x128xf32>
    %147 = tpu.matmul %144, %9, %cst_25 {dimension_numbers = #tpu.dot_dimension_numbers<[1], [0], [0], [1], [0, 0, 1, 1], [], []>} : vector<2x32xf32>, vector<32x128xf32>, vector<2x128xf32> -> vector<2x128xf32>
    %148 = arith.addf %146, %147 : vector<2x128xf32>
    %149 = arith.negf %148 : vector<2x128xf32>
    %150 = math.exp %149 : vector<2x128xf32>
    %cst_26 = arith.constant 1.000000e+00 : f32
    %151 = vector.broadcast %cst_26 : f32 to vector<2x128xf32>
    %152 = arith.addf %151, %150 : vector<2x128xf32>
    %153 = arith.divf %151, %152 : vector<2x128xf32>
    %154 = math.tanh %148 : vector<2x128xf32>
    %155 = vector.extract_strided_slice %153 {offsets = [0, 0], sizes = [2, 32], strides = [1, 1]} : vector<2x128xf32> to vector<2x32xf32>
    %156 = vector.extract_strided_slice %153 {offsets = [0, 32], sizes = [2, 32], strides = [1, 1]} : vector<2x128xf32> to vector<2x32xf32>
    %157 = vector.extract_strided_slice %154 {offsets = [0, 64], sizes = [2, 32], strides = [1, 1]} : vector<2x128xf32> to vector<2x32xf32>
    %158 = vector.extract_strided_slice %153 {offsets = [0, 96], sizes = [2, 32], strides = [1, 1]} : vector<2x128xf32> to vector<2x32xf32>
    %159 = arith.mulf %156, %142 : vector<2x32xf32>
    %160 = arith.mulf %155, %157 : vector<2x32xf32>
    %161 = arith.addf %159, %160 : vector<2x32xf32>
    %162 = math.tanh %161 : vector<2x32xf32>
    %163 = arith.mulf %158, %162 : vector<2x32xf32>
    %164 = vector.shape_cast %30 : vector<2x32xf32> to vector<2x1x32xf32>
    %165 = vector.shape_cast %49 : vector<2x32xf32> to vector<2x1x32xf32>
    %166 = vector.shape_cast %68 : vector<2x32xf32> to vector<2x1x32xf32>
    %167 = vector.shape_cast %87 : vector<2x32xf32> to vector<2x1x32xf32>
    %168 = vector.shape_cast %106 : vector<2x32xf32> to vector<2x1x32xf32>
    %169 = vector.shape_cast %125 : vector<2x32xf32> to vector<2x1x32xf32>
    %170 = vector.shape_cast %144 : vector<2x32xf32> to vector<2x1x32xf32>
    %171 = vector.shape_cast %163 : vector<2x32xf32> to vector<2x1x32xf32>
    %172 = tpu.concatenate %164, %165, %166, %167, %168, %169, %170, %171 in 1 : vector<2x1x32xf32>, vector<2x1x32xf32>, vector<2x1x32xf32>, vector<2x1x32xf32>, vector<2x1x32xf32>, vector<2x1x32xf32>, vector<2x1x32xf32>, vector<2x1x32xf32> -> vector<2x8x32xf32>
    %173 = vector.shape_cast %172 : vector<2x8x32xf32> to vector<16x32xf32>
    %c0_27 = arith.constant 0 : index
    %c0_28 = arith.constant 0 : index
    %c0_29 = arith.constant 0 : index
    %174 = vector.load %arg2[%c0_27, %c0_28, %c0_29] : memref<4x32x128xf32, #tpu.memory_space<vmem>>, vector<1x32x128xf32>
    %175 = vector.shape_cast %174 : vector<1x32x128xf32> to vector<32x128xf32>
    %cst_30 = arith.constant dense<0.000000e+00> : vector<16x128xf32>
    %176 = tpu.matmul %173, %175, %cst_30 {dimension_numbers = #tpu.dot_dimension_numbers<[1], [0], [0], [1], [0, 0, 1, 1], [], []>} : vector<16x32xf32>, vector<32x128xf32>, vector<16x128xf32> -> vector<16x128xf32>
    %c1 = arith.constant 1 : index
    %c0_31 = arith.constant 0 : index
    %c0_32 = arith.constant 0 : index
    %177 = vector.load %arg4[%c1, %c0_31, %c0_32] : memref<5x1x128xf32, #tpu.memory_space<vmem>>, vector<1x1x128xf32>
    %178 = vector.shape_cast %177 : vector<1x1x128xf32> to vector<1x128xf32>
    %179 = vector.broadcast %178 : vector<1x128xf32> to vector<16x128xf32>
    %180 = arith.addf %176, %179 : vector<16x128xf32>
    %181 = vector.shape_cast %180 : vector<16x128xf32> to vector<2x8x128xf32>
    %c1_33 = arith.constant 1 : index
    %c0_34 = arith.constant 0 : index
    %c0_35 = arith.constant 0 : index
    %182 = vector.load %arg3[%c1_33, %c0_34, %c0_35] : memref<5x32x128xf32, #tpu.memory_space<vmem>>, vector<1x32x128xf32>
    %183 = vector.shape_cast %182 : vector<1x32x128xf32> to vector<32x128xf32>
    %cst_36 = arith.constant 0.000000e+00 : f32
    %184 = vector.broadcast %cst_36 : f32 to vector<2x32xf32>
    %cst_37 = arith.constant 0.000000e+00 : f32
    %185 = vector.broadcast %cst_37 : f32 to vector<2x32xf32>
    %186 = vector.extract_strided_slice %181 {offsets = [0, 0, 0], sizes = [2, 1, 128], strides = [1, 1, 1]} : vector<2x8x128xf32> to vector<2x1x128xf32>
    %187 = vector.shape_cast %186 : vector<2x1x128xf32> to vector<2x128xf32>
    %cst_38 = arith.constant dense<0.000000e+00> : vector<2x128xf32>
    %188 = tpu.matmul %184, %183, %cst_38 {dimension_numbers = #tpu.dot_dimension_numbers<[1], [0], [0], [1], [0, 0, 1, 1], [], []>} : vector<2x32xf32>, vector<32x128xf32>, vector<2x128xf32> -> vector<2x128xf32>
    %189 = arith.addf %187, %188 : vector<2x128xf32>
    %190 = arith.negf %189 : vector<2x128xf32>
    %191 = math.exp %190 : vector<2x128xf32>
    %cst_39 = arith.constant 1.000000e+00 : f32
    %192 = vector.broadcast %cst_39 : f32 to vector<2x128xf32>
    %193 = arith.addf %192, %191 : vector<2x128xf32>
    %194 = arith.divf %192, %193 : vector<2x128xf32>
    %195 = math.tanh %189 : vector<2x128xf32>
    %196 = vector.extract_strided_slice %194 {offsets = [0, 0], sizes = [2, 32], strides = [1, 1]} : vector<2x128xf32> to vector<2x32xf32>
    %197 = vector.extract_strided_slice %194 {offsets = [0, 32], sizes = [2, 32], strides = [1, 1]} : vector<2x128xf32> to vector<2x32xf32>
    %198 = vector.extract_strided_slice %195 {offsets = [0, 64], sizes = [2, 32], strides = [1, 1]} : vector<2x128xf32> to vector<2x32xf32>
    %199 = vector.extract_strided_slice %194 {offsets = [0, 96], sizes = [2, 32], strides = [1, 1]} : vector<2x128xf32> to vector<2x32xf32>
    %200 = arith.mulf %197, %185 : vector<2x32xf32>
    %201 = arith.mulf %196, %198 : vector<2x32xf32>
    %202 = arith.addf %200, %201 : vector<2x32xf32>
    %203 = math.tanh %202 : vector<2x32xf32>
    %204 = arith.mulf %199, %203 : vector<2x32xf32>
    %205 = vector.extract_strided_slice %181 {offsets = [0, 1, 0], sizes = [2, 1, 128], strides = [1, 1, 1]} : vector<2x8x128xf32> to vector<2x1x128xf32>
    %206 = vector.shape_cast %205 : vector<2x1x128xf32> to vector<2x128xf32>
    %cst_40 = arith.constant dense<0.000000e+00> : vector<2x128xf32>
    %207 = tpu.matmul %204, %183, %cst_40 {dimension_numbers = #tpu.dot_dimension_numbers<[1], [0], [0], [1], [0, 0, 1, 1], [], []>} : vector<2x32xf32>, vector<32x128xf32>, vector<2x128xf32> -> vector<2x128xf32>
    %208 = arith.addf %206, %207 : vector<2x128xf32>
    %209 = arith.negf %208 : vector<2x128xf32>
    %210 = math.exp %209 : vector<2x128xf32>
    %cst_41 = arith.constant 1.000000e+00 : f32
    %211 = vector.broadcast %cst_41 : f32 to vector<2x128xf32>
    %212 = arith.addf %211, %210 : vector<2x128xf32>
    %213 = arith.divf %211, %212 : vector<2x128xf32>
    %214 = math.tanh %208 : vector<2x128xf32>
    %215 = vector.extract_strided_slice %213 {offsets = [0, 0], sizes = [2, 32], strides = [1, 1]} : vector<2x128xf32> to vector<2x32xf32>
    %216 = vector.extract_strided_slice %213 {offsets = [0, 32], sizes = [2, 32], strides = [1, 1]} : vector<2x128xf32> to vector<2x32xf32>
    %217 = vector.extract_strided_slice %214 {offsets = [0, 64], sizes = [2, 32], strides = [1, 1]} : vector<2x128xf32> to vector<2x32xf32>
    %218 = vector.extract_strided_slice %213 {offsets = [0, 96], sizes = [2, 32], strides = [1, 1]} : vector<2x128xf32> to vector<2x32xf32>
    %219 = arith.mulf %216, %202 : vector<2x32xf32>
    %220 = arith.mulf %215, %217 : vector<2x32xf32>
    %221 = arith.addf %219, %220 : vector<2x32xf32>
    %222 = math.tanh %221 : vector<2x32xf32>
    %223 = arith.mulf %218, %222 : vector<2x32xf32>
    %224 = vector.extract_strided_slice %181 {offsets = [0, 2, 0], sizes = [2, 1, 128], strides = [1, 1, 1]} : vector<2x8x128xf32> to vector<2x1x128xf32>
    %225 = vector.shape_cast %224 : vector<2x1x128xf32> to vector<2x128xf32>
    %cst_42 = arith.constant dense<0.000000e+00> : vector<2x128xf32>
    %226 = tpu.matmul %223, %183, %cst_42 {dimension_numbers = #tpu.dot_dimension_numbers<[1], [0], [0], [1], [0, 0, 1, 1], [], []>} : vector<2x32xf32>, vector<32x128xf32>, vector<2x128xf32> -> vector<2x128xf32>
    %227 = arith.addf %225, %226 : vector<2x128xf32>
    %228 = arith.negf %227 : vector<2x128xf32>
    %229 = math.exp %228 : vector<2x128xf32>
    %cst_43 = arith.constant 1.000000e+00 : f32
    %230 = vector.broadcast %cst_43 : f32 to vector<2x128xf32>
    %231 = arith.addf %230, %229 : vector<2x128xf32>
    %232 = arith.divf %230, %231 : vector<2x128xf32>
    %233 = math.tanh %227 : vector<2x128xf32>
    %234 = vector.extract_strided_slice %232 {offsets = [0, 0], sizes = [2, 32], strides = [1, 1]} : vector<2x128xf32> to vector<2x32xf32>
    %235 = vector.extract_strided_slice %232 {offsets = [0, 32], sizes = [2, 32], strides = [1, 1]} : vector<2x128xf32> to vector<2x32xf32>
    %236 = vector.extract_strided_slice %233 {offsets = [0, 64], sizes = [2, 32], strides = [1, 1]} : vector<2x128xf32> to vector<2x32xf32>
    %237 = vector.extract_strided_slice %232 {offsets = [0, 96], sizes = [2, 32], strides = [1, 1]} : vector<2x128xf32> to vector<2x32xf32>
    %238 = arith.mulf %235, %221 : vector<2x32xf32>
    %239 = arith.mulf %234, %236 : vector<2x32xf32>
    %240 = arith.addf %238, %239 : vector<2x32xf32>
    %241 = math.tanh %240 : vector<2x32xf32>
    %242 = arith.mulf %237, %241 : vector<2x32xf32>
    %243 = vector.extract_strided_slice %181 {offsets = [0, 3, 0], sizes = [2, 1, 128], strides = [1, 1, 1]} : vector<2x8x128xf32> to vector<2x1x128xf32>
    %244 = vector.shape_cast %243 : vector<2x1x128xf32> to vector<2x128xf32>
    %cst_44 = arith.constant dense<0.000000e+00> : vector<2x128xf32>
    %245 = tpu.matmul %242, %183, %cst_44 {dimension_numbers = #tpu.dot_dimension_numbers<[1], [0], [0], [1], [0, 0, 1, 1], [], []>} : vector<2x32xf32>, vector<32x128xf32>, vector<2x128xf32> -> vector<2x128xf32>
    %246 = arith.addf %244, %245 : vector<2x128xf32>
    %247 = arith.negf %246 : vector<2x128xf32>
    %248 = math.exp %247 : vector<2x128xf32>
    %cst_45 = arith.constant 1.000000e+00 : f32
    %249 = vector.broadcast %cst_45 : f32 to vector<2x128xf32>
    %250 = arith.addf %249, %248 : vector<2x128xf32>
    %251 = arith.divf %249, %250 : vector<2x128xf32>
    %252 = math.tanh %246 : vector<2x128xf32>
    %253 = vector.extract_strided_slice %251 {offsets = [0, 0], sizes = [2, 32], strides = [1, 1]} : vector<2x128xf32> to vector<2x32xf32>
    %254 = vector.extract_strided_slice %251 {offsets = [0, 32], sizes = [2, 32], strides = [1, 1]} : vector<2x128xf32> to vector<2x32xf32>
    %255 = vector.extract_strided_slice %252 {offsets = [0, 64], sizes = [2, 32], strides = [1, 1]} : vector<2x128xf32> to vector<2x32xf32>
    %256 = vector.extract_strided_slice %251 {offsets = [0, 96], sizes = [2, 32], strides = [1, 1]} : vector<2x128xf32> to vector<2x32xf32>
    %257 = arith.mulf %254, %240 : vector<2x32xf32>
    %258 = arith.mulf %253, %255 : vector<2x32xf32>
    %259 = arith.addf %257, %258 : vector<2x32xf32>
    %260 = math.tanh %259 : vector<2x32xf32>
    %261 = arith.mulf %256, %260 : vector<2x32xf32>
    %262 = vector.extract_strided_slice %181 {offsets = [0, 4, 0], sizes = [2, 1, 128], strides = [1, 1, 1]} : vector<2x8x128xf32> to vector<2x1x128xf32>
    %263 = vector.shape_cast %262 : vector<2x1x128xf32> to vector<2x128xf32>
    %cst_46 = arith.constant dense<0.000000e+00> : vector<2x128xf32>
    %264 = tpu.matmul %261, %183, %cst_46 {dimension_numbers = #tpu.dot_dimension_numbers<[1], [0], [0], [1], [0, 0, 1, 1], [], []>} : vector<2x32xf32>, vector<32x128xf32>, vector<2x128xf32> -> vector<2x128xf32>
    %265 = arith.addf %263, %264 : vector<2x128xf32>
    %266 = arith.negf %265 : vector<2x128xf32>
    %267 = math.exp %266 : vector<2x128xf32>
    %cst_47 = arith.constant 1.000000e+00 : f32
    %268 = vector.broadcast %cst_47 : f32 to vector<2x128xf32>
    %269 = arith.addf %268, %267 : vector<2x128xf32>
    %270 = arith.divf %268, %269 : vector<2x128xf32>
    %271 = math.tanh %265 : vector<2x128xf32>
    %272 = vector.extract_strided_slice %270 {offsets = [0, 0], sizes = [2, 32], strides = [1, 1]} : vector<2x128xf32> to vector<2x32xf32>
    %273 = vector.extract_strided_slice %270 {offsets = [0, 32], sizes = [2, 32], strides = [1, 1]} : vector<2x128xf32> to vector<2x32xf32>
    %274 = vector.extract_strided_slice %271 {offsets = [0, 64], sizes = [2, 32], strides = [1, 1]} : vector<2x128xf32> to vector<2x32xf32>
    %275 = vector.extract_strided_slice %270 {offsets = [0, 96], sizes = [2, 32], strides = [1, 1]} : vector<2x128xf32> to vector<2x32xf32>
    %276 = arith.mulf %273, %259 : vector<2x32xf32>
    %277 = arith.mulf %272, %274 : vector<2x32xf32>
    %278 = arith.addf %276, %277 : vector<2x32xf32>
    %279 = math.tanh %278 : vector<2x32xf32>
    %280 = arith.mulf %275, %279 : vector<2x32xf32>
    %281 = vector.extract_strided_slice %181 {offsets = [0, 5, 0], sizes = [2, 1, 128], strides = [1, 1, 1]} : vector<2x8x128xf32> to vector<2x1x128xf32>
    %282 = vector.shape_cast %281 : vector<2x1x128xf32> to vector<2x128xf32>
    %cst_48 = arith.constant dense<0.000000e+00> : vector<2x128xf32>
    %283 = tpu.matmul %280, %183, %cst_48 {dimension_numbers = #tpu.dot_dimension_numbers<[1], [0], [0], [1], [0, 0, 1, 1], [], []>} : vector<2x32xf32>, vector<32x128xf32>, vector<2x128xf32> -> vector<2x128xf32>
    %284 = arith.addf %282, %283 : vector<2x128xf32>
    %285 = arith.negf %284 : vector<2x128xf32>
    %286 = math.exp %285 : vector<2x128xf32>
    %cst_49 = arith.constant 1.000000e+00 : f32
    %287 = vector.broadcast %cst_49 : f32 to vector<2x128xf32>
    %288 = arith.addf %287, %286 : vector<2x128xf32>
    %289 = arith.divf %287, %288 : vector<2x128xf32>
    %290 = math.tanh %284 : vector<2x128xf32>
    %291 = vector.extract_strided_slice %289 {offsets = [0, 0], sizes = [2, 32], strides = [1, 1]} : vector<2x128xf32> to vector<2x32xf32>
    %292 = vector.extract_strided_slice %289 {offsets = [0, 32], sizes = [2, 32], strides = [1, 1]} : vector<2x128xf32> to vector<2x32xf32>
    %293 = vector.extract_strided_slice %290 {offsets = [0, 64], sizes = [2, 32], strides = [1, 1]} : vector<2x128xf32> to vector<2x32xf32>
    %294 = vector.extract_strided_slice %289 {offsets = [0, 96], sizes = [2, 32], strides = [1, 1]} : vector<2x128xf32> to vector<2x32xf32>
    %295 = arith.mulf %292, %278 : vector<2x32xf32>
    %296 = arith.mulf %291, %293 : vector<2x32xf32>
    %297 = arith.addf %295, %296 : vector<2x32xf32>
    %298 = math.tanh %297 : vector<2x32xf32>
    %299 = arith.mulf %294, %298 : vector<2x32xf32>
    %300 = vector.extract_strided_slice %181 {offsets = [0, 6, 0], sizes = [2, 1, 128], strides = [1, 1, 1]} : vector<2x8x128xf32> to vector<2x1x128xf32>
    %301 = vector.shape_cast %300 : vector<2x1x128xf32> to vector<2x128xf32>
    %cst_50 = arith.constant dense<0.000000e+00> : vector<2x128xf32>
    %302 = tpu.matmul %299, %183, %cst_50 {dimension_numbers = #tpu.dot_dimension_numbers<[1], [0], [0], [1], [0, 0, 1, 1], [], []>} : vector<2x32xf32>, vector<32x128xf32>, vector<2x128xf32> -> vector<2x128xf32>
    %303 = arith.addf %301, %302 : vector<2x128xf32>
    %304 = arith.negf %303 : vector<2x128xf32>
    %305 = math.exp %304 : vector<2x128xf32>
    %cst_51 = arith.constant 1.000000e+00 : f32
    %306 = vector.broadcast %cst_51 : f32 to vector<2x128xf32>
    %307 = arith.addf %306, %305 : vector<2x128xf32>
    %308 = arith.divf %306, %307 : vector<2x128xf32>
    %309 = math.tanh %303 : vector<2x128xf32>
    %310 = vector.extract_strided_slice %308 {offsets = [0, 0], sizes = [2, 32], strides = [1, 1]} : vector<2x128xf32> to vector<2x32xf32>
    %311 = vector.extract_strided_slice %308 {offsets = [0, 32], sizes = [2, 32], strides = [1, 1]} : vector<2x128xf32> to vector<2x32xf32>
    %312 = vector.extract_strided_slice %309 {offsets = [0, 64], sizes = [2, 32], strides = [1, 1]} : vector<2x128xf32> to vector<2x32xf32>
    %313 = vector.extract_strided_slice %308 {offsets = [0, 96], sizes = [2, 32], strides = [1, 1]} : vector<2x128xf32> to vector<2x32xf32>
    %314 = arith.mulf %311, %297 : vector<2x32xf32>
    %315 = arith.mulf %310, %312 : vector<2x32xf32>
    %316 = arith.addf %314, %315 : vector<2x32xf32>
    %317 = math.tanh %316 : vector<2x32xf32>
    %318 = arith.mulf %313, %317 : vector<2x32xf32>
    %319 = vector.extract_strided_slice %181 {offsets = [0, 7, 0], sizes = [2, 1, 128], strides = [1, 1, 1]} : vector<2x8x128xf32> to vector<2x1x128xf32>
    %320 = vector.shape_cast %319 : vector<2x1x128xf32> to vector<2x128xf32>
    %cst_52 = arith.constant dense<0.000000e+00> : vector<2x128xf32>
    %321 = tpu.matmul %318, %183, %cst_52 {dimension_numbers = #tpu.dot_dimension_numbers<[1], [0], [0], [1], [0, 0, 1, 1], [], []>} : vector<2x32xf32>, vector<32x128xf32>, vector<2x128xf32> -> vector<2x128xf32>
    %322 = arith.addf %320, %321 : vector<2x128xf32>
    %323 = arith.negf %322 : vector<2x128xf32>
    %324 = math.exp %323 : vector<2x128xf32>
    %cst_53 = arith.constant 1.000000e+00 : f32
    %325 = vector.broadcast %cst_53 : f32 to vector<2x128xf32>
    %326 = arith.addf %325, %324 : vector<2x128xf32>
    %327 = arith.divf %325, %326 : vector<2x128xf32>
    %328 = math.tanh %322 : vector<2x128xf32>
    %329 = vector.extract_strided_slice %327 {offsets = [0, 0], sizes = [2, 32], strides = [1, 1]} : vector<2x128xf32> to vector<2x32xf32>
    %330 = vector.extract_strided_slice %327 {offsets = [0, 32], sizes = [2, 32], strides = [1, 1]} : vector<2x128xf32> to vector<2x32xf32>
    %331 = vector.extract_strided_slice %328 {offsets = [0, 64], sizes = [2, 32], strides = [1, 1]} : vector<2x128xf32> to vector<2x32xf32>
    %332 = vector.extract_strided_slice %327 {offsets = [0, 96], sizes = [2, 32], strides = [1, 1]} : vector<2x128xf32> to vector<2x32xf32>
    %333 = arith.mulf %330, %316 : vector<2x32xf32>
    %334 = arith.mulf %329, %331 : vector<2x32xf32>
    %335 = arith.addf %333, %334 : vector<2x32xf32>
    %336 = math.tanh %335 : vector<2x32xf32>
    %337 = arith.mulf %332, %336 : vector<2x32xf32>
    %338 = vector.shape_cast %204 : vector<2x32xf32> to vector<2x1x32xf32>
    %339 = vector.shape_cast %223 : vector<2x32xf32> to vector<2x1x32xf32>
    %340 = vector.shape_cast %242 : vector<2x32xf32> to vector<2x1x32xf32>
    %341 = vector.shape_cast %261 : vector<2x32xf32> to vector<2x1x32xf32>
    %342 = vector.shape_cast %280 : vector<2x32xf32> to vector<2x1x32xf32>
    %343 = vector.shape_cast %299 : vector<2x32xf32> to vector<2x1x32xf32>
    %344 = vector.shape_cast %318 : vector<2x32xf32> to vector<2x1x32xf32>
    %345 = vector.shape_cast %337 : vector<2x32xf32> to vector<2x1x32xf32>
    %346 = tpu.concatenate %338, %339, %340, %341, %342, %343, %344, %345 in 1 : vector<2x1x32xf32>, vector<2x1x32xf32>, vector<2x1x32xf32>, vector<2x1x32xf32>, vector<2x1x32xf32>, vector<2x1x32xf32>, vector<2x1x32xf32>, vector<2x1x32xf32> -> vector<2x8x32xf32>
    %347 = vector.shape_cast %346 : vector<2x8x32xf32> to vector<16x32xf32>
    %c1_54 = arith.constant 1 : index
    %c0_55 = arith.constant 0 : index
    %c0_56 = arith.constant 0 : index
    %348 = vector.load %arg2[%c1_54, %c0_55, %c0_56] : memref<4x32x128xf32, #tpu.memory_space<vmem>>, vector<1x32x128xf32>
    %349 = vector.shape_cast %348 : vector<1x32x128xf32> to vector<32x128xf32>
    %cst_57 = arith.constant dense<0.000000e+00> : vector<16x128xf32>
    %350 = tpu.matmul %347, %349, %cst_57 {dimension_numbers = #tpu.dot_dimension_numbers<[1], [0], [0], [1], [0, 0, 1, 1], [], []>} : vector<16x32xf32>, vector<32x128xf32>, vector<16x128xf32> -> vector<16x128xf32>
    %c2 = arith.constant 2 : index
    %c0_58 = arith.constant 0 : index
    %c0_59 = arith.constant 0 : index
    %351 = vector.load %arg4[%c2, %c0_58, %c0_59] : memref<5x1x128xf32, #tpu.memory_space<vmem>>, vector<1x1x128xf32>
    %352 = vector.shape_cast %351 : vector<1x1x128xf32> to vector<1x128xf32>
    %353 = vector.broadcast %352 : vector<1x128xf32> to vector<16x128xf32>
    %354 = arith.addf %350, %353 : vector<16x128xf32>
    %355 = vector.shape_cast %354 : vector<16x128xf32> to vector<2x8x128xf32>
    %c2_60 = arith.constant 2 : index
    %c0_61 = arith.constant 0 : index
    %c0_62 = arith.constant 0 : index
    %356 = vector.load %arg3[%c2_60, %c0_61, %c0_62] : memref<5x32x128xf32, #tpu.memory_space<vmem>>, vector<1x32x128xf32>
    %357 = vector.shape_cast %356 : vector<1x32x128xf32> to vector<32x128xf32>
    %cst_63 = arith.constant 0.000000e+00 : f32
    %358 = vector.broadcast %cst_63 : f32 to vector<2x32xf32>
    %cst_64 = arith.constant 0.000000e+00 : f32
    %359 = vector.broadcast %cst_64 : f32 to vector<2x32xf32>
    %360 = vector.extract_strided_slice %355 {offsets = [0, 0, 0], sizes = [2, 1, 128], strides = [1, 1, 1]} : vector<2x8x128xf32> to vector<2x1x128xf32>
    %361 = vector.shape_cast %360 : vector<2x1x128xf32> to vector<2x128xf32>
    %cst_65 = arith.constant dense<0.000000e+00> : vector<2x128xf32>
    %362 = tpu.matmul %358, %357, %cst_65 {dimension_numbers = #tpu.dot_dimension_numbers<[1], [0], [0], [1], [0, 0, 1, 1], [], []>} : vector<2x32xf32>, vector<32x128xf32>, vector<2x128xf32> -> vector<2x128xf32>
    %363 = arith.addf %361, %362 : vector<2x128xf32>
    %364 = arith.negf %363 : vector<2x128xf32>
    %365 = math.exp %364 : vector<2x128xf32>
    %cst_66 = arith.constant 1.000000e+00 : f32
    %366 = vector.broadcast %cst_66 : f32 to vector<2x128xf32>
    %367 = arith.addf %366, %365 : vector<2x128xf32>
    %368 = arith.divf %366, %367 : vector<2x128xf32>
    %369 = math.tanh %363 : vector<2x128xf32>
    %370 = vector.extract_strided_slice %368 {offsets = [0, 0], sizes = [2, 32], strides = [1, 1]} : vector<2x128xf32> to vector<2x32xf32>
    %371 = vector.extract_strided_slice %368 {offsets = [0, 32], sizes = [2, 32], strides = [1, 1]} : vector<2x128xf32> to vector<2x32xf32>
    %372 = vector.extract_strided_slice %369 {offsets = [0, 64], sizes = [2, 32], strides = [1, 1]} : vector<2x128xf32> to vector<2x32xf32>
    %373 = vector.extract_strided_slice %368 {offsets = [0, 96], sizes = [2, 32], strides = [1, 1]} : vector<2x128xf32> to vector<2x32xf32>
    %374 = arith.mulf %371, %359 : vector<2x32xf32>
    %375 = arith.mulf %370, %372 : vector<2x32xf32>
    %376 = arith.addf %374, %375 : vector<2x32xf32>
    %377 = math.tanh %376 : vector<2x32xf32>
    %378 = arith.mulf %373, %377 : vector<2x32xf32>
    %379 = vector.extract_strided_slice %355 {offsets = [0, 1, 0], sizes = [2, 1, 128], strides = [1, 1, 1]} : vector<2x8x128xf32> to vector<2x1x128xf32>
    %380 = vector.shape_cast %379 : vector<2x1x128xf32> to vector<2x128xf32>
    %cst_67 = arith.constant dense<0.000000e+00> : vector<2x128xf32>
    %381 = tpu.matmul %378, %357, %cst_67 {dimension_numbers = #tpu.dot_dimension_numbers<[1], [0], [0], [1], [0, 0, 1, 1], [], []>} : vector<2x32xf32>, vector<32x128xf32>, vector<2x128xf32> -> vector<2x128xf32>
    %382 = arith.addf %380, %381 : vector<2x128xf32>
    %383 = arith.negf %382 : vector<2x128xf32>
    %384 = math.exp %383 : vector<2x128xf32>
    %cst_68 = arith.constant 1.000000e+00 : f32
    %385 = vector.broadcast %cst_68 : f32 to vector<2x128xf32>
    %386 = arith.addf %385, %384 : vector<2x128xf32>
    %387 = arith.divf %385, %386 : vector<2x128xf32>
    %388 = math.tanh %382 : vector<2x128xf32>
    %389 = vector.extract_strided_slice %387 {offsets = [0, 0], sizes = [2, 32], strides = [1, 1]} : vector<2x128xf32> to vector<2x32xf32>
    %390 = vector.extract_strided_slice %387 {offsets = [0, 32], sizes = [2, 32], strides = [1, 1]} : vector<2x128xf32> to vector<2x32xf32>
    %391 = vector.extract_strided_slice %388 {offsets = [0, 64], sizes = [2, 32], strides = [1, 1]} : vector<2x128xf32> to vector<2x32xf32>
    %392 = vector.extract_strided_slice %387 {offsets = [0, 96], sizes = [2, 32], strides = [1, 1]} : vector<2x128xf32> to vector<2x32xf32>
    %393 = arith.mulf %390, %376 : vector<2x32xf32>
    %394 = arith.mulf %389, %391 : vector<2x32xf32>
    %395 = arith.addf %393, %394 : vector<2x32xf32>
    %396 = math.tanh %395 : vector<2x32xf32>
    %397 = arith.mulf %392, %396 : vector<2x32xf32>
    %398 = vector.extract_strided_slice %355 {offsets = [0, 2, 0], sizes = [2, 1, 128], strides = [1, 1, 1]} : vector<2x8x128xf32> to vector<2x1x128xf32>
    %399 = vector.shape_cast %398 : vector<2x1x128xf32> to vector<2x128xf32>
    %cst_69 = arith.constant dense<0.000000e+00> : vector<2x128xf32>
    %400 = tpu.matmul %397, %357, %cst_69 {dimension_numbers = #tpu.dot_dimension_numbers<[1], [0], [0], [1], [0, 0, 1, 1], [], []>} : vector<2x32xf32>, vector<32x128xf32>, vector<2x128xf32> -> vector<2x128xf32>
    %401 = arith.addf %399, %400 : vector<2x128xf32>
    %402 = arith.negf %401 : vector<2x128xf32>
    %403 = math.exp %402 : vector<2x128xf32>
    %cst_70 = arith.constant 1.000000e+00 : f32
    %404 = vector.broadcast %cst_70 : f32 to vector<2x128xf32>
    %405 = arith.addf %404, %403 : vector<2x128xf32>
    %406 = arith.divf %404, %405 : vector<2x128xf32>
    %407 = math.tanh %401 : vector<2x128xf32>
    %408 = vector.extract_strided_slice %406 {offsets = [0, 0], sizes = [2, 32], strides = [1, 1]} : vector<2x128xf32> to vector<2x32xf32>
    %409 = vector.extract_strided_slice %406 {offsets = [0, 32], sizes = [2, 32], strides = [1, 1]} : vector<2x128xf32> to vector<2x32xf32>
    %410 = vector.extract_strided_slice %407 {offsets = [0, 64], sizes = [2, 32], strides = [1, 1]} : vector<2x128xf32> to vector<2x32xf32>
    %411 = vector.extract_strided_slice %406 {offsets = [0, 96], sizes = [2, 32], strides = [1, 1]} : vector<2x128xf32> to vector<2x32xf32>
    %412 = arith.mulf %409, %395 : vector<2x32xf32>
    %413 = arith.mulf %408, %410 : vector<2x32xf32>
    %414 = arith.addf %412, %413 : vector<2x32xf32>
    %415 = math.tanh %414 : vector<2x32xf32>
    %416 = arith.mulf %411, %415 : vector<2x32xf32>
    %417 = vector.extract_strided_slice %355 {offsets = [0, 3, 0], sizes = [2, 1, 128], strides = [1, 1, 1]} : vector<2x8x128xf32> to vector<2x1x128xf32>
    %418 = vector.shape_cast %417 : vector<2x1x128xf32> to vector<2x128xf32>
    %cst_71 = arith.constant dense<0.000000e+00> : vector<2x128xf32>
    %419 = tpu.matmul %416, %357, %cst_71 {dimension_numbers = #tpu.dot_dimension_numbers<[1], [0], [0], [1], [0, 0, 1, 1], [], []>} : vector<2x32xf32>, vector<32x128xf32>, vector<2x128xf32> -> vector<2x128xf32>
    %420 = arith.addf %418, %419 : vector<2x128xf32>
    %421 = arith.negf %420 : vector<2x128xf32>
    %422 = math.exp %421 : vector<2x128xf32>
    %cst_72 = arith.constant 1.000000e+00 : f32
    %423 = vector.broadcast %cst_72 : f32 to vector<2x128xf32>
    %424 = arith.addf %423, %422 : vector<2x128xf32>
    %425 = arith.divf %423, %424 : vector<2x128xf32>
    %426 = math.tanh %420 : vector<2x128xf32>
    %427 = vector.extract_strided_slice %425 {offsets = [0, 0], sizes = [2, 32], strides = [1, 1]} : vector<2x128xf32> to vector<2x32xf32>
    %428 = vector.extract_strided_slice %425 {offsets = [0, 32], sizes = [2, 32], strides = [1, 1]} : vector<2x128xf32> to vector<2x32xf32>
    %429 = vector.extract_strided_slice %426 {offsets = [0, 64], sizes = [2, 32], strides = [1, 1]} : vector<2x128xf32> to vector<2x32xf32>
    %430 = vector.extract_strided_slice %425 {offsets = [0, 96], sizes = [2, 32], strides = [1, 1]} : vector<2x128xf32> to vector<2x32xf32>
    %431 = arith.mulf %428, %414 : vector<2x32xf32>
    %432 = arith.mulf %427, %429 : vector<2x32xf32>
    %433 = arith.addf %431, %432 : vector<2x32xf32>
    %434 = math.tanh %433 : vector<2x32xf32>
    %435 = arith.mulf %430, %434 : vector<2x32xf32>
    %436 = vector.extract_strided_slice %355 {offsets = [0, 4, 0], sizes = [2, 1, 128], strides = [1, 1, 1]} : vector<2x8x128xf32> to vector<2x1x128xf32>
    %437 = vector.shape_cast %436 : vector<2x1x128xf32> to vector<2x128xf32>
    %cst_73 = arith.constant dense<0.000000e+00> : vector<2x128xf32>
    %438 = tpu.matmul %435, %357, %cst_73 {dimension_numbers = #tpu.dot_dimension_numbers<[1], [0], [0], [1], [0, 0, 1, 1], [], []>} : vector<2x32xf32>, vector<32x128xf32>, vector<2x128xf32> -> vector<2x128xf32>
    %439 = arith.addf %437, %438 : vector<2x128xf32>
    %440 = arith.negf %439 : vector<2x128xf32>
    %441 = math.exp %440 : vector<2x128xf32>
    %cst_74 = arith.constant 1.000000e+00 : f32
    %442 = vector.broadcast %cst_74 : f32 to vector<2x128xf32>
    %443 = arith.addf %442, %441 : vector<2x128xf32>
    %444 = arith.divf %442, %443 : vector<2x128xf32>
    %445 = math.tanh %439 : vector<2x128xf32>
    %446 = vector.extract_strided_slice %444 {offsets = [0, 0], sizes = [2, 32], strides = [1, 1]} : vector<2x128xf32> to vector<2x32xf32>
    %447 = vector.extract_strided_slice %444 {offsets = [0, 32], sizes = [2, 32], strides = [1, 1]} : vector<2x128xf32> to vector<2x32xf32>
    %448 = vector.extract_strided_slice %445 {offsets = [0, 64], sizes = [2, 32], strides = [1, 1]} : vector<2x128xf32> to vector<2x32xf32>
    %449 = vector.extract_strided_slice %444 {offsets = [0, 96], sizes = [2, 32], strides = [1, 1]} : vector<2x128xf32> to vector<2x32xf32>
    %450 = arith.mulf %447, %433 : vector<2x32xf32>
    %451 = arith.mulf %446, %448 : vector<2x32xf32>
    %452 = arith.addf %450, %451 : vector<2x32xf32>
    %453 = math.tanh %452 : vector<2x32xf32>
    %454 = arith.mulf %449, %453 : vector<2x32xf32>
    %455 = vector.extract_strided_slice %355 {offsets = [0, 5, 0], sizes = [2, 1, 128], strides = [1, 1, 1]} : vector<2x8x128xf32> to vector<2x1x128xf32>
    %456 = vector.shape_cast %455 : vector<2x1x128xf32> to vector<2x128xf32>
    %cst_75 = arith.constant dense<0.000000e+00> : vector<2x128xf32>
    %457 = tpu.matmul %454, %357, %cst_75 {dimension_numbers = #tpu.dot_dimension_numbers<[1], [0], [0], [1], [0, 0, 1, 1], [], []>} : vector<2x32xf32>, vector<32x128xf32>, vector<2x128xf32> -> vector<2x128xf32>
    %458 = arith.addf %456, %457 : vector<2x128xf32>
    %459 = arith.negf %458 : vector<2x128xf32>
    %460 = math.exp %459 : vector<2x128xf32>
    %cst_76 = arith.constant 1.000000e+00 : f32
    %461 = vector.broadcast %cst_76 : f32 to vector<2x128xf32>
    %462 = arith.addf %461, %460 : vector<2x128xf32>
    %463 = arith.divf %461, %462 : vector<2x128xf32>
    %464 = math.tanh %458 : vector<2x128xf32>
    %465 = vector.extract_strided_slice %463 {offsets = [0, 0], sizes = [2, 32], strides = [1, 1]} : vector<2x128xf32> to vector<2x32xf32>
    %466 = vector.extract_strided_slice %463 {offsets = [0, 32], sizes = [2, 32], strides = [1, 1]} : vector<2x128xf32> to vector<2x32xf32>
    %467 = vector.extract_strided_slice %464 {offsets = [0, 64], sizes = [2, 32], strides = [1, 1]} : vector<2x128xf32> to vector<2x32xf32>
    %468 = vector.extract_strided_slice %463 {offsets = [0, 96], sizes = [2, 32], strides = [1, 1]} : vector<2x128xf32> to vector<2x32xf32>
    %469 = arith.mulf %466, %452 : vector<2x32xf32>
    %470 = arith.mulf %465, %467 : vector<2x32xf32>
    %471 = arith.addf %469, %470 : vector<2x32xf32>
    %472 = math.tanh %471 : vector<2x32xf32>
    %473 = arith.mulf %468, %472 : vector<2x32xf32>
    %474 = vector.extract_strided_slice %355 {offsets = [0, 6, 0], sizes = [2, 1, 128], strides = [1, 1, 1]} : vector<2x8x128xf32> to vector<2x1x128xf32>
    %475 = vector.shape_cast %474 : vector<2x1x128xf32> to vector<2x128xf32>
    %cst_77 = arith.constant dense<0.000000e+00> : vector<2x128xf32>
    %476 = tpu.matmul %473, %357, %cst_77 {dimension_numbers = #tpu.dot_dimension_numbers<[1], [0], [0], [1], [0, 0, 1, 1], [], []>} : vector<2x32xf32>, vector<32x128xf32>, vector<2x128xf32> -> vector<2x128xf32>
    %477 = arith.addf %475, %476 : vector<2x128xf32>
    %478 = arith.negf %477 : vector<2x128xf32>
    %479 = math.exp %478 : vector<2x128xf32>
    %cst_78 = arith.constant 1.000000e+00 : f32
    %480 = vector.broadcast %cst_78 : f32 to vector<2x128xf32>
    %481 = arith.addf %480, %479 : vector<2x128xf32>
    %482 = arith.divf %480, %481 : vector<2x128xf32>
    %483 = math.tanh %477 : vector<2x128xf32>
    %484 = vector.extract_strided_slice %482 {offsets = [0, 0], sizes = [2, 32], strides = [1, 1]} : vector<2x128xf32> to vector<2x32xf32>
    %485 = vector.extract_strided_slice %482 {offsets = [0, 32], sizes = [2, 32], strides = [1, 1]} : vector<2x128xf32> to vector<2x32xf32>
    %486 = vector.extract_strided_slice %483 {offsets = [0, 64], sizes = [2, 32], strides = [1, 1]} : vector<2x128xf32> to vector<2x32xf32>
    %487 = vector.extract_strided_slice %482 {offsets = [0, 96], sizes = [2, 32], strides = [1, 1]} : vector<2x128xf32> to vector<2x32xf32>
    %488 = arith.mulf %485, %471 : vector<2x32xf32>
    %489 = arith.mulf %484, %486 : vector<2x32xf32>
    %490 = arith.addf %488, %489 : vector<2x32xf32>
    %491 = math.tanh %490 : vector<2x32xf32>
    %492 = arith.mulf %487, %491 : vector<2x32xf32>
    %493 = vector.extract_strided_slice %355 {offsets = [0, 7, 0], sizes = [2, 1, 128], strides = [1, 1, 1]} : vector<2x8x128xf32> to vector<2x1x128xf32>
    %494 = vector.shape_cast %493 : vector<2x1x128xf32> to vector<2x128xf32>
    %cst_79 = arith.constant dense<0.000000e+00> : vector<2x128xf32>
    %495 = tpu.matmul %492, %357, %cst_79 {dimension_numbers = #tpu.dot_dimension_numbers<[1], [0], [0], [1], [0, 0, 1, 1], [], []>} : vector<2x32xf32>, vector<32x128xf32>, vector<2x128xf32> -> vector<2x128xf32>
    %496 = arith.addf %494, %495 : vector<2x128xf32>
    %497 = arith.negf %496 : vector<2x128xf32>
    %498 = math.exp %497 : vector<2x128xf32>
    %cst_80 = arith.constant 1.000000e+00 : f32
    %499 = vector.broadcast %cst_80 : f32 to vector<2x128xf32>
    %500 = arith.addf %499, %498 : vector<2x128xf32>
    %501 = arith.divf %499, %500 : vector<2x128xf32>
    %502 = math.tanh %496 : vector<2x128xf32>
    %503 = vector.extract_strided_slice %501 {offsets = [0, 0], sizes = [2, 32], strides = [1, 1]} : vector<2x128xf32> to vector<2x32xf32>
    %504 = vector.extract_strided_slice %501 {offsets = [0, 32], sizes = [2, 32], strides = [1, 1]} : vector<2x128xf32> to vector<2x32xf32>
    %505 = vector.extract_strided_slice %502 {offsets = [0, 64], sizes = [2, 32], strides = [1, 1]} : vector<2x128xf32> to vector<2x32xf32>
    %506 = vector.extract_strided_slice %501 {offsets = [0, 96], sizes = [2, 32], strides = [1, 1]} : vector<2x128xf32> to vector<2x32xf32>
    %507 = arith.mulf %504, %490 : vector<2x32xf32>
    %508 = arith.mulf %503, %505 : vector<2x32xf32>
    %509 = arith.addf %507, %508 : vector<2x32xf32>
    %510 = math.tanh %509 : vector<2x32xf32>
    %511 = arith.mulf %506, %510 : vector<2x32xf32>
    %512 = vector.shape_cast %378 : vector<2x32xf32> to vector<2x1x32xf32>
    %513 = vector.shape_cast %397 : vector<2x32xf32> to vector<2x1x32xf32>
    %514 = vector.shape_cast %416 : vector<2x32xf32> to vector<2x1x32xf32>
    %515 = vector.shape_cast %435 : vector<2x32xf32> to vector<2x1x32xf32>
    %516 = vector.shape_cast %454 : vector<2x32xf32> to vector<2x1x32xf32>
    %517 = vector.shape_cast %473 : vector<2x32xf32> to vector<2x1x32xf32>
    %518 = vector.shape_cast %492 : vector<2x32xf32> to vector<2x1x32xf32>
    %519 = vector.shape_cast %511 : vector<2x32xf32> to vector<2x1x32xf32>
    %520 = tpu.concatenate %512, %513, %514, %515, %516, %517, %518, %519 in 1 : vector<2x1x32xf32>, vector<2x1x32xf32>, vector<2x1x32xf32>, vector<2x1x32xf32>, vector<2x1x32xf32>, vector<2x1x32xf32>, vector<2x1x32xf32>, vector<2x1x32xf32> -> vector<2x8x32xf32>
    %521 = vector.shape_cast %520 : vector<2x8x32xf32> to vector<16x32xf32>
    %c2_81 = arith.constant 2 : index
    %c0_82 = arith.constant 0 : index
    %c0_83 = arith.constant 0 : index
    %522 = vector.load %arg2[%c2_81, %c0_82, %c0_83] : memref<4x32x128xf32, #tpu.memory_space<vmem>>, vector<1x32x128xf32>
    %523 = vector.shape_cast %522 : vector<1x32x128xf32> to vector<32x128xf32>
    %cst_84 = arith.constant dense<0.000000e+00> : vector<16x128xf32>
    %524 = tpu.matmul %521, %523, %cst_84 {dimension_numbers = #tpu.dot_dimension_numbers<[1], [0], [0], [1], [0, 0, 1, 1], [], []>} : vector<16x32xf32>, vector<32x128xf32>, vector<16x128xf32> -> vector<16x128xf32>
    %c3 = arith.constant 3 : index
    %c0_85 = arith.constant 0 : index
    %c0_86 = arith.constant 0 : index
    %525 = vector.load %arg4[%c3, %c0_85, %c0_86] : memref<5x1x128xf32, #tpu.memory_space<vmem>>, vector<1x1x128xf32>
    %526 = vector.shape_cast %525 : vector<1x1x128xf32> to vector<1x128xf32>
    %527 = vector.broadcast %526 : vector<1x128xf32> to vector<16x128xf32>
    %528 = arith.addf %524, %527 : vector<16x128xf32>
    %529 = vector.shape_cast %528 : vector<16x128xf32> to vector<2x8x128xf32>
    %c3_87 = arith.constant 3 : index
    %c0_88 = arith.constant 0 : index
    %c0_89 = arith.constant 0 : index
    %530 = vector.load %arg3[%c3_87, %c0_88, %c0_89] : memref<5x32x128xf32, #tpu.memory_space<vmem>>, vector<1x32x128xf32>
    %531 = vector.shape_cast %530 : vector<1x32x128xf32> to vector<32x128xf32>
    %cst_90 = arith.constant 0.000000e+00 : f32
    %532 = vector.broadcast %cst_90 : f32 to vector<2x32xf32>
    %cst_91 = arith.constant 0.000000e+00 : f32
    %533 = vector.broadcast %cst_91 : f32 to vector<2x32xf32>
    %534 = vector.extract_strided_slice %529 {offsets = [0, 0, 0], sizes = [2, 1, 128], strides = [1, 1, 1]} : vector<2x8x128xf32> to vector<2x1x128xf32>
    %535 = vector.shape_cast %534 : vector<2x1x128xf32> to vector<2x128xf32>
    %cst_92 = arith.constant dense<0.000000e+00> : vector<2x128xf32>
    %536 = tpu.matmul %532, %531, %cst_92 {dimension_numbers = #tpu.dot_dimension_numbers<[1], [0], [0], [1], [0, 0, 1, 1], [], []>} : vector<2x32xf32>, vector<32x128xf32>, vector<2x128xf32> -> vector<2x128xf32>
    %537 = arith.addf %535, %536 : vector<2x128xf32>
    %538 = arith.negf %537 : vector<2x128xf32>
    %539 = math.exp %538 : vector<2x128xf32>
    %cst_93 = arith.constant 1.000000e+00 : f32
    %540 = vector.broadcast %cst_93 : f32 to vector<2x128xf32>
    %541 = arith.addf %540, %539 : vector<2x128xf32>
    %542 = arith.divf %540, %541 : vector<2x128xf32>
    %543 = math.tanh %537 : vector<2x128xf32>
    %544 = vector.extract_strided_slice %542 {offsets = [0, 0], sizes = [2, 32], strides = [1, 1]} : vector<2x128xf32> to vector<2x32xf32>
    %545 = vector.extract_strided_slice %542 {offsets = [0, 32], sizes = [2, 32], strides = [1, 1]} : vector<2x128xf32> to vector<2x32xf32>
    %546 = vector.extract_strided_slice %543 {offsets = [0, 64], sizes = [2, 32], strides = [1, 1]} : vector<2x128xf32> to vector<2x32xf32>
    %547 = vector.extract_strided_slice %542 {offsets = [0, 96], sizes = [2, 32], strides = [1, 1]} : vector<2x128xf32> to vector<2x32xf32>
    %548 = arith.mulf %545, %533 : vector<2x32xf32>
    %549 = arith.mulf %544, %546 : vector<2x32xf32>
    %550 = arith.addf %548, %549 : vector<2x32xf32>
    %551 = math.tanh %550 : vector<2x32xf32>
    %552 = arith.mulf %547, %551 : vector<2x32xf32>
    %553 = vector.extract_strided_slice %529 {offsets = [0, 1, 0], sizes = [2, 1, 128], strides = [1, 1, 1]} : vector<2x8x128xf32> to vector<2x1x128xf32>
    %554 = vector.shape_cast %553 : vector<2x1x128xf32> to vector<2x128xf32>
    %cst_94 = arith.constant dense<0.000000e+00> : vector<2x128xf32>
    %555 = tpu.matmul %552, %531, %cst_94 {dimension_numbers = #tpu.dot_dimension_numbers<[1], [0], [0], [1], [0, 0, 1, 1], [], []>} : vector<2x32xf32>, vector<32x128xf32>, vector<2x128xf32> -> vector<2x128xf32>
    %556 = arith.addf %554, %555 : vector<2x128xf32>
    %557 = arith.negf %556 : vector<2x128xf32>
    %558 = math.exp %557 : vector<2x128xf32>
    %cst_95 = arith.constant 1.000000e+00 : f32
    %559 = vector.broadcast %cst_95 : f32 to vector<2x128xf32>
    %560 = arith.addf %559, %558 : vector<2x128xf32>
    %561 = arith.divf %559, %560 : vector<2x128xf32>
    %562 = math.tanh %556 : vector<2x128xf32>
    %563 = vector.extract_strided_slice %561 {offsets = [0, 0], sizes = [2, 32], strides = [1, 1]} : vector<2x128xf32> to vector<2x32xf32>
    %564 = vector.extract_strided_slice %561 {offsets = [0, 32], sizes = [2, 32], strides = [1, 1]} : vector<2x128xf32> to vector<2x32xf32>
    %565 = vector.extract_strided_slice %562 {offsets = [0, 64], sizes = [2, 32], strides = [1, 1]} : vector<2x128xf32> to vector<2x32xf32>
    %566 = vector.extract_strided_slice %561 {offsets = [0, 96], sizes = [2, 32], strides = [1, 1]} : vector<2x128xf32> to vector<2x32xf32>
    %567 = arith.mulf %564, %550 : vector<2x32xf32>
    %568 = arith.mulf %563, %565 : vector<2x32xf32>
    %569 = arith.addf %567, %568 : vector<2x32xf32>
    %570 = math.tanh %569 : vector<2x32xf32>
    %571 = arith.mulf %566, %570 : vector<2x32xf32>
    %572 = vector.extract_strided_slice %529 {offsets = [0, 2, 0], sizes = [2, 1, 128], strides = [1, 1, 1]} : vector<2x8x128xf32> to vector<2x1x128xf32>
    %573 = vector.shape_cast %572 : vector<2x1x128xf32> to vector<2x128xf32>
    %cst_96 = arith.constant dense<0.000000e+00> : vector<2x128xf32>
    %574 = tpu.matmul %571, %531, %cst_96 {dimension_numbers = #tpu.dot_dimension_numbers<[1], [0], [0], [1], [0, 0, 1, 1], [], []>} : vector<2x32xf32>, vector<32x128xf32>, vector<2x128xf32> -> vector<2x128xf32>
    %575 = arith.addf %573, %574 : vector<2x128xf32>
    %576 = arith.negf %575 : vector<2x128xf32>
    %577 = math.exp %576 : vector<2x128xf32>
    %cst_97 = arith.constant 1.000000e+00 : f32
    %578 = vector.broadcast %cst_97 : f32 to vector<2x128xf32>
    %579 = arith.addf %578, %577 : vector<2x128xf32>
    %580 = arith.divf %578, %579 : vector<2x128xf32>
    %581 = math.tanh %575 : vector<2x128xf32>
    %582 = vector.extract_strided_slice %580 {offsets = [0, 0], sizes = [2, 32], strides = [1, 1]} : vector<2x128xf32> to vector<2x32xf32>
    %583 = vector.extract_strided_slice %580 {offsets = [0, 32], sizes = [2, 32], strides = [1, 1]} : vector<2x128xf32> to vector<2x32xf32>
    %584 = vector.extract_strided_slice %581 {offsets = [0, 64], sizes = [2, 32], strides = [1, 1]} : vector<2x128xf32> to vector<2x32xf32>
    %585 = vector.extract_strided_slice %580 {offsets = [0, 96], sizes = [2, 32], strides = [1, 1]} : vector<2x128xf32> to vector<2x32xf32>
    %586 = arith.mulf %583, %569 : vector<2x32xf32>
    %587 = arith.mulf %582, %584 : vector<2x32xf32>
    %588 = arith.addf %586, %587 : vector<2x32xf32>
    %589 = math.tanh %588 : vector<2x32xf32>
    %590 = arith.mulf %585, %589 : vector<2x32xf32>
    %591 = vector.extract_strided_slice %529 {offsets = [0, 3, 0], sizes = [2, 1, 128], strides = [1, 1, 1]} : vector<2x8x128xf32> to vector<2x1x128xf32>
    %592 = vector.shape_cast %591 : vector<2x1x128xf32> to vector<2x128xf32>
    %cst_98 = arith.constant dense<0.000000e+00> : vector<2x128xf32>
    %593 = tpu.matmul %590, %531, %cst_98 {dimension_numbers = #tpu.dot_dimension_numbers<[1], [0], [0], [1], [0, 0, 1, 1], [], []>} : vector<2x32xf32>, vector<32x128xf32>, vector<2x128xf32> -> vector<2x128xf32>
    %594 = arith.addf %592, %593 : vector<2x128xf32>
    %595 = arith.negf %594 : vector<2x128xf32>
    %596 = math.exp %595 : vector<2x128xf32>
    %cst_99 = arith.constant 1.000000e+00 : f32
    %597 = vector.broadcast %cst_99 : f32 to vector<2x128xf32>
    %598 = arith.addf %597, %596 : vector<2x128xf32>
    %599 = arith.divf %597, %598 : vector<2x128xf32>
    %600 = math.tanh %594 : vector<2x128xf32>
    %601 = vector.extract_strided_slice %599 {offsets = [0, 0], sizes = [2, 32], strides = [1, 1]} : vector<2x128xf32> to vector<2x32xf32>
    %602 = vector.extract_strided_slice %599 {offsets = [0, 32], sizes = [2, 32], strides = [1, 1]} : vector<2x128xf32> to vector<2x32xf32>
    %603 = vector.extract_strided_slice %600 {offsets = [0, 64], sizes = [2, 32], strides = [1, 1]} : vector<2x128xf32> to vector<2x32xf32>
    %604 = vector.extract_strided_slice %599 {offsets = [0, 96], sizes = [2, 32], strides = [1, 1]} : vector<2x128xf32> to vector<2x32xf32>
    %605 = arith.mulf %602, %588 : vector<2x32xf32>
    %606 = arith.mulf %601, %603 : vector<2x32xf32>
    %607 = arith.addf %605, %606 : vector<2x32xf32>
    %608 = math.tanh %607 : vector<2x32xf32>
    %609 = arith.mulf %604, %608 : vector<2x32xf32>
    %610 = vector.extract_strided_slice %529 {offsets = [0, 4, 0], sizes = [2, 1, 128], strides = [1, 1, 1]} : vector<2x8x128xf32> to vector<2x1x128xf32>
    %611 = vector.shape_cast %610 : vector<2x1x128xf32> to vector<2x128xf32>
    %cst_100 = arith.constant dense<0.000000e+00> : vector<2x128xf32>
    %612 = tpu.matmul %609, %531, %cst_100 {dimension_numbers = #tpu.dot_dimension_numbers<[1], [0], [0], [1], [0, 0, 1, 1], [], []>} : vector<2x32xf32>, vector<32x128xf32>, vector<2x128xf32> -> vector<2x128xf32>
    %613 = arith.addf %611, %612 : vector<2x128xf32>
    %614 = arith.negf %613 : vector<2x128xf32>
    %615 = math.exp %614 : vector<2x128xf32>
    %cst_101 = arith.constant 1.000000e+00 : f32
    %616 = vector.broadcast %cst_101 : f32 to vector<2x128xf32>
    %617 = arith.addf %616, %615 : vector<2x128xf32>
    %618 = arith.divf %616, %617 : vector<2x128xf32>
    %619 = math.tanh %613 : vector<2x128xf32>
    %620 = vector.extract_strided_slice %618 {offsets = [0, 0], sizes = [2, 32], strides = [1, 1]} : vector<2x128xf32> to vector<2x32xf32>
    %621 = vector.extract_strided_slice %618 {offsets = [0, 32], sizes = [2, 32], strides = [1, 1]} : vector<2x128xf32> to vector<2x32xf32>
    %622 = vector.extract_strided_slice %619 {offsets = [0, 64], sizes = [2, 32], strides = [1, 1]} : vector<2x128xf32> to vector<2x32xf32>
    %623 = vector.extract_strided_slice %618 {offsets = [0, 96], sizes = [2, 32], strides = [1, 1]} : vector<2x128xf32> to vector<2x32xf32>
    %624 = arith.mulf %621, %607 : vector<2x32xf32>
    %625 = arith.mulf %620, %622 : vector<2x32xf32>
    %626 = arith.addf %624, %625 : vector<2x32xf32>
    %627 = math.tanh %626 : vector<2x32xf32>
    %628 = arith.mulf %623, %627 : vector<2x32xf32>
    %629 = vector.extract_strided_slice %529 {offsets = [0, 5, 0], sizes = [2, 1, 128], strides = [1, 1, 1]} : vector<2x8x128xf32> to vector<2x1x128xf32>
    %630 = vector.shape_cast %629 : vector<2x1x128xf32> to vector<2x128xf32>
    %cst_102 = arith.constant dense<0.000000e+00> : vector<2x128xf32>
    %631 = tpu.matmul %628, %531, %cst_102 {dimension_numbers = #tpu.dot_dimension_numbers<[1], [0], [0], [1], [0, 0, 1, 1], [], []>} : vector<2x32xf32>, vector<32x128xf32>, vector<2x128xf32> -> vector<2x128xf32>
    %632 = arith.addf %630, %631 : vector<2x128xf32>
    %633 = arith.negf %632 : vector<2x128xf32>
    %634 = math.exp %633 : vector<2x128xf32>
    %cst_103 = arith.constant 1.000000e+00 : f32
    %635 = vector.broadcast %cst_103 : f32 to vector<2x128xf32>
    %636 = arith.addf %635, %634 : vector<2x128xf32>
    %637 = arith.divf %635, %636 : vector<2x128xf32>
    %638 = math.tanh %632 : vector<2x128xf32>
    %639 = vector.extract_strided_slice %637 {offsets = [0, 0], sizes = [2, 32], strides = [1, 1]} : vector<2x128xf32> to vector<2x32xf32>
    %640 = vector.extract_strided_slice %637 {offsets = [0, 32], sizes = [2, 32], strides = [1, 1]} : vector<2x128xf32> to vector<2x32xf32>
    %641 = vector.extract_strided_slice %638 {offsets = [0, 64], sizes = [2, 32], strides = [1, 1]} : vector<2x128xf32> to vector<2x32xf32>
    %642 = vector.extract_strided_slice %637 {offsets = [0, 96], sizes = [2, 32], strides = [1, 1]} : vector<2x128xf32> to vector<2x32xf32>
    %643 = arith.mulf %640, %626 : vector<2x32xf32>
    %644 = arith.mulf %639, %641 : vector<2x32xf32>
    %645 = arith.addf %643, %644 : vector<2x32xf32>
    %646 = math.tanh %645 : vector<2x32xf32>
    %647 = arith.mulf %642, %646 : vector<2x32xf32>
    %648 = vector.extract_strided_slice %529 {offsets = [0, 6, 0], sizes = [2, 1, 128], strides = [1, 1, 1]} : vector<2x8x128xf32> to vector<2x1x128xf32>
    %649 = vector.shape_cast %648 : vector<2x1x128xf32> to vector<2x128xf32>
    %cst_104 = arith.constant dense<0.000000e+00> : vector<2x128xf32>
    %650 = tpu.matmul %647, %531, %cst_104 {dimension_numbers = #tpu.dot_dimension_numbers<[1], [0], [0], [1], [0, 0, 1, 1], [], []>} : vector<2x32xf32>, vector<32x128xf32>, vector<2x128xf32> -> vector<2x128xf32>
    %651 = arith.addf %649, %650 : vector<2x128xf32>
    %652 = arith.negf %651 : vector<2x128xf32>
    %653 = math.exp %652 : vector<2x128xf32>
    %cst_105 = arith.constant 1.000000e+00 : f32
    %654 = vector.broadcast %cst_105 : f32 to vector<2x128xf32>
    %655 = arith.addf %654, %653 : vector<2x128xf32>
    %656 = arith.divf %654, %655 : vector<2x128xf32>
    %657 = math.tanh %651 : vector<2x128xf32>
    %658 = vector.extract_strided_slice %656 {offsets = [0, 0], sizes = [2, 32], strides = [1, 1]} : vector<2x128xf32> to vector<2x32xf32>
    %659 = vector.extract_strided_slice %656 {offsets = [0, 32], sizes = [2, 32], strides = [1, 1]} : vector<2x128xf32> to vector<2x32xf32>
    %660 = vector.extract_strided_slice %657 {offsets = [0, 64], sizes = [2, 32], strides = [1, 1]} : vector<2x128xf32> to vector<2x32xf32>
    %661 = vector.extract_strided_slice %656 {offsets = [0, 96], sizes = [2, 32], strides = [1, 1]} : vector<2x128xf32> to vector<2x32xf32>
    %662 = arith.mulf %659, %645 : vector<2x32xf32>
    %663 = arith.mulf %658, %660 : vector<2x32xf32>
    %664 = arith.addf %662, %663 : vector<2x32xf32>
    %665 = math.tanh %664 : vector<2x32xf32>
    %666 = arith.mulf %661, %665 : vector<2x32xf32>
    %667 = vector.extract_strided_slice %529 {offsets = [0, 7, 0], sizes = [2, 1, 128], strides = [1, 1, 1]} : vector<2x8x128xf32> to vector<2x1x128xf32>
    %668 = vector.shape_cast %667 : vector<2x1x128xf32> to vector<2x128xf32>
    %cst_106 = arith.constant dense<0.000000e+00> : vector<2x128xf32>
    %669 = tpu.matmul %666, %531, %cst_106 {dimension_numbers = #tpu.dot_dimension_numbers<[1], [0], [0], [1], [0, 0, 1, 1], [], []>} : vector<2x32xf32>, vector<32x128xf32>, vector<2x128xf32> -> vector<2x128xf32>
    %670 = arith.addf %668, %669 : vector<2x128xf32>
    %671 = arith.negf %670 : vector<2x128xf32>
    %672 = math.exp %671 : vector<2x128xf32>
    %cst_107 = arith.constant 1.000000e+00 : f32
    %673 = vector.broadcast %cst_107 : f32 to vector<2x128xf32>
    %674 = arith.addf %673, %672 : vector<2x128xf32>
    %675 = arith.divf %673, %674 : vector<2x128xf32>
    %676 = math.tanh %670 : vector<2x128xf32>
    %677 = vector.extract_strided_slice %675 {offsets = [0, 0], sizes = [2, 32], strides = [1, 1]} : vector<2x128xf32> to vector<2x32xf32>
    %678 = vector.extract_strided_slice %675 {offsets = [0, 32], sizes = [2, 32], strides = [1, 1]} : vector<2x128xf32> to vector<2x32xf32>
    %679 = vector.extract_strided_slice %676 {offsets = [0, 64], sizes = [2, 32], strides = [1, 1]} : vector<2x128xf32> to vector<2x32xf32>
    %680 = vector.extract_strided_slice %675 {offsets = [0, 96], sizes = [2, 32], strides = [1, 1]} : vector<2x128xf32> to vector<2x32xf32>
    %681 = arith.mulf %678, %664 : vector<2x32xf32>
    %682 = arith.mulf %677, %679 : vector<2x32xf32>
    %683 = arith.addf %681, %682 : vector<2x32xf32>
    %684 = math.tanh %683 : vector<2x32xf32>
    %685 = arith.mulf %680, %684 : vector<2x32xf32>
    %686 = vector.shape_cast %552 : vector<2x32xf32> to vector<2x1x32xf32>
    %687 = vector.shape_cast %571 : vector<2x32xf32> to vector<2x1x32xf32>
    %688 = vector.shape_cast %590 : vector<2x32xf32> to vector<2x1x32xf32>
    %689 = vector.shape_cast %609 : vector<2x32xf32> to vector<2x1x32xf32>
    %690 = vector.shape_cast %628 : vector<2x32xf32> to vector<2x1x32xf32>
    %691 = vector.shape_cast %647 : vector<2x32xf32> to vector<2x1x32xf32>
    %692 = vector.shape_cast %666 : vector<2x32xf32> to vector<2x1x32xf32>
    %693 = vector.shape_cast %685 : vector<2x32xf32> to vector<2x1x32xf32>
    %694 = tpu.concatenate %686, %687, %688, %689, %690, %691, %692, %693 in 1 : vector<2x1x32xf32>, vector<2x1x32xf32>, vector<2x1x32xf32>, vector<2x1x32xf32>, vector<2x1x32xf32>, vector<2x1x32xf32>, vector<2x1x32xf32>, vector<2x1x32xf32> -> vector<2x8x32xf32>
    %695 = vector.shape_cast %694 : vector<2x8x32xf32> to vector<16x32xf32>
    %c3_108 = arith.constant 3 : index
    %c0_109 = arith.constant 0 : index
    %c0_110 = arith.constant 0 : index
    %696 = vector.load %arg2[%c3_108, %c0_109, %c0_110] : memref<4x32x128xf32, #tpu.memory_space<vmem>>, vector<1x32x128xf32>
    %697 = vector.shape_cast %696 : vector<1x32x128xf32> to vector<32x128xf32>
    %cst_111 = arith.constant dense<0.000000e+00> : vector<16x128xf32>
    %698 = tpu.matmul %695, %697, %cst_111 {dimension_numbers = #tpu.dot_dimension_numbers<[1], [0], [0], [1], [0, 0, 1, 1], [], []>} : vector<16x32xf32>, vector<32x128xf32>, vector<16x128xf32> -> vector<16x128xf32>
    %c4 = arith.constant 4 : index
    %c0_112 = arith.constant 0 : index
    %c0_113 = arith.constant 0 : index
    %699 = vector.load %arg4[%c4, %c0_112, %c0_113] : memref<5x1x128xf32, #tpu.memory_space<vmem>>, vector<1x1x128xf32>
    %700 = vector.shape_cast %699 : vector<1x1x128xf32> to vector<1x128xf32>
    %701 = vector.broadcast %700 : vector<1x128xf32> to vector<16x128xf32>
    %702 = arith.addf %698, %701 : vector<16x128xf32>
    %703 = vector.shape_cast %702 : vector<16x128xf32> to vector<2x8x128xf32>
    %c4_114 = arith.constant 4 : index
    %c0_115 = arith.constant 0 : index
    %c0_116 = arith.constant 0 : index
    %704 = vector.load %arg3[%c4_114, %c0_115, %c0_116] : memref<5x32x128xf32, #tpu.memory_space<vmem>>, vector<1x32x128xf32>
    %705 = vector.shape_cast %704 : vector<1x32x128xf32> to vector<32x128xf32>
    %cst_117 = arith.constant 0.000000e+00 : f32
    %706 = vector.broadcast %cst_117 : f32 to vector<2x32xf32>
    %cst_118 = arith.constant 0.000000e+00 : f32
    %707 = vector.broadcast %cst_118 : f32 to vector<2x32xf32>
    %708 = vector.extract_strided_slice %703 {offsets = [0, 0, 0], sizes = [2, 1, 128], strides = [1, 1, 1]} : vector<2x8x128xf32> to vector<2x1x128xf32>
    %709 = vector.shape_cast %708 : vector<2x1x128xf32> to vector<2x128xf32>
    %cst_119 = arith.constant dense<0.000000e+00> : vector<2x128xf32>
    %710 = tpu.matmul %706, %705, %cst_119 {dimension_numbers = #tpu.dot_dimension_numbers<[1], [0], [0], [1], [0, 0, 1, 1], [], []>} : vector<2x32xf32>, vector<32x128xf32>, vector<2x128xf32> -> vector<2x128xf32>
    %711 = arith.addf %709, %710 : vector<2x128xf32>
    %712 = arith.negf %711 : vector<2x128xf32>
    %713 = math.exp %712 : vector<2x128xf32>
    %cst_120 = arith.constant 1.000000e+00 : f32
    %714 = vector.broadcast %cst_120 : f32 to vector<2x128xf32>
    %715 = arith.addf %714, %713 : vector<2x128xf32>
    %716 = arith.divf %714, %715 : vector<2x128xf32>
    %717 = math.tanh %711 : vector<2x128xf32>
    %718 = vector.extract_strided_slice %716 {offsets = [0, 0], sizes = [2, 32], strides = [1, 1]} : vector<2x128xf32> to vector<2x32xf32>
    %719 = vector.extract_strided_slice %716 {offsets = [0, 32], sizes = [2, 32], strides = [1, 1]} : vector<2x128xf32> to vector<2x32xf32>
    %720 = vector.extract_strided_slice %717 {offsets = [0, 64], sizes = [2, 32], strides = [1, 1]} : vector<2x128xf32> to vector<2x32xf32>
    %721 = vector.extract_strided_slice %716 {offsets = [0, 96], sizes = [2, 32], strides = [1, 1]} : vector<2x128xf32> to vector<2x32xf32>
    %722 = arith.mulf %719, %707 : vector<2x32xf32>
    %723 = arith.mulf %718, %720 : vector<2x32xf32>
    %724 = arith.addf %722, %723 : vector<2x32xf32>
    %725 = math.tanh %724 : vector<2x32xf32>
    %726 = arith.mulf %721, %725 : vector<2x32xf32>
    %727 = vector.extract_strided_slice %703 {offsets = [0, 1, 0], sizes = [2, 1, 128], strides = [1, 1, 1]} : vector<2x8x128xf32> to vector<2x1x128xf32>
    %728 = vector.shape_cast %727 : vector<2x1x128xf32> to vector<2x128xf32>
    %cst_121 = arith.constant dense<0.000000e+00> : vector<2x128xf32>
    %729 = tpu.matmul %726, %705, %cst_121 {dimension_numbers = #tpu.dot_dimension_numbers<[1], [0], [0], [1], [0, 0, 1, 1], [], []>} : vector<2x32xf32>, vector<32x128xf32>, vector<2x128xf32> -> vector<2x128xf32>
    %730 = arith.addf %728, %729 : vector<2x128xf32>
    %731 = arith.negf %730 : vector<2x128xf32>
    %732 = math.exp %731 : vector<2x128xf32>
    %cst_122 = arith.constant 1.000000e+00 : f32
    %733 = vector.broadcast %cst_122 : f32 to vector<2x128xf32>
    %734 = arith.addf %733, %732 : vector<2x128xf32>
    %735 = arith.divf %733, %734 : vector<2x128xf32>
    %736 = math.tanh %730 : vector<2x128xf32>
    %737 = vector.extract_strided_slice %735 {offsets = [0, 0], sizes = [2, 32], strides = [1, 1]} : vector<2x128xf32> to vector<2x32xf32>
    %738 = vector.extract_strided_slice %735 {offsets = [0, 32], sizes = [2, 32], strides = [1, 1]} : vector<2x128xf32> to vector<2x32xf32>
    %739 = vector.extract_strided_slice %736 {offsets = [0, 64], sizes = [2, 32], strides = [1, 1]} : vector<2x128xf32> to vector<2x32xf32>
    %740 = vector.extract_strided_slice %735 {offsets = [0, 96], sizes = [2, 32], strides = [1, 1]} : vector<2x128xf32> to vector<2x32xf32>
    %741 = arith.mulf %738, %724 : vector<2x32xf32>
    %742 = arith.mulf %737, %739 : vector<2x32xf32>
    %743 = arith.addf %741, %742 : vector<2x32xf32>
    %744 = math.tanh %743 : vector<2x32xf32>
    %745 = arith.mulf %740, %744 : vector<2x32xf32>
    %746 = vector.extract_strided_slice %703 {offsets = [0, 2, 0], sizes = [2, 1, 128], strides = [1, 1, 1]} : vector<2x8x128xf32> to vector<2x1x128xf32>
    %747 = vector.shape_cast %746 : vector<2x1x128xf32> to vector<2x128xf32>
    %cst_123 = arith.constant dense<0.000000e+00> : vector<2x128xf32>
    %748 = tpu.matmul %745, %705, %cst_123 {dimension_numbers = #tpu.dot_dimension_numbers<[1], [0], [0], [1], [0, 0, 1, 1], [], []>} : vector<2x32xf32>, vector<32x128xf32>, vector<2x128xf32> -> vector<2x128xf32>
    %749 = arith.addf %747, %748 : vector<2x128xf32>
    %750 = arith.negf %749 : vector<2x128xf32>
    %751 = math.exp %750 : vector<2x128xf32>
    %cst_124 = arith.constant 1.000000e+00 : f32
    %752 = vector.broadcast %cst_124 : f32 to vector<2x128xf32>
    %753 = arith.addf %752, %751 : vector<2x128xf32>
    %754 = arith.divf %752, %753 : vector<2x128xf32>
    %755 = math.tanh %749 : vector<2x128xf32>
    %756 = vector.extract_strided_slice %754 {offsets = [0, 0], sizes = [2, 32], strides = [1, 1]} : vector<2x128xf32> to vector<2x32xf32>
    %757 = vector.extract_strided_slice %754 {offsets = [0, 32], sizes = [2, 32], strides = [1, 1]} : vector<2x128xf32> to vector<2x32xf32>
    %758 = vector.extract_strided_slice %755 {offsets = [0, 64], sizes = [2, 32], strides = [1, 1]} : vector<2x128xf32> to vector<2x32xf32>
    %759 = vector.extract_strided_slice %754 {offsets = [0, 96], sizes = [2, 32], strides = [1, 1]} : vector<2x128xf32> to vector<2x32xf32>
    %760 = arith.mulf %757, %743 : vector<2x32xf32>
    %761 = arith.mulf %756, %758 : vector<2x32xf32>
    %762 = arith.addf %760, %761 : vector<2x32xf32>
    %763 = math.tanh %762 : vector<2x32xf32>
    %764 = arith.mulf %759, %763 : vector<2x32xf32>
    %765 = vector.extract_strided_slice %703 {offsets = [0, 3, 0], sizes = [2, 1, 128], strides = [1, 1, 1]} : vector<2x8x128xf32> to vector<2x1x128xf32>
    %766 = vector.shape_cast %765 : vector<2x1x128xf32> to vector<2x128xf32>
    %cst_125 = arith.constant dense<0.000000e+00> : vector<2x128xf32>
    %767 = tpu.matmul %764, %705, %cst_125 {dimension_numbers = #tpu.dot_dimension_numbers<[1], [0], [0], [1], [0, 0, 1, 1], [], []>} : vector<2x32xf32>, vector<32x128xf32>, vector<2x128xf32> -> vector<2x128xf32>
    %768 = arith.addf %766, %767 : vector<2x128xf32>
    %769 = arith.negf %768 : vector<2x128xf32>
    %770 = math.exp %769 : vector<2x128xf32>
    %cst_126 = arith.constant 1.000000e+00 : f32
    %771 = vector.broadcast %cst_126 : f32 to vector<2x128xf32>
    %772 = arith.addf %771, %770 : vector<2x128xf32>
    %773 = arith.divf %771, %772 : vector<2x128xf32>
    %774 = math.tanh %768 : vector<2x128xf32>
    %775 = vector.extract_strided_slice %773 {offsets = [0, 0], sizes = [2, 32], strides = [1, 1]} : vector<2x128xf32> to vector<2x32xf32>
    %776 = vector.extract_strided_slice %773 {offsets = [0, 32], sizes = [2, 32], strides = [1, 1]} : vector<2x128xf32> to vector<2x32xf32>
    %777 = vector.extract_strided_slice %774 {offsets = [0, 64], sizes = [2, 32], strides = [1, 1]} : vector<2x128xf32> to vector<2x32xf32>
    %778 = vector.extract_strided_slice %773 {offsets = [0, 96], sizes = [2, 32], strides = [1, 1]} : vector<2x128xf32> to vector<2x32xf32>
    %779 = arith.mulf %776, %762 : vector<2x32xf32>
    %780 = arith.mulf %775, %777 : vector<2x32xf32>
    %781 = arith.addf %779, %780 : vector<2x32xf32>
    %782 = math.tanh %781 : vector<2x32xf32>
    %783 = arith.mulf %778, %782 : vector<2x32xf32>
    %784 = vector.extract_strided_slice %703 {offsets = [0, 4, 0], sizes = [2, 1, 128], strides = [1, 1, 1]} : vector<2x8x128xf32> to vector<2x1x128xf32>
    %785 = vector.shape_cast %784 : vector<2x1x128xf32> to vector<2x128xf32>
    %cst_127 = arith.constant dense<0.000000e+00> : vector<2x128xf32>
    %786 = tpu.matmul %783, %705, %cst_127 {dimension_numbers = #tpu.dot_dimension_numbers<[1], [0], [0], [1], [0, 0, 1, 1], [], []>} : vector<2x32xf32>, vector<32x128xf32>, vector<2x128xf32> -> vector<2x128xf32>
    %787 = arith.addf %785, %786 : vector<2x128xf32>
    %788 = arith.negf %787 : vector<2x128xf32>
    %789 = math.exp %788 : vector<2x128xf32>
    %cst_128 = arith.constant 1.000000e+00 : f32
    %790 = vector.broadcast %cst_128 : f32 to vector<2x128xf32>
    %791 = arith.addf %790, %789 : vector<2x128xf32>
    %792 = arith.divf %790, %791 : vector<2x128xf32>
    %793 = math.tanh %787 : vector<2x128xf32>
    %794 = vector.extract_strided_slice %792 {offsets = [0, 0], sizes = [2, 32], strides = [1, 1]} : vector<2x128xf32> to vector<2x32xf32>
    %795 = vector.extract_strided_slice %792 {offsets = [0, 32], sizes = [2, 32], strides = [1, 1]} : vector<2x128xf32> to vector<2x32xf32>
    %796 = vector.extract_strided_slice %793 {offsets = [0, 64], sizes = [2, 32], strides = [1, 1]} : vector<2x128xf32> to vector<2x32xf32>
    %797 = vector.extract_strided_slice %792 {offsets = [0, 96], sizes = [2, 32], strides = [1, 1]} : vector<2x128xf32> to vector<2x32xf32>
    %798 = arith.mulf %795, %781 : vector<2x32xf32>
    %799 = arith.mulf %794, %796 : vector<2x32xf32>
    %800 = arith.addf %798, %799 : vector<2x32xf32>
    %801 = math.tanh %800 : vector<2x32xf32>
    %802 = arith.mulf %797, %801 : vector<2x32xf32>
    %803 = vector.extract_strided_slice %703 {offsets = [0, 5, 0], sizes = [2, 1, 128], strides = [1, 1, 1]} : vector<2x8x128xf32> to vector<2x1x128xf32>
    %804 = vector.shape_cast %803 : vector<2x1x128xf32> to vector<2x128xf32>
    %cst_129 = arith.constant dense<0.000000e+00> : vector<2x128xf32>
    %805 = tpu.matmul %802, %705, %cst_129 {dimension_numbers = #tpu.dot_dimension_numbers<[1], [0], [0], [1], [0, 0, 1, 1], [], []>} : vector<2x32xf32>, vector<32x128xf32>, vector<2x128xf32> -> vector<2x128xf32>
    %806 = arith.addf %804, %805 : vector<2x128xf32>
    %807 = arith.negf %806 : vector<2x128xf32>
    %808 = math.exp %807 : vector<2x128xf32>
    %cst_130 = arith.constant 1.000000e+00 : f32
    %809 = vector.broadcast %cst_130 : f32 to vector<2x128xf32>
    %810 = arith.addf %809, %808 : vector<2x128xf32>
    %811 = arith.divf %809, %810 : vector<2x128xf32>
    %812 = math.tanh %806 : vector<2x128xf32>
    %813 = vector.extract_strided_slice %811 {offsets = [0, 0], sizes = [2, 32], strides = [1, 1]} : vector<2x128xf32> to vector<2x32xf32>
    %814 = vector.extract_strided_slice %811 {offsets = [0, 32], sizes = [2, 32], strides = [1, 1]} : vector<2x128xf32> to vector<2x32xf32>
    %815 = vector.extract_strided_slice %812 {offsets = [0, 64], sizes = [2, 32], strides = [1, 1]} : vector<2x128xf32> to vector<2x32xf32>
    %816 = vector.extract_strided_slice %811 {offsets = [0, 96], sizes = [2, 32], strides = [1, 1]} : vector<2x128xf32> to vector<2x32xf32>
    %817 = arith.mulf %814, %800 : vector<2x32xf32>
    %818 = arith.mulf %813, %815 : vector<2x32xf32>
    %819 = arith.addf %817, %818 : vector<2x32xf32>
    %820 = math.tanh %819 : vector<2x32xf32>
    %821 = arith.mulf %816, %820 : vector<2x32xf32>
    %822 = vector.extract_strided_slice %703 {offsets = [0, 6, 0], sizes = [2, 1, 128], strides = [1, 1, 1]} : vector<2x8x128xf32> to vector<2x1x128xf32>
    %823 = vector.shape_cast %822 : vector<2x1x128xf32> to vector<2x128xf32>
    %cst_131 = arith.constant dense<0.000000e+00> : vector<2x128xf32>
    %824 = tpu.matmul %821, %705, %cst_131 {dimension_numbers = #tpu.dot_dimension_numbers<[1], [0], [0], [1], [0, 0, 1, 1], [], []>} : vector<2x32xf32>, vector<32x128xf32>, vector<2x128xf32> -> vector<2x128xf32>
    %825 = arith.addf %823, %824 : vector<2x128xf32>
    %826 = arith.negf %825 : vector<2x128xf32>
    %827 = math.exp %826 : vector<2x128xf32>
    %cst_132 = arith.constant 1.000000e+00 : f32
    %828 = vector.broadcast %cst_132 : f32 to vector<2x128xf32>
    %829 = arith.addf %828, %827 : vector<2x128xf32>
    %830 = arith.divf %828, %829 : vector<2x128xf32>
    %831 = math.tanh %825 : vector<2x128xf32>
    %832 = vector.extract_strided_slice %830 {offsets = [0, 0], sizes = [2, 32], strides = [1, 1]} : vector<2x128xf32> to vector<2x32xf32>
    %833 = vector.extract_strided_slice %830 {offsets = [0, 32], sizes = [2, 32], strides = [1, 1]} : vector<2x128xf32> to vector<2x32xf32>
    %834 = vector.extract_strided_slice %831 {offsets = [0, 64], sizes = [2, 32], strides = [1, 1]} : vector<2x128xf32> to vector<2x32xf32>
    %835 = vector.extract_strided_slice %830 {offsets = [0, 96], sizes = [2, 32], strides = [1, 1]} : vector<2x128xf32> to vector<2x32xf32>
    %836 = arith.mulf %833, %819 : vector<2x32xf32>
    %837 = arith.mulf %832, %834 : vector<2x32xf32>
    %838 = arith.addf %836, %837 : vector<2x32xf32>
    %839 = math.tanh %838 : vector<2x32xf32>
    %840 = arith.mulf %835, %839 : vector<2x32xf32>
    %841 = vector.extract_strided_slice %703 {offsets = [0, 7, 0], sizes = [2, 1, 128], strides = [1, 1, 1]} : vector<2x8x128xf32> to vector<2x1x128xf32>
    %842 = vector.shape_cast %841 : vector<2x1x128xf32> to vector<2x128xf32>
    %cst_133 = arith.constant dense<0.000000e+00> : vector<2x128xf32>
    %843 = tpu.matmul %840, %705, %cst_133 {dimension_numbers = #tpu.dot_dimension_numbers<[1], [0], [0], [1], [0, 0, 1, 1], [], []>} : vector<2x32xf32>, vector<32x128xf32>, vector<2x128xf32> -> vector<2x128xf32>
    %844 = arith.addf %842, %843 : vector<2x128xf32>
    %845 = arith.negf %844 : vector<2x128xf32>
    %846 = math.exp %845 : vector<2x128xf32>
    %cst_134 = arith.constant 1.000000e+00 : f32
    %847 = vector.broadcast %cst_134 : f32 to vector<2x128xf32>
    %848 = arith.addf %847, %846 : vector<2x128xf32>
    %849 = arith.divf %847, %848 : vector<2x128xf32>
    %850 = math.tanh %844 : vector<2x128xf32>
    %851 = vector.extract_strided_slice %849 {offsets = [0, 0], sizes = [2, 32], strides = [1, 1]} : vector<2x128xf32> to vector<2x32xf32>
    %852 = vector.extract_strided_slice %849 {offsets = [0, 32], sizes = [2, 32], strides = [1, 1]} : vector<2x128xf32> to vector<2x32xf32>
    %853 = vector.extract_strided_slice %850 {offsets = [0, 64], sizes = [2, 32], strides = [1, 1]} : vector<2x128xf32> to vector<2x32xf32>
    %854 = vector.extract_strided_slice %849 {offsets = [0, 96], sizes = [2, 32], strides = [1, 1]} : vector<2x128xf32> to vector<2x32xf32>
    %855 = arith.mulf %852, %838 : vector<2x32xf32>
    %856 = arith.mulf %851, %853 : vector<2x32xf32>
    %857 = arith.addf %855, %856 : vector<2x32xf32>
    %858 = math.tanh %857 : vector<2x32xf32>
    %859 = arith.mulf %854, %858 : vector<2x32xf32>
    %c0_135 = arith.constant 0 : index
    %c0_136 = arith.constant 0 : index
    %860 = vector.load %arg5[%c0_135, %c0_136] : memref<32x8xf32, #tpu.memory_space<vmem>>, vector<32x8xf32>
    %cst_137 = arith.constant dense<0.000000e+00> : vector<2x8xf32>
    %861 = tpu.matmul %859, %860, %cst_137 {dimension_numbers = #tpu.dot_dimension_numbers<[1], [0], [0], [1], [0, 0, 1, 1], [], []>} : vector<2x32xf32>, vector<32x8xf32>, vector<2x8xf32> -> vector<2x8xf32>
    %c0_138 = arith.constant 0 : index
    %c0_139 = arith.constant 0 : index
    %862 = vector.load %arg6[%c0_138, %c0_139] : memref<1x8xf32, #tpu.memory_space<vmem>>, vector<1x8xf32>
    %863 = vector.broadcast %862 : vector<1x8xf32> to vector<2x8xf32>
    %864 = arith.addf %861, %863 : vector<2x8xf32>
    %865 = arith.negf %864 : vector<2x8xf32>
    %866 = math.exp %865 : vector<2x8xf32>
    %cst_140 = arith.constant 1.000000e+00 : f32
    %867 = vector.broadcast %cst_140 : f32 to vector<2x8xf32>
    %868 = arith.addf %867, %866 : vector<2x8xf32>
    %869 = arith.divf %867, %868 : vector<2x8xf32>
    %c0_141 = arith.constant 0 : index
    %c0_142 = arith.constant 0 : index
    %870 = vector.load %arg7[%c0_141, %c0_142] : memref<2x8xf32, #tpu.memory_space<vmem>>, vector<2x8xf32>
    tpu.vector_store %arg7[%c0_141, %c0_142], %869 {strides = array<i32>} : memref<2x8xf32, #tpu.memory_space<vmem>>, vector<2x8xf32>,
    return
  }
}

</mosaic_0001>

<llo_original>
// kernel: blstm_forward.1
$region0: #{blstm_forward.1}
  #allocation0 [shape = 'u32[]', space=smem, size = 0x4, offset = 0x4, fixed_abs, tag = 'smem constant byte address 0x4 - core index']
  #allocation1 [shape = 'u32[144,128]{1,0:T(1,128)}', space=vmem, size = 0x12000, scoped, tag = 'internal scratch']
  %s0 = inlined_call_operand.vmem [shape: f32[16,16], index: 0, kind: input, shape index: {}]
  %s1 = inlined_call_operand.vmem [shape: f32[16,128], index: 1, kind: input, shape index: {}]
  %s2 = inlined_call_operand.hbm [shape: f32[4,32,128], index: 2, kind: input, shape index: {}]
  %s3 = inlined_call_operand.hbm [shape: f32[5,32,128], index: 3, kind: input, shape index: {}]
  %s4 = inlined_call_operand.vmem [shape: f32[5,1,128], index: 4, kind: input, shape index: {}]
  %s5 = inlined_call_operand.vmem [shape: f32[32,8], index: 5, kind: input, shape index: {}]
  %s6 = inlined_call_operand.vmem [shape: f32[1,8], index: 6, kind: input, shape index: {}]
  %s7 = inlined_call_operand.vmem [shape: f32[2,8], index: 7, kind: output, shape index: {}]
  %s8 = sld [smem:[#allocation0]]
  $region46: #{blstm_forward.1} parent=0
    _
  %s10 = ssub.s32 1, %s8
  %s11 = scalar_select 0, %s10, %s8
  $region1: #{blstm_forward.1} parent=0
    #allocation2 [shape = 'u8[65536]{0}', space=vmem, size = 0x10000, scoped, tag = 'input window, operand 2, single buffered']
    #allocation3 [shape = 's32[1]{0}', space=sflag, size = 0x4, scoped, tag = 'scoped memory for blstm_forward.1']
    #allocation4 [shape = 'u8[81920]{0}', space=vmem, size = 0x14000, scoped, tag = 'input window, operand 3, single buffered']
    #allocation5 [shape = 's32[1]{0}', space=sflag, size = 0x4, scoped, tag = 'scoped memory for blstm_forward.1']
    %12 = vsyncpa [#allocation3], 0
    %13 = vsyncpa [#allocation5], 0
    // Predicated region
    $region2: #{blstm_forward.1} parent=1 // pred_check
      _
    $region3: #{blstm_forward.1} parent=1 // pred_check_branch
      %15 = sbr.rel (0) target = $region5
    $region4: #{blstm_forward.1} parent=1 // pred_region
      _
    $region5: #{blstm_forward.1} parent=1 // pred_fallthru
      _
    // Predicated region
    $region6: #{blstm_forward.1} parent=1 // pred_check
      _
    $region7: #{blstm_forward.1} parent=1 // pred_check_branch
      %17 = sbr.rel (0) target = $region9
    $region8: #{blstm_forward.1} parent=1 // pred_region
      _
    $region9: #{blstm_forward.1} parent=1 // pred_fallthru
      _
    // Predicated region
    $region10: #{blstm_forward.1} parent=1 // pred_check
      _
    $region11: #{blstm_forward.1} parent=1 // pred_check_branch
      %19 = sbr.rel (0) target = $region13
    $region12: #{blstm_forward.1} parent=1 // pred_region
      %s21 = ssub.s32 2048, 2048
      %22 = vsyncadd [#allocation3], %s21
      %s23 = sshll.u32 [#allocation2], 4
      %s24 = int_to_ptr.vmem [resolvable:$true] %s23
      %29 = dma.hbm_to_vmem [thread:$0]  %s2, 2048, %s24, [#allocation3], 128, 128, 8
    $region13: #{blstm_forward.1} parent=1 // pred_fallthru
      _
    // Predicated region
    $region14: #{blstm_forward.1} parent=1 // pred_check
      _
    $region15: #{blstm_forward.1} parent=1 // pred_check_branch
      %31 = sbr.rel (0) target = $region17
    $region16: #{blstm_forward.1} parent=1 // pred_region
      %s33 = ssub.s32 2560, 2560
      %34 = vsyncadd [#allocation5], %s33
      %s35 = sshll.u32 [#allocation4], 4
      %s36 = int_to_ptr.vmem [resolvable:$true] %s35
      %41 = dma.hbm_to_vmem [thread:$0]  %s3, 2560, %s36, [#allocation5], 128, 128, 8
    $region17: #{blstm_forward.1} parent=1 // pred_fallthru
      _
    // Predicated region
    $region18: #{blstm_forward.1} parent=1 // pred_check
      _
    $region19: #{blstm_forward.1} parent=1 // pred_check_branch
      %43 = sbr.rel (0) target = $region21
    $region20: #{blstm_forward.1} parent=1 // pred_region
      _
    $region21: #{blstm_forward.1} parent=1 // pred_fallthru
      _
    // Predicated region
    $region22: #{blstm_forward.1} parent=1 // pred_check
      _
    $region23: #{blstm_forward.1} parent=1 // pred_check_branch
      %45 = sbr.rel (0) target = $region25
    $region24: #{blstm_forward.1} parent=1 // pred_region
      _
    $region25: #{blstm_forward.1} parent=1 // pred_fallthru
      _
    // Predicated region
    $region26: #{blstm_forward.1} parent=1 // pred_check
      _
    $region27: #{blstm_forward.1} parent=1 // pred_check_branch
      %47 = sbr.rel (0) target = $region29
    $region28: #{blstm_forward.1} parent=1 // pred_region
      _
    $region29: #{blstm_forward.1} parent=1 // pred_fallthru
      _
    // Predicated region
    $region30: #{blstm_forward.1} parent=1 // pred_check
      _
    $region31: #{blstm_forward.1} parent=1 // pred_check_branch
      %49 = sbr.rel (0) target = $region33
    $region32: #{blstm_forward.1} parent=1 // pred_region
      %50 = dma.done [#allocation3], 2048
    $region33: #{blstm_forward.1} parent=1 // pred_fallthru
      _
    // Predicated region
    $region34: #{blstm_forward.1} parent=1 // pred_check
      _
    $region35: #{blstm_forward.1} parent=1 // pred_check_branch
      %52 = sbr.rel (0) target = $region37
    $region36: #{blstm_forward.1} parent=1 // pred_region
      %53 = dma.done [#allocation5], 2560
    $region37: #{blstm_forward.1} parent=1 // pred_fallthru
      _
    %v54 = vld [vmem:[%s0] sm:$0xff]
    %v55 = vld [vmem:[%s0 + $0x8] sm:$0xff]
    %v56 = vld [vmem:[%s1] sm:$0xff]
    %v57 = vld [vmem:[%s1 + $0x8] sm:$0xff]
    %v58 = vld [vmem:[%s4] sm:$0x1]
    %v60 = vlaneseq
    %v61 = vshrl.u32 %v60, 7
    %v62 = vsub.s32 0, %v61
    %v63 = vrot.slane %v58, %v62
    %vm65 = vcmask 130048
    %v67 = vsel %vm65, %v54, 0
    %v70 = vsel %vm65, %v55, 0
    %72 = vmatprep.subr.mxu0 0.0
    %73 = vmatpush1.msra.mxu0 %v56
    %74 = vmatprep.subr.mxu0 0.0
    %75 = vmatpush1.msra.mxu0 %v57
    %76 = vmatprep.subr.mxu0 0.0
    %77 = vmatpush1.msra.mxu0 0.0
    %78 = vmatprep.subr.mxu0 0.0
    %79 = vmatpush1.msra.mxu0 0.0
    %80 = vmatprep.subr.mxu0 0.0
    %81 = vmatpush1.msra.mxu0 0.0
    %82 = vmatprep.subr.mxu0 0.0
    %83 = vmatpush1.msra.mxu0 0.0
    %84 = vmatprep.subr.mxu0 0.0
    %85 = vmatpush1.msra.mxu0 0.0
    %86 = vmatprep.subr.mxu0 0.0
    %87 = vmatpush1.msra.mxu0 0.0
    %88 = vmatprep.subr.mxu0 0.0
    %89 = vmatpush1.msra.mxu0 0.0
    %90 = vmatprep.subr.mxu0 0.0
    %91 = vmatpush1.msra.mxu0 0.0
    %92 = vmatprep.subr.mxu0 0.0
    %93 = vmatpush1.msra.mxu0 0.0
    %94 = vmatprep.subr.mxu0 0.0
    %95 = vmatpush1.msra.mxu0 0.0
    %96 = vmatprep.subr.mxu0 0.0
    %97 = vmatpush1.msra.mxu0 0.0
    %98 = vmatprep.subr.mxu0 0.0
    %99 = vmatpush1.msra.mxu0 0.0
    %100 = vmatprep.subr.mxu0 0.0
    %101 = vmatpush1.msra.mxu0 0.0
    %102 = vmatprep.subr.mxu0 0.0
    %103 = vmatpush1.msra.mxu0 0.0
    %104 = vmatprep.subr.mxu0 0.0
    %105 = vmatpush1.msra.mxu0 0.0
    %106 = vmatprep.subr.mxu0 0.0
    %107 = vmatpush1.msra.mxu0 0.0
    %108 = vmatprep.subr.mxu0 0.0
    %109 = vmatpush1.msra.mxu0 0.0
    %110 = vmatprep.subr.mxu0 0.0
    %111 = vmatpush1.msra.mxu0 0.0
    %112 = vmatprep.subr.mxu0 0.0
    %113 = vmatpush1.msra.mxu0 0.0
    %114 = vmatprep.subr.mxu0 0.0
    %115 = vmatpush1.msra.mxu0 0.0
    %116 = vmatprep.subr.mxu0 0.0
    %117 = vmatpush1.msra.mxu0 0.0
    %118 = vmatprep.subr.mxu0 0.0
    %119 = vmatpush1.msra.mxu0 0.0
    %120 = vmatprep.subr.mxu0 0.0
    %121 = vmatpush1.msra.mxu0 0.0
    %122 = vmatprep.subr.mxu0 0.0
    %123 = vmatpush1.msra.mxu0 0.0
    %124 = vmatprep.subr.mxu0 0.0
    %125 = vmatpush1.msra.mxu0 0.0
    %126 = vmatprep.subr.mxu0 0.0
    %127 = vmatpush1.msra.mxu0 0.0
    %128 = vmatprep.subr.mxu0 0.0
    %129 = vmatpush1.msra.mxu0 0.0
    %130 = vmatprep.subr.mxu0 0.0
    %131 = vmatpush1.msra.mxu0 0.0
    %132 = vmatprep.subr.mxu0 0.0
    %133 = vmatpush1.msra.mxu0 0.0
    %134 = vmatprep.subr.mxu0 0.0
    %135 = vmatpush1.msra.mxu0 0.0
    %136 = vmatprep.mubr.f32.mxu0 0.0
    %137 = vmatmul.mubr.f32.gmra.mrb[0].mxu0 %v67
    %v138 = vpop.f32.mrb[0].mxu0
    %v139 = vadd.f32 %v63, %v138
    %v140 = vpop.f32.mrb[0].mxu0
    %141 = vmatprep.mubr.f32.mxu0 0.0
    %142 = vmatmul.mubr.f32.gmra.mrb[0].mxu0 %v70
    %v143 = vpop.f32.mrb[0].mxu0
    %v144 = vadd.f32 %v63, %v143
    %v145 = vpop.f32.mrb[0].mxu0
    %146 = vdwg.mxu0
    %v147 = vld [vmem:[#allocation4] sm:$0xff]
    %v148 = vld [vmem:[#allocation4 + $0x8] sm:$0xff]
    %v149 = vld [vmem:[#allocation4 + $0x10] sm:$0xff]
    %v150 = vld [vmem:[#allocation4 + $0x18] sm:$0xff]
    %vm151 = vcmask 261120
    %v153 = vsel %vm151, 0.0, 0
    %155 = vmatprep.subr.mxu0 0.0
    %156 = vmatpush1.msra.mxu0 %v147
    %157 = vmatprep.subr.mxu0 0.0
    %158 = vmatpush1.msra.mxu0 %v148
    %159 = vmatprep.subr.mxu0 0.0
    %160 = vmatpush1.msra.mxu0 %v149
    %161 = vmatprep.subr.mxu0 0.0
    %162 = vmatpush1.msra.mxu0 %v150
    %163 = vmatprep.subr.mxu0 0.0
    %164 = vmatpush1.msra.mxu0 0.0
    %165 = vmatprep.subr.mxu0 0.0
    %166 = vmatpush1.msra.mxu0 0.0
    %167 = vmatprep.subr.mxu0 0.0
    %168 = vmatpush1.msra.mxu0 0.0
    %169 = vmatprep.subr.mxu0 0.0
    %170 = vmatpush1.msra.mxu0 0.0
    %171 = vmatprep.subr.mxu0 0.0
    %172 = vmatpush1.msra.mxu0 0.0
    %173 = vmatprep.subr.mxu0 0.0
    %174 = vmatpush1.msra.mxu0 0.0
    %175 = vmatprep.subr.mxu0 0.0
    %176 = vmatpush1.msra.mxu0 0.0
    %177 = vmatprep.subr.mxu0 0.0
    %178 = vmatpush1.msra.mxu0 0.0
    %179 = vmatprep.subr.mxu0 0.0
    %180 = vmatpush1.msra.mxu0 0.0
    %181 = vmatprep.subr.mxu0 0.0
    %182 = vmatpush1.msra.mxu0 0.0
    %183 = vmatprep.subr.mxu0 0.0
    %184 = vmatpush1.msra.mxu0 0.0
    %185 = vmatprep.subr.mxu0 0.0
    %186 = vmatpush1.msra.mxu0 0.0
    %187 = vmatprep.subr.mxu0 0.0
    %188 = vmatpush1.msra.mxu0 0.0
    %189 = vmatprep.subr.mxu0 0.0
    %190 = vmatpush1.msra.mxu0 0.0
    %191 = vmatprep.subr.mxu0 0.0
    %192 = vmatpush1.msra.mxu0 0.0
    %193 = vmatprep.subr.mxu0 0.0
    %194 = vmatpush1.msra.mxu0 0.0
    %195 = vmatprep.subr.mxu0 0.0
    %196 = vmatpush1.msra.mxu0 0.0
    %197 = vmatprep.subr.mxu0 0.0
    %198 = vmatpush1.msra.mxu0 0.0
    %199 = vmatprep.subr.mxu0 0.0
    %200 = vmatpush1.msra.mxu0 0.0
    %201 = vmatprep.subr.mxu0 0.0
    %202 = vmatpush1.msra.mxu0 0.0
    %203 = vmatprep.subr.mxu0 0.0
    %204 = vmatpush1.msra.mxu0 0.0
    %205 = vmatprep.subr.mxu0 0.0
    %206 = vmatpush1.msra.mxu0 0.0
    %207 = vmatprep.subr.mxu0 0.0
    %208 = vmatpush1.msra.mxu0 0.0
    %209 = vmatprep.subr.mxu0 0.0
    %210 = vmatpush1.msra.mxu0 0.0
    %211 = vmatprep.subr.mxu0 0.0
    %212 = vmatpush1.msra.mxu0 0.0
    %213 = vmatprep.subr.mxu0 0.0
    %214 = vmatpush1.msra.mxu0 0.0
    %215 = vmatprep.subr.mxu0 0.0
    %216 = vmatpush1.msra.mxu0 0.0
    %217 = vmatprep.subr.mxu0 0.0
    %218 = vmatpush1.msra.mxu0 0.0
    %219 = vmatprep.mubr.f32.mxu0 0.0
    %220 = vmatmul.mubr.f32.gmra.mrb[0].mxu0 %v153
    %v221 = vpop.f32.mrb[0].mxu0
    %v222 = vadd.f32 0.0, %v221
    %v223 = vpop.f32.mrb[0].mxu0
    %224 = vdwg.mxu0
    %v226 = vrot.slane %v222, 1
    %v229 = vadd.f32 %v139, %v222
    %v230 = vadd.f32 %v144, %v226
    %v231 = vxor.u32 %v229, 2147483648
    %v232 = vxor.u32 %v230, 2147483648
    %v233 = vmul.f32 %v231, 1.442695
    %v234 = vpow.pop %v233
    %v235 = vmul.f32 %v232, 1.442695
    %v236 = vpow.pop %v235
    %v237 = vadd.f32 %v234, 1.0
    %v238 = vadd.f32 %v236, 1.0
    %v239 = vrcp.pop %v237
    %v240 = vmul.f32 1.0, %v239
    %v241 = vrcp.pop %v238
    %v242 = vmul.f32 1.0, %v241
    %v243 = vtanh.pop %v229
    %v244 = vtanh.pop %v230
    %v245 = vmul.f32 %v240, 0.0
    %v246 = vmul.f32 %v242, 0.0
    %249 = vrot.lane.b32.xlu0 %v243, 64
    %v250 = vpop.permute.xlu0 %249
    %251 = vrot.lane.b32.xlu0 %v244, 64
    %v252 = vpop.permute.xlu0 %251
    %v255 = vmul.f32 %v240, %v250
    %v256 = vmul.f32 %v242, %v252
    %259 = vrot.lane.b32.xlu0 %v255, 32
    %v260 = vpop.permute.xlu0 %259
    %261 = vrot.lane.b32.xlu0 %v256, 32
    %v262 = vpop.permute.xlu0 %261
    %v265 = vadd.f32 %v245, %v260
    %v266 = vadd.f32 %v246, %v262
    %v267 = vtanh.pop %v265
    %v268 = vtanh.pop %v266
    %271 = vrot.lane.b32.xlu0 %v267, 64
    %v272 = vpop.permute.xlu0 %271
    %273 = vrot.lane.b32.xlu0 %v268, 64
    %v274 = vpop.permute.xlu0 %273
    %v277 = vmul.f32 %v240, %v272
    %v278 = vmul.f32 %v242, %v274
    %v281 = vrot.slane %v278, 7
    %vm282 = vcmask 1041409
    %v283 = vsel %vm282, %v281, %v277
    %284 = vrot.lane.b32.xlu0 %v283, 32
    %v285 = vpop.permute.xlu0 %284
    %v286 = vsel %vm151, %v285, 0
    %288 = vmatprep.subr.mxu0 0.0
    %289 = vmatpush1.msra.mxu0 %v147
    %290 = vmatprep.subr.mxu0 0.0
    %291 = vmatpush1.msra.mxu0 %v148
    %292 = vmatprep.subr.mxu0 0.0
    %293 = vmatpush1.msra.mxu0 %v149
    %294 = vmatprep.subr.mxu0 0.0
    %295 = vmatpush1.msra.mxu0 %v150
    %296 = vmatprep.subr.mxu0 0.0
    %297 = vmatpush1.msra.mxu0 0.0
    %298 = vmatprep.subr.mxu0 0.0
    %299 = vmatpush1.msra.mxu0 0.0
    %300 = vmatprep.subr.mxu0 0.0
    %301 = vmatpush1.msra.mxu0 0.0
    %302 = vmatprep.subr.mxu0 0.0
    %303 = vmatpush1.msra.mxu0 0.0
    %304 = vmatprep.subr.mxu0 0.0
    %305 = vmatpush1.msra.mxu0 0.0
    %306 = vmatprep.subr.mxu0 0.0
    %307 = vmatpush1.msra.mxu0 0.0
    %308 = vmatprep.subr.mxu0 0.0
    %309 = vmatpush1.msra.mxu0 0.0
    %310 = vmatprep.subr.mxu0 0.0
    %311 = vmatpush1.msra.mxu0 0.0
    %312 = vmatprep.subr.mxu0 0.0
    %313 = vmatpush1.msra.mxu0 0.0
    %314 = vmatprep.subr.mxu0 0.0
    %315 = vmatpush1.msra.mxu0 0.0
    %316 = vmatprep.subr.mxu0 0.0
    %317 = vmatpush1.msra.mxu0 0.0
    %318 = vmatprep.subr.mxu0 0.0
    %319 = vmatpush1.msra.mxu0 0.0
    %320 = vmatprep.subr.mxu0 0.0
    %321 = vmatpush1.msra.mxu0 0.0
    %322 = vmatprep.subr.mxu0 0.0
    %323 = vmatpush1.msra.mxu0 0.0
    %324 = vmatprep.subr.mxu0 0.0
    %325 = vmatpush1.msra.mxu0 0.0
    %326 = vmatprep.subr.mxu0 0.0
    %327 = vmatpush1.msra.mxu0 0.0
    %328 = vmatprep.subr.mxu0 0.0
    %329 = vmatpush1.msra.mxu0 0.0
    %330 = vmatprep.subr.mxu0 0.0
    %331 = vmatpush1.msra.mxu0 0.0
    %332 = vmatprep.subr.mxu0 0.0
    %333 = vmatpush1.msra.mxu0 0.0
    %334 = vmatprep.subr.mxu0 0.0
    %335 = vmatpush1.msra.mxu0 0.0
    %336 = vmatprep.subr.mxu0 0.0
    %337 = vmatpush1.msra.mxu0 0.0
    %338 = vmatprep.subr.mxu0 0.0
    %339 = vmatpush1.msra.mxu0 0.0
    %340 = vmatprep.subr.mxu0 0.0
    %341 = vmatpush1.msra.mxu0 0.0
    %342 = vmatprep.subr.mxu0 0.0
    %343 = vmatpush1.msra.mxu0 0.0
    %344 = vmatprep.subr.mxu0 0.0
    %345 = vmatpush1.msra.mxu0 0.0
    %346 = vmatprep.subr.mxu0 0.0
    %347 = vmatpush1.msra.mxu0 0.0
    %348 = vmatprep.subr.mxu0 0.0
    %349 = vmatpush1.msra.mxu0 0.0
    %350 = vmatprep.subr.mxu0 0.0
    %351 = vmatpush1.msra.mxu0 0.0
    %352 = vmatprep.mubr.f32.mxu0 0.0
    %353 = vmatmul.mubr.f32.gmra.mrb[0].mxu0 %v286
    %v354 = vpop.f32.mrb[0].mxu0
    %v355 = vadd.f32 0.0, %v354
    %v356 = vpop.f32.mrb[0].mxu0
    %357 = vdwg.mxu0
    %v359 = vrot.slane %v355, 7
    %v362 = vadd.f32 %v139, %v359
    %v363 = vadd.f32 %v144, %v355
    %v364 = vxor.u32 %v362, 2147483648
    %v365 = vxor.u32 %v363, 2147483648
    %v366 = vmul.f32 %v364, 1.442695
    %v367 = vpow.pop %v366
    %v368 = vmul.f32 %v365, 1.442695
    %v369 = vpow.pop %v368
    %v370 = vadd.f32 %v367, 1.0
    %v371 = vadd.f32 %v369, 1.0
    %v372 = vrcp.pop %v370
    %v373 = vmul.f32 1.0, %v372
    %v374 = vrcp.pop %v371
    %v375 = vmul.f32 1.0, %v374
    %v376 = vtanh.pop %v362
    %v377 = vtanh.pop %v363
    %v380 = vrot.slane %v265, 7
    %v381 = vrot.slane %v266, 7
    %v384 = vmul.f32 %v373, %v380
    %v385 = vmul.f32 %v375, %v381
    %388 = vrot.lane.b32.xlu0 %v376, 64
    %v389 = vpop.permute.xlu0 %388
    %390 = vrot.lane.b32.xlu0 %v377, 64
    %v391 = vpop.permute.xlu0 %390
    %v394 = vmul.f32 %v373, %v389
    %v395 = vmul.f32 %v375, %v391
    %398 = vrot.lane.b32.xlu0 %v394, 32
    %v399 = vpop.permute.xlu0 %398
    %400 = vrot.lane.b32.xlu0 %v395, 32
    %v401 = vpop.permute.xlu0 %400
    %v404 = vadd.f32 %v384, %v399
    %v405 = vadd.f32 %v385, %v401
    %v406 = vtanh.pop %v404
    %v407 = vtanh.pop %v405
    %410 = vrot.lane.b32.xlu0 %v406, 64
    %v411 = vpop.permute.xlu0 %410
    %412 = vrot.lane.b32.xlu0 %v407, 64
    %v413 = vpop.permute.xlu0 %412
    %v416 = vmul.f32 %v373, %v411
    %v417 = vmul.f32 %v375, %v413
    %v420 = vrot.slane %v416, 1
    %v421 = vsel %vm282, %v417, %v420
    %422 = vrot.lane.b32.xlu0 %v421, 32
    %v423 = vpop.permute.xlu0 %422
    %v424 = vsel %vm151, %v423, 0
    %426 = vmatprep.subr.mxu0 0.0
    %427 = vmatpush1.msra.mxu0 %v147
    %428 = vmatprep.subr.mxu0 0.0
    %429 = vmatpush1.msra.mxu0 %v148
    %430 = vmatprep.subr.mxu0 0.0
    %431 = vmatpush1.msra.mxu0 %v149
    %432 = vmatprep.subr.mxu0 0.0
    %433 = vmatpush1.msra.mxu0 %v150
    %434 = vmatprep.subr.mxu0 0.0
    %435 = vmatpush1.msra.mxu0 0.0
    %436 = vmatprep.subr.mxu0 0.0
    %437 = vmatpush1.msra.mxu0 0.0
    %438 = vmatprep.subr.mxu0 0.0
    %439 = vmatpush1.msra.mxu0 0.0
    %440 = vmatprep.subr.mxu0 0.0
    %441 = vmatpush1.msra.mxu0 0.0
    %442 = vmatprep.subr.mxu0 0.0
    %443 = vmatpush1.msra.mxu0 0.0
    %444 = vmatprep.subr.mxu0 0.0
    %445 = vmatpush1.msra.mxu0 0.0
    %446 = vmatprep.subr.mxu0 0.0
    %447 = vmatpush1.msra.mxu0 0.0
    %448 = vmatprep.subr.mxu0 0.0
    %449 = vmatpush1.msra.mxu0 0.0
    %450 = vmatprep.subr.mxu0 0.0
    %451 = vmatpush1.msra.mxu0 0.0
    %452 = vmatprep.subr.mxu0 0.0
    %453 = vmatpush1.msra.mxu0 0.0
    %454 = vmatprep.subr.mxu0 0.0
    %455 = vmatpush1.msra.mxu0 0.0
    %456 = vmatprep.subr.mxu0 0.0
    %457 = vmatpush1.msra.mxu0 0.0
    %458 = vmatprep.subr.mxu0 0.0
    %459 = vmatpush1.msra.mxu0 0.0
    %460 = vmatprep.subr.mxu0 0.0
    %461 = vmatpush1.msra.mxu0 0.0
    %462 = vmatprep.subr.mxu0 0.0
    %463 = vmatpush1.msra.mxu0 0.0
    %464 = vmatprep.subr.mxu0 0.0
    %465 = vmatpush1.msra.mxu0 0.0
    %466 = vmatprep.subr.mxu0 0.0
    %467 = vmatpush1.msra.mxu0 0.0
    %468 = vmatprep.subr.mxu0 0.0
    %469 = vmatpush1.msra.mxu0 0.0
    %470 = vmatprep.subr.mxu0 0.0
    %471 = vmatpush1.msra.mxu0 0.0
    %472 = vmatprep.subr.mxu0 0.0
    %473 = vmatpush1.msra.mxu0 0.0
    %474 = vmatprep.subr.mxu0 0.0
    %475 = vmatpush1.msra.mxu0 0.0
    %476 = vmatprep.subr.mxu0 0.0
    %477 = vmatpush1.msra.mxu0 0.0
    %478 = vmatprep.subr.mxu0 0.0
    %479 = vmatpush1.msra.mxu0 0.0
    %480 = vmatprep.subr.mxu0 0.0
    %481 = vmatpush1.msra.mxu0 0.0
    %482 = vmatprep.subr.mxu0 0.0
    %483 = vmatpush1.msra.mxu0 0.0
    %484 = vmatprep.subr.mxu0 0.0
    %485 = vmatpush1.msra.mxu0 0.0
    %486 = vmatprep.subr.mxu0 0.0
    %487 = vmatpush1.msra.mxu0 0.0
    %488 = vmatprep.subr.mxu0 0.0
    %489 = vmatpush1.msra.mxu0 0.0
    %490 = vmatprep.mubr.f32.mxu0 0.0
    %491 = vmatmul.mubr.f32.gmra.mrb[0].mxu0 %v424
    %v492 = vpop.f32.mrb[0].mxu0
    %v493 = vadd.f32 0.0, %v492
    %v494 = vpop.f32.mrb[0].mxu0
    %495 = vdwg.mxu0
    %v497 = vrot.slane %v493, 6
    %v498 = vrot.slane %v493, 7
    %v501 = vadd.f32 %v139, %v497
    %v502 = vadd.f32 %v144, %v498
    %v503 = vxor.u32 %v501, 2147483648
    %v504 = vxor.u32 %v502, 2147483648
    %v505 = vmul.f32 %v503, 1.442695
    %v506 = vpow.pop %v505
    %v507 = vmul.f32 %v504, 1.442695
    %v508 = vpow.pop %v507
    %v509 = vadd.f32 %v506, 1.0
    %v510 = vadd.f32 %v508, 1.0
    %v511 = vrcp.pop %v509
    %v512 = vmul.f32 1.0, %v511
    %v513 = vrcp.pop %v510
    %v514 = vmul.f32 1.0, %v513
    %v515 = vtanh.pop %v501
    %v516 = vtanh.pop %v502
    %v519 = vrot.slane %v404, 7
    %v520 = vrot.slane %v405, 7
    %v523 = vmul.f32 %v512, %v519
    %v524 = vmul.f32 %v514, %v520
    %527 = vrot.lane.b32.xlu0 %v515, 64
    %v528 = vpop.permute.xlu0 %527
    %529 = vrot.lane.b32.xlu0 %v516, 64
    %v530 = vpop.permute.xlu0 %529
    %v533 = vmul.f32 %v512, %v528
    %v534 = vmul.f32 %v514, %v530
    %537 = vrot.lane.b32.xlu0 %v533, 32
    %v538 = vpop.permute.xlu0 %537
    %539 = vrot.lane.b32.xlu0 %v534, 32
    %v540 = vpop.permute.xlu0 %539
    %v543 = vadd.f32 %v523, %v538
    %v544 = vadd.f32 %v524, %v540
    %v545 = vtanh.pop %v543
    %v546 = vtanh.pop %v544
    %549 = vrot.lane.b32.xlu0 %v545, 64
    %v550 = vpop.permute.xlu0 %549
    %551 = vrot.lane.b32.xlu0 %v546, 64
    %v552 = vpop.permute.xlu0 %551
    %v555 = vmul.f32 %v512, %v550
    %v556 = vmul.f32 %v514, %v552
    %v559 = vrot.slane %v555, 2
    %v560 = vrot.slane %v556, 1
    %v561 = vsel %vm282, %v560, %v559
    %562 = vrot.lane.b32.xlu0 %v561, 32
    %v563 = vpop.permute.xlu0 %562
    %v564 = vsel %vm151, %v563, 0
    %566 = vmatprep.subr.mxu0 0.0
    %567 = vmatpush1.msra.mxu0 %v147
    %568 = vmatprep.subr.mxu0 0.0
    %569 = vmatpush1.msra.mxu0 %v148
    %570 = vmatprep.subr.mxu0 0.0
    %571 = vmatpush1.msra.mxu0 %v149
    %572 = vmatprep.subr.mxu0 0.0
    %573 = vmatpush1.msra.mxu0 %v150
    %574 = vmatprep.subr.mxu0 0.0
    %575 = vmatpush1.msra.mxu0 0.0
    %576 = vmatprep.subr.mxu0 0.0
    %577 = vmatpush1.msra.mxu0 0.0
    %578 = vmatprep.subr.mxu0 0.0
    %579 = vmatpush1.msra.mxu0 0.0
    %580 = vmatprep.subr.mxu0 0.0
    %581 = vmatpush1.msra.mxu0 0.0
    %582 = vmatprep.subr.mxu0 0.0
    %583 = vmatpush1.msra.mxu0 0.0
    %584 = vmatprep.subr.mxu0 0.0
    %585 = vmatpush1.msra.mxu0 0.0
    %586 = vmatprep.subr.mxu0 0.0
    %587 = vmatpush1.msra.mxu0 0.0
    %588 = vmatprep.subr.mxu0 0.0
    %589 = vmatpush1.msra.mxu0 0.0
    %590 = vmatprep.subr.mxu0 0.0
    %591 = vmatpush1.msra.mxu0 0.0
    %592 = vmatprep.subr.mxu0 0.0
    %593 = vmatpush1.msra.mxu0 0.0
    %594 = vmatprep.subr.mxu0 0.0
    %595 = vmatpush1.msra.mxu0 0.0
    %596 = vmatprep.subr.mxu0 0.0
    %597 = vmatpush1.msra.mxu0 0.0
    %598 = vmatprep.subr.mxu0 0.0
    %599 = vmatpush1.msra.mxu0 0.0
    %600 = vmatprep.subr.mxu0 0.0
    %601 = vmatpush1.msra.mxu0 0.0
    %602 = vmatprep.subr.mxu0 0.0
    %603 = vmatpush1.msra.mxu0 0.0
    %604 = vmatprep.subr.mxu0 0.0
    %605 = vmatpush1.msra.mxu0 0.0
    %606 = vmatprep.subr.mxu0 0.0
    %607 = vmatpush1.msra.mxu0 0.0
    %608 = vmatprep.subr.mxu0 0.0
    %609 = vmatpush1.msra.mxu0 0.0
    %610 = vmatprep.subr.mxu0 0.0
    %611 = vmatpush1.msra.mxu0 0.0
    %612 = vmatprep.subr.mxu0 0.0
    %613 = vmatpush1.msra.mxu0 0.0
    %614 = vmatprep.subr.mxu0 0.0
    %615 = vmatpush1.msra.mxu0 0.0
    %616 = vmatprep.subr.mxu0 0.0
    %617 = vmatpush1.msra.mxu0 0.0
    %618 = vmatprep.subr.mxu0 0.0
    %619 = vmatpush1.msra.mxu0 0.0
    %620 = vmatprep.subr.mxu0 0.0
    %621 = vmatpush1.msra.mxu0 0.0
    %622 = vmatprep.subr.mxu0 0.0
    %623 = vmatpush1.msra.mxu0 0.0
    %624 = vmatprep.subr.mxu0 0.0
    %625 = vmatpush1.msra.mxu0 0.0
    %626 = vmatprep.subr.mxu0 0.0
    %627 = vmatpush1.msra.mxu0 0.0
    %628 = vmatprep.subr.mxu0 0.0
    %629 = vmatpush1.msra.mxu0 0.0
    %630 = vmatprep.mubr.f32.mxu0 0.0
    %631 = vmatmul.mubr.f32.gmra.mrb[0].mxu0 %v564
    %v632 = vpop.f32.mrb[0].mxu0
    %v633 = vadd.f32 0.0, %v632
    %v634 = vpop.f32.mrb[0].mxu0
    %635 = vdwg.mxu0
    %v637 = vrot.slane %v633, 5
    %v638 = vrot.slane %v633, 6
    %v641 = vadd.f32 %v139, %v637
    %v642 = vadd.f32 %v144, %v638
    %v643 = vxor.u32 %v641, 2147483648
    %v644 = vxor.u32 %v642, 2147483648
    %v645 = vmul.f32 %v643, 1.442695
    %v646 = vpow.pop %v645
    %v647 = vmul.f32 %v644, 1.442695
    %v648 = vpow.pop %v647
    %v649 = vadd.f32 %v646, 1.0
    %v650 = vadd.f32 %v648, 1.0
    %v651 = vrcp.pop %v649
    %v652 = vmul.f32 1.0, %v651
    %v653 = vrcp.pop %v650
    %v654 = vmul.f32 1.0, %v653
    %v655 = vtanh.pop %v641
    %v656 = vtanh.pop %v642
    %v659 = vrot.slane %v543, 7
    %v660 = vrot.slane %v544, 7
    %v663 = vmul.f32 %v652, %v659
    %v664 = vmul.f32 %v654, %v660
    %667 = vrot.lane.b32.xlu0 %v655, 64
    %v668 = vpop.permute.xlu0 %667
    %669 = vrot.lane.b32.xlu0 %v656, 64
    %v670 = vpop.permute.xlu0 %669
    %v673 = vmul.f32 %v652, %v668
    %v674 = vmul.f32 %v654, %v670
    %677 = vrot.lane.b32.xlu0 %v673, 32
    %v678 = vpop.permute.xlu0 %677
    %679 = vrot.lane.b32.xlu0 %v674, 32
    %v680 = vpop.permute.xlu0 %679
    %v683 = vadd.f32 %v663, %v678
    %v684 = vadd.f32 %v664, %v680
    %v685 = vtanh.pop %v683
    %v686 = vtanh.pop %v684
    %689 = vrot.lane.b32.xlu0 %v685, 64
    %v690 = vpop.permute.xlu0 %689
    %691 = vrot.lane.b32.xlu0 %v686, 64
    %v692 = vpop.permute.xlu0 %691
    %v695 = vmul.f32 %v652, %v690
    %v696 = vmul.f32 %v654, %v692
    %v699 = vrot.slane %v695, 3
    %v700 = vrot.slane %v696, 2
    %v701 = vsel %vm282, %v700, %v699
    %702 = vrot.lane.b32.xlu0 %v701, 32
    %v703 = vpop.permute.xlu0 %702
    %v704 = vsel %vm151, %v703, 0
    %706 = vmatprep.subr.mxu0 0.0
    %707 = vmatpush1.msra.mxu0 %v147
    %708 = vmatprep.subr.mxu0 0.0
    %709 = vmatpush1.msra.mxu0 %v148
    %710 = vmatprep.subr.mxu0 0.0
    %711 = vmatpush1.msra.mxu0 %v149
    %712 = vmatprep.subr.mxu0 0.0
    %713 = vmatpush1.msra.mxu0 %v150
    %714 = vmatprep.subr.mxu0 0.0
    %715 = vmatpush1.msra.mxu0 0.0
    %716 = vmatprep.subr.mxu0 0.0
    %717 = vmatpush1.msra.mxu0 0.0
    %718 = vmatprep.subr.mxu0 0.0
    %719 = vmatpush1.msra.mxu0 0.0
    %720 = vmatprep.subr.mxu0 0.0
    %721 = vmatpush1.msra.mxu0 0.0
    %722 = vmatprep.subr.mxu0 0.0
    %723 = vmatpush1.msra.mxu0 0.0
    %724 = vmatprep.subr.mxu0 0.0
    %725 = vmatpush1.msra.mxu0 0.0
    %726 = vmatprep.subr.mxu0 0.0
    %727 = vmatpush1.msra.mxu0 0.0
    %728 = vmatprep.subr.mxu0 0.0
    %729 = vmatpush1.msra.mxu0 0.0
    %730 = vmatprep.subr.mxu0 0.0
    %731 = vmatpush1.msra.mxu0 0.0
    %732 = vmatprep.subr.mxu0 0.0
    %733 = vmatpush1.msra.mxu0 0.0
    %734 = vmatprep.subr.mxu0 0.0
    %735 = vmatpush1.msra.mxu0 0.0
    %736 = vmatprep.subr.mxu0 0.0
    %737 = vmatpush1.msra.mxu0 0.0
    %738 = vmatprep.subr.mxu0 0.0
    %739 = vmatpush1.msra.mxu0 0.0
    %740 = vmatprep.subr.mxu0 0.0
    %741 = vmatpush1.msra.mxu0 0.0
    %742 = vmatprep.subr.mxu0 0.0
    %743 = vmatpush1.msra.mxu0 0.0
    %744 = vmatprep.subr.mxu0 0.0
    %745 = vmatpush1.msra.mxu0 0.0
    %746 = vmatprep.subr.mxu0 0.0
    %747 = vmatpush1.msra.mxu0 0.0
    %748 = vmatprep.subr.mxu0 0.0
    %749 = vmatpush1.msra.mxu0 0.0
    %750 = vmatprep.subr.mxu0 0.0
    %751 = vmatpush1.msra.mxu0 0.0
    %752 = vmatprep.subr.mxu0 0.0
    %753 = vmatpush1.msra.mxu0 0.0
    %754 = vmatprep.subr.mxu0 0.0
    %755 = vmatpush1.msra.mxu0 0.0
    %756 = vmatprep.subr.mxu0 0.0
    %757 = vmatpush1.msra.mxu0 0.0
    %758 = vmatprep.subr.mxu0 0.0
    %759 = vmatpush1.msra.mxu0 0.0
    %760 = vmatprep.subr.mxu0 0.0
    %761 = vmatpush1.msra.mxu0 0.0
    %762 = vmatprep.subr.mxu0 0.0
    %763 = vmatpush1.msra.mxu0 0.0
    %764 = vmatprep.subr.mxu0 0.0
    %765 = vmatpush1.msra.mxu0 0.0
    %766 = vmatprep.subr.mxu0 0.0
    %767 = vmatpush1.msra.mxu0 0.0
    %768 = vmatprep.subr.mxu0 0.0
    %769 = vmatpush1.msra.mxu0 0.0
    %770 = vmatprep.mubr.f32.mxu0 0.0
    %771 = vmatmul.mubr.f32.gmra.mrb[0].mxu0 %v704
    %v772 = vpop.f32.mrb[0].mxu0
    %v773 = vadd.f32 0.0, %v772
    %v774 = vpop.f32.mrb[0].mxu0
    %775 = vdwg.mxu0
    %v777 = vrot.slane %v773, 4
    %v778 = vrot.slane %v773, 5
    %v781 = vadd.f32 %v139, %v777
    %v782 = vadd.f32 %v144, %v778
    %v783 = vxor.u32 %v781, 2147483648
    %v784 = vxor.u32 %v782, 2147483648
    %v785 = vmul.f32 %v783, 1.442695
    %v786 = vpow.pop %v785
    %v787 = vmul.f32 %v784, 1.442695
    %v788 = vpow.pop %v787
    %v789 = vadd.f32 %v786, 1.0
    %v790 = vadd.f32 %v788, 1.0
    %v791 = vrcp.pop %v789
    %v792 = vmul.f32 1.0, %v791
    %v793 = vrcp.pop %v790
    %v794 = vmul.f32 1.0, %v793
    %v795 = vtanh.pop %v781
    %v796 = vtanh.pop %v782
    %v799 = vrot.slane %v683, 7
    %v800 = vrot.slane %v684, 7
    %v803 = vmul.f32 %v792, %v799
    %v804 = vmul.f32 %v794, %v800
    %807 = vrot.lane.b32.xlu0 %v795, 64
    %v808 = vpop.permute.xlu0 %807
    %809 = vrot.lane.b32.xlu0 %v796, 64
    %v810 = vpop.permute.xlu0 %809
    %v813 = vmul.f32 %v792, %v808
    %v814 = vmul.f32 %v794, %v810
    %817 = vrot.lane.b32.xlu0 %v813, 32
    %v818 = vpop.permute.xlu0 %817
    %819 = vrot.lane.b32.xlu0 %v814, 32
    %v820 = vpop.permute.xlu0 %819
    %v823 = vadd.f32 %v803, %v818
    %v824 = vadd.f32 %v804, %v820
    %v825 = vtanh.pop %v823
    %v826 = vtanh.pop %v824
    %829 = vrot.lane.b32.xlu0 %v825, 64
    %v830 = vpop.permute.xlu0 %829
    %831 = vrot.lane.b32.xlu0 %v826, 64
    %v832 = vpop.permute.xlu0 %831
    %v835 = vmul.f32 %v792, %v830
    %v836 = vmul.f32 %v794, %v832
    %v839 = vrot.slane %v835, 4
    %v840 = vrot.slane %v836, 3
    %v841 = vsel %vm282, %v840, %v839
    %842 = vrot.lane.b32.xlu0 %v841, 32
    %v843 = vpop.permute.xlu0 %842
    %v844 = vsel %vm151, %v843, 0
    %846 = vmatprep.subr.mxu0 0.0
    %847 = vmatpush1.msra.mxu0 %v147
    %848 = vmatprep.subr.mxu0 0.0
    %849 = vmatpush1.msra.mxu0 %v148
    %850 = vmatprep.subr.mxu0 0.0
    %851 = vmatpush1.msra.mxu0 %v149
    %852 = vmatprep.subr.mxu0 0.0
    %853 = vmatpush1.msra.mxu0 %v150
    %854 = vmatprep.subr.mxu0 0.0
    %855 = vmatpush1.msra.mxu0 0.0
    %856 = vmatprep.subr.mxu0 0.0
    %857 = vmatpush1.msra.mxu0 0.0
    %858 = vmatprep.subr.mxu0 0.0
    %859 = vmatpush1.msra.mxu0 0.0
    %860 = vmatprep.subr.mxu0 0.0
    %861 = vmatpush1.msra.mxu0 0.0
    %862 = vmatprep.subr.mxu0 0.0
    %863 = vmatpush1.msra.mxu0 0.0
    %864 = vmatprep.subr.mxu0 0.0
    %865 = vmatpush1.msra.mxu0 0.0
    %866 = vmatprep.subr.mxu0 0.0
    %867 = vmatpush1.msra.mxu0 0.0
    %868 = vmatprep.subr.mxu0 0.0
    %869 = vmatpush1.msra.mxu0 0.0
    %870 = vmatprep.subr.mxu0 0.0
    %871 = vmatpush1.msra.mxu0 0.0
    %872 = vmatprep.subr.mxu0 0.0
    %873 = vmatpush1.msra.mxu0 0.0
    %874 = vmatprep.subr.mxu0 0.0
    %875 = vmatpush1.msra.mxu0 0.0
    %876 = vmatprep.subr.mxu0 0.0
    %877 = vmatpush1.msra.mxu0 0.0
    %878 = vmatprep.subr.mxu0 0.0
    %879 = vmatpush1.msra.mxu0 0.0
    %880 = vmatprep.subr.mxu0 0.0
    %881 = vmatpush1.msra.mxu0 0.0
    %882 = vmatprep.subr.mxu0 0.0
    %883 = vmatpush1.msra.mxu0 0.0
    %884 = vmatprep.subr.mxu0 0.0
    %885 = vmatpush1.msra.mxu0 0.0
    %886 = vmatprep.subr.mxu0 0.0
    %887 = vmatpush1.msra.mxu0 0.0
    %888 = vmatprep.subr.mxu0 0.0
    %889 = vmatpush1.msra.mxu0 0.0
    %890 = vmatprep.subr.mxu0 0.0
    %891 = vmatpush1.msra.mxu0 0.0
    %892 = vmatprep.subr.mxu0 0.0
    %893 = vmatpush1.msra.mxu0 0.0
    %894 = vmatprep.subr.mxu0 0.0
    %895 = vmatpush1.msra.mxu0 0.0
    %896 = vmatprep.subr.mxu0 0.0
    %897 = vmatpush1.msra.mxu0 0.0
    %898 = vmatprep.subr.mxu0 0.0
    %899 = vmatpush1.msra.mxu0 0.0
    %900 = vmatprep.subr.mxu0 0.0
    %901 = vmatpush1.msra.mxu0 0.0
    %902 = vmatprep.subr.mxu0 0.0
    %903 = vmatpush1.msra.mxu0 0.0
    %904 = vmatprep.subr.mxu0 0.0
    %905 = vmatpush1.msra.mxu0 0.0
    %906 = vmatprep.subr.mxu0 0.0
    %907 = vmatpush1.msra.mxu0 0.0
    %908 = vmatprep.subr.mxu0 0.0
    %909 = vmatpush1.msra.mxu0 0.0
    %910 = vmatprep.mubr.f32.mxu0 0.0
    %911 = vmatmul.mubr.f32.gmra.mrb[0].mxu0 %v844
    %v912 = vpop.f32.mrb[0].mxu0
    %v913 = vadd.f32 0.0, %v912
    %v914 = vpop.f32.mrb[0].mxu0
    %915 = vdwg.mxu0
    %v917 = vrot.slane %v913, 3
    %v918 = vrot.slane %v913, 4
    %v921 = vadd.f32 %v139, %v917
    %v922 = vadd.f32 %v144, %v918
    %v923 = vxor.u32 %v921, 2147483648
    %v924 = vxor.u32 %v922, 2147483648
    %v925 = vmul.f32 %v923, 1.442695
    %v926 = vpow.pop %v925
    %v927 = vmul.f32 %v924, 1.442695
    %v928 = vpow.pop %v927
    %v929 = vadd.f32 %v926, 1.0
    %v930 = vadd.f32 %v928, 1.0
    %v931 = vrcp.pop %v929
    %v932 = vmul.f32 1.0, %v931
    %v933 = vrcp.pop %v930
    %v934 = vmul.f32 1.0, %v933
    %v935 = vtanh.pop %v921
    %v936 = vtanh.pop %v922
    %v939 = vrot.slane %v823, 7
    %v940 = vrot.slane %v824, 7
    %v943 = vmul.f32 %v932, %v939
    %v944 = vmul.f32 %v934, %v940
    %947 = vrot.lane.b32.xlu0 %v935, 64
    %v948 = vpop.permute.xlu0 %947
    %949 = vrot.lane.b32.xlu0 %v936, 64
    %v950 = vpop.permute.xlu0 %949
    %v953 = vmul.f32 %v932, %v948
    %v954 = vmul.f32 %v934, %v950
    %957 = vrot.lane.b32.xlu0 %v953, 32
    %v958 = vpop.permute.xlu0 %957
    %959 = vrot.lane.b32.xlu0 %v954, 32
    %v960 = vpop.permute.xlu0 %959
    %v963 = vadd.f32 %v943, %v958
    %v964 = vadd.f32 %v944, %v960
    %v965 = vtanh.pop %v963
    %v966 = vtanh.pop %v964
    %969 = vrot.lane.b32.xlu0 %v965, 64
    %v970 = vpop.permute.xlu0 %969
    %971 = vrot.lane.b32.xlu0 %v966, 64
    %v972 = vpop.permute.xlu0 %971
    %v975 = vmul.f32 %v932, %v970
    %v976 = vmul.f32 %v934, %v972
    %v979 = vrot.slane %v975, 5
    %v980 = vrot.slane %v976, 4
    %v981 = vsel %vm282, %v980, %v979
    %982 = vrot.lane.b32.xlu0 %v981, 32
    %v983 = vpop.permute.xlu0 %982
    %v984 = vsel %vm151, %v983, 0
    %986 = vmatprep.subr.mxu0 0.0
    %987 = vmatpush1.msra.mxu0 %v147
    %988 = vmatprep.subr.mxu0 0.0
    %989 = vmatpush1.msra.mxu0 %v148
    %990 = vmatprep.subr.mxu0 0.0
    %991 = vmatpush1.msra.mxu0 %v149
    %992 = vmatprep.subr.mxu0 0.0
    %993 = vmatpush1.msra.mxu0 %v150
    %994 = vmatprep.subr.mxu0 0.0
    %995 = vmatpush1.msra.mxu0 0.0
    %996 = vmatprep.subr.mxu0 0.0
    %997 = vmatpush1.msra.mxu0 0.0
    %998 = vmatprep.subr.mxu0 0.0
    %999 = vmatpush1.msra.mxu0 0.0
    %1000 = vmatprep.subr.mxu0 0.0
    %1001 = vmatpush1.msra.mxu0 0.0
    %1002 = vmatprep.subr.mxu0 0.0
    %1003 = vmatpush1.msra.mxu0 0.0
    %1004 = vmatprep.subr.mxu0 0.0
    %1005 = vmatpush1.msra.mxu0 0.0
    %1006 = vmatprep.subr.mxu0 0.0
    %1007 = vmatpush1.msra.mxu0 0.0
    %1008 = vmatprep.subr.mxu0 0.0
    %1009 = vmatpush1.msra.mxu0 0.0
    %1010 = vmatprep.subr.mxu0 0.0
    %1011 = vmatpush1.msra.mxu0 0.0
    %1012 = vmatprep.subr.mxu0 0.0
    %1013 = vmatpush1.msra.mxu0 0.0
    %1014 = vmatprep.subr.mxu0 0.0
    %1015 = vmatpush1.msra.mxu0 0.0
    %1016 = vmatprep.subr.mxu0 0.0
    %1017 = vmatpush1.msra.mxu0 0.0
    %1018 = vmatprep.subr.mxu0 0.0
    %1019 = vmatpush1.msra.mxu0 0.0
    %1020 = vmatprep.subr.mxu0 0.0
    %1021 = vmatpush1.msra.mxu0 0.0
    %1022 = vmatprep.subr.mxu0 0.0
    %1023 = vmatpush1.msra.mxu0 0.0
    %1024 = vmatprep.subr.mxu0 0.0
    %1025 = vmatpush1.msra.mxu0 0.0
    %1026 = vmatprep.subr.mxu0 0.0
    %1027 = vmatpush1.msra.mxu0 0.0
    %1028 = vmatprep.subr.mxu0 0.0
    %1029 = vmatpush1.msra.mxu0 0.0
    %1030 = vmatprep.subr.mxu0 0.0
    %1031 = vmatpush1.msra.mxu0 0.0
    %1032 = vmatprep.subr.mxu0 0.0
    %1033 = vmatpush1.msra.mxu0 0.0
    %1034 = vmatprep.subr.mxu0 0.0
    %1035 = vmatpush1.msra.mxu0 0.0
    %1036 = vmatprep.subr.mxu0 0.0
    %1037 = vmatpush1.msra.mxu0 0.0
    %1038 = vmatprep.subr.mxu0 0.0
    %1039 = vmatpush1.msra.mxu0 0.0
    %1040 = vmatprep.subr.mxu0 0.0
    %1041 = vmatpush1.msra.mxu0 0.0
    %1042 = vmatprep.subr.mxu0 0.0
    %1043 = vmatpush1.msra.mxu0 0.0
    %1044 = vmatprep.subr.mxu0 0.0
    %1045 = vmatpush1.msra.mxu0 0.0
    %1046 = vmatprep.subr.mxu0 0.0
    %1047 = vmatpush1.msra.mxu0 0.0
    %1048 = vmatprep.subr.mxu0 0.0
    %1049 = vmatpush1.msra.mxu0 0.0
    %1050 = vmatprep.mubr.f32.mxu0 0.0
    %1051 = vmatmul.mubr.f32.gmra.mrb[0].mxu0 %v984
    %v1052 = vpop.f32.mrb[0].mxu0
    %v1053 = vadd.f32 0.0, %v1052
    %v1054 = vpop.f32.mrb[0].mxu0
    %1055 = vdwg.mxu0
    %v1057 = vrot.slane %v1053, 2
    %v1058 = vrot.slane %v1053, 3
    %v1061 = vadd.f32 %v139, %v1057
    %v1062 = vadd.f32 %v144, %v1058
    %v1063 = vxor.u32 %v1061, 2147483648
    %v1064 = vxor.u32 %v1062, 2147483648
    %v1065 = vmul.f32 %v1063, 1.442695
    %v1066 = vpow.pop %v1065
    %v1067 = vmul.f32 %v1064, 1.442695
    %v1068 = vpow.pop %v1067
    %v1069 = vadd.f32 %v1066, 1.0
    %v1070 = vadd.f32 %v1068, 1.0
    %v1071 = vrcp.pop %v1069
    %v1072 = vmul.f32 1.0, %v1071
    %v1073 = vrcp.pop %v1070
    %v1074 = vmul.f32 1.0, %v1073
    %v1075 = vtanh.pop %v1061
    %v1076 = vtanh.pop %v1062
    %v1079 = vrot.slane %v963, 7
    %v1080 = vrot.slane %v964, 7
    %v1083 = vmul.f32 %v1072, %v1079
    %v1084 = vmul.f32 %v1074, %v1080
    %1087 = vrot.lane.b32.xlu0 %v1075, 64
    %v1088 = vpop.permute.xlu0 %1087
    %1089 = vrot.lane.b32.xlu0 %v1076, 64
    %v1090 = vpop.permute.xlu0 %1089
    %v1093 = vmul.f32 %v1072, %v1088
    %v1094 = vmul.f32 %v1074, %v1090
    %1097 = vrot.lane.b32.xlu0 %v1093, 32
    %v1098 = vpop.permute.xlu0 %1097
    %1099 = vrot.lane.b32.xlu0 %v1094, 32
    %v1100 = vpop.permute.xlu0 %1099
    %v1103 = vadd.f32 %v1083, %v1098
    %v1104 = vadd.f32 %v1084, %v1100
    %v1105 = vtanh.pop %v1103
    %v1106 = vtanh.pop %v1104
    %1109 = vrot.lane.b32.xlu0 %v1105, 64
    %v1110 = vpop.permute.xlu0 %1109
    %1111 = vrot.lane.b32.xlu0 %v1106, 64
    %v1112 = vpop.permute.xlu0 %1111
    %v1115 = vmul.f32 %v1072, %v1110
    %v1116 = vmul.f32 %v1074, %v1112
    %v1119 = vrot.slane %v1115, 6
    %v1120 = vrot.slane %v1116, 5
    %v1121 = vsel %vm282, %v1120, %v1119
    %1122 = vrot.lane.b32.xlu0 %v1121, 32
    %v1123 = vpop.permute.xlu0 %1122
    %v1124 = vsel %vm151, %v1123, 0
    %1126 = vmatprep.subr.mxu0 0.0
    %1127 = vmatpush1.msra.mxu0 %v147
    %1128 = vmatprep.subr.mxu0 0.0
    %1129 = vmatpush1.msra.mxu0 %v148
    %1130 = vmatprep.subr.mxu0 0.0
    %1131 = vmatpush1.msra.mxu0 %v149
    %1132 = vmatprep.subr.mxu0 0.0
    %1133 = vmatpush1.msra.mxu0 %v150
    %1134 = vmatprep.subr.mxu0 0.0
    %1135 = vmatpush1.msra.mxu0 0.0
    %1136 = vmatprep.subr.mxu0 0.0
    %1137 = vmatpush1.msra.mxu0 0.0
    %1138 = vmatprep.subr.mxu0 0.0
    %1139 = vmatpush1.msra.mxu0 0.0
    %1140 = vmatprep.subr.mxu0 0.0
    %1141 = vmatpush1.msra.mxu0 0.0
    %1142 = vmatprep.subr.mxu0 0.0
    %1143 = vmatpush1.msra.mxu0 0.0
    %1144 = vmatprep.subr.mxu0 0.0
    %1145 = vmatpush1.msra.mxu0 0.0
    %1146 = vmatprep.subr.mxu0 0.0
    %1147 = vmatpush1.msra.mxu0 0.0
    %1148 = vmatprep.subr.mxu0 0.0
    %1149 = vmatpush1.msra.mxu0 0.0
    %1150 = vmatprep.subr.mxu0 0.0
    %1151 = vmatpush1.msra.mxu0 0.0
    %1152 = vmatprep.subr.mxu0 0.0
    %1153 = vmatpush1.msra.mxu0 0.0
    %1154 = vmatprep.subr.mxu0 0.0
    %1155 = vmatpush1.msra.mxu0 0.0
    %1156 = vmatprep.subr.mxu0 0.0
    %1157 = vmatpush1.msra.mxu0 0.0
    %1158 = vmatprep.subr.mxu0 0.0
    %1159 = vmatpush1.msra.mxu0 0.0
    %1160 = vmatprep.subr.mxu0 0.0
    %1161 = vmatpush1.msra.mxu0 0.0
    %1162 = vmatprep.subr.mxu0 0.0
    %1163 = vmatpush1.msra.mxu0 0.0
    %1164 = vmatprep.subr.mxu0 0.0
    %1165 = vmatpush1.msra.mxu0 0.0
    %1166 = vmatprep.subr.mxu0 0.0
    %1167 = vmatpush1.msra.mxu0 0.0
    %1168 = vmatprep.subr.mxu0 0.0
    %1169 = vmatpush1.msra.mxu0 0.0
    %1170 = vmatprep.subr.mxu0 0.0
    %1171 = vmatpush1.msra.mxu0 0.0
    %1172 = vmatprep.subr.mxu0 0.0
    %1173 = vmatpush1.msra.mxu0 0.0
    %1174 = vmatprep.subr.mxu0 0.0
    %1175 = vmatpush1.msra.mxu0 0.0
    %1176 = vmatprep.subr.mxu0 0.0
    %1177 = vmatpush1.msra.mxu0 0.0
    %1178 = vmatprep.subr.mxu0 0.0
    %1179 = vmatpush1.msra.mxu0 0.0
    %1180 = vmatprep.subr.mxu0 0.0
    %1181 = vmatpush1.msra.mxu0 0.0
    %1182 = vmatprep.subr.mxu0 0.0
    %1183 = vmatpush1.msra.mxu0 0.0
    %1184 = vmatprep.subr.mxu0 0.0
    %1185 = vmatpush1.msra.mxu0 0.0
    %1186 = vmatprep.subr.mxu0 0.0
    %1187 = vmatpush1.msra.mxu0 0.0
    %1188 = vmatprep.subr.mxu0 0.0
    %1189 = vmatpush1.msra.mxu0 0.0
    %1190 = vmatprep.mubr.f32.mxu0 0.0
    %1191 = vmatmul.mubr.f32.gmra.mrb[0].mxu0 %v1124
    %v1192 = vpop.f32.mrb[0].mxu0
    %v1193 = vadd.f32 0.0, %v1192
    %v1194 = vpop.f32.mrb[0].mxu0
    %1195 = vdwg.mxu0
    %v1197 = vrot.slane %v1193, 1
    %v1198 = vrot.slane %v1193, 2
    %v1201 = vadd.f32 %v139, %v1197
    %v1202 = vadd.f32 %v144, %v1198
    %v1203 = vxor.u32 %v1201, 2147483648
    %v1204 = vxor.u32 %v1202, 2147483648
    %v1205 = vmul.f32 %v1203, 1.442695
    %v1206 = vpow.pop %v1205
    %v1207 = vmul.f32 %v1204, 1.442695
    %v1208 = vpow.pop %v1207
    %v1209 = vadd.f32 %v1206, 1.0
    %v1210 = vadd.f32 %v1208, 1.0
    %v1211 = vrcp.pop %v1209
    %v1212 = vmul.f32 1.0, %v1211
    %v1213 = vrcp.pop %v1210
    %v1214 = vmul.f32 1.0, %v1213
    %v1215 = vtanh.pop %v1201
    %v1216 = vtanh.pop %v1202
    %v1219 = vrot.slane %v1103, 7
    %v1220 = vrot.slane %v1104, 7
    %v1223 = vmul.f32 %v1212, %v1219
    %v1224 = vmul.f32 %v1214, %v1220
    %1227 = vrot.lane.b32.xlu0 %v1215, 64
    %v1228 = vpop.permute.xlu0 %1227
    %1229 = vrot.lane.b32.xlu0 %v1216, 64
    %v1230 = vpop.permute.xlu0 %1229
    %v1233 = vmul.f32 %v1212, %v1228
    %v1234 = vmul.f32 %v1214, %v1230
    %1237 = vrot.lane.b32.xlu0 %v1233, 32
    %v1238 = vpop.permute.xlu0 %1237
    %1239 = vrot.lane.b32.xlu0 %v1234, 32
    %v1240 = vpop.permute.xlu0 %1239
    %v1243 = vadd.f32 %v1223, %v1238
    %v1244 = vadd.f32 %v1224, %v1240
    %v1245 = vtanh.pop %v1243
    %v1246 = vtanh.pop %v1244
    %1249 = vrot.lane.b32.xlu0 %v1245, 64
    %v1250 = vpop.permute.xlu0 %1249
    %1251 = vrot.lane.b32.xlu0 %v1246, 64
    %v1252 = vpop.permute.xlu0 %1251
    %v1255 = vmul.f32 %v1212, %v1250
    %v1256 = vmul.f32 %v1214, %v1252
    %vm1257 = vcmask 1040384
    %v1258 = vsel %vm1257, %v277, %v416
    %v1259 = vsel %vm1257, %v278, %v417
    %vm1260 = vcmask 1041408
    %v1261 = vsel %vm1260, %v1258, %v555
    %v1262 = vsel %vm1260, %v1259, %v556
    %vm1263 = vcmask 1042432
    %v1264 = vsel %vm1263, %v1261, %v695
    %v1265 = vsel %vm1263, %v1262, %v696
    %vm1266 = vcmask 1043456
    %v1267 = vsel %vm1266, %v1264, %v835
    %v1268 = vsel %vm1266, %v1265, %v836
    %vm1269 = vcmask 1044480
    %v1270 = vsel %vm1269, %v1267, %v975
    %v1271 = vsel %vm1269, %v1268, %v976
    %vm1272 = vcmask 1045504
    %v1273 = vsel %vm1272, %v1270, %v1115
    %v1274 = vsel %vm1272, %v1271, %v1116
    %vm1275 = vcmask 1046528
    %v1276 = vsel %vm1275, %v1273, %v1255
    %v1277 = vsel %vm1275, %v1274, %v1256
    %v1278 = vld [vmem:[#allocation2] sm:$0xff]
    %v1279 = vld [vmem:[#allocation2 + $0x8] sm:$0xff]
    %v1280 = vld [vmem:[#allocation2 + $0x10] sm:$0xff]
    %v1281 = vld [vmem:[#allocation2 + $0x18] sm:$0xff]
    %s1282 = scalar_lea.vmem %s4, 1
    %v1283 = vld [vmem:[%s1282] sm:$0x1]
    %v1285 = vlaneseq
    %v1286 = vshrl.u32 %v1285, 7
    %v1287 = vsub.s32 0, %v1286
    %v1288 = vrot.slane %v1283, %v1287
    %1292 = vrot.lane.b32.xlu0 %v1276, 32
    %v1293 = vpop.permute.xlu0 %1292
    %1294 = vrot.lane.b32.xlu0 %v1277, 32
    %v1295 = vpop.permute.xlu0 %1294
    %v1296 = vsel %vm151, %v1293, 0
    %v1298 = vsel %vm151, %v1295, 0
    %1300 = vmatprep.subr.mxu0 0.0
    %1301 = vmatpush1.msra.mxu0 %v1278
    %1302 = vmatprep.subr.mxu0 0.0
    %1303 = vmatpush1.msra.mxu0 %v1279
    %1304 = vmatprep.subr.mxu0 0.0
    %1305 = vmatpush1.msra.mxu0 %v1280
    %1306 = vmatprep.subr.mxu0 0.0
    %1307 = vmatpush1.msra.mxu0 %v1281
    %1308 = vmatprep.subr.mxu0 0.0
    %1309 = vmatpush1.msra.mxu0 0.0
    %1310 = vmatprep.subr.mxu0 0.0
    %1311 = vmatpush1.msra.mxu0 0.0
    %1312 = vmatprep.subr.mxu0 0.0
    %1313 = vmatpush1.msra.mxu0 0.0
    %1314 = vmatprep.subr.mxu0 0.0
    %1315 = vmatpush1.msra.mxu0 0.0
    %1316 = vmatprep.subr.mxu0 0.0
    %1317 = vmatpush1.msra.mxu0 0.0
    %1318 = vmatprep.subr.mxu0 0.0
    %1319 = vmatpush1.msra.mxu0 0.0
    %1320 = vmatprep.subr.mxu0 0.0
    %1321 = vmatpush1.msra.mxu0 0.0
    %1322 = vmatprep.subr.mxu0 0.0
    %1323 = vmatpush1.msra.mxu0 0.0
    %1324 = vmatprep.subr.mxu0 0.0
    %1325 = vmatpush1.msra.mxu0 0.0
    %1326 = vmatprep.subr.mxu0 0.0
    %1327 = vmatpush1.msra.mxu0 0.0
    %1328 = vmatprep.subr.mxu0 0.0
    %1329 = vmatpush1.msra.mxu0 0.0
    %1330 = vmatprep.subr.mxu0 0.0
    %1331 = vmatpush1.msra.mxu0 0.0
    %1332 = vmatprep.subr.mxu0 0.0
    %1333 = vmatpush1.msra.mxu0 0.0
    %1334 = vmatprep.subr.mxu0 0.0
    %1335 = vmatpush1.msra.mxu0 0.0
    %1336 = vmatprep.subr.mxu0 0.0
    %1337 = vmatpush1.msra.mxu0 0.0
    %1338 = vmatprep.subr.mxu0 0.0
    %1339 = vmatpush1.msra.mxu0 0.0
    %1340 = vmatprep.subr.mxu0 0.0
    %1341 = vmatpush1.msra.mxu0 0.0
    %1342 = vmatprep.subr.mxu0 0.0
    %1343 = vmatpush1.msra.mxu0 0.0
    %1344 = vmatprep.subr.mxu0 0.0
    %1345 = vmatpush1.msra.mxu0 0.0
    %1346 = vmatprep.subr.mxu0 0.0
    %1347 = vmatpush1.msra.mxu0 0.0
    %1348 = vmatprep.subr.mxu0 0.0
    %1349 = vmatpush1.msra.mxu0 0.0
    %1350 = vmatprep.subr.mxu0 0.0
    %1351 = vmatpush1.msra.mxu0 0.0
    %1352 = vmatprep.subr.mxu0 0.0
    %1353 = vmatpush1.msra.mxu0 0.0
    %1354 = vmatprep.subr.mxu0 0.0
    %1355 = vmatpush1.msra.mxu0 0.0
    %1356 = vmatprep.subr.mxu0 0.0
    %1357 = vmatpush1.msra.mxu0 0.0
    %1358 = vmatprep.subr.mxu0 0.0
    %1359 = vmatpush1.msra.mxu0 0.0
    %1360 = vmatprep.subr.mxu0 0.0
    %1361 = vmatpush1.msra.mxu0 0.0
    %1362 = vmatprep.subr.mxu0 0.0
    %1363 = vmatpush1.msra.mxu0 0.0
    %1364 = vmatprep.mubr.f32.mxu0 0.0
    %1365 = vmatmul.mubr.f32.gmra.mrb[0].mxu0 %v1296
    %v1366 = vpop.f32.mrb[0].mxu0
    %v1367 = vadd.f32 %v1288, %v1366
    %v1368 = vpop.f32.mrb[0].mxu0
    %1369 = vmatprep.mubr.f32.mxu0 0.0
    %1370 = vmatmul.mubr.f32.gmra.mrb[0].mxu0 %v1298
    %v1371 = vpop.f32.mrb[0].mxu0
    %v1372 = vadd.f32 %v1288, %v1371
    %v1373 = vpop.f32.mrb[0].mxu0
    %1374 = vdwg.mxu0
    %s1375 = scalar_lea.vmem [#allocation4], 32
    %v1376 = vld [vmem:[%s1375] sm:$0xff]
    %v1377 = vld [vmem:[%s1375 + $0x8] sm:$0xff]
    %v1378 = vld [vmem:[%s1375 + $0x10] sm:$0xff]
    %v1379 = vld [vmem:[%s1375 + $0x18] sm:$0xff]
    %1380 = vmatprep.subr.mxu0 0.0
    %1381 = vmatpush1.msra.mxu0 %v1376
    %1382 = vmatprep.subr.mxu0 0.0
    %1383 = vmatpush1.msra.mxu0 %v1377
    %1384 = vmatprep.subr.mxu0 0.0
    %1385 = vmatpush1.msra.mxu0 %v1378
    %1386 = vmatprep.subr.mxu0 0.0
    %1387 = vmatpush1.msra.mxu0 %v1379
    %1388 = vmatprep.subr.mxu0 0.0
    %1389 = vmatpush1.msra.mxu0 0.0
    %1390 = vmatprep.subr.mxu0 0.0
    %1391 = vmatpush1.msra.mxu0 0.0
    %1392 = vmatprep.subr.mxu0 0.0
    %1393 = vmatpush1.msra.mxu0 0.0
    %1394 = vmatprep.subr.mxu0 0.0
    %1395 = vmatpush1.msra.mxu0 0.0
    %1396 = vmatprep.subr.mxu0 0.0
    %1397 = vmatpush1.msra.mxu0 0.0
    %1398 = vmatprep.subr.mxu0 0.0
    %1399 = vmatpush1.msra.mxu0 0.0
    %1400 = vmatprep.subr.mxu0 0.0
    %1401 = vmatpush1.msra.mxu0 0.0
    %1402 = vmatprep.subr.mxu0 0.0
    %1403 = vmatpush1.msra.mxu0 0.0
    %1404 = vmatprep.subr.mxu0 0.0
    %1405 = vmatpush1.msra.mxu0 0.0
    %1406 = vmatprep.subr.mxu0 0.0
    %1407 = vmatpush1.msra.mxu0 0.0
    %1408 = vmatprep.subr.mxu0 0.0
    %1409 = vmatpush1.msra.mxu0 0.0
    %1410 = vmatprep.subr.mxu0 0.0
    %1411 = vmatpush1.msra.mxu0 0.0
    %1412 = vmatprep.subr.mxu0 0.0
    %1413 = vmatpush1.msra.mxu0 0.0
    %1414 = vmatprep.subr.mxu0 0.0
    %1415 = vmatpush1.msra.mxu0 0.0
    %1416 = vmatprep.subr.mxu0 0.0
    %1417 = vmatpush1.msra.mxu0 0.0
    %1418 = vmatprep.subr.mxu0 0.0
    %1419 = vmatpush1.msra.mxu0 0.0
    %1420 = vmatprep.subr.mxu0 0.0
    %1421 = vmatpush1.msra.mxu0 0.0
    %1422 = vmatprep.subr.mxu0 0.0
    %1423 = vmatpush1.msra.mxu0 0.0
    %1424 = vmatprep.subr.mxu0 0.0
    %1425 = vmatpush1.msra.mxu0 0.0
    %1426 = vmatprep.subr.mxu0 0.0
    %1427 = vmatpush1.msra.mxu0 0.0
    %1428 = vmatprep.subr.mxu0 0.0
    %1429 = vmatpush1.msra.mxu0 0.0
    %1430 = vmatprep.subr.mxu0 0.0
    %1431 = vmatpush1.msra.mxu0 0.0
    %1432 = vmatprep.subr.mxu0 0.0
    %1433 = vmatpush1.msra.mxu0 0.0
    %1434 = vmatprep.subr.mxu0 0.0
    %1435 = vmatpush1.msra.mxu0 0.0
    %1436 = vmatprep.subr.mxu0 0.0
    %1437 = vmatpush1.msra.mxu0 0.0
    %1438 = vmatprep.subr.mxu0 0.0
    %1439 = vmatpush1.msra.mxu0 0.0
    %1440 = vmatprep.subr.mxu0 0.0
    %1441 = vmatpush1.msra.mxu0 0.0
    %1442 = vmatprep.subr.mxu0 0.0
    %1443 = vmatpush1.msra.mxu0 0.0
    %1444 = vmatprep.mubr.f32.mxu0 0.0
    %1445 = vmatmul.mubr.f32.gmra.mrb[0].mxu0 %v153
    %v1446 = vpop.f32.mrb[0].mxu0
    %v1447 = vadd.f32 0.0, %v1446
    %v1448 = vpop.f32.mrb[0].mxu0
    %1449 = vdwg.mxu0
    %v1451 = vrot.slane %v1447, 1
    %v1454 = vadd.f32 %v1367, %v1447
    %v1455 = vadd.f32 %v1372, %v1451
    %v1456 = vxor.u32 %v1454, 2147483648
    %v1457 = vxor.u32 %v1455, 2147483648
    %v1458 = vmul.f32 %v1456, 1.442695
    %v1459 = vpow.pop %v1458
    %v1460 = vmul.f32 %v1457, 1.442695
    %v1461 = vpow.pop %v1460
    %v1462 = vadd.f32 %v1459, 1.0
    %v1463 = vadd.f32 %v1461, 1.0
    %v1464 = vrcp.pop %v1462
    %v1465 = vmul.f32 1.0, %v1464
    %v1466 = vrcp.pop %v1463
    %v1467 = vmul.f32 1.0, %v1466
    %v1468 = vtanh.pop %v1454
    %v1469 = vtanh.pop %v1455
    %v1470 = vmul.f32 %v1465, 0.0
    %v1471 = vmul.f32 %v1467, 0.0
    %1474 = vrot.lane.b32.xlu0 %v1468, 64
    %v1475 = vpop.permute.xlu0 %1474
    %1476 = vrot.lane.b32.xlu0 %v1469, 64
    %v1477 = vpop.permute.xlu0 %1476
    %v1480 = vmul.f32 %v1465, %v1475
    %v1481 = vmul.f32 %v1467, %v1477
    %1484 = vrot.lane.b32.xlu0 %v1480, 32
    %v1485 = vpop.permute.xlu0 %1484
    %1486 = vrot.lane.b32.xlu0 %v1481, 32
    %v1487 = vpop.permute.xlu0 %1486
    %v1490 = vadd.f32 %v1470, %v1485
    %v1491 = vadd.f32 %v1471, %v1487
    %v1492 = vtanh.pop %v1490
    %v1493 = vtanh.pop %v1491
    %1496 = vrot.lane.b32.xlu0 %v1492, 64
    %v1497 = vpop.permute.xlu0 %1496
    %1498 = vrot.lane.b32.xlu0 %v1493, 64
    %v1499 = vpop.permute.xlu0 %1498
    %v1502 = vmul.f32 %v1465, %v1497
    %v1503 = vmul.f32 %v1467, %v1499
    %v1506 = vrot.slane %v1503, 7
    %v1507 = vsel %vm282, %v1506, %v1502
    %1508 = vrot.lane.b32.xlu0 %v1507, 32
    %v1509 = vpop.permute.xlu0 %1508
    %v1510 = vsel %vm151, %v1509, 0
    %1512 = vmatprep.subr.mxu0 0.0
    %1513 = vmatpush1.msra.mxu0 %v1376
    %1514 = vmatprep.subr.mxu0 0.0
    %1515 = vmatpush1.msra.mxu0 %v1377
    %1516 = vmatprep.subr.mxu0 0.0
    %1517 = vmatpush1.msra.mxu0 %v1378
    %1518 = vmatprep.subr.mxu0 0.0
    %1519 = vmatpush1.msra.mxu0 %v1379
    %1520 = vmatprep.subr.mxu0 0.0
    %1521 = vmatpush1.msra.mxu0 0.0
    %1522 = vmatprep.subr.mxu0 0.0
    %1523 = vmatpush1.msra.mxu0 0.0
    %1524 = vmatprep.subr.mxu0 0.0
    %1525 = vmatpush1.msra.mxu0 0.0
    %1526 = vmatprep.subr.mxu0 0.0
    %1527 = vmatpush1.msra.mxu0 0.0
    %1528 = vmatprep.subr.mxu0 0.0
    %1529 = vmatpush1.msra.mxu0 0.0
    %1530 = vmatprep.subr.mxu0 0.0
    %1531 = vmatpush1.msra.mxu0 0.0
    %1532 = vmatprep.subr.mxu0 0.0
    %1533 = vmatpush1.msra.mxu0 0.0
    %1534 = vmatprep.subr.mxu0 0.0
    %1535 = vmatpush1.msra.mxu0 0.0
    %1536 = vmatprep.subr.mxu0 0.0
    %1537 = vmatpush1.msra.mxu0 0.0
    %1538 = vmatprep.subr.mxu0 0.0
    %1539 = vmatpush1.msra.mxu0 0.0
    %1540 = vmatprep.subr.mxu0 0.0
    %1541 = vmatpush1.msra.mxu0 0.0
    %1542 = vmatprep.subr.mxu0 0.0
    %1543 = vmatpush1.msra.mxu0 0.0
    %1544 = vmatprep.subr.mxu0 0.0
    %1545 = vmatpush1.msra.mxu0 0.0
    %1546 = vmatprep.subr.mxu0 0.0
    %1547 = vmatpush1.msra.mxu0 0.0
    %1548 = vmatprep.subr.mxu0 0.0
    %1549 = vmatpush1.msra.mxu0 0.0
    %1550 = vmatprep.subr.mxu0 0.0
    %1551 = vmatpush1.msra.mxu0 0.0
    %1552 = vmatprep.subr.mxu0 0.0
    %1553 = vmatpush1.msra.mxu0 0.0
    %1554 = vmatprep.subr.mxu0 0.0
    %1555 = vmatpush1.msra.mxu0 0.0
    %1556 = vmatprep.subr.mxu0 0.0
    %1557 = vmatpush1.msra.mxu0 0.0
    %1558 = vmatprep.subr.mxu0 0.0
    %1559 = vmatpush1.msra.mxu0 0.0
    %1560 = vmatprep.subr.mxu0 0.0
    %1561 = vmatpush1.msra.mxu0 0.0
    %1562 = vmatprep.subr.mxu0 0.0
    %1563 = vmatpush1.msra.mxu0 0.0
    %1564 = vmatprep.subr.mxu0 0.0
    %1565 = vmatpush1.msra.mxu0 0.0
    %1566 = vmatprep.subr.mxu0 0.0
    %1567 = vmatpush1.msra.mxu0 0.0
    %1568 = vmatprep.subr.mxu0 0.0
    %1569 = vmatpush1.msra.mxu0 0.0
    %1570 = vmatprep.subr.mxu0 0.0
    %1571 = vmatpush1.msra.mxu0 0.0
    %1572 = vmatprep.subr.mxu0 0.0
    %1573 = vmatpush1.msra.mxu0 0.0
    %1574 = vmatprep.subr.mxu0 0.0
    %1575 = vmatpush1.msra.mxu0 0.0
    %1576 = vmatprep.mubr.f32.mxu0 0.0
    %1577 = vmatmul.mubr.f32.gmra.mrb[0].mxu0 %v1510
    %v1578 = vpop.f32.mrb[0].mxu0
    %v1579 = vadd.f32 0.0, %v1578
    %v1580 = vpop.f32.mrb[0].mxu0
    %1581 = vdwg.mxu0
    %v1583 = vrot.slane %v1579, 7
    %v1586 = vadd.f32 %v1367, %v1583
    %v1587 = vadd.f32 %v1372, %v1579
    %v1588 = vxor.u32 %v1586, 2147483648
    %v1589 = vxor.u32 %v1587, 2147483648
    %v1590 = vmul.f32 %v1588, 1.442695
    %v1591 = vpow.pop %v1590
    %v1592 = vmul.f32 %v1589, 1.442695
    %v1593 = vpow.pop %v1592
    %v1594 = vadd.f32 %v1591, 1.0
    %v1595 = vadd.f32 %v1593, 1.0
    %v1596 = vrcp.pop %v1594
    %v1597 = vmul.f32 1.0, %v1596
    %v1598 = vrcp.pop %v1595
    %v1599 = vmul.f32 1.0, %v1598
    %v1600 = vtanh.pop %v1586
    %v1601 = vtanh.pop %v1587
    %v1604 = vrot.slane %v1490, 7
    %v1605 = vrot.slane %v1491, 7
    %v1608 = vmul.f32 %v1597, %v1604
    %v1609 = vmul.f32 %v1599, %v1605
    %1612 = vrot.lane.b32.xlu0 %v1600, 64
    %v1613 = vpop.permute.xlu0 %1612
    %1614 = vrot.lane.b32.xlu0 %v1601, 64
    %v1615 = vpop.permute.xlu0 %1614
    %v1618 = vmul.f32 %v1597, %v1613
    %v1619 = vmul.f32 %v1599, %v1615
    %1622 = vrot.lane.b32.xlu0 %v1618, 32
    %v1623 = vpop.permute.xlu0 %1622
    %1624 = vrot.lane.b32.xlu0 %v1619, 32
    %v1625 = vpop.permute.xlu0 %1624
    %v1628 = vadd.f32 %v1608, %v1623
    %v1629 = vadd.f32 %v1609, %v1625
    %v1630 = vtanh.pop %v1628
    %v1631 = vtanh.pop %v1629
    %1634 = vrot.lane.b32.xlu0 %v1630, 64
    %v1635 = vpop.permute.xlu0 %1634
    %1636 = vrot.lane.b32.xlu0 %v1631, 64
    %v1637 = vpop.permute.xlu0 %1636
    %v1640 = vmul.f32 %v1597, %v1635
    %v1641 = vmul.f32 %v1599, %v1637
    %v1644 = vrot.slane %v1640, 1
    %v1645 = vsel %vm282, %v1641, %v1644
    %1646 = vrot.lane.b32.xlu0 %v1645, 32
    %v1647 = vpop.permute.xlu0 %1646
    %v1648 = vsel %vm151, %v1647, 0
    %1650 = vmatprep.subr.mxu0 0.0
    %1651 = vmatpush1.msra.mxu0 %v1376
    %1652 = vmatprep.subr.mxu0 0.0
    %1653 = vmatpush1.msra.mxu0 %v1377
    %1654 = vmatprep.subr.mxu0 0.0
    %1655 = vmatpush1.msra.mxu0 %v1378
    %1656 = vmatprep.subr.mxu0 0.0
    %1657 = vmatpush1.msra.mxu0 %v1379
    %1658 = vmatprep.subr.mxu0 0.0
    %1659 = vmatpush1.msra.mxu0 0.0
    %1660 = vmatprep.subr.mxu0 0.0
    %1661 = vmatpush1.msra.mxu0 0.0
    %1662 = vmatprep.subr.mxu0 0.0
    %1663 = vmatpush1.msra.mxu0 0.0
    %1664 = vmatprep.subr.mxu0 0.0
    %1665 = vmatpush1.msra.mxu0 0.0
    %1666 = vmatprep.subr.mxu0 0.0
    %1667 = vmatpush1.msra.mxu0 0.0
    %1668 = vmatprep.subr.mxu0 0.0
    %1669 = vmatpush1.msra.mxu0 0.0
    %1670 = vmatprep.subr.mxu0 0.0
    %1671 = vmatpush1.msra.mxu0 0.0
    %1672 = vmatprep.subr.mxu0 0.0
    %1673 = vmatpush1.msra.mxu0 0.0
    %1674 = vmatprep.subr.mxu0 0.0
    %1675 = vmatpush1.msra.mxu0 0.0
    %1676 = vmatprep.subr.mxu0 0.0
    %1677 = vmatpush1.msra.mxu0 0.0
    %1678 = vmatprep.subr.mxu0 0.0
    %1679 = vmatpush1.msra.mxu0 0.0
    %1680 = vmatprep.subr.mxu0 0.0
    %1681 = vmatpush1.msra.mxu0 0.0
    %1682 = vmatprep.subr.mxu0 0.0
    %1683 = vmatpush1.msra.mxu0 0.0
    %1684 = vmatprep.subr.mxu0 0.0
    %1685 = vmatpush1.msra.mxu0 0.0
    %1686 = vmatprep.subr.mxu0 0.0
    %1687 = vmatpush1.msra.mxu0 0.0
    %1688 = vmatprep.subr.mxu0 0.0
    %1689 = vmatpush1.msra.mxu0 0.0
    %1690 = vmatprep.subr.mxu0 0.0
    %1691 = vmatpush1.msra.mxu0 0.0
    %1692 = vmatprep.subr.mxu0 0.0
    %1693 = vmatpush1.msra.mxu0 0.0
    %1694 = vmatprep.subr.mxu0 0.0
    %1695 = vmatpush1.msra.mxu0 0.0
    %1696 = vmatprep.subr.mxu0 0.0
    %1697 = vmatpush1.msra.mxu0 0.0
    %1698 = vmatprep.subr.mxu0 0.0
    %1699 = vmatpush1.msra.mxu0 0.0
    %1700 = vmatprep.subr.mxu0 0.0
    %1701 = vmatpush1.msra.mxu0 0.0
    %1702 = vmatprep.subr.mxu0 0.0
    %1703 = vmatpush1.msra.mxu0 0.0
    %1704 = vmatprep.subr.mxu0 0.0
    %1705 = vmatpush1.msra.mxu0 0.0
    %1706 = vmatprep.subr.mxu0 0.0
    %1707 = vmatpush1.msra.mxu0 0.0
    %1708 = vmatprep.subr.mxu0 0.0
    %1709 = vmatpush1.msra.mxu0 0.0
    %1710 = vmatprep.subr.mxu0 0.0
    %1711 = vmatpush1.msra.mxu0 0.0
    %1712 = vmatprep.subr.mxu0 0.0
    %1713 = vmatpush1.msra.mxu0 0.0
    %1714 = vmatprep.mubr.f32.mxu0 0.0
    %1715 = vmatmul.mubr.f32.gmra.mrb[0].mxu0 %v1648
    %v1716 = vpop.f32.mrb[0].mxu0
    %v1717 = vadd.f32 0.0, %v1716
    %v1718 = vpop.f32.mrb[0].mxu0
    %1719 = vdwg.mxu0
    %v1721 = vrot.slane %v1717, 6
    %v1722 = vrot.slane %v1717, 7
    %v1725 = vadd.f32 %v1367, %v1721
    %v1726 = vadd.f32 %v1372, %v1722
    %v1727 = vxor.u32 %v1725, 2147483648
    %v1728 = vxor.u32 %v1726, 2147483648
    %v1729 = vmul.f32 %v1727, 1.442695
    %v1730 = vpow.pop %v1729
    %v1731 = vmul.f32 %v1728, 1.442695
    %v1732 = vpow.pop %v1731
    %v1733 = vadd.f32 %v1730, 1.0
    %v1734 = vadd.f32 %v1732, 1.0
    %v1735 = vrcp.pop %v1733
    %v1736 = vmul.f32 1.0, %v1735
    %v1737 = vrcp.pop %v1734
    %v1738 = vmul.f32 1.0, %v1737
    %v1739 = vtanh.pop %v1725
    %v1740 = vtanh.pop %v1726
    %v1743 = vrot.slane %v1628, 7
    %v1744 = vrot.slane %v1629, 7
    %v1747 = vmul.f32 %v1736, %v1743
    %v1748 = vmul.f32 %v1738, %v1744
    %1751 = vrot.lane.b32.xlu0 %v1739, 64
    %v1752 = vpop.permute.xlu0 %1751
    %1753 = vrot.lane.b32.xlu0 %v1740, 64
    %v1754 = vpop.permute.xlu0 %1753
    %v1757 = vmul.f32 %v1736, %v1752
    %v1758 = vmul.f32 %v1738, %v1754
    %1761 = vrot.lane.b32.xlu0 %v1757, 32
    %v1762 = vpop.permute.xlu0 %1761
    %1763 = vrot.lane.b32.xlu0 %v1758, 32
    %v1764 = vpop.permute.xlu0 %1763
    %v1767 = vadd.f32 %v1747, %v1762
    %v1768 = vadd.f32 %v1748, %v1764
    %v1769 = vtanh.pop %v1767
    %v1770 = vtanh.pop %v1768
    %1773 = vrot.lane.b32.xlu0 %v1769, 64
    %v1774 = vpop.permute.xlu0 %1773
    %1775 = vrot.lane.b32.xlu0 %v1770, 64
    %v1776 = vpop.permute.xlu0 %1775
    %v1779 = vmul.f32 %v1736, %v1774
    %v1780 = vmul.f32 %v1738, %v1776
    %v1783 = vrot.slane %v1779, 2
    %v1784 = vrot.slane %v1780, 1
    %v1785 = vsel %vm282, %v1784, %v1783
    %1786 = vrot.lane.b32.xlu0 %v1785, 32
    %v1787 = vpop.permute.xlu0 %1786
    %v1788 = vsel %vm151, %v1787, 0
    %1790 = vmatprep.subr.mxu0 0.0
    %1791 = vmatpush1.msra.mxu0 %v1376
    %1792 = vmatprep.subr.mxu0 0.0
    %1793 = vmatpush1.msra.mxu0 %v1377
    %1794 = vmatprep.subr.mxu0 0.0
    %1795 = vmatpush1.msra.mxu0 %v1378
    %1796 = vmatprep.subr.mxu0 0.0
    %1797 = vmatpush1.msra.mxu0 %v1379
    %1798 = vmatprep.subr.mxu0 0.0
    %1799 = vmatpush1.msra.mxu0 0.0
    %1800 = vmatprep.subr.mxu0 0.0
    %1801 = vmatpush1.msra.mxu0 0.0
    %1802 = vmatprep.subr.mxu0 0.0
    %1803 = vmatpush1.msra.mxu0 0.0
    %1804 = vmatprep.subr.mxu0 0.0
    %1805 = vmatpush1.msra.mxu0 0.0
    %1806 = vmatprep.subr.mxu0 0.0
    %1807 = vmatpush1.msra.mxu0 0.0
    %1808 = vmatprep.subr.mxu0 0.0
    %1809 = vmatpush1.msra.mxu0 0.0
    %1810 = vmatprep.subr.mxu0 0.0
    %1811 = vmatpush1.msra.mxu0 0.0
    %1812 = vmatprep.subr.mxu0 0.0
    %1813 = vmatpush1.msra.mxu0 0.0
    %1814 = vmatprep.subr.mxu0 0.0
    %1815 = vmatpush1.msra.mxu0 0.0
    %1816 = vmatprep.subr.mxu0 0.0
    %1817 = vmatpush1.msra.mxu0 0.0
    %1818 = vmatprep.subr.mxu0 0.0
    %1819 = vmatpush1.msra.mxu0 0.0
    %1820 = vmatprep.subr.mxu0 0.0
    %1821 = vmatpush1.msra.mxu0 0.0
    %1822 = vmatprep.subr.mxu0 0.0
    %1823 = vmatpush1.msra.mxu0 0.0
    %1824 = vmatprep.subr.mxu0 0.0
    %1825 = vmatpush1.msra.mxu0 0.0
    %1826 = vmatprep.subr.mxu0 0.0
    %1827 = vmatpush1.msra.mxu0 0.0
    %1828 = vmatprep.subr.mxu0 0.0
    %1829 = vmatpush1.msra.mxu0 0.0
    %1830 = vmatprep.subr.mxu0 0.0
    %1831 = vmatpush1.msra.mxu0 0.0
    %1832 = vmatprep.subr.mxu0 0.0
    %1833 = vmatpush1.msra.mxu0 0.0
    %1834 = vmatprep.subr.mxu0 0.0
    %1835 = vmatpush1.msra.mxu0 0.0
    %1836 = vmatprep.subr.mxu0 0.0
    %1837 = vmatpush1.msra.mxu0 0.0
    %1838 = vmatprep.subr.mxu0 0.0
    %1839 = vmatpush1.msra.mxu0 0.0
    %1840 = vmatprep.subr.mxu0 0.0
    %1841 = vmatpush1.msra.mxu0 0.0
    %1842 = vmatprep.subr.mxu0 0.0
    %1843 = vmatpush1.msra.mxu0 0.0
    %1844 = vmatprep.subr.mxu0 0.0
    %1845 = vmatpush1.msra.mxu0 0.0
    %1846 = vmatprep.subr.mxu0 0.0
    %1847 = vmatpush1.msra.mxu0 0.0
    %1848 = vmatprep.subr.mxu0 0.0
    %1849 = vmatpush1.msra.mxu0 0.0
    %1850 = vmatprep.subr.mxu0 0.0
    %1851 = vmatpush1.msra.mxu0 0.0
    %1852 = vmatprep.subr.mxu0 0.0
    %1853 = vmatpush1.msra.mxu0 0.0
    %1854 = vmatprep.mubr.f32.mxu0 0.0
    %1855 = vmatmul.mubr.f32.gmra.mrb[0].mxu0 %v1788
    %v1856 = vpop.f32.mrb[0].mxu0
    %v1857 = vadd.f32 0.0, %v1856
    %v1858 = vpop.f32.mrb[0].mxu0
    %1859 = vdwg.mxu0
    %v1861 = vrot.slane %v1857, 5
    %v1862 = vrot.slane %v1857, 6
    %v1865 = vadd.f32 %v1367, %v1861
    %v1866 = vadd.f32 %v1372, %v1862
    %v1867 = vxor.u32 %v1865, 2147483648
    %v1868 = vxor.u32 %v1866, 2147483648
    %v1869 = vmul.f32 %v1867, 1.442695
    %v1870 = vpow.pop %v1869
    %v1871 = vmul.f32 %v1868, 1.442695
    %v1872 = vpow.pop %v1871
    %v1873 = vadd.f32 %v1870, 1.0
    %v1874 = vadd.f32 %v1872, 1.0
    %v1875 = vrcp.pop %v1873
    %v1876 = vmul.f32 1.0, %v1875
    %v1877 = vrcp.pop %v1874
    %v1878 = vmul.f32 1.0, %v1877
    %v1879 = vtanh.pop %v1865
    %v1880 = vtanh.pop %v1866
    %v1883 = vrot.slane %v1767, 7
    %v1884 = vrot.slane %v1768, 7
    %v1887 = vmul.f32 %v1876, %v1883
    %v1888 = vmul.f32 %v1878, %v1884
    %1891 = vrot.lane.b32.xlu0 %v1879, 64
    %v1892 = vpop.permute.xlu0 %1891
    %1893 = vrot.lane.b32.xlu0 %v1880, 64
    %v1894 = vpop.permute.xlu0 %1893
    %v1897 = vmul.f32 %v1876, %v1892
    %v1898 = vmul.f32 %v1878, %v1894
    %1901 = vrot.lane.b32.xlu0 %v1897, 32
    %v1902 = vpop.permute.xlu0 %1901
    %1903 = vrot.lane.b32.xlu0 %v1898, 32
    %v1904 = vpop.permute.xlu0 %1903
    %v1907 = vadd.f32 %v1887, %v1902
    %v1908 = vadd.f32 %v1888, %v1904
    %v1909 = vtanh.pop %v1907
    %v1910 = vtanh.pop %v1908
    %1913 = vrot.lane.b32.xlu0 %v1909, 64
    %v1914 = vpop.permute.xlu0 %1913
    %1915 = vrot.lane.b32.xlu0 %v1910, 64
    %v1916 = vpop.permute.xlu0 %1915
    %v1919 = vmul.f32 %v1876, %v1914
    %v1920 = vmul.f32 %v1878, %v1916
    %v1923 = vrot.slane %v1919, 3
    %v1924 = vrot.slane %v1920, 2
    %v1925 = vsel %vm282, %v1924, %v1923
    %1926 = vrot.lane.b32.xlu0 %v1925, 32
    %v1927 = vpop.permute.xlu0 %1926
    %v1928 = vsel %vm151, %v1927, 0
    %1930 = vmatprep.subr.mxu0 0.0
    %1931 = vmatpush1.msra.mxu0 %v1376
    %1932 = vmatprep.subr.mxu0 0.0
    %1933 = vmatpush1.msra.mxu0 %v1377
    %1934 = vmatprep.subr.mxu0 0.0
    %1935 = vmatpush1.msra.mxu0 %v1378
    %1936 = vmatprep.subr.mxu0 0.0
    %1937 = vmatpush1.msra.mxu0 %v1379
    %1938 = vmatprep.subr.mxu0 0.0
    %1939 = vmatpush1.msra.mxu0 0.0
    %1940 = vmatprep.subr.mxu0 0.0
    %1941 = vmatpush1.msra.mxu0 0.0
    %1942 = vmatprep.subr.mxu0 0.0
    %1943 = vmatpush1.msra.mxu0 0.0
    %1944 = vmatprep.subr.mxu0 0.0
    %1945 = vmatpush1.msra.mxu0 0.0
    %1946 = vmatprep.subr.mxu0 0.0
    %1947 = vmatpush1.msra.mxu0 0.0
    %1948 = vmatprep.subr.mxu0 0.0
    %1949 = vmatpush1.msra.mxu0 0.0
    %1950 = vmatprep.subr.mxu0 0.0
    %1951 = vmatpush1.msra.mxu0 0.0
    %1952 = vmatprep.subr.mxu0 0.0
    %1953 = vmatpush1.msra.mxu0 0.0
    %1954 = vmatprep.subr.mxu0 0.0
    %1955 = vmatpush1.msra.mxu0 0.0
    %1956 = vmatprep.subr.mxu0 0.0
    %1957 = vmatpush1.msra.mxu0 0.0
    %1958 = vmatprep.subr.mxu0 0.0
    %1959 = vmatpush1.msra.mxu0 0.0
    %1960 = vmatprep.subr.mxu0 0.0
    %1961 = vmatpush1.msra.mxu0 0.0
    %1962 = vmatprep.subr.mxu0 0.0
    %1963 = vmatpush1.msra.mxu0 0.0
    %1964 = vmatprep.subr.mxu0 0.0
    %1965 = vmatpush1.msra.mxu0 0.0
    %1966 = vmatprep.subr.mxu0 0.0
    %1967 = vmatpush1.msra.mxu0 0.0
    %1968 = vmatprep.subr.mxu0 0.0
    %1969 = vmatpush1.msra.mxu0 0.0
    %1970 = vmatprep.subr.mxu0 0.0
    %1971 = vmatpush1.msra.mxu0 0.0
    %1972 = vmatprep.subr.mxu0 0.0
    %1973 = vmatpush1.msra.mxu0 0.0
    %1974 = vmatprep.subr.mxu0 0.0
    %1975 = vmatpush1.msra.mxu0 0.0
    %1976 = vmatprep.subr.mxu0 0.0
    %1977 = vmatpush1.msra.mxu0 0.0
    %1978 = vmatprep.subr.mxu0 0.0
    %1979 = vmatpush1.msra.mxu0 0.0
    %1980 = vmatprep.subr.mxu0 0.0
    %1981 = vmatpush1.msra.mxu0 0.0
    %1982 = vmatprep.subr.mxu0 0.0
    %1983 = vmatpush1.msra.mxu0 0.0
    %1984 = vmatprep.subr.mxu0 0.0
    %1985 = vmatpush1.msra.mxu0 0.0
    %1986 = vmatprep.subr.mxu0 0.0
    %1987 = vmatpush1.msra.mxu0 0.0
    %1988 = vmatprep.subr.mxu0 0.0
    %1989 = vmatpush1.msra.mxu0 0.0
    %1990 = vmatprep.subr.mxu0 0.0
    %1991 = vmatpush1.msra.mxu0 0.0
    %1992 = vmatprep.subr.mxu0 0.0
    %1993 = vmatpush1.msra.mxu0 0.0
    %1994 = vmatprep.mubr.f32.mxu0 0.0
    %1995 = vmatmul.mubr.f32.gmra.mrb[0].mxu0 %v1928
    %v1996 = vpop.f32.mrb[0].mxu0
    %v1997 = vadd.f32 0.0, %v1996
    %v1998 = vpop.f32.mrb[0].mxu0
    %1999 = vdwg.mxu0
    %v2001 = vrot.slane %v1997, 4
    %v2002 = vrot.slane %v1997, 5
    %v2005 = vadd.f32 %v1367, %v2001
    %v2006 = vadd.f32 %v1372, %v2002
    %v2007 = vxor.u32 %v2005, 2147483648
    %v2008 = vxor.u32 %v2006, 2147483648
    %v2009 = vmul.f32 %v2007, 1.442695
    %v2010 = vpow.pop %v2009
    %v2011 = vmul.f32 %v2008, 1.442695
    %v2012 = vpow.pop %v2011
    %v2013 = vadd.f32 %v2010, 1.0
    %v2014 = vadd.f32 %v2012, 1.0
    %v2015 = vrcp.pop %v2013
    %v2016 = vmul.f32 1.0, %v2015
    %v2017 = vrcp.pop %v2014
    %v2018 = vmul.f32 1.0, %v2017
    %v2019 = vtanh.pop %v2005
    %v2020 = vtanh.pop %v2006
    %v2023 = vrot.slane %v1907, 7
    %v2024 = vrot.slane %v1908, 7
    %v2027 = vmul.f32 %v2016, %v2023
    %v2028 = vmul.f32 %v2018, %v2024
    %2031 = vrot.lane.b32.xlu0 %v2019, 64
    %v2032 = vpop.permute.xlu0 %2031
    %2033 = vrot.lane.b32.xlu0 %v2020, 64
    %v2034 = vpop.permute.xlu0 %2033
    %v2037 = vmul.f32 %v2016, %v2032
    %v2038 = vmul.f32 %v2018, %v2034
    %2041 = vrot.lane.b32.xlu0 %v2037, 32
    %v2042 = vpop.permute.xlu0 %2041
    %2043 = vrot.lane.b32.xlu0 %v2038, 32
    %v2044 = vpop.permute.xlu0 %2043
    %v2047 = vadd.f32 %v2027, %v2042
    %v2048 = vadd.f32 %v2028, %v2044
    %v2049 = vtanh.pop %v2047
    %v2050 = vtanh.pop %v2048
    %2053 = vrot.lane.b32.xlu0 %v2049, 64
    %v2054 = vpop.permute.xlu0 %2053
    %2055 = vrot.lane.b32.xlu0 %v2050, 64
    %v2056 = vpop.permute.xlu0 %2055
    %v2059 = vmul.f32 %v2016, %v2054
    %v2060 = vmul.f32 %v2018, %v2056
    %v2063 = vrot.slane %v2059, 4
    %v2064 = vrot.slane %v2060, 3
    %v2065 = vsel %vm282, %v2064, %v2063
    %2066 = vrot.lane.b32.xlu0 %v2065, 32
    %v2067 = vpop.permute.xlu0 %2066
    %v2068 = vsel %vm151, %v2067, 0
    %2070 = vmatprep.subr.mxu0 0.0
    %2071 = vmatpush1.msra.mxu0 %v1376
    %2072 = vmatprep.subr.mxu0 0.0
    %2073 = vmatpush1.msra.mxu0 %v1377
    %2074 = vmatprep.subr.mxu0 0.0
    %2075 = vmatpush1.msra.mxu0 %v1378
    %2076 = vmatprep.subr.mxu0 0.0
    %2077 = vmatpush1.msra.mxu0 %v1379
    %2078 = vmatprep.subr.mxu0 0.0
    %2079 = vmatpush1.msra.mxu0 0.0
    %2080 = vmatprep.subr.mxu0 0.0
    %2081 = vmatpush1.msra.mxu0 0.0
    %2082 = vmatprep.subr.mxu0 0.0
    %2083 = vmatpush1.msra.mxu0 0.0
    %2084 = vmatprep.subr.mxu0 0.0
    %2085 = vmatpush1.msra.mxu0 0.0
    %2086 = vmatprep.subr.mxu0 0.0
    %2087 = vmatpush1.msra.mxu0 0.0
    %2088 = vmatprep.subr.mxu0 0.0
    %2089 = vmatpush1.msra.mxu0 0.0
    %2090 = vmatprep.subr.mxu0 0.0
    %2091 = vmatpush1.msra.mxu0 0.0
    %2092 = vmatprep.subr.mxu0 0.0
    %2093 = vmatpush1.msra.mxu0 0.0
    %2094 = vmatprep.subr.mxu0 0.0
    %2095 = vmatpush1.msra.mxu0 0.0
    %2096 = vmatprep.subr.mxu0 0.0
    %2097 = vmatpush1.msra.mxu0 0.0
    %2098 = vmatprep.subr.mxu0 0.0
    %2099 = vmatpush1.msra.mxu0 0.0
    %2100 = vmatprep.subr.mxu0 0.0
    %2101 = vmatpush1.msra.mxu0 0.0
    %2102 = vmatprep.subr.mxu0 0.0
    %2103 = vmatpush1.msra.mxu0 0.0
    %2104 = vmatprep.subr.mxu0 0.0
    %2105 = vmatpush1.msra.mxu0 0.0
    %2106 = vmatprep.subr.mxu0 0.0
    %2107 = vmatpush1.msra.mxu0 0.0
    %2108 = vmatprep.subr.mxu0 0.0
    %2109 = vmatpush1.msra.mxu0 0.0
    %2110 = vmatprep.subr.mxu0 0.0
    %2111 = vmatpush1.msra.mxu0 0.0
    %2112 = vmatprep.subr.mxu0 0.0
    %2113 = vmatpush1.msra.mxu0 0.0
    %2114 = vmatprep.subr.mxu0 0.0
    %2115 = vmatpush1.msra.mxu0 0.0
    %2116 = vmatprep.subr.mxu0 0.0
    %2117 = vmatpush1.msra.mxu0 0.0
    %2118 = vmatprep.subr.mxu0 0.0
    %2119 = vmatpush1.msra.mxu0 0.0
    %2120 = vmatprep.subr.mxu0 0.0
    %2121 = vmatpush1.msra.mxu0 0.0
    %2122 = vmatprep.subr.mxu0 0.0
    %2123 = vmatpush1.msra.mxu0 0.0
    %2124 = vmatprep.subr.mxu0 0.0
    %2125 = vmatpush1.msra.mxu0 0.0
    %2126 = vmatprep.subr.mxu0 0.0
    %2127 = vmatpush1.msra.mxu0 0.0
    %2128 = vmatprep.subr.mxu0 0.0
    %2129 = vmatpush1.msra.mxu0 0.0
    %2130 = vmatprep.subr.mxu0 0.0
    %2131 = vmatpush1.msra.mxu0 0.0
    %2132 = vmatprep.subr.mxu0 0.0
    %2133 = vmatpush1.msra.mxu0 0.0
    %2134 = vmatprep.mubr.f32.mxu0 0.0
    %2135 = vmatmul.mubr.f32.gmra.mrb[0].mxu0 %v2068
    %v2136 = vpop.f32.mrb[0].mxu0
    %v2137 = vadd.f32 0.0, %v2136
    %v2138 = vpop.f32.mrb[0].mxu0
    %2139 = vdwg.mxu0
    %v2141 = vrot.slane %v2137, 3
    %v2142 = vrot.slane %v2137, 4
    %v2145 = vadd.f32 %v1367, %v2141
    %v2146 = vadd.f32 %v1372, %v2142
    %v2147 = vxor.u32 %v2145, 2147483648
    %v2148 = vxor.u32 %v2146, 2147483648
    %v2149 = vmul.f32 %v2147, 1.442695
    %v2150 = vpow.pop %v2149
    %v2151 = vmul.f32 %v2148, 1.442695
    %v2152 = vpow.pop %v2151
    %v2153 = vadd.f32 %v2150, 1.0
    %v2154 = vadd.f32 %v2152, 1.0
    %v2155 = vrcp.pop %v2153
    %v2156 = vmul.f32 1.0, %v2155
    %v2157 = vrcp.pop %v2154
    %v2158 = vmul.f32 1.0, %v2157
    %v2159 = vtanh.pop %v2145
    %v2160 = vtanh.pop %v2146
    %v2163 = vrot.slane %v2047, 7
    %v2164 = vrot.slane %v2048, 7
    %v2167 = vmul.f32 %v2156, %v2163
    %v2168 = vmul.f32 %v2158, %v2164
    %2171 = vrot.lane.b32.xlu0 %v2159, 64
    %v2172 = vpop.permute.xlu0 %2171
    %2173 = vrot.lane.b32.xlu0 %v2160, 64
    %v2174 = vpop.permute.xlu0 %2173
    %v2177 = vmul.f32 %v2156, %v2172
    %v2178 = vmul.f32 %v2158, %v2174
    %2181 = vrot.lane.b32.xlu0 %v2177, 32
    %v2182 = vpop.permute.xlu0 %2181
    %2183 = vrot.lane.b32.xlu0 %v2178, 32
    %v2184 = vpop.permute.xlu0 %2183
    %v2187 = vadd.f32 %v2167, %v2182
    %v2188 = vadd.f32 %v2168, %v2184
    %v2189 = vtanh.pop %v2187
    %v2190 = vtanh.pop %v2188
    %2193 = vrot.lane.b32.xlu0 %v2189, 64
    %v2194 = vpop.permute.xlu0 %2193
    %2195 = vrot.lane.b32.xlu0 %v2190, 64
    %v2196 = vpop.permute.xlu0 %2195
    %v2199 = vmul.f32 %v2156, %v2194
    %v2200 = vmul.f32 %v2158, %v2196
    %v2203 = vrot.slane %v2199, 5
    %v2204 = vrot.slane %v2200, 4
    %v2205 = vsel %vm282, %v2204, %v2203
    %2206 = vrot.lane.b32.xlu0 %v2205, 32
    %v2207 = vpop.permute.xlu0 %2206
    %v2208 = vsel %vm151, %v2207, 0
    %2210 = vmatprep.subr.mxu0 0.0
    %2211 = vmatpush1.msra.mxu0 %v1376
    %2212 = vmatprep.subr.mxu0 0.0
    %2213 = vmatpush1.msra.mxu0 %v1377
    %2214 = vmatprep.subr.mxu0 0.0
    %2215 = vmatpush1.msra.mxu0 %v1378
    %2216 = vmatprep.subr.mxu0 0.0
    %2217 = vmatpush1.msra.mxu0 %v1379
    %2218 = vmatprep.subr.mxu0 0.0
    %2219 = vmatpush1.msra.mxu0 0.0
    %2220 = vmatprep.subr.mxu0 0.0
    %2221 = vmatpush1.msra.mxu0 0.0
    %2222 = vmatprep.subr.mxu0 0.0
    %2223 = vmatpush1.msra.mxu0 0.0
    %2224 = vmatprep.subr.mxu0 0.0
    %2225 = vmatpush1.msra.mxu0 0.0
    %2226 = vmatprep.subr.mxu0 0.0
    %2227 = vmatpush1.msra.mxu0 0.0
    %2228 = vmatprep.subr.mxu0 0.0
    %2229 = vmatpush1.msra.mxu0 0.0
    %2230 = vmatprep.subr.mxu0 0.0
    %2231 = vmatpush1.msra.mxu0 0.0
    %2232 = vmatprep.subr.mxu0 0.0
    %2233 = vmatpush1.msra.mxu0 0.0
    %2234 = vmatprep.subr.mxu0 0.0
    %2235 = vmatpush1.msra.mxu0 0.0
    %2236 = vmatprep.subr.mxu0 0.0
    %2237 = vmatpush1.msra.mxu0 0.0
    %2238 = vmatprep.subr.mxu0 0.0
    %2239 = vmatpush1.msra.mxu0 0.0
    %2240 = vmatprep.subr.mxu0 0.0
    %2241 = vmatpush1.msra.mxu0 0.0
    %2242 = vmatprep.subr.mxu0 0.0
    %2243 = vmatpush1.msra.mxu0 0.0
    %2244 = vmatprep.subr.mxu0 0.0
    %2245 = vmatpush1.msra.mxu0 0.0
    %2246 = vmatprep.subr.mxu0 0.0
    %2247 = vmatpush1.msra.mxu0 0.0
    %2248 = vmatprep.subr.mxu0 0.0
    %2249 = vmatpush1.msra.mxu0 0.0
    %2250 = vmatprep.subr.mxu0 0.0
    %2251 = vmatpush1.msra.mxu0 0.0
    %2252 = vmatprep.subr.mxu0 0.0
    %2253 = vmatpush1.msra.mxu0 0.0
    %2254 = vmatprep.subr.mxu0 0.0
    %2255 = vmatpush1.msra.mxu0 0.0
    %2256 = vmatprep.subr.mxu0 0.0
    %2257 = vmatpush1.msra.mxu0 0.0
    %2258 = vmatprep.subr.mxu0 0.0
    %2259 = vmatpush1.msra.mxu0 0.0
    %2260 = vmatprep.subr.mxu0 0.0
    %2261 = vmatpush1.msra.mxu0 0.0
    %2262 = vmatprep.subr.mxu0 0.0
    %2263 = vmatpush1.msra.mxu0 0.0
    %2264 = vmatprep.subr.mxu0 0.0
    %2265 = vmatpush1.msra.mxu0 0.0
    %2266 = vmatprep.subr.mxu0 0.0
    %2267 = vmatpush1.msra.mxu0 0.0
    %2268 = vmatprep.subr.mxu0 0.0
    %2269 = vmatpush1.msra.mxu0 0.0
    %2270 = vmatprep.subr.mxu0 0.0
    %2271 = vmatpush1.msra.mxu0 0.0
    %2272 = vmatprep.subr.mxu0 0.0
    %2273 = vmatpush1.msra.mxu0 0.0
    %2274 = vmatprep.mubr.f32.mxu0 0.0
    %2275 = vmatmul.mubr.f32.gmra.mrb[0].mxu0 %v2208
    %v2276 = vpop.f32.mrb[0].mxu0
    %v2277 = vadd.f32 0.0, %v2276
    %v2278 = vpop.f32.mrb[0].mxu0
    %2279 = vdwg.mxu0
    %v2281 = vrot.slane %v2277, 2
    %v2282 = vrot.slane %v2277, 3
    %v2285 = vadd.f32 %v1367, %v2281
    %v2286 = vadd.f32 %v1372, %v2282
    %v2287 = vxor.u32 %v2285, 2147483648
    %v2288 = vxor.u32 %v2286, 2147483648
    %v2289 = vmul.f32 %v2287, 1.442695
    %v2290 = vpow.pop %v2289
    %v2291 = vmul.f32 %v2288, 1.442695
    %v2292 = vpow.pop %v2291
    %v2293 = vadd.f32 %v2290, 1.0
    %v2294 = vadd.f32 %v2292, 1.0
    %v2295 = vrcp.pop %v2293
    %v2296 = vmul.f32 1.0, %v2295
    %v2297 = vrcp.pop %v2294
    %v2298 = vmul.f32 1.0, %v2297
    %v2299 = vtanh.pop %v2285
    %v2300 = vtanh.pop %v2286
    %v2303 = vrot.slane %v2187, 7
    %v2304 = vrot.slane %v2188, 7
    %v2307 = vmul.f32 %v2296, %v2303
    %v2308 = vmul.f32 %v2298, %v2304
    %2311 = vrot.lane.b32.xlu0 %v2299, 64
    %v2312 = vpop.permute.xlu0 %2311
    %2313 = vrot.lane.b32.xlu0 %v2300, 64
    %v2314 = vpop.permute.xlu0 %2313
    %v2317 = vmul.f32 %v2296, %v2312
    %v2318 = vmul.f32 %v2298, %v2314
    %2321 = vrot.lane.b32.xlu0 %v2317, 32
    %v2322 = vpop.permute.xlu0 %2321
    %2323 = vrot.lane.b32.xlu0 %v2318, 32
    %v2324 = vpop.permute.xlu0 %2323
    %v2327 = vadd.f32 %v2307, %v2322
    %v2328 = vadd.f32 %v2308, %v2324
    %v2329 = vtanh.pop %v2327
    %v2330 = vtanh.pop %v2328
    %2333 = vrot.lane.b32.xlu0 %v2329, 64
    %v2334 = vpop.permute.xlu0 %2333
    %2335 = vrot.lane.b32.xlu0 %v2330, 64
    %v2336 = vpop.permute.xlu0 %2335
    %v2339 = vmul.f32 %v2296, %v2334
    %v2340 = vmul.f32 %v2298, %v2336
    %v2343 = vrot.slane %v2339, 6
    %v2344 = vrot.slane %v2340, 5
    %v2345 = vsel %vm282, %v2344, %v2343
    %2346 = vrot.lane.b32.xlu0 %v2345, 32
    %v2347 = vpop.permute.xlu0 %2346
    %v2348 = vsel %vm151, %v2347, 0
    %2350 = vmatprep.subr.mxu0 0.0
    %2351 = vmatpush1.msra.mxu0 %v1376
    %2352 = vmatprep.subr.mxu0 0.0
    %2353 = vmatpush1.msra.mxu0 %v1377
    %2354 = vmatprep.subr.mxu0 0.0
    %2355 = vmatpush1.msra.mxu0 %v1378
    %2356 = vmatprep.subr.mxu0 0.0
    %2357 = vmatpush1.msra.mxu0 %v1379
    %2358 = vmatprep.subr.mxu0 0.0
    %2359 = vmatpush1.msra.mxu0 0.0
    %2360 = vmatprep.subr.mxu0 0.0
    %2361 = vmatpush1.msra.mxu0 0.0
    %2362 = vmatprep.subr.mxu0 0.0
    %2363 = vmatpush1.msra.mxu0 0.0
    %2364 = vmatprep.subr.mxu0 0.0
    %2365 = vmatpush1.msra.mxu0 0.0
    %2366 = vmatprep.subr.mxu0 0.0
    %2367 = vmatpush1.msra.mxu0 0.0
    %2368 = vmatprep.subr.mxu0 0.0
    %2369 = vmatpush1.msra.mxu0 0.0
    %2370 = vmatprep.subr.mxu0 0.0
    %2371 = vmatpush1.msra.mxu0 0.0
    %2372 = vmatprep.subr.mxu0 0.0
    %2373 = vmatpush1.msra.mxu0 0.0
    %2374 = vmatprep.subr.mxu0 0.0
    %2375 = vmatpush1.msra.mxu0 0.0
    %2376 = vmatprep.subr.mxu0 0.0
    %2377 = vmatpush1.msra.mxu0 0.0
    %2378 = vmatprep.subr.mxu0 0.0
    %2379 = vmatpush1.msra.mxu0 0.0
    %2380 = vmatprep.subr.mxu0 0.0
    %2381 = vmatpush1.msra.mxu0 0.0
    %2382 = vmatprep.subr.mxu0 0.0
    %2383 = vmatpush1.msra.mxu0 0.0
    %2384 = vmatprep.subr.mxu0 0.0
    %2385 = vmatpush1.msra.mxu0 0.0
    %2386 = vmatprep.subr.mxu0 0.0
    %2387 = vmatpush1.msra.mxu0 0.0
    %2388 = vmatprep.subr.mxu0 0.0
    %2389 = vmatpush1.msra.mxu0 0.0
    %2390 = vmatprep.subr.mxu0 0.0
    %2391 = vmatpush1.msra.mxu0 0.0
    %2392 = vmatprep.subr.mxu0 0.0
    %2393 = vmatpush1.msra.mxu0 0.0
    %2394 = vmatprep.subr.mxu0 0.0
    %2395 = vmatpush1.msra.mxu0 0.0
    %2396 = vmatprep.subr.mxu0 0.0
    %2397 = vmatpush1.msra.mxu0 0.0
    %2398 = vmatprep.subr.mxu0 0.0
    %2399 = vmatpush1.msra.mxu0 0.0
    %2400 = vmatprep.subr.mxu0 0.0
    %2401 = vmatpush1.msra.mxu0 0.0
    %2402 = vmatprep.subr.mxu0 0.0
    %2403 = vmatpush1.msra.mxu0 0.0
    %2404 = vmatprep.subr.mxu0 0.0
    %2405 = vmatpush1.msra.mxu0 0.0
    %2406 = vmatprep.subr.mxu0 0.0
    %2407 = vmatpush1.msra.mxu0 0.0
    %2408 = vmatprep.subr.mxu0 0.0
    %2409 = vmatpush1.msra.mxu0 0.0
    %2410 = vmatprep.subr.mxu0 0.0
    %2411 = vmatpush1.msra.mxu0 0.0
    %2412 = vmatprep.subr.mxu0 0.0
    %2413 = vmatpush1.msra.mxu0 0.0
    %2414 = vmatprep.mubr.f32.mxu0 0.0
    %2415 = vmatmul.mubr.f32.gmra.mrb[0].mxu0 %v2348
    %v2416 = vpop.f32.mrb[0].mxu0
    %v2417 = vadd.f32 0.0, %v2416
    %v2418 = vpop.f32.mrb[0].mxu0
    %2419 = vdwg.mxu0
    %v2421 = vrot.slane %v2417, 1
    %v2422 = vrot.slane %v2417, 2
    %v2425 = vadd.f32 %v1367, %v2421
    %v2426 = vadd.f32 %v1372, %v2422
    %v2427 = vxor.u32 %v2425, 2147483648
    %v2428 = vxor.u32 %v2426, 2147483648
    %v2429 = vmul.f32 %v2427, 1.442695
    %v2430 = vpow.pop %v2429
    %v2431 = vmul.f32 %v2428, 1.442695
    %v2432 = vpow.pop %v2431
    %v2433 = vadd.f32 %v2430, 1.0
    %v2434 = vadd.f32 %v2432, 1.0
    %v2435 = vrcp.pop %v2433
    %v2436 = vmul.f32 1.0, %v2435
    %v2437 = vrcp.pop %v2434
    %v2438 = vmul.f32 1.0, %v2437
    %v2439 = vtanh.pop %v2425
    %v2440 = vtanh.pop %v2426
    %v2443 = vrot.slane %v2327, 7
    %v2444 = vrot.slane %v2328, 7
    %v2447 = vmul.f32 %v2436, %v2443
    %v2448 = vmul.f32 %v2438, %v2444
    %2451 = vrot.lane.b32.xlu0 %v2439, 64
    %v2452 = vpop.permute.xlu0 %2451
    %2453 = vrot.lane.b32.xlu0 %v2440, 64
    %v2454 = vpop.permute.xlu0 %2453
    %v2457 = vmul.f32 %v2436, %v2452
    %v2458 = vmul.f32 %v2438, %v2454
    %2461 = vrot.lane.b32.xlu0 %v2457, 32
    %v2462 = vpop.permute.xlu0 %2461
    %2463 = vrot.lane.b32.xlu0 %v2458, 32
    %v2464 = vpop.permute.xlu0 %2463
    %v2467 = vadd.f32 %v2447, %v2462
    %v2468 = vadd.f32 %v2448, %v2464
    %v2469 = vtanh.pop %v2467
    %v2470 = vtanh.pop %v2468
    %2473 = vrot.lane.b32.xlu0 %v2469, 64
    %v2474 = vpop.permute.xlu0 %2473
    %2475 = vrot.lane.b32.xlu0 %v2470, 64
    %v2476 = vpop.permute.xlu0 %2475
    %v2479 = vmul.f32 %v2436, %v2474
    %v2480 = vmul.f32 %v2438, %v2476
    %v2481 = vsel %vm1257, %v1502, %v1640
    %v2482 = vsel %vm1257, %v1503, %v1641
    %v2483 = vsel %vm1260, %v2481, %v1779
    %v2484 = vsel %vm1260, %v2482, %v1780
    %v2485 = vsel %vm1263, %v2483, %v1919
    %v2486 = vsel %vm1263, %v2484, %v1920
    %v2487 = vsel %vm1266, %v2485, %v2059
    %v2488 = vsel %vm1266, %v2486, %v2060
    %v2489 = vsel %vm1269, %v2487, %v2199
    %v2490 = vsel %vm1269, %v2488, %v2200
    %v2491 = vsel %vm1272, %v2489, %v2339
    %v2492 = vsel %vm1272, %v2490, %v2340
    %v2493 = vsel %vm1275, %v2491, %v2479
    %v2494 = vsel %vm1275, %v2492, %v2480
    %s2495 = scalar_lea.vmem [#allocation2], 32
    %v2496 = vld [vmem:[%s2495] sm:$0xff]
    %v2497 = vld [vmem:[%s2495 + $0x8] sm:$0xff]
    %v2498 = vld [vmem:[%s2495 + $0x10] sm:$0xff]
    %v2499 = vld [vmem:[%s2495 + $0x18] sm:$0xff]
    %s2500 = scalar_lea.vmem %s4, 2
    %v2501 = vld [vmem:[%s2500] sm:$0x1]
    %v2503 = vlaneseq
    %v2504 = vshrl.u32 %v2503, 7
    %v2505 = vsub.s32 0, %v2504
    %v2506 = vrot.slane %v2501, %v2505
    %2510 = vrot.lane.b32.xlu0 %v2493, 32
    %v2511 = vpop.permute.xlu0 %2510
    %2512 = vrot.lane.b32.xlu0 %v2494, 32
    %v2513 = vpop.permute.xlu0 %2512
    %v2514 = vsel %vm151, %v2511, 0
    %v2516 = vsel %vm151, %v2513, 0
    %2518 = vmatprep.subr.mxu0 0.0
    %2519 = vmatpush1.msra.mxu0 %v2496
    %2520 = vmatprep.subr.mxu0 0.0
    %2521 = vmatpush1.msra.mxu0 %v2497
    %2522 = vmatprep.subr.mxu0 0.0
    %2523 = vmatpush1.msra.mxu0 %v2498
    %2524 = vmatprep.subr.mxu0 0.0
    %2525 = vmatpush1.msra.mxu0 %v2499
    %2526 = vmatprep.subr.mxu0 0.0
    %2527 = vmatpush1.msra.mxu0 0.0
    %2528 = vmatprep.subr.mxu0 0.0
    %2529 = vmatpush1.msra.mxu0 0.0
    %2530 = vmatprep.subr.mxu0 0.0
    %2531 = vmatpush1.msra.mxu0 0.0
    %2532 = vmatprep.subr.mxu0 0.0
    %2533 = vmatpush1.msra.mxu0 0.0
    %2534 = vmatprep.subr.mxu0 0.0
    %2535 = vmatpush1.msra.mxu0 0.0
    %2536 = vmatprep.subr.mxu0 0.0
    %2537 = vmatpush1.msra.mxu0 0.0
    %2538 = vmatprep.subr.mxu0 0.0
    %2539 = vmatpush1.msra.mxu0 0.0
    %2540 = vmatprep.subr.mxu0 0.0
    %2541 = vmatpush1.msra.mxu0 0.0
    %2542 = vmatprep.subr.mxu0 0.0
    %2543 = vmatpush1.msra.mxu0 0.0
    %2544 = vmatprep.subr.mxu0 0.0
    %2545 = vmatpush1.msra.mxu0 0.0
    %2546 = vmatprep.subr.mxu0 0.0
    %2547 = vmatpush1.msra.mxu0 0.0
    %2548 = vmatprep.subr.mxu0 0.0
    %2549 = vmatpush1.msra.mxu0 0.0
    %2550 = vmatprep.subr.mxu0 0.0
    %2551 = vmatpush1.msra.mxu0 0.0
    %2552 = vmatprep.subr.mxu0 0.0
    %2553 = vmatpush1.msra.mxu0 0.0
    %2554 = vmatprep.subr.mxu0 0.0
    %2555 = vmatpush1.msra.mxu0 0.0
    %2556 = vmatprep.subr.mxu0 0.0
    %2557 = vmatpush1.msra.mxu0 0.0
    %2558 = vmatprep.subr.mxu0 0.0
    %2559 = vmatpush1.msra.mxu0 0.0
    %2560 = vmatprep.subr.mxu0 0.0
    %2561 = vmatpush1.msra.mxu0 0.0
    %2562 = vmatprep.subr.mxu0 0.0
    %2563 = vmatpush1.msra.mxu0 0.0
    %2564 = vmatprep.subr.mxu0 0.0
    %2565 = vmatpush1.msra.mxu0 0.0
    %2566 = vmatprep.subr.mxu0 0.0
    %2567 = vmatpush1.msra.mxu0 0.0
    %2568 = vmatprep.subr.mxu0 0.0
    %2569 = vmatpush1.msra.mxu0 0.0
    %2570 = vmatprep.subr.mxu0 0.0
    %2571 = vmatpush1.msra.mxu0 0.0
    %2572 = vmatprep.subr.mxu0 0.0
    %2573 = vmatpush1.msra.mxu0 0.0
    %2574 = vmatprep.subr.mxu0 0.0
    %2575 = vmatpush1.msra.mxu0 0.0
    %2576 = vmatprep.subr.mxu0 0.0
    %2577 = vmatpush1.msra.mxu0 0.0
    %2578 = vmatprep.subr.mxu0 0.0
    %2579 = vmatpush1.msra.mxu0 0.0
    %2580 = vmatprep.subr.mxu0 0.0
    %2581 = vmatpush1.msra.mxu0 0.0
    %2582 = vmatprep.mubr.f32.mxu0 0.0
    %2583 = vmatmul.mubr.f32.gmra.mrb[0].mxu0 %v2514
    %v2584 = vpop.f32.mrb[0].mxu0
    %v2585 = vadd.f32 %v2506, %v2584
    %v2586 = vpop.f32.mrb[0].mxu0
    %2587 = vmatprep.mubr.f32.mxu0 0.0
    %2588 = vmatmul.mubr.f32.gmra.mrb[0].mxu0 %v2516
    %v2589 = vpop.f32.mrb[0].mxu0
    %v2590 = vadd.f32 %v2506, %v2589
    %v2591 = vpop.f32.mrb[0].mxu0
    %2592 = vdwg.mxu0
    %s2593 = scalar_lea.vmem [#allocation4], 64
    %v2594 = vld [vmem:[%s2593] sm:$0xff]
    %v2595 = vld [vmem:[%s2593 + $0x8] sm:$0xff]
    %v2596 = vld [vmem:[%s2593 + $0x10] sm:$0xff]
    %v2597 = vld [vmem:[%s2593 + $0x18] sm:$0xff]
    %2598 = vmatprep.subr.mxu0 0.0
    %2599 = vmatpush1.msra.mxu0 %v2594
    %2600 = vmatprep.subr.mxu0 0.0
    %2601 = vmatpush1.msra.mxu0 %v2595
    %2602 = vmatprep.subr.mxu0 0.0
    %2603 = vmatpush1.msra.mxu0 %v2596
    %2604 = vmatprep.subr.mxu0 0.0
    %2605 = vmatpush1.msra.mxu0 %v2597
    %2606 = vmatprep.subr.mxu0 0.0
    %2607 = vmatpush1.msra.mxu0 0.0
    %2608 = vmatprep.subr.mxu0 0.0
    %2609 = vmatpush1.msra.mxu0 0.0
    %2610 = vmatprep.subr.mxu0 0.0
    %2611 = vmatpush1.msra.mxu0 0.0
    %2612 = vmatprep.subr.mxu0 0.0
    %2613 = vmatpush1.msra.mxu0 0.0
    %2614 = vmatprep.subr.mxu0 0.0
    %2615 = vmatpush1.msra.mxu0 0.0
    %2616 = vmatprep.subr.mxu0 0.0
    %2617 = vmatpush1.msra.mxu0 0.0
    %2618 = vmatprep.subr.mxu0 0.0
    %2619 = vmatpush1.msra.mxu0 0.0
    %2620 = vmatprep.subr.mxu0 0.0
    %2621 = vmatpush1.msra.mxu0 0.0
    %2622 = vmatprep.subr.mxu0 0.0
    %2623 = vmatpush1.msra.mxu0 0.0
    %2624 = vmatprep.subr.mxu0 0.0
    %2625 = vmatpush1.msra.mxu0 0.0
    %2626 = vmatprep.subr.mxu0 0.0
    %2627 = vmatpush1.msra.mxu0 0.0
    %2628 = vmatprep.subr.mxu0 0.0
    %2629 = vmatpush1.msra.mxu0 0.0
    %2630 = vmatprep.subr.mxu0 0.0
    %2631 = vmatpush1.msra.mxu0 0.0
    %2632 = vmatprep.subr.mxu0 0.0
    %2633 = vmatpush1.msra.mxu0 0.0
    %2634 = vmatprep.subr.mxu0 0.0
    %2635 = vmatpush1.msra.mxu0 0.0
    %2636 = vmatprep.subr.mxu0 0.0
    %2637 = vmatpush1.msra.mxu0 0.0
    %2638 = vmatprep.subr.mxu0 0.0
    %2639 = vmatpush1.msra.mxu0 0.0
    %2640 = vmatprep.subr.mxu0 0.0
    %2641 = vmatpush1.msra.mxu0 0.0
    %2642 = vmatprep.subr.mxu0 0.0
    %2643 = vmatpush1.msra.mxu0 0.0
    %2644 = vmatprep.subr.mxu0 0.0
    %2645 = vmatpush1.msra.mxu0 0.0
    %2646 = vmatprep.subr.mxu0 0.0
    %2647 = vmatpush1.msra.mxu0 0.0
    %2648 = vmatprep.subr.mxu0 0.0
    %2649 = vmatpush1.msra.mxu0 0.0
    %2650 = vmatprep.subr.mxu0 0.0
    %2651 = vmatpush1.msra.mxu0 0.0
    %2652 = vmatprep.subr.mxu0 0.0
    %2653 = vmatpush1.msra.mxu0 0.0
    %2654 = vmatprep.subr.mxu0 0.0
    %2655 = vmatpush1.msra.mxu0 0.0
    %2656 = vmatprep.subr.mxu0 0.0
    %2657 = vmatpush1.msra.mxu0 0.0
    %2658 = vmatprep.subr.mxu0 0.0
    %2659 = vmatpush1.msra.mxu0 0.0
    %2660 = vmatprep.subr.mxu0 0.0
    %2661 = vmatpush1.msra.mxu0 0.0
    %2662 = vmatprep.mubr.f32.mxu0 0.0
    %2663 = vmatmul.mubr.f32.gmra.mrb[0].mxu0 %v153
    %v2664 = vpop.f32.mrb[0].mxu0
    %v2665 = vadd.f32 0.0, %v2664
    %v2666 = vpop.f32.mrb[0].mxu0
    %2667 = vdwg.mxu0
    %v2669 = vrot.slane %v2665, 1
    %v2672 = vadd.f32 %v2585, %v2665
    %v2673 = vadd.f32 %v2590, %v2669
    %v2674 = vxor.u32 %v2672, 2147483648
    %v2675 = vxor.u32 %v2673, 2147483648
    %v2676 = vmul.f32 %v2674, 1.442695
    %v2677 = vpow.pop %v2676
    %v2678 = vmul.f32 %v2675, 1.442695
    %v2679 = vpow.pop %v2678
    %v2680 = vadd.f32 %v2677, 1.0
    %v2681 = vadd.f32 %v2679, 1.0
    %v2682 = vrcp.pop %v2680
    %v2683 = vmul.f32 1.0, %v2682
    %v2684 = vrcp.pop %v2681
    %v2685 = vmul.f32 1.0, %v2684
    %v2686 = vtanh.pop %v2672
    %v2687 = vtanh.pop %v2673
    %v2688 = vmul.f32 %v2683, 0.0
    %v2689 = vmul.f32 %v2685, 0.0
    %2692 = vrot.lane.b32.xlu0 %v2686, 64
    %v2693 = vpop.permute.xlu0 %2692
    %2694 = vrot.lane.b32.xlu0 %v2687, 64
    %v2695 = vpop.permute.xlu0 %2694
    %v2698 = vmul.f32 %v2683, %v2693
    %v2699 = vmul.f32 %v2685, %v2695
    %2702 = vrot.lane.b32.xlu0 %v2698, 32
    %v2703 = vpop.permute.xlu0 %2702
    %2704 = vrot.lane.b32.xlu0 %v2699, 32
    %v2705 = vpop.permute.xlu0 %2704
    %v2708 = vadd.f32 %v2688, %v2703
    %v2709 = vadd.f32 %v2689, %v2705
    %v2710 = vtanh.pop %v2708
    %v2711 = vtanh.pop %v2709
    %2714 = vrot.lane.b32.xlu0 %v2710, 64
    %v2715 = vpop.permute.xlu0 %2714
    %2716 = vrot.lane.b32.xlu0 %v2711, 64
    %v2717 = vpop.permute.xlu0 %2716
    %v2720 = vmul.f32 %v2683, %v2715
    %v2721 = vmul.f32 %v2685, %v2717
    %v2724 = vrot.slane %v2721, 7
    %v2725 = vsel %vm282, %v2724, %v2720
    %2726 = vrot.lane.b32.xlu0 %v2725, 32
    %v2727 = vpop.permute.xlu0 %2726
    %v2728 = vsel %vm151, %v2727, 0
    %2730 = vmatprep.subr.mxu0 0.0
    %2731 = vmatpush1.msra.mxu0 %v2594
    %2732 = vmatprep.subr.mxu0 0.0
    %2733 = vmatpush1.msra.mxu0 %v2595
    %2734 = vmatprep.subr.mxu0 0.0
    %2735 = vmatpush1.msra.mxu0 %v2596
    %2736 = vmatprep.subr.mxu0 0.0
    %2737 = vmatpush1.msra.mxu0 %v2597
    %2738 = vmatprep.subr.mxu0 0.0
    %2739 = vmatpush1.msra.mxu0 0.0
    %2740 = vmatprep.subr.mxu0 0.0
    %2741 = vmatpush1.msra.mxu0 0.0
    %2742 = vmatprep.subr.mxu0 0.0
    %2743 = vmatpush1.msra.mxu0 0.0
    %2744 = vmatprep.subr.mxu0 0.0
    %2745 = vmatpush1.msra.mxu0 0.0
    %2746 = vmatprep.subr.mxu0 0.0
    %2747 = vmatpush1.msra.mxu0 0.0
    %2748 = vmatprep.subr.mxu0 0.0
    %2749 = vmatpush1.msra.mxu0 0.0
    %2750 = vmatprep.subr.mxu0 0.0
    %2751 = vmatpush1.msra.mxu0 0.0
    %2752 = vmatprep.subr.mxu0 0.0
    %2753 = vmatpush1.msra.mxu0 0.0
    %2754 = vmatprep.subr.mxu0 0.0
    %2755 = vmatpush1.msra.mxu0 0.0
    %2756 = vmatprep.subr.mxu0 0.0
    %2757 = vmatpush1.msra.mxu0 0.0
    %2758 = vmatprep.subr.mxu0 0.0
    %2759 = vmatpush1.msra.mxu0 0.0
    %2760 = vmatprep.subr.mxu0 0.0
    %2761 = vmatpush1.msra.mxu0 0.0
    %2762 = vmatprep.subr.mxu0 0.0
    %2763 = vmatpush1.msra.mxu0 0.0
    %2764 = vmatprep.subr.mxu0 0.0
    %2765 = vmatpush1.msra.mxu0 0.0
    %2766 = vmatprep.subr.mxu0 0.0
    %2767 = vmatpush1.msra.mxu0 0.0
    %2768 = vmatprep.subr.mxu0 0.0
    %2769 = vmatpush1.msra.mxu0 0.0
    %2770 = vmatprep.subr.mxu0 0.0
    %2771 = vmatpush1.msra.mxu0 0.0
    %2772 = vmatprep.subr.mxu0 0.0
    %2773 = vmatpush1.msra.mxu0 0.0
    %2774 = vmatprep.subr.mxu0 0.0
    %2775 = vmatpush1.msra.mxu0 0.0
    %2776 = vmatprep.subr.mxu0 0.0
    %2777 = vmatpush1.msra.mxu0 0.0
    %2778 = vmatprep.subr.mxu0 0.0
    %2779 = vmatpush1.msra.mxu0 0.0
    %2780 = vmatprep.subr.mxu0 0.0
    %2781 = vmatpush1.msra.mxu0 0.0
    %2782 = vmatprep.subr.mxu0 0.0
    %2783 = vmatpush1.msra.mxu0 0.0
    %2784 = vmatprep.subr.mxu0 0.0
    %2785 = vmatpush1.msra.mxu0 0.0
    %2786 = vmatprep.subr.mxu0 0.0
    %2787 = vmatpush1.msra.mxu0 0.0
    %2788 = vmatprep.subr.mxu0 0.0
    %2789 = vmatpush1.msra.mxu0 0.0
    %2790 = vmatprep.subr.mxu0 0.0
    %2791 = vmatpush1.msra.mxu0 0.0
    %2792 = vmatprep.subr.mxu0 0.0
    %2793 = vmatpush1.msra.mxu0 0.0
    %2794 = vmatprep.mubr.f32.mxu0 0.0
    %2795 = vmatmul.mubr.f32.gmra.mrb[0].mxu0 %v2728
    %v2796 = vpop.f32.mrb[0].mxu0
    %v2797 = vadd.f32 0.0, %v2796
    %v2798 = vpop.f32.mrb[0].mxu0
    %2799 = vdwg.mxu0
    %v2801 = vrot.slane %v2797, 7
    %v2804 = vadd.f32 %v2585, %v2801
    %v2805 = vadd.f32 %v2590, %v2797
    %v2806 = vxor.u32 %v2804, 2147483648
    %v2807 = vxor.u32 %v2805, 2147483648
    %v2808 = vmul.f32 %v2806, 1.442695
    %v2809 = vpow.pop %v2808
    %v2810 = vmul.f32 %v2807, 1.442695
    %v2811 = vpow.pop %v2810
    %v2812 = vadd.f32 %v2809, 1.0
    %v2813 = vadd.f32 %v2811, 1.0
    %v2814 = vrcp.pop %v2812
    %v2815 = vmul.f32 1.0, %v2814
    %v2816 = vrcp.pop %v2813
    %v2817 = vmul.f32 1.0, %v2816
    %v2818 = vtanh.pop %v2804
    %v2819 = vtanh.pop %v2805
    %v2822 = vrot.slane %v2708, 7
    %v2823 = vrot.slane %v2709, 7
    %v2826 = vmul.f32 %v2815, %v2822
    %v2827 = vmul.f32 %v2817, %v2823
    %2830 = vrot.lane.b32.xlu0 %v2818, 64
    %v2831 = vpop.permute.xlu0 %2830
    %2832 = vrot.lane.b32.xlu0 %v2819, 64
    %v2833 = vpop.permute.xlu0 %2832
    %v2836 = vmul.f32 %v2815, %v2831
    %v2837 = vmul.f32 %v2817, %v2833
    %2840 = vrot.lane.b32.xlu0 %v2836, 32
    %v2841 = vpop.permute.xlu0 %2840
    %2842 = vrot.lane.b32.xlu0 %v2837, 32
    %v2843 = vpop.permute.xlu0 %2842
    %v2846 = vadd.f32 %v2826, %v2841
    %v2847 = vadd.f32 %v2827, %v2843
    %v2848 = vtanh.pop %v2846
    %v2849 = vtanh.pop %v2847
    %2852 = vrot.lane.b32.xlu0 %v2848, 64
    %v2853 = vpop.permute.xlu0 %2852
    %2854 = vrot.lane.b32.xlu0 %v2849, 64
    %v2855 = vpop.permute.xlu0 %2854
    %v2858 = vmul.f32 %v2815, %v2853
    %v2859 = vmul.f32 %v2817, %v2855
    %v2862 = vrot.slane %v2858, 1
    %v2863 = vsel %vm282, %v2859, %v2862
    %2864 = vrot.lane.b32.xlu0 %v2863, 32
    %v2865 = vpop.permute.xlu0 %2864
    %v2866 = vsel %vm151, %v2865, 0
    %2868 = vmatprep.subr.mxu0 0.0
    %2869 = vmatpush1.msra.mxu0 %v2594
    %2870 = vmatprep.subr.mxu0 0.0
    %2871 = vmatpush1.msra.mxu0 %v2595
    %2872 = vmatprep.subr.mxu0 0.0
    %2873 = vmatpush1.msra.mxu0 %v2596
    %2874 = vmatprep.subr.mxu0 0.0
    %2875 = vmatpush1.msra.mxu0 %v2597
    %2876 = vmatprep.subr.mxu0 0.0
    %2877 = vmatpush1.msra.mxu0 0.0
    %2878 = vmatprep.subr.mxu0 0.0
    %2879 = vmatpush1.msra.mxu0 0.0
    %2880 = vmatprep.subr.mxu0 0.0
    %2881 = vmatpush1.msra.mxu0 0.0
    %2882 = vmatprep.subr.mxu0 0.0
    %2883 = vmatpush1.msra.mxu0 0.0
    %2884 = vmatprep.subr.mxu0 0.0
    %2885 = vmatpush1.msra.mxu0 0.0
    %2886 = vmatprep.subr.mxu0 0.0
    %2887 = vmatpush1.msra.mxu0 0.0
    %2888 = vmatprep.subr.mxu0 0.0
    %2889 = vmatpush1.msra.mxu0 0.0
    %2890 = vmatprep.subr.mxu0 0.0
    %2891 = vmatpush1.msra.mxu0 0.0
    %2892 = vmatprep.subr.mxu0 0.0
    %2893 = vmatpush1.msra.mxu0 0.0
    %2894 = vmatprep.subr.mxu0 0.0
    %2895 = vmatpush1.msra.mxu0 0.0
    %2896 = vmatprep.subr.mxu0 0.0
    %2897 = vmatpush1.msra.mxu0 0.0
    %2898 = vmatprep.subr.mxu0 0.0
    %2899 = vmatpush1.msra.mxu0 0.0
    %2900 = vmatprep.subr.mxu0 0.0
    %2901 = vmatpush1.msra.mxu0 0.0
    %2902 = vmatprep.subr.mxu0 0.0
    %2903 = vmatpush1.msra.mxu0 0.0
    %2904 = vmatprep.subr.mxu0 0.0
    %2905 = vmatpush1.msra.mxu0 0.0
    %2906 = vmatprep.subr.mxu0 0.0
    %2907 = vmatpush1.msra.mxu0 0.0
    %2908 = vmatprep.subr.mxu0 0.0
    %2909 = vmatpush1.msra.mxu0 0.0
    %2910 = vmatprep.subr.mxu0 0.0
    %2911 = vmatpush1.msra.mxu0 0.0
    %2912 = vmatprep.subr.mxu0 0.0
    %2913 = vmatpush1.msra.mxu0 0.0
    %2914 = vmatprep.subr.mxu0 0.0
    %2915 = vmatpush1.msra.mxu0 0.0
    %2916 = vmatprep.subr.mxu0 0.0
    %2917 = vmatpush1.msra.mxu0 0.0
    %2918 = vmatprep.subr.mxu0 0.0
    %2919 = vmatpush1.msra.mxu0 0.0
    %2920 = vmatprep.subr.mxu0 0.0
    %2921 = vmatpush1.msra.mxu0 0.0
    %2922 = vmatprep.subr.mxu0 0.0
    %2923 = vmatpush1.msra.mxu0 0.0
    %2924 = vmatprep.subr.mxu0 0.0
    %2925 = vmatpush1.msra.mxu0 0.0
    %2926 = vmatprep.subr.mxu0 0.0
    %2927 = vmatpush1.msra.mxu0 0.0
    %2928 = vmatprep.subr.mxu0 0.0
    %2929 = vmatpush1.msra.mxu0 0.0
    %2930 = vmatprep.subr.mxu0 0.0
    %2931 = vmatpush1.msra.mxu0 0.0
    %2932 = vmatprep.mubr.f32.mxu0 0.0
    %2933 = vmatmul.mubr.f32.gmra.mrb[0].mxu0 %v2866
    %v2934 = vpop.f32.mrb[0].mxu0
    %v2935 = vadd.f32 0.0, %v2934
    %v2936 = vpop.f32.mrb[0].mxu0
    %2937 = vdwg.mxu0
    %v2939 = vrot.slane %v2935, 6
    %v2940 = vrot.slane %v2935, 7
    %v2943 = vadd.f32 %v2585, %v2939
    %v2944 = vadd.f32 %v2590, %v2940
    %v2945 = vxor.u32 %v2943, 2147483648
    %v2946 = vxor.u32 %v2944, 2147483648
    %v2947 = vmul.f32 %v2945, 1.442695
    %v2948 = vpow.pop %v2947
    %v2949 = vmul.f32 %v2946, 1.442695
    %v2950 = vpow.pop %v2949
    %v2951 = vadd.f32 %v2948, 1.0
    %v2952 = vadd.f32 %v2950, 1.0
    %v2953 = vrcp.pop %v2951
    %v2954 = vmul.f32 1.0, %v2953
    %v2955 = vrcp.pop %v2952
    %v2956 = vmul.f32 1.0, %v2955
    %v2957 = vtanh.pop %v2943
    %v2958 = vtanh.pop %v2944
    %v2961 = vrot.slane %v2846, 7
    %v2962 = vrot.slane %v2847, 7
    %v2965 = vmul.f32 %v2954, %v2961
    %v2966 = vmul.f32 %v2956, %v2962
    %2969 = vrot.lane.b32.xlu0 %v2957, 64
    %v2970 = vpop.permute.xlu0 %2969
    %2971 = vrot.lane.b32.xlu0 %v2958, 64
    %v2972 = vpop.permute.xlu0 %2971
    %v2975 = vmul.f32 %v2954, %v2970
    %v2976 = vmul.f32 %v2956, %v2972
    %2979 = vrot.lane.b32.xlu0 %v2975, 32
    %v2980 = vpop.permute.xlu0 %2979
    %2981 = vrot.lane.b32.xlu0 %v2976, 32
    %v2982 = vpop.permute.xlu0 %2981
    %v2985 = vadd.f32 %v2965, %v2980
    %v2986 = vadd.f32 %v2966, %v2982
    %v2987 = vtanh.pop %v2985
    %v2988 = vtanh.pop %v2986
    %2991 = vrot.lane.b32.xlu0 %v2987, 64
    %v2992 = vpop.permute.xlu0 %2991
    %2993 = vrot.lane.b32.xlu0 %v2988, 64
    %v2994 = vpop.permute.xlu0 %2993
    %v2997 = vmul.f32 %v2954, %v2992
    %v2998 = vmul.f32 %v2956, %v2994
    %v3001 = vrot.slane %v2997, 2
    %v3002 = vrot.slane %v2998, 1
    %v3003 = vsel %vm282, %v3002, %v3001
    %3004 = vrot.lane.b32.xlu0 %v3003, 32
    %v3005 = vpop.permute.xlu0 %3004
    %v3006 = vsel %vm151, %v3005, 0
    %3008 = vmatprep.subr.mxu0 0.0
    %3009 = vmatpush1.msra.mxu0 %v2594
    %3010 = vmatprep.subr.mxu0 0.0
    %3011 = vmatpush1.msra.mxu0 %v2595
    %3012 = vmatprep.subr.mxu0 0.0
    %3013 = vmatpush1.msra.mxu0 %v2596
    %3014 = vmatprep.subr.mxu0 0.0
    %3015 = vmatpush1.msra.mxu0 %v2597
    %3016 = vmatprep.subr.mxu0 0.0
    %3017 = vmatpush1.msra.mxu0 0.0
    %3018 = vmatprep.subr.mxu0 0.0
    %3019 = vmatpush1.msra.mxu0 0.0
    %3020 = vmatprep.subr.mxu0 0.0
    %3021 = vmatpush1.msra.mxu0 0.0
    %3022 = vmatprep.subr.mxu0 0.0
    %3023 = vmatpush1.msra.mxu0 0.0
    %3024 = vmatprep.subr.mxu0 0.0
    %3025 = vmatpush1.msra.mxu0 0.0
    %3026 = vmatprep.subr.mxu0 0.0
    %3027 = vmatpush1.msra.mxu0 0.0
    %3028 = vmatprep.subr.mxu0 0.0
    %3029 = vmatpush1.msra.mxu0 0.0
    %3030 = vmatprep.subr.mxu0 0.0
    %3031 = vmatpush1.msra.mxu0 0.0
    %3032 = vmatprep.subr.mxu0 0.0
    %3033 = vmatpush1.msra.mxu0 0.0
    %3034 = vmatprep.subr.mxu0 0.0
    %3035 = vmatpush1.msra.mxu0 0.0
    %3036 = vmatprep.subr.mxu0 0.0
    %3037 = vmatpush1.msra.mxu0 0.0
    %3038 = vmatprep.subr.mxu0 0.0
    %3039 = vmatpush1.msra.mxu0 0.0
    %3040 = vmatprep.subr.mxu0 0.0
    %3041 = vmatpush1.msra.mxu0 0.0
    %3042 = vmatprep.subr.mxu0 0.0
    %3043 = vmatpush1.msra.mxu0 0.0
    %3044 = vmatprep.subr.mxu0 0.0
    %3045 = vmatpush1.msra.mxu0 0.0
    %3046 = vmatprep.subr.mxu0 0.0
    %3047 = vmatpush1.msra.mxu0 0.0
    %3048 = vmatprep.subr.mxu0 0.0
    %3049 = vmatpush1.msra.mxu0 0.0
    %3050 = vmatprep.subr.mxu0 0.0
    %3051 = vmatpush1.msra.mxu0 0.0
    %3052 = vmatprep.subr.mxu0 0.0
    %3053 = vmatpush1.msra.mxu0 0.0
    %3054 = vmatprep.subr.mxu0 0.0
    %3055 = vmatpush1.msra.mxu0 0.0
    %3056 = vmatprep.subr.mxu0 0.0
    %3057 = vmatpush1.msra.mxu0 0.0
    %3058 = vmatprep.subr.mxu0 0.0
    %3059 = vmatpush1.msra.mxu0 0.0
    %3060 = vmatprep.subr.mxu0 0.0
    %3061 = vmatpush1.msra.mxu0 0.0
    %3062 = vmatprep.subr.mxu0 0.0
    %3063 = vmatpush1.msra.mxu0 0.0
    %3064 = vmatprep.subr.mxu0 0.0
    %3065 = vmatpush1.msra.mxu0 0.0
    %3066 = vmatprep.subr.mxu0 0.0
    %3067 = vmatpush1.msra.mxu0 0.0
    %3068 = vmatprep.subr.mxu0 0.0
    %3069 = vmatpush1.msra.mxu0 0.0
    %3070 = vmatprep.subr.mxu0 0.0
    %3071 = vmatpush1.msra.mxu0 0.0
    %3072 = vmatprep.mubr.f32.mxu0 0.0
    %3073 = vmatmul.mubr.f32.gmra.mrb[0].mxu0 %v3006
    %v3074 = vpop.f32.mrb[0].mxu0
    %v3075 = vadd.f32 0.0, %v3074
    %v3076 = vpop.f32.mrb[0].mxu0
    %3077 = vdwg.mxu0
    %v3079 = vrot.slane %v3075, 5
    %v3080 = vrot.slane %v3075, 6
    %v3083 = vadd.f32 %v2585, %v3079
    %v3084 = vadd.f32 %v2590, %v3080
    %v3085 = vxor.u32 %v3083, 2147483648
    %v3086 = vxor.u32 %v3084, 2147483648
    %v3087 = vmul.f32 %v3085, 1.442695
    %v3088 = vpow.pop %v3087
    %v3089 = vmul.f32 %v3086, 1.442695
    %v3090 = vpow.pop %v3089
    %v3091 = vadd.f32 %v3088, 1.0
    %v3092 = vadd.f32 %v3090, 1.0
    %v3093 = vrcp.pop %v3091
    %v3094 = vmul.f32 1.0, %v3093
    %v3095 = vrcp.pop %v3092
    %v3096 = vmul.f32 1.0, %v3095
    %v3097 = vtanh.pop %v3083
    %v3098 = vtanh.pop %v3084
    %v3101 = vrot.slane %v2985, 7
    %v3102 = vrot.slane %v2986, 7
    %v3105 = vmul.f32 %v3094, %v3101
    %v3106 = vmul.f32 %v3096, %v3102
    %3109 = vrot.lane.b32.xlu0 %v3097, 64
    %v3110 = vpop.permute.xlu0 %3109
    %3111 = vrot.lane.b32.xlu0 %v3098, 64
    %v3112 = vpop.permute.xlu0 %3111
    %v3115 = vmul.f32 %v3094, %v3110
    %v3116 = vmul.f32 %v3096, %v3112
    %3119 = vrot.lane.b32.xlu0 %v3115, 32
    %v3120 = vpop.permute.xlu0 %3119
    %3121 = vrot.lane.b32.xlu0 %v3116, 32
    %v3122 = vpop.permute.xlu0 %3121
    %v3125 = vadd.f32 %v3105, %v3120
    %v3126 = vadd.f32 %v3106, %v3122
    %v3127 = vtanh.pop %v3125
    %v3128 = vtanh.pop %v3126
    %3131 = vrot.lane.b32.xlu0 %v3127, 64
    %v3132 = vpop.permute.xlu0 %3131
    %3133 = vrot.lane.b32.xlu0 %v3128, 64
    %v3134 = vpop.permute.xlu0 %3133
    %v3137 = vmul.f32 %v3094, %v3132
    %v3138 = vmul.f32 %v3096, %v3134
    %v3141 = vrot.slane %v3137, 3
    %v3142 = vrot.slane %v3138, 2
    %v3143 = vsel %vm282, %v3142, %v3141
    %3144 = vrot.lane.b32.xlu0 %v3143, 32
    %v3145 = vpop.permute.xlu0 %3144
    %v3146 = vsel %vm151, %v3145, 0
    %3148 = vmatprep.subr.mxu0 0.0
    %3149 = vmatpush1.msra.mxu0 %v2594
    %3150 = vmatprep.subr.mxu0 0.0
    %3151 = vmatpush1.msra.mxu0 %v2595
    %3152 = vmatprep.subr.mxu0 0.0
    %3153 = vmatpush1.msra.mxu0 %v2596
    %3154 = vmatprep.subr.mxu0 0.0
    %3155 = vmatpush1.msra.mxu0 %v2597
    %3156 = vmatprep.subr.mxu0 0.0
    %3157 = vmatpush1.msra.mxu0 0.0
    %3158 = vmatprep.subr.mxu0 0.0
    %3159 = vmatpush1.msra.mxu0 0.0
    %3160 = vmatprep.subr.mxu0 0.0
    %3161 = vmatpush1.msra.mxu0 0.0
    %3162 = vmatprep.subr.mxu0 0.0
    %3163 = vmatpush1.msra.mxu0 0.0
    %3164 = vmatprep.subr.mxu0 0.0
    %3165 = vmatpush1.msra.mxu0 0.0
    %3166 = vmatprep.subr.mxu0 0.0
    %3167 = vmatpush1.msra.mxu0 0.0
    %3168 = vmatprep.subr.mxu0 0.0
    %3169 = vmatpush1.msra.mxu0 0.0
    %3170 = vmatprep.subr.mxu0 0.0
    %3171 = vmatpush1.msra.mxu0 0.0
    %3172 = vmatprep.subr.mxu0 0.0
    %3173 = vmatpush1.msra.mxu0 0.0
    %3174 = vmatprep.subr.mxu0 0.0
    %3175 = vmatpush1.msra.mxu0 0.0
    %3176 = vmatprep.subr.mxu0 0.0
    %3177 = vmatpush1.msra.mxu0 0.0
    %3178 = vmatprep.subr.mxu0 0.0
    %3179 = vmatpush1.msra.mxu0 0.0
    %3180 = vmatprep.subr.mxu0 0.0
    %3181 = vmatpush1.msra.mxu0 0.0
    %3182 = vmatprep.subr.mxu0 0.0
    %3183 = vmatpush1.msra.mxu0 0.0
    %3184 = vmatprep.subr.mxu0 0.0
    %3185 = vmatpush1.msra.mxu0 0.0
    %3186 = vmatprep.subr.mxu0 0.0
    %3187 = vmatpush1.msra.mxu0 0.0
    %3188 = vmatprep.subr.mxu0 0.0
    %3189 = vmatpush1.msra.mxu0 0.0
    %3190 = vmatprep.subr.mxu0 0.0
    %3191 = vmatpush1.msra.mxu0 0.0
    %3192 = vmatprep.subr.mxu0 0.0
    %3193 = vmatpush1.msra.mxu0 0.0
    %3194 = vmatprep.subr.mxu0 0.0
    %3195 = vmatpush1.msra.mxu0 0.0
    %3196 = vmatprep.subr.mxu0 0.0
    %3197 = vmatpush1.msra.mxu0 0.0
    %3198 = vmatprep.subr.mxu0 0.0
    %3199 = vmatpush1.msra.mxu0 0.0
    %3200 = vmatprep.subr.mxu0 0.0
    %3201 = vmatpush1.msra.mxu0 0.0
    %3202 = vmatprep.subr.mxu0 0.0
    %3203 = vmatpush1.msra.mxu0 0.0
    %3204 = vmatprep.subr.mxu0 0.0
    %3205 = vmatpush1.msra.mxu0 0.0
    %3206 = vmatprep.subr.mxu0 0.0
    %3207 = vmatpush1.msra.mxu0 0.0
    %3208 = vmatprep.subr.mxu0 0.0
    %3209 = vmatpush1.msra.mxu0 0.0
    %3210 = vmatprep.subr.mxu0 0.0
    %3211 = vmatpush1.msra.mxu0 0.0
    %3212 = vmatprep.mubr.f32.mxu0 0.0
    %3213 = vmatmul.mubr.f32.gmra.mrb[0].mxu0 %v3146
    %v3214 = vpop.f32.mrb[0].mxu0
    %v3215 = vadd.f32 0.0, %v3214
    %v3216 = vpop.f32.mrb[0].mxu0
    %3217 = vdwg.mxu0
    %v3219 = vrot.slane %v3215, 4
    %v3220 = vrot.slane %v3215, 5
    %v3223 = vadd.f32 %v2585, %v3219
    %v3224 = vadd.f32 %v2590, %v3220
    %v3225 = vxor.u32 %v3223, 2147483648
    %v3226 = vxor.u32 %v3224, 2147483648
    %v3227 = vmul.f32 %v3225, 1.442695
    %v3228 = vpow.pop %v3227
    %v3229 = vmul.f32 %v3226, 1.442695
    %v3230 = vpow.pop %v3229
    %v3231 = vadd.f32 %v3228, 1.0
    %v3232 = vadd.f32 %v3230, 1.0
    %v3233 = vrcp.pop %v3231
    %v3234 = vmul.f32 1.0, %v3233
    %v3235 = vrcp.pop %v3232
    %v3236 = vmul.f32 1.0, %v3235
    %v3237 = vtanh.pop %v3223
    %v3238 = vtanh.pop %v3224
    %v3241 = vrot.slane %v3125, 7
    %v3242 = vrot.slane %v3126, 7
    %v3245 = vmul.f32 %v3234, %v3241
    %v3246 = vmul.f32 %v3236, %v3242
    %3249 = vrot.lane.b32.xlu0 %v3237, 64
    %v3250 = vpop.permute.xlu0 %3249
    %3251 = vrot.lane.b32.xlu0 %v3238, 64
    %v3252 = vpop.permute.xlu0 %3251
    %v3255 = vmul.f32 %v3234, %v3250
    %v3256 = vmul.f32 %v3236, %v3252
    %3259 = vrot.lane.b32.xlu0 %v3255, 32
    %v3260 = vpop.permute.xlu0 %3259
    %3261 = vrot.lane.b32.xlu0 %v3256, 32
    %v3262 = vpop.permute.xlu0 %3261
    %v3265 = vadd.f32 %v3245, %v3260
    %v3266 = vadd.f32 %v3246, %v3262
    %v3267 = vtanh.pop %v3265
    %v3268 = vtanh.pop %v3266
    %3271 = vrot.lane.b32.xlu0 %v3267, 64
    %v3272 = vpop.permute.xlu0 %3271
    %3273 = vrot.lane.b32.xlu0 %v3268, 64
    %v3274 = vpop.permute.xlu0 %3273
    %v3277 = vmul.f32 %v3234, %v3272
    %v3278 = vmul.f32 %v3236, %v3274
    %v3281 = vrot.slane %v3277, 4
    %v3282 = vrot.slane %v3278, 3
    %v3283 = vsel %vm282, %v3282, %v3281
    %3284 = vrot.lane.b32.xlu0 %v3283, 32
    %v3285 = vpop.permute.xlu0 %3284
    %v3286 = vsel %vm151, %v3285, 0
    %3288 = vmatprep.subr.mxu0 0.0
    %3289 = vmatpush1.msra.mxu0 %v2594
    %3290 = vmatprep.subr.mxu0 0.0
    %3291 = vmatpush1.msra.mxu0 %v2595
    %3292 = vmatprep.subr.mxu0 0.0
    %3293 = vmatpush1.msra.mxu0 %v2596
    %3294 = vmatprep.subr.mxu0 0.0
    %3295 = vmatpush1.msra.mxu0 %v2597
    %3296 = vmatprep.subr.mxu0 0.0
    %3297 = vmatpush1.msra.mxu0 0.0
    %3298 = vmatprep.subr.mxu0 0.0
    %3299 = vmatpush1.msra.mxu0 0.0
    %3300 = vmatprep.subr.mxu0 0.0
    %3301 = vmatpush1.msra.mxu0 0.0
    %3302 = vmatprep.subr.mxu0 0.0
    %3303 = vmatpush1.msra.mxu0 0.0
    %3304 = vmatprep.subr.mxu0 0.0
    %3305 = vmatpush1.msra.mxu0 0.0
    %3306 = vmatprep.subr.mxu0 0.0
    %3307 = vmatpush1.msra.mxu0 0.0
    %3308 = vmatprep.subr.mxu0 0.0
    %3309 = vmatpush1.msra.mxu0 0.0
    %3310 = vmatprep.subr.mxu0 0.0
    %3311 = vmatpush1.msra.mxu0 0.0
    %3312 = vmatprep.subr.mxu0 0.0
    %3313 = vmatpush1.msra.mxu0 0.0
    %3314 = vmatprep.subr.mxu0 0.0
    %3315 = vmatpush1.msra.mxu0 0.0
    %3316 = vmatprep.subr.mxu0 0.0
    %3317 = vmatpush1.msra.mxu0 0.0
    %3318 = vmatprep.subr.mxu0 0.0
    %3319 = vmatpush1.msra.mxu0 0.0
    %3320 = vmatprep.subr.mxu0 0.0
    %3321 = vmatpush1.msra.mxu0 0.0
    %3322 = vmatprep.subr.mxu0 0.0
    %3323 = vmatpush1.msra.mxu0 0.0
    %3324 = vmatprep.subr.mxu0 0.0
    %3325 = vmatpush1.msra.mxu0 0.0
    %3326 = vmatprep.subr.mxu0 0.0
    %3327 = vmatpush1.msra.mxu0 0.0
    %3328 = vmatprep.subr.mxu0 0.0
    %3329 = vmatpush1.msra.mxu0 0.0
    %3330 = vmatprep.subr.mxu0 0.0
    %3331 = vmatpush1.msra.mxu0 0.0
    %3332 = vmatprep.subr.mxu0 0.0
    %3333 = vmatpush1.msra.mxu0 0.0
    %3334 = vmatprep.subr.mxu0 0.0
    %3335 = vmatpush1.msra.mxu0 0.0
    %3336 = vmatprep.subr.mxu0 0.0
    %3337 = vmatpush1.msra.mxu0 0.0
    %3338 = vmatprep.subr.mxu0 0.0
    %3339 = vmatpush1.msra.mxu0 0.0
    %3340 = vmatprep.subr.mxu0 0.0
    %3341 = vmatpush1.msra.mxu0 0.0
    %3342 = vmatprep.subr.mxu0 0.0
    %3343 = vmatpush1.msra.mxu0 0.0
    %3344 = vmatprep.subr.mxu0 0.0
    %3345 = vmatpush1.msra.mxu0 0.0
    %3346 = vmatprep.subr.mxu0 0.0
    %3347 = vmatpush1.msra.mxu0 0.0
    %3348 = vmatprep.subr.mxu0 0.0
    %3349 = vmatpush1.msra.mxu0 0.0
    %3350 = vmatprep.subr.mxu0 0.0
    %3351 = vmatpush1.msra.mxu0 0.0
    %3352 = vmatprep.mubr.f32.mxu0 0.0
    %3353 = vmatmul.mubr.f32.gmra.mrb[0].mxu0 %v3286
    %v3354 = vpop.f32.mrb[0].mxu0
    %v3355 = vadd.f32 0.0, %v3354
    %v3356 = vpop.f32.mrb[0].mxu0
    %3357 = vdwg.mxu0
    %v3359 = vrot.slane %v3355, 3
    %v3360 = vrot.slane %v3355, 4
    %v3363 = vadd.f32 %v2585, %v3359
    %v3364 = vadd.f32 %v2590, %v3360
    %v3365 = vxor.u32 %v3363, 2147483648
    %v3366 = vxor.u32 %v3364, 2147483648
    %v3367 = vmul.f32 %v3365, 1.442695
    %v3368 = vpow.pop %v3367
    %v3369 = vmul.f32 %v3366, 1.442695
    %v3370 = vpow.pop %v3369
    %v3371 = vadd.f32 %v3368, 1.0
    %v3372 = vadd.f32 %v3370, 1.0
    %v3373 = vrcp.pop %v3371
    %v3374 = vmul.f32 1.0, %v3373
    %v3375 = vrcp.pop %v3372
    %v3376 = vmul.f32 1.0, %v3375
    %v3377 = vtanh.pop %v3363
    %v3378 = vtanh.pop %v3364
    %v3381 = vrot.slane %v3265, 7
    %v3382 = vrot.slane %v3266, 7
    %v3385 = vmul.f32 %v3374, %v3381
    %v3386 = vmul.f32 %v3376, %v3382
    %3389 = vrot.lane.b32.xlu0 %v3377, 64
    %v3390 = vpop.permute.xlu0 %3389
    %3391 = vrot.lane.b32.xlu0 %v3378, 64
    %v3392 = vpop.permute.xlu0 %3391
    %v3395 = vmul.f32 %v3374, %v3390
    %v3396 = vmul.f32 %v3376, %v3392
    %3399 = vrot.lane.b32.xlu0 %v3395, 32
    %v3400 = vpop.permute.xlu0 %3399
    %3401 = vrot.lane.b32.xlu0 %v3396, 32
    %v3402 = vpop.permute.xlu0 %3401
    %v3405 = vadd.f32 %v3385, %v3400
    %v3406 = vadd.f32 %v3386, %v3402
    %v3407 = vtanh.pop %v3405
    %v3408 = vtanh.pop %v3406
    %3411 = vrot.lane.b32.xlu0 %v3407, 64
    %v3412 = vpop.permute.xlu0 %3411
    %3413 = vrot.lane.b32.xlu0 %v3408, 64
    %v3414 = vpop.permute.xlu0 %3413
    %v3417 = vmul.f32 %v3374, %v3412
    %v3418 = vmul.f32 %v3376, %v3414
    %v3421 = vrot.slane %v3417, 5
    %v3422 = vrot.slane %v3418, 4
    %v3423 = vsel %vm282, %v3422, %v3421
    %3424 = vrot.lane.b32.xlu0 %v3423, 32
    %v3425 = vpop.permute.xlu0 %3424
    %v3426 = vsel %vm151, %v3425, 0
    %3428 = vmatprep.subr.mxu0 0.0
    %3429 = vmatpush1.msra.mxu0 %v2594
    %3430 = vmatprep.subr.mxu0 0.0
    %3431 = vmatpush1.msra.mxu0 %v2595
    %3432 = vmatprep.subr.mxu0 0.0
    %3433 = vmatpush1.msra.mxu0 %v2596
    %3434 = vmatprep.subr.mxu0 0.0
    %3435 = vmatpush1.msra.mxu0 %v2597
    %3436 = vmatprep.subr.mxu0 0.0
    %3437 = vmatpush1.msra.mxu0 0.0
    %3438 = vmatprep.subr.mxu0 0.0
    %3439 = vmatpush1.msra.mxu0 0.0
    %3440 = vmatprep.subr.mxu0 0.0
    %3441 = vmatpush1.msra.mxu0 0.0
    %3442 = vmatprep.subr.mxu0 0.0
    %3443 = vmatpush1.msra.mxu0 0.0
    %3444 = vmatprep.subr.mxu0 0.0
    %3445 = vmatpush1.msra.mxu0 0.0
    %3446 = vmatprep.subr.mxu0 0.0
    %3447 = vmatpush1.msra.mxu0 0.0
    %3448 = vmatprep.subr.mxu0 0.0
    %3449 = vmatpush1.msra.mxu0 0.0
    %3450 = vmatprep.subr.mxu0 0.0
    %3451 = vmatpush1.msra.mxu0 0.0
    %3452 = vmatprep.subr.mxu0 0.0
    %3453 = vmatpush1.msra.mxu0 0.0
    %3454 = vmatprep.subr.mxu0 0.0
    %3455 = vmatpush1.msra.mxu0 0.0
    %3456 = vmatprep.subr.mxu0 0.0
    %3457 = vmatpush1.msra.mxu0 0.0
    %3458 = vmatprep.subr.mxu0 0.0
    %3459 = vmatpush1.msra.mxu0 0.0
    %3460 = vmatprep.subr.mxu0 0.0
    %3461 = vmatpush1.msra.mxu0 0.0
    %3462 = vmatprep.subr.mxu0 0.0
    %3463 = vmatpush1.msra.mxu0 0.0
    %3464 = vmatprep.subr.mxu0 0.0
    %3465 = vmatpush1.msra.mxu0 0.0
    %3466 = vmatprep.subr.mxu0 0.0
    %3467 = vmatpush1.msra.mxu0 0.0
    %3468 = vmatprep.subr.mxu0 0.0
    %3469 = vmatpush1.msra.mxu0 0.0
    %3470 = vmatprep.subr.mxu0 0.0
    %3471 = vmatpush1.msra.mxu0 0.0
    %3472 = vmatprep.subr.mxu0 0.0
    %3473 = vmatpush1.msra.mxu0 0.0
    %3474 = vmatprep.subr.mxu0 0.0
    %3475 = vmatpush1.msra.mxu0 0.0
    %3476 = vmatprep.subr.mxu0 0.0
    %3477 = vmatpush1.msra.mxu0 0.0
    %3478 = vmatprep.subr.mxu0 0.0
    %3479 = vmatpush1.msra.mxu0 0.0
    %3480 = vmatprep.subr.mxu0 0.0
    %3481 = vmatpush1.msra.mxu0 0.0
    %3482 = vmatprep.subr.mxu0 0.0
    %3483 = vmatpush1.msra.mxu0 0.0
    %3484 = vmatprep.subr.mxu0 0.0
    %3485 = vmatpush1.msra.mxu0 0.0
    %3486 = vmatprep.subr.mxu0 0.0
    %3487 = vmatpush1.msra.mxu0 0.0
    %3488 = vmatprep.subr.mxu0 0.0
    %3489 = vmatpush1.msra.mxu0 0.0
    %3490 = vmatprep.subr.mxu0 0.0
    %3491 = vmatpush1.msra.mxu0 0.0
    %3492 = vmatprep.mubr.f32.mxu0 0.0
    %3493 = vmatmul.mubr.f32.gmra.mrb[0].mxu0 %v3426
    %v3494 = vpop.f32.mrb[0].mxu0
    %v3495 = vadd.f32 0.0, %v3494
    %v3496 = vpop.f32.mrb[0].mxu0
    %3497 = vdwg.mxu0
    %v3499 = vrot.slane %v3495, 2
    %v3500 = vrot.slane %v3495, 3
    %v3503 = vadd.f32 %v2585, %v3499
    %v3504 = vadd.f32 %v2590, %v3500
    %v3505 = vxor.u32 %v3503, 2147483648
    %v3506 = vxor.u32 %v3504, 2147483648
    %v3507 = vmul.f32 %v3505, 1.442695
    %v3508 = vpow.pop %v3507
    %v3509 = vmul.f32 %v3506, 1.442695
    %v3510 = vpow.pop %v3509
    %v3511 = vadd.f32 %v3508, 1.0
    %v3512 = vadd.f32 %v3510, 1.0
    %v3513 = vrcp.pop %v3511
    %v3514 = vmul.f32 1.0, %v3513
    %v3515 = vrcp.pop %v3512
    %v3516 = vmul.f32 1.0, %v3515
    %v3517 = vtanh.pop %v3503
    %v3518 = vtanh.pop %v3504
    %v3521 = vrot.slane %v3405, 7
    %v3522 = vrot.slane %v3406, 7
    %v3525 = vmul.f32 %v3514, %v3521
    %v3526 = vmul.f32 %v3516, %v3522
    %3529 = vrot.lane.b32.xlu0 %v3517, 64
    %v3530 = vpop.permute.xlu0 %3529
    %3531 = vrot.lane.b32.xlu0 %v3518, 64
    %v3532 = vpop.permute.xlu0 %3531
    %v3535 = vmul.f32 %v3514, %v3530
    %v3536 = vmul.f32 %v3516, %v3532
    %3539 = vrot.lane.b32.xlu0 %v3535, 32
    %v3540 = vpop.permute.xlu0 %3539
    %3541 = vrot.lane.b32.xlu0 %v3536, 32
    %v3542 = vpop.permute.xlu0 %3541
    %v3545 = vadd.f32 %v3525, %v3540
    %v3546 = vadd.f32 %v3526, %v3542
    %v3547 = vtanh.pop %v3545
    %v3548 = vtanh.pop %v3546
    %3551 = vrot.lane.b32.xlu0 %v3547, 64
    %v3552 = vpop.permute.xlu0 %3551
    %3553 = vrot.lane.b32.xlu0 %v3548, 64
    %v3554 = vpop.permute.xlu0 %3553
    %v3557 = vmul.f32 %v3514, %v3552
    %v3558 = vmul.f32 %v3516, %v3554
    %v3561 = vrot.slane %v3557, 6
    %v3562 = vrot.slane %v3558, 5
    %v3563 = vsel %vm282, %v3562, %v3561
    %3564 = vrot.lane.b32.xlu0 %v3563, 32
    %v3565 = vpop.permute.xlu0 %3564
    %v3566 = vsel %vm151, %v3565, 0
    %3568 = vmatprep.subr.mxu0 0.0
    %3569 = vmatpush1.msra.mxu0 %v2594
    %3570 = vmatprep.subr.mxu0 0.0
    %3571 = vmatpush1.msra.mxu0 %v2595
    %3572 = vmatprep.subr.mxu0 0.0
    %3573 = vmatpush1.msra.mxu0 %v2596
    %3574 = vmatprep.subr.mxu0 0.0
    %3575 = vmatpush1.msra.mxu0 %v2597
    %3576 = vmatprep.subr.mxu0 0.0
    %3577 = vmatpush1.msra.mxu0 0.0
    %3578 = vmatprep.subr.mxu0 0.0
    %3579 = vmatpush1.msra.mxu0 0.0
    %3580 = vmatprep.subr.mxu0 0.0
    %3581 = vmatpush1.msra.mxu0 0.0
    %3582 = vmatprep.subr.mxu0 0.0
    %3583 = vmatpush1.msra.mxu0 0.0
    %3584 = vmatprep.subr.mxu0 0.0
    %3585 = vmatpush1.msra.mxu0 0.0
    %3586 = vmatprep.subr.mxu0 0.0
    %3587 = vmatpush1.msra.mxu0 0.0
    %3588 = vmatprep.subr.mxu0 0.0
    %3589 = vmatpush1.msra.mxu0 0.0
    %3590 = vmatprep.subr.mxu0 0.0
    %3591 = vmatpush1.msra.mxu0 0.0
    %3592 = vmatprep.subr.mxu0 0.0
    %3593 = vmatpush1.msra.mxu0 0.0
    %3594 = vmatprep.subr.mxu0 0.0
    %3595 = vmatpush1.msra.mxu0 0.0
    %3596 = vmatprep.subr.mxu0 0.0
    %3597 = vmatpush1.msra.mxu0 0.0
    %3598 = vmatprep.subr.mxu0 0.0
    %3599 = vmatpush1.msra.mxu0 0.0
    %3600 = vmatprep.subr.mxu0 0.0
    %3601 = vmatpush1.msra.mxu0 0.0
    %3602 = vmatprep.subr.mxu0 0.0
    %3603 = vmatpush1.msra.mxu0 0.0
    %3604 = vmatprep.subr.mxu0 0.0
    %3605 = vmatpush1.msra.mxu0 0.0
    %3606 = vmatprep.subr.mxu0 0.0
    %3607 = vmatpush1.msra.mxu0 0.0
    %3608 = vmatprep.subr.mxu0 0.0
    %3609 = vmatpush1.msra.mxu0 0.0
    %3610 = vmatprep.subr.mxu0 0.0
    %3611 = vmatpush1.msra.mxu0 0.0
    %3612 = vmatprep.subr.mxu0 0.0
    %3613 = vmatpush1.msra.mxu0 0.0
    %3614 = vmatprep.subr.mxu0 0.0
    %3615 = vmatpush1.msra.mxu0 0.0
    %3616 = vmatprep.subr.mxu0 0.0
    %3617 = vmatpush1.msra.mxu0 0.0
    %3618 = vmatprep.subr.mxu0 0.0
    %3619 = vmatpush1.msra.mxu0 0.0
    %3620 = vmatprep.subr.mxu0 0.0
    %3621 = vmatpush1.msra.mxu0 0.0
    %3622 = vmatprep.subr.mxu0 0.0
    %3623 = vmatpush1.msra.mxu0 0.0
    %3624 = vmatprep.subr.mxu0 0.0
    %3625 = vmatpush1.msra.mxu0 0.0
    %3626 = vmatprep.subr.mxu0 0.0
    %3627 = vmatpush1.msra.mxu0 0.0
    %3628 = vmatprep.subr.mxu0 0.0
    %3629 = vmatpush1.msra.mxu0 0.0
    %3630 = vmatprep.subr.mxu0 0.0
    %3631 = vmatpush1.msra.mxu0 0.0
    %3632 = vmatprep.mubr.f32.mxu0 0.0
    %3633 = vmatmul.mubr.f32.gmra.mrb[0].mxu0 %v3566
    %v3634 = vpop.f32.mrb[0].mxu0
    %v3635 = vadd.f32 0.0, %v3634
    %v3636 = vpop.f32.mrb[0].mxu0
    %3637 = vdwg.mxu0
    %v3639 = vrot.slane %v3635, 1
    %v3640 = vrot.slane %v3635, 2
    %v3643 = vadd.f32 %v2585, %v3639
    %v3644 = vadd.f32 %v2590, %v3640
    %v3645 = vxor.u32 %v3643, 2147483648
    %v3646 = vxor.u32 %v3644, 2147483648
    %v3647 = vmul.f32 %v3645, 1.442695
    %v3648 = vpow.pop %v3647
    %v3649 = vmul.f32 %v3646, 1.442695
    %v3650 = vpow.pop %v3649
    %v3651 = vadd.f32 %v3648, 1.0
    %v3652 = vadd.f32 %v3650, 1.0
    %v3653 = vrcp.pop %v3651
    %v3654 = vmul.f32 1.0, %v3653
    %v3655 = vrcp.pop %v3652
    %v3656 = vmul.f32 1.0, %v3655
    %v3657 = vtanh.pop %v3643
    %v3658 = vtanh.pop %v3644
    %v3661 = vrot.slane %v3545, 7
    %v3662 = vrot.slane %v3546, 7
    %v3665 = vmul.f32 %v3654, %v3661
    %v3666 = vmul.f32 %v3656, %v3662
    %3669 = vrot.lane.b32.xlu0 %v3657, 64
    %v3670 = vpop.permute.xlu0 %3669
    %3671 = vrot.lane.b32.xlu0 %v3658, 64
    %v3672 = vpop.permute.xlu0 %3671
    %v3675 = vmul.f32 %v3654, %v3670
    %v3676 = vmul.f32 %v3656, %v3672
    %3679 = vrot.lane.b32.xlu0 %v3675, 32
    %v3680 = vpop.permute.xlu0 %3679
    %3681 = vrot.lane.b32.xlu0 %v3676, 32
    %v3682 = vpop.permute.xlu0 %3681
    %v3685 = vadd.f32 %v3665, %v3680
    %v3686 = vadd.f32 %v3666, %v3682
    %v3687 = vtanh.pop %v3685
    %v3688 = vtanh.pop %v3686
    %3691 = vrot.lane.b32.xlu0 %v3687, 64
    %v3692 = vpop.permute.xlu0 %3691
    %3693 = vrot.lane.b32.xlu0 %v3688, 64
    %v3694 = vpop.permute.xlu0 %3693
    %v3697 = vmul.f32 %v3654, %v3692
    %v3698 = vmul.f32 %v3656, %v3694
    %v3699 = vsel %vm1257, %v2720, %v2858
    %v3700 = vsel %vm1257, %v2721, %v2859
    %v3701 = vsel %vm1260, %v3699, %v2997
    %v3702 = vsel %vm1260, %v3700, %v2998
    %v3703 = vsel %vm1263, %v3701, %v3137
    %v3704 = vsel %vm1263, %v3702, %v3138
    %v3705 = vsel %vm1266, %v3703, %v3277
    %v3706 = vsel %vm1266, %v3704, %v3278
    %v3707 = vsel %vm1269, %v3705, %v3417
    %v3708 = vsel %vm1269, %v3706, %v3418
    %v3709 = vsel %vm1272, %v3707, %v3557
    %v3710 = vsel %vm1272, %v3708, %v3558
    %v3711 = vsel %vm1275, %v3709, %v3697
    %v3712 = vsel %vm1275, %v3710, %v3698
    %s3713 = scalar_lea.vmem [#allocation2], 64
    %v3714 = vld [vmem:[%s3713] sm:$0xff]
    %v3715 = vld [vmem:[%s3713 + $0x8] sm:$0xff]
    %v3716 = vld [vmem:[%s3713 + $0x10] sm:$0xff]
    %v3717 = vld [vmem:[%s3713 + $0x18] sm:$0xff]
    %s3718 = scalar_lea.vmem %s4, 3
    %v3719 = vld [vmem:[%s3718] sm:$0x1]
    %v3721 = vlaneseq
    %v3722 = vshrl.u32 %v3721, 7
    %v3723 = vsub.s32 0, %v3722
    %v3724 = vrot.slane %v3719, %v3723
    %3728 = vrot.lane.b32.xlu0 %v3711, 32
    %v3729 = vpop.permute.xlu0 %3728
    %3730 = vrot.lane.b32.xlu0 %v3712, 32
    %v3731 = vpop.permute.xlu0 %3730
    %v3732 = vsel %vm151, %v3729, 0
    %v3734 = vsel %vm151, %v3731, 0
    %3736 = vmatprep.subr.mxu0 0.0
    %3737 = vmatpush1.msra.mxu0 %v3714
    %3738 = vmatprep.subr.mxu0 0.0
    %3739 = vmatpush1.msra.mxu0 %v3715
    %3740 = vmatprep.subr.mxu0 0.0
    %3741 = vmatpush1.msra.mxu0 %v3716
    %3742 = vmatprep.subr.mxu0 0.0
    %3743 = vmatpush1.msra.mxu0 %v3717
    %3744 = vmatprep.subr.mxu0 0.0
    %3745 = vmatpush1.msra.mxu0 0.0
    %3746 = vmatprep.subr.mxu0 0.0
    %3747 = vmatpush1.msra.mxu0 0.0
    %3748 = vmatprep.subr.mxu0 0.0
    %3749 = vmatpush1.msra.mxu0 0.0
    %3750 = vmatprep.subr.mxu0 0.0
    %3751 = vmatpush1.msra.mxu0 0.0
    %3752 = vmatprep.subr.mxu0 0.0
    %3753 = vmatpush1.msra.mxu0 0.0
    %3754 = vmatprep.subr.mxu0 0.0
    %3755 = vmatpush1.msra.mxu0 0.0
    %3756 = vmatprep.subr.mxu0 0.0
    %3757 = vmatpush1.msra.mxu0 0.0
    %3758 = vmatprep.subr.mxu0 0.0
    %3759 = vmatpush1.msra.mxu0 0.0
    %3760 = vmatprep.subr.mxu0 0.0
    %3761 = vmatpush1.msra.mxu0 0.0
    %3762 = vmatprep.subr.mxu0 0.0
    %3763 = vmatpush1.msra.mxu0 0.0
    %3764 = vmatprep.subr.mxu0 0.0
    %3765 = vmatpush1.msra.mxu0 0.0
    %3766 = vmatprep.subr.mxu0 0.0
    %3767 = vmatpush1.msra.mxu0 0.0
    %3768 = vmatprep.subr.mxu0 0.0
    %3769 = vmatpush1.msra.mxu0 0.0
    %3770 = vmatprep.subr.mxu0 0.0
    %3771 = vmatpush1.msra.mxu0 0.0
    %3772 = vmatprep.subr.mxu0 0.0
    %3773 = vmatpush1.msra.mxu0 0.0
    %3774 = vmatprep.subr.mxu0 0.0
    %3775 = vmatpush1.msra.mxu0 0.0
    %3776 = vmatprep.subr.mxu0 0.0
    %3777 = vmatpush1.msra.mxu0 0.0
    %3778 = vmatprep.subr.mxu0 0.0
    %3779 = vmatpush1.msra.mxu0 0.0
    %3780 = vmatprep.subr.mxu0 0.0
    %3781 = vmatpush1.msra.mxu0 0.0
    %3782 = vmatprep.subr.mxu0 0.0
    %3783 = vmatpush1.msra.mxu0 0.0
    %3784 = vmatprep.subr.mxu0 0.0
    %3785 = vmatpush1.msra.mxu0 0.0
    %3786 = vmatprep.subr.mxu0 0.0
    %3787 = vmatpush1.msra.mxu0 0.0
    %3788 = vmatprep.subr.mxu0 0.0
    %3789 = vmatpush1.msra.mxu0 0.0
    %3790 = vmatprep.subr.mxu0 0.0
    %3791 = vmatpush1.msra.mxu0 0.0
    %3792 = vmatprep.subr.mxu0 0.0
    %3793 = vmatpush1.msra.mxu0 0.0
    %3794 = vmatprep.subr.mxu0 0.0
    %3795 = vmatpush1.msra.mxu0 0.0
    %3796 = vmatprep.subr.mxu0 0.0
    %3797 = vmatpush1.msra.mxu0 0.0
    %3798 = vmatprep.subr.mxu0 0.0
    %3799 = vmatpush1.msra.mxu0 0.0
    %3800 = vmatprep.mubr.f32.mxu0 0.0
    %3801 = vmatmul.mubr.f32.gmra.mrb[0].mxu0 %v3732
    %v3802 = vpop.f32.mrb[0].mxu0
    %v3803 = vadd.f32 %v3724, %v3802
    %v3804 = vpop.f32.mrb[0].mxu0
    %3805 = vmatprep.mubr.f32.mxu0 0.0
    %3806 = vmatmul.mubr.f32.gmra.mrb[0].mxu0 %v3734
    %v3807 = vpop.f32.mrb[0].mxu0
    %v3808 = vadd.f32 %v3724, %v3807
    %v3809 = vpop.f32.mrb[0].mxu0
    %3810 = vdwg.mxu0
    %s3811 = scalar_lea.vmem [#allocation4], 96
    %v3812 = vld [vmem:[%s3811] sm:$0xff]
    %v3813 = vld [vmem:[%s3811 + $0x8] sm:$0xff]
    %v3814 = vld [vmem:[%s3811 + $0x10] sm:$0xff]
    %v3815 = vld [vmem:[%s3811 + $0x18] sm:$0xff]
    %3816 = vmatprep.subr.mxu0 0.0
    %3817 = vmatpush1.msra.mxu0 %v3812
    %3818 = vmatprep.subr.mxu0 0.0
    %3819 = vmatpush1.msra.mxu0 %v3813
    %3820 = vmatprep.subr.mxu0 0.0
    %3821 = vmatpush1.msra.mxu0 %v3814
    %3822 = vmatprep.subr.mxu0 0.0
    %3823 = vmatpush1.msra.mxu0 %v3815
    %3824 = vmatprep.subr.mxu0 0.0
    %3825 = vmatpush1.msra.mxu0 0.0
    %3826 = vmatprep.subr.mxu0 0.0
    %3827 = vmatpush1.msra.mxu0 0.0
    %3828 = vmatprep.subr.mxu0 0.0
    %3829 = vmatpush1.msra.mxu0 0.0
    %3830 = vmatprep.subr.mxu0 0.0
    %3831 = vmatpush1.msra.mxu0 0.0
    %3832 = vmatprep.subr.mxu0 0.0
    %3833 = vmatpush1.msra.mxu0 0.0
    %3834 = vmatprep.subr.mxu0 0.0
    %3835 = vmatpush1.msra.mxu0 0.0
    %3836 = vmatprep.subr.mxu0 0.0
    %3837 = vmatpush1.msra.mxu0 0.0
    %3838 = vmatprep.subr.mxu0 0.0
    %3839 = vmatpush1.msra.mxu0 0.0
    %3840 = vmatprep.subr.mxu0 0.0
    %3841 = vmatpush1.msra.mxu0 0.0
    %3842 = vmatprep.subr.mxu0 0.0
    %3843 = vmatpush1.msra.mxu0 0.0
    %3844 = vmatprep.subr.mxu0 0.0
    %3845 = vmatpush1.msra.mxu0 0.0
    %3846 = vmatprep.subr.mxu0 0.0
    %3847 = vmatpush1.msra.mxu0 0.0
    %3848 = vmatprep.subr.mxu0 0.0
    %3849 = vmatpush1.msra.mxu0 0.0
    %3850 = vmatprep.subr.mxu0 0.0
    %3851 = vmatpush1.msra.mxu0 0.0
    %3852 = vmatprep.subr.mxu0 0.0
    %3853 = vmatpush1.msra.mxu0 0.0
    %3854 = vmatprep.subr.mxu0 0.0
    %3855 = vmatpush1.msra.mxu0 0.0
    %3856 = vmatprep.subr.mxu0 0.0
    %3857 = vmatpush1.msra.mxu0 0.0
    %3858 = vmatprep.subr.mxu0 0.0
    %3859 = vmatpush1.msra.mxu0 0.0
    %3860 = vmatprep.subr.mxu0 0.0
    %3861 = vmatpush1.msra.mxu0 0.0
    %3862 = vmatprep.subr.mxu0 0.0
    %3863 = vmatpush1.msra.mxu0 0.0
    %3864 = vmatprep.subr.mxu0 0.0
    %3865 = vmatpush1.msra.mxu0 0.0
    %3866 = vmatprep.subr.mxu0 0.0
    %3867 = vmatpush1.msra.mxu0 0.0
    %3868 = vmatprep.subr.mxu0 0.0
    %3869 = vmatpush1.msra.mxu0 0.0
    %3870 = vmatprep.subr.mxu0 0.0
    %3871 = vmatpush1.msra.mxu0 0.0
    %3872 = vmatprep.subr.mxu0 0.0
    %3873 = vmatpush1.msra.mxu0 0.0
    %3874 = vmatprep.subr.mxu0 0.0
    %3875 = vmatpush1.msra.mxu0 0.0
    %3876 = vmatprep.subr.mxu0 0.0
    %3877 = vmatpush1.msra.mxu0 0.0
    %3878 = vmatprep.subr.mxu0 0.0
    %3879 = vmatpush1.msra.mxu0 0.0
    %3880 = vmatprep.mubr.f32.mxu0 0.0
    %3881 = vmatmul.mubr.f32.gmra.mrb[0].mxu0 %v153
    %v3882 = vpop.f32.mrb[0].mxu0
    %v3883 = vadd.f32 0.0, %v3882
    %v3884 = vpop.f32.mrb[0].mxu0
    %3885 = vdwg.mxu0
    %v3887 = vrot.slane %v3883, 1
    %v3890 = vadd.f32 %v3803, %v3883
    %v3891 = vadd.f32 %v3808, %v3887
    %v3892 = vxor.u32 %v3890, 2147483648
    %v3893 = vxor.u32 %v3891, 2147483648
    %v3894 = vmul.f32 %v3892, 1.442695
    %v3895 = vpow.pop %v3894
    %v3896 = vmul.f32 %v3893, 1.442695
    %v3897 = vpow.pop %v3896
    %v3898 = vadd.f32 %v3895, 1.0
    %v3899 = vadd.f32 %v3897, 1.0
    %v3900 = vrcp.pop %v3898
    %v3901 = vmul.f32 1.0, %v3900
    %v3902 = vrcp.pop %v3899
    %v3903 = vmul.f32 1.0, %v3902
    %v3904 = vtanh.pop %v3890
    %v3905 = vtanh.pop %v3891
    %v3906 = vmul.f32 %v3901, 0.0
    %v3907 = vmul.f32 %v3903, 0.0
    %3910 = vrot.lane.b32.xlu0 %v3904, 64
    %v3911 = vpop.permute.xlu0 %3910
    %3912 = vrot.lane.b32.xlu0 %v3905, 64
    %v3913 = vpop.permute.xlu0 %3912
    %v3916 = vmul.f32 %v3901, %v3911
    %v3917 = vmul.f32 %v3903, %v3913
    %3920 = vrot.lane.b32.xlu0 %v3916, 32
    %v3921 = vpop.permute.xlu0 %3920
    %3922 = vrot.lane.b32.xlu0 %v3917, 32
    %v3923 = vpop.permute.xlu0 %3922
    %v3926 = vadd.f32 %v3906, %v3921
    %v3927 = vadd.f32 %v3907, %v3923
    %v3928 = vtanh.pop %v3926
    %v3929 = vtanh.pop %v3927
    %3932 = vrot.lane.b32.xlu0 %v3928, 64
    %v3933 = vpop.permute.xlu0 %3932
    %3934 = vrot.lane.b32.xlu0 %v3929, 64
    %v3935 = vpop.permute.xlu0 %3934
    %v3938 = vmul.f32 %v3901, %v3933
    %v3939 = vmul.f32 %v3903, %v3935
    %v3942 = vrot.slane %v3939, 7
    %v3943 = vsel %vm282, %v3942, %v3938
    %3944 = vrot.lane.b32.xlu0 %v3943, 32
    %v3945 = vpop.permute.xlu0 %3944
    %v3946 = vsel %vm151, %v3945, 0
    %3948 = vmatprep.subr.mxu0 0.0
    %3949 = vmatpush1.msra.mxu0 %v3812
    %3950 = vmatprep.subr.mxu0 0.0
    %3951 = vmatpush1.msra.mxu0 %v3813
    %3952 = vmatprep.subr.mxu0 0.0
    %3953 = vmatpush1.msra.mxu0 %v3814
    %3954 = vmatprep.subr.mxu0 0.0
    %3955 = vmatpush1.msra.mxu0 %v3815
    %3956 = vmatprep.subr.mxu0 0.0
    %3957 = vmatpush1.msra.mxu0 0.0
    %3958 = vmatprep.subr.mxu0 0.0
    %3959 = vmatpush1.msra.mxu0 0.0
    %3960 = vmatprep.subr.mxu0 0.0
    %3961 = vmatpush1.msra.mxu0 0.0
    %3962 = vmatprep.subr.mxu0 0.0
    %3963 = vmatpush1.msra.mxu0 0.0
    %3964 = vmatprep.subr.mxu0 0.0
    %3965 = vmatpush1.msra.mxu0 0.0
    %3966 = vmatprep.subr.mxu0 0.0
    %3967 = vmatpush1.msra.mxu0 0.0
    %3968 = vmatprep.subr.mxu0 0.0
    %3969 = vmatpush1.msra.mxu0 0.0
    %3970 = vmatprep.subr.mxu0 0.0
    %3971 = vmatpush1.msra.mxu0 0.0
    %3972 = vmatprep.subr.mxu0 0.0
    %3973 = vmatpush1.msra.mxu0 0.0
    %3974 = vmatprep.subr.mxu0 0.0
    %3975 = vmatpush1.msra.mxu0 0.0
    %3976 = vmatprep.subr.mxu0 0.0
    %3977 = vmatpush1.msra.mxu0 0.0
    %3978 = vmatprep.subr.mxu0 0.0
    %3979 = vmatpush1.msra.mxu0 0.0
    %3980 = vmatprep.subr.mxu0 0.0
    %3981 = vmatpush1.msra.mxu0 0.0
    %3982 = vmatprep.subr.mxu0 0.0
    %3983 = vmatpush1.msra.mxu0 0.0
    %3984 = vmatprep.subr.mxu0 0.0
    %3985 = vmatpush1.msra.mxu0 0.0
    %3986 = vmatprep.subr.mxu0 0.0
    %3987 = vmatpush1.msra.mxu0 0.0
    %3988 = vmatprep.subr.mxu0 0.0
    %3989 = vmatpush1.msra.mxu0 0.0
    %3990 = vmatprep.subr.mxu0 0.0
    %3991 = vmatpush1.msra.mxu0 0.0
    %3992 = vmatprep.subr.mxu0 0.0
    %3993 = vmatpush1.msra.mxu0 0.0
    %3994 = vmatprep.subr.mxu0 0.0
    %3995 = vmatpush1.msra.mxu0 0.0
    %3996 = vmatprep.subr.mxu0 0.0
    %3997 = vmatpush1.msra.mxu0 0.0
    %3998 = vmatprep.subr.mxu0 0.0
    %3999 = vmatpush1.msra.mxu0 0.0
    %4000 = vmatprep.subr.mxu0 0.0
    %4001 = vmatpush1.msra.mxu0 0.0
    %4002 = vmatprep.subr.mxu0 0.0
    %4003 = vmatpush1.msra.mxu0 0.0
    %4004 = vmatprep.subr.mxu0 0.0
    %4005 = vmatpush1.msra.mxu0 0.0
    %4006 = vmatprep.subr.mxu0 0.0
    %4007 = vmatpush1.msra.mxu0 0.0
    %4008 = vmatprep.subr.mxu0 0.0
    %4009 = vmatpush1.msra.mxu0 0.0
    %4010 = vmatprep.subr.mxu0 0.0
    %4011 = vmatpush1.msra.mxu0 0.0
    %4012 = vmatprep.mubr.f32.mxu0 0.0
    %4013 = vmatmul.mubr.f32.gmra.mrb[0].mxu0 %v3946
    %v4014 = vpop.f32.mrb[0].mxu0
    %v4015 = vadd.f32 0.0, %v4014
    %v4016 = vpop.f32.mrb[0].mxu0
    %4017 = vdwg.mxu0
    %v4019 = vrot.slane %v4015, 7
    %v4022 = vadd.f32 %v3803, %v4019
    %v4023 = vadd.f32 %v3808, %v4015
    %v4024 = vxor.u32 %v4022, 2147483648
    %v4025 = vxor.u32 %v4023, 2147483648
    %v4026 = vmul.f32 %v4024, 1.442695
    %v4027 = vpow.pop %v4026
    %v4028 = vmul.f32 %v4025, 1.442695
    %v4029 = vpow.pop %v4028
    %v4030 = vadd.f32 %v4027, 1.0
    %v4031 = vadd.f32 %v4029, 1.0
    %v4032 = vrcp.pop %v4030
    %v4033 = vmul.f32 1.0, %v4032
    %v4034 = vrcp.pop %v4031
    %v4035 = vmul.f32 1.0, %v4034
    %v4036 = vtanh.pop %v4022
    %v4037 = vtanh.pop %v4023
    %v4040 = vrot.slane %v3926, 7
    %v4041 = vrot.slane %v3927, 7
    %v4044 = vmul.f32 %v4033, %v4040
    %v4045 = vmul.f32 %v4035, %v4041
    %4048 = vrot.lane.b32.xlu0 %v4036, 64
    %v4049 = vpop.permute.xlu0 %4048
    %4050 = vrot.lane.b32.xlu0 %v4037, 64
    %v4051 = vpop.permute.xlu0 %4050
    %v4054 = vmul.f32 %v4033, %v4049
    %v4055 = vmul.f32 %v4035, %v4051
    %4058 = vrot.lane.b32.xlu0 %v4054, 32
    %v4059 = vpop.permute.xlu0 %4058
    %4060 = vrot.lane.b32.xlu0 %v4055, 32
    %v4061 = vpop.permute.xlu0 %4060
    %v4064 = vadd.f32 %v4044, %v4059
    %v4065 = vadd.f32 %v4045, %v4061
    %v4066 = vtanh.pop %v4064
    %v4067 = vtanh.pop %v4065
    %4070 = vrot.lane.b32.xlu0 %v4066, 64
    %v4071 = vpop.permute.xlu0 %4070
    %4072 = vrot.lane.b32.xlu0 %v4067, 64
    %v4073 = vpop.permute.xlu0 %4072
    %v4076 = vmul.f32 %v4033, %v4071
    %v4077 = vmul.f32 %v4035, %v4073
    %v4080 = vrot.slane %v4076, 1
    %v4081 = vsel %vm282, %v4077, %v4080
    %4082 = vrot.lane.b32.xlu0 %v4081, 32
    %v4083 = vpop.permute.xlu0 %4082
    %v4084 = vsel %vm151, %v4083, 0
    %4086 = vmatprep.subr.mxu0 0.0
    %4087 = vmatpush1.msra.mxu0 %v3812
    %4088 = vmatprep.subr.mxu0 0.0
    %4089 = vmatpush1.msra.mxu0 %v3813
    %4090 = vmatprep.subr.mxu0 0.0
    %4091 = vmatpush1.msra.mxu0 %v3814
    %4092 = vmatprep.subr.mxu0 0.0
    %4093 = vmatpush1.msra.mxu0 %v3815
    %4094 = vmatprep.subr.mxu0 0.0
    %4095 = vmatpush1.msra.mxu0 0.0
    %4096 = vmatprep.subr.mxu0 0.0
    %4097 = vmatpush1.msra.mxu0 0.0
    %4098 = vmatprep.subr.mxu0 0.0
    %4099 = vmatpush1.msra.mxu0 0.0
    %4100 = vmatprep.subr.mxu0 0.0
    %4101 = vmatpush1.msra.mxu0 0.0
    %4102 = vmatprep.subr.mxu0 0.0
    %4103 = vmatpush1.msra.mxu0 0.0
    %4104 = vmatprep.subr.mxu0 0.0
    %4105 = vmatpush1.msra.mxu0 0.0
    %4106 = vmatprep.subr.mxu0 0.0
    %4107 = vmatpush1.msra.mxu0 0.0
    %4108 = vmatprep.subr.mxu0 0.0
    %4109 = vmatpush1.msra.mxu0 0.0
    %4110 = vmatprep.subr.mxu0 0.0
    %4111 = vmatpush1.msra.mxu0 0.0
    %4112 = vmatprep.subr.mxu0 0.0
    %4113 = vmatpush1.msra.mxu0 0.0
    %4114 = vmatprep.subr.mxu0 0.0
    %4115 = vmatpush1.msra.mxu0 0.0
    %4116 = vmatprep.subr.mxu0 0.0
    %4117 = vmatpush1.msra.mxu0 0.0
    %4118 = vmatprep.subr.mxu0 0.0
    %4119 = vmatpush1.msra.mxu0 0.0
    %4120 = vmatprep.subr.mxu0 0.0
    %4121 = vmatpush1.msra.mxu0 0.0
    %4122 = vmatprep.subr.mxu0 0.0
    %4123 = vmatpush1.msra.mxu0 0.0
    %4124 = vmatprep.subr.mxu0 0.0
    %4125 = vmatpush1.msra.mxu0 0.0
    %4126 = vmatprep.subr.mxu0 0.0
    %4127 = vmatpush1.msra.mxu0 0.0
    %4128 = vmatprep.subr.mxu0 0.0
    %4129 = vmatpush1.msra.mxu0 0.0
    %4130 = vmatprep.subr.mxu0 0.0
    %4131 = vmatpush1.msra.mxu0 0.0
    %4132 = vmatprep.subr.mxu0 0.0
    %4133 = vmatpush1.msra.mxu0 0.0
    %4134 = vmatprep.subr.mxu0 0.0
    %4135 = vmatpush1.msra.mxu0 0.0
    %4136 = vmatprep.subr.mxu0 0.0
    %4137 = vmatpush1.msra.mxu0 0.0
    %4138 = vmatprep.subr.mxu0 0.0
    %4139 = vmatpush1.msra.mxu0 0.0
    %4140 = vmatprep.subr.mxu0 0.0
    %4141 = vmatpush1.msra.mxu0 0.0
    %4142 = vmatprep.subr.mxu0 0.0
    %4143 = vmatpush1.msra.mxu0 0.0
    %4144 = vmatprep.subr.mxu0 0.0
    %4145 = vmatpush1.msra.mxu0 0.0
    %4146 = vmatprep.subr.mxu0 0.0
    %4147 = vmatpush1.msra.mxu0 0.0
    %4148 = vmatprep.subr.mxu0 0.0
    %4149 = vmatpush1.msra.mxu0 0.0
    %4150 = vmatprep.mubr.f32.mxu0 0.0
    %4151 = vmatmul.mubr.f32.gmra.mrb[0].mxu0 %v4084
    %v4152 = vpop.f32.mrb[0].mxu0
    %v4153 = vadd.f32 0.0, %v4152
    %v4154 = vpop.f32.mrb[0].mxu0
    %4155 = vdwg.mxu0
    %v4157 = vrot.slane %v4153, 6
    %v4158 = vrot.slane %v4153, 7
    %v4161 = vadd.f32 %v3803, %v4157
    %v4162 = vadd.f32 %v3808, %v4158
    %v4163 = vxor.u32 %v4161, 2147483648
    %v4164 = vxor.u32 %v4162, 2147483648
    %v4165 = vmul.f32 %v4163, 1.442695
    %v4166 = vpow.pop %v4165
    %v4167 = vmul.f32 %v4164, 1.442695
    %v4168 = vpow.pop %v4167
    %v4169 = vadd.f32 %v4166, 1.0
    %v4170 = vadd.f32 %v4168, 1.0
    %v4171 = vrcp.pop %v4169
    %v4172 = vmul.f32 1.0, %v4171
    %v4173 = vrcp.pop %v4170
    %v4174 = vmul.f32 1.0, %v4173
    %v4175 = vtanh.pop %v4161
    %v4176 = vtanh.pop %v4162
    %v4179 = vrot.slane %v4064, 7
    %v4180 = vrot.slane %v4065, 7
    %v4183 = vmul.f32 %v4172, %v4179
    %v4184 = vmul.f32 %v4174, %v4180
    %4187 = vrot.lane.b32.xlu0 %v4175, 64
    %v4188 = vpop.permute.xlu0 %4187
    %4189 = vrot.lane.b32.xlu0 %v4176, 64
    %v4190 = vpop.permute.xlu0 %4189
    %v4193 = vmul.f32 %v4172, %v4188
    %v4194 = vmul.f32 %v4174, %v4190
    %4197 = vrot.lane.b32.xlu0 %v4193, 32
    %v4198 = vpop.permute.xlu0 %4197
    %4199 = vrot.lane.b32.xlu0 %v4194, 32
    %v4200 = vpop.permute.xlu0 %4199
    %v4203 = vadd.f32 %v4183, %v4198
    %v4204 = vadd.f32 %v4184, %v4200
    %v4205 = vtanh.pop %v4203
    %v4206 = vtanh.pop %v4204
    %4209 = vrot.lane.b32.xlu0 %v4205, 64
    %v4210 = vpop.permute.xlu0 %4209
    %4211 = vrot.lane.b32.xlu0 %v4206, 64
    %v4212 = vpop.permute.xlu0 %4211
    %v4215 = vmul.f32 %v4172, %v4210
    %v4216 = vmul.f32 %v4174, %v4212
    %v4219 = vrot.slane %v4215, 2
    %v4220 = vrot.slane %v4216, 1
    %v4221 = vsel %vm282, %v4220, %v4219
    %4222 = vrot.lane.b32.xlu0 %v4221, 32
    %v4223 = vpop.permute.xlu0 %4222
    %v4224 = vsel %vm151, %v4223, 0
    %4226 = vmatprep.subr.mxu0 0.0
    %4227 = vmatpush1.msra.mxu0 %v3812
    %4228 = vmatprep.subr.mxu0 0.0
    %4229 = vmatpush1.msra.mxu0 %v3813
    %4230 = vmatprep.subr.mxu0 0.0
    %4231 = vmatpush1.msra.mxu0 %v3814
    %4232 = vmatprep.subr.mxu0 0.0
    %4233 = vmatpush1.msra.mxu0 %v3815
    %4234 = vmatprep.subr.mxu0 0.0
    %4235 = vmatpush1.msra.mxu0 0.0
    %4236 = vmatprep.subr.mxu0 0.0
    %4237 = vmatpush1.msra.mxu0 0.0
    %4238 = vmatprep.subr.mxu0 0.0
    %4239 = vmatpush1.msra.mxu0 0.0
    %4240 = vmatprep.subr.mxu0 0.0
    %4241 = vmatpush1.msra.mxu0 0.0
    %4242 = vmatprep.subr.mxu0 0.0
    %4243 = vmatpush1.msra.mxu0 0.0
    %4244 = vmatprep.subr.mxu0 0.0
    %4245 = vmatpush1.msra.mxu0 0.0
    %4246 = vmatprep.subr.mxu0 0.0
    %4247 = vmatpush1.msra.mxu0 0.0
    %4248 = vmatprep.subr.mxu0 0.0
    %4249 = vmatpush1.msra.mxu0 0.0
    %4250 = vmatprep.subr.mxu0 0.0
    %4251 = vmatpush1.msra.mxu0 0.0
    %4252 = vmatprep.subr.mxu0 0.0
    %4253 = vmatpush1.msra.mxu0 0.0
    %4254 = vmatprep.subr.mxu0 0.0
    %4255 = vmatpush1.msra.mxu0 0.0
    %4256 = vmatprep.subr.mxu0 0.0
    %4257 = vmatpush1.msra.mxu0 0.0
    %4258 = vmatprep.subr.mxu0 0.0
    %4259 = vmatpush1.msra.mxu0 0.0
    %4260 = vmatprep.subr.mxu0 0.0
    %4261 = vmatpush1.msra.mxu0 0.0
    %4262 = vmatprep.subr.mxu0 0.0
    %4263 = vmatpush1.msra.mxu0 0.0
    %4264 = vmatprep.subr.mxu0 0.0
    %4265 = vmatpush1.msra.mxu0 0.0
    %4266 = vmatprep.subr.mxu0 0.0
    %4267 = vmatpush1.msra.mxu0 0.0
    %4268 = vmatprep.subr.mxu0 0.0
    %4269 = vmatpush1.msra.mxu0 0.0
    %4270 = vmatprep.subr.mxu0 0.0
    %4271 = vmatpush1.msra.mxu0 0.0
    %4272 = vmatprep.subr.mxu0 0.0
    %4273 = vmatpush1.msra.mxu0 0.0
    %4274 = vmatprep.subr.mxu0 0.0
    %4275 = vmatpush1.msra.mxu0 0.0
    %4276 = vmatprep.subr.mxu0 0.0
    %4277 = vmatpush1.msra.mxu0 0.0
    %4278 = vmatprep.subr.mxu0 0.0
    %4279 = vmatpush1.msra.mxu0 0.0
    %4280 = vmatprep.subr.mxu0 0.0
    %4281 = vmatpush1.msra.mxu0 0.0
    %4282 = vmatprep.subr.mxu0 0.0
    %4283 = vmatpush1.msra.mxu0 0.0
    %4284 = vmatprep.subr.mxu0 0.0
    %4285 = vmatpush1.msra.mxu0 0.0
    %4286 = vmatprep.subr.mxu0 0.0
    %4287 = vmatpush1.msra.mxu0 0.0
    %4288 = vmatprep.subr.mxu0 0.0
    %4289 = vmatpush1.msra.mxu0 0.0
    %4290 = vmatprep.mubr.f32.mxu0 0.0
    %4291 = vmatmul.mubr.f32.gmra.mrb[0].mxu0 %v4224
    %v4292 = vpop.f32.mrb[0].mxu0
    %v4293 = vadd.f32 0.0, %v4292
    %v4294 = vpop.f32.mrb[0].mxu0
    %4295 = vdwg.mxu0
    %v4297 = vrot.slane %v4293, 5
    %v4298 = vrot.slane %v4293, 6
    %v4301 = vadd.f32 %v3803, %v4297
    %v4302 = vadd.f32 %v3808, %v4298
    %v4303 = vxor.u32 %v4301, 2147483648
    %v4304 = vxor.u32 %v4302, 2147483648
    %v4305 = vmul.f32 %v4303, 1.442695
    %v4306 = vpow.pop %v4305
    %v4307 = vmul.f32 %v4304, 1.442695
    %v4308 = vpow.pop %v4307
    %v4309 = vadd.f32 %v4306, 1.0
    %v4310 = vadd.f32 %v4308, 1.0
    %v4311 = vrcp.pop %v4309
    %v4312 = vmul.f32 1.0, %v4311
    %v4313 = vrcp.pop %v4310
    %v4314 = vmul.f32 1.0, %v4313
    %v4315 = vtanh.pop %v4301
    %v4316 = vtanh.pop %v4302
    %v4319 = vrot.slane %v4203, 7
    %v4320 = vrot.slane %v4204, 7
    %v4323 = vmul.f32 %v4312, %v4319
    %v4324 = vmul.f32 %v4314, %v4320
    %4327 = vrot.lane.b32.xlu0 %v4315, 64
    %v4328 = vpop.permute.xlu0 %4327
    %4329 = vrot.lane.b32.xlu0 %v4316, 64
    %v4330 = vpop.permute.xlu0 %4329
    %v4333 = vmul.f32 %v4312, %v4328
    %v4334 = vmul.f32 %v4314, %v4330
    %4337 = vrot.lane.b32.xlu0 %v4333, 32
    %v4338 = vpop.permute.xlu0 %4337
    %4339 = vrot.lane.b32.xlu0 %v4334, 32
    %v4340 = vpop.permute.xlu0 %4339
    %v4343 = vadd.f32 %v4323, %v4338
    %v4344 = vadd.f32 %v4324, %v4340
    %v4345 = vtanh.pop %v4343
    %v4346 = vtanh.pop %v4344
    %4349 = vrot.lane.b32.xlu0 %v4345, 64
    %v4350 = vpop.permute.xlu0 %4349
    %4351 = vrot.lane.b32.xlu0 %v4346, 64
    %v4352 = vpop.permute.xlu0 %4351
    %v4355 = vmul.f32 %v4312, %v4350
    %v4356 = vmul.f32 %v4314, %v4352
    %v4359 = vrot.slane %v4355, 3
    %v4360 = vrot.slane %v4356, 2
    %v4361 = vsel %vm282, %v4360, %v4359
    %4362 = vrot.lane.b32.xlu0 %v4361, 32
    %v4363 = vpop.permute.xlu0 %4362
    %v4364 = vsel %vm151, %v4363, 0
    %4366 = vmatprep.subr.mxu0 0.0
    %4367 = vmatpush1.msra.mxu0 %v3812
    %4368 = vmatprep.subr.mxu0 0.0
    %4369 = vmatpush1.msra.mxu0 %v3813
    %4370 = vmatprep.subr.mxu0 0.0
    %4371 = vmatpush1.msra.mxu0 %v3814
    %4372 = vmatprep.subr.mxu0 0.0
    %4373 = vmatpush1.msra.mxu0 %v3815
    %4374 = vmatprep.subr.mxu0 0.0
    %4375 = vmatpush1.msra.mxu0 0.0
    %4376 = vmatprep.subr.mxu0 0.0
    %4377 = vmatpush1.msra.mxu0 0.0
    %4378 = vmatprep.subr.mxu0 0.0
    %4379 = vmatpush1.msra.mxu0 0.0
    %4380 = vmatprep.subr.mxu0 0.0
    %4381 = vmatpush1.msra.mxu0 0.0
    %4382 = vmatprep.subr.mxu0 0.0
    %4383 = vmatpush1.msra.mxu0 0.0
    %4384 = vmatprep.subr.mxu0 0.0
    %4385 = vmatpush1.msra.mxu0 0.0
    %4386 = vmatprep.subr.mxu0 0.0
    %4387 = vmatpush1.msra.mxu0 0.0
    %4388 = vmatprep.subr.mxu0 0.0
    %4389 = vmatpush1.msra.mxu0 0.0
    %4390 = vmatprep.subr.mxu0 0.0
    %4391 = vmatpush1.msra.mxu0 0.0
    %4392 = vmatprep.subr.mxu0 0.0
    %4393 = vmatpush1.msra.mxu0 0.0
    %4394 = vmatprep.subr.mxu0 0.0
    %4395 = vmatpush1.msra.mxu0 0.0
    %4396 = vmatprep.subr.mxu0 0.0
    %4397 = vmatpush1.msra.mxu0 0.0
    %4398 = vmatprep.subr.mxu0 0.0
    %4399 = vmatpush1.msra.mxu0 0.0
    %4400 = vmatprep.subr.mxu0 0.0
    %4401 = vmatpush1.msra.mxu0 0.0
    %4402 = vmatprep.subr.mxu0 0.0
    %4403 = vmatpush1.msra.mxu0 0.0
    %4404 = vmatprep.subr.mxu0 0.0
    %4405 = vmatpush1.msra.mxu0 0.0
    %4406 = vmatprep.subr.mxu0 0.0
    %4407 = vmatpush1.msra.mxu0 0.0
    %4408 = vmatprep.subr.mxu0 0.0
    %4409 = vmatpush1.msra.mxu0 0.0
    %4410 = vmatprep.subr.mxu0 0.0
    %4411 = vmatpush1.msra.mxu0 0.0
    %4412 = vmatprep.subr.mxu0 0.0
    %4413 = vmatpush1.msra.mxu0 0.0
    %4414 = vmatprep.subr.mxu0 0.0
    %4415 = vmatpush1.msra.mxu0 0.0
    %4416 = vmatprep.subr.mxu0 0.0
    %4417 = vmatpush1.msra.mxu0 0.0
    %4418 = vmatprep.subr.mxu0 0.0
    %4419 = vmatpush1.msra.mxu0 0.0
    %4420 = vmatprep.subr.mxu0 0.0
    %4421 = vmatpush1.msra.mxu0 0.0
    %4422 = vmatprep.subr.mxu0 0.0
    %4423 = vmatpush1.msra.mxu0 0.0
    %4424 = vmatprep.subr.mxu0 0.0
    %4425 = vmatpush1.msra.mxu0 0.0
    %4426 = vmatprep.subr.mxu0 0.0
    %4427 = vmatpush1.msra.mxu0 0.0
    %4428 = vmatprep.subr.mxu0 0.0
    %4429 = vmatpush1.msra.mxu0 0.0
    %4430 = vmatprep.mubr.f32.mxu0 0.0
    %4431 = vmatmul.mubr.f32.gmra.mrb[0].mxu0 %v4364
    %v4432 = vpop.f32.mrb[0].mxu0
    %v4433 = vadd.f32 0.0, %v4432
    %v4434 = vpop.f32.mrb[0].mxu0
    %4435 = vdwg.mxu0
    %v4437 = vrot.slane %v4433, 4
    %v4438 = vrot.slane %v4433, 5
    %v4441 = vadd.f32 %v3803, %v4437
    %v4442 = vadd.f32 %v3808, %v4438
    %v4443 = vxor.u32 %v4441, 2147483648
    %v4444 = vxor.u32 %v4442, 2147483648
    %v4445 = vmul.f32 %v4443, 1.442695
    %v4446 = vpow.pop %v4445
    %v4447 = vmul.f32 %v4444, 1.442695
    %v4448 = vpow.pop %v4447
    %v4449 = vadd.f32 %v4446, 1.0
    %v4450 = vadd.f32 %v4448, 1.0
    %v4451 = vrcp.pop %v4449
    %v4452 = vmul.f32 1.0, %v4451
    %v4453 = vrcp.pop %v4450
    %v4454 = vmul.f32 1.0, %v4453
    %v4455 = vtanh.pop %v4441
    %v4456 = vtanh.pop %v4442
    %v4459 = vrot.slane %v4343, 7
    %v4460 = vrot.slane %v4344, 7
    %v4463 = vmul.f32 %v4452, %v4459
    %v4464 = vmul.f32 %v4454, %v4460
    %4467 = vrot.lane.b32.xlu0 %v4455, 64
    %v4468 = vpop.permute.xlu0 %4467
    %4469 = vrot.lane.b32.xlu0 %v4456, 64
    %v4470 = vpop.permute.xlu0 %4469
    %v4473 = vmul.f32 %v4452, %v4468
    %v4474 = vmul.f32 %v4454, %v4470
    %4477 = vrot.lane.b32.xlu0 %v4473, 32
    %v4478 = vpop.permute.xlu0 %4477
    %4479 = vrot.lane.b32.xlu0 %v4474, 32
    %v4480 = vpop.permute.xlu0 %4479
    %v4483 = vadd.f32 %v4463, %v4478
    %v4484 = vadd.f32 %v4464, %v4480
    %v4485 = vtanh.pop %v4483
    %v4486 = vtanh.pop %v4484
    %4489 = vrot.lane.b32.xlu0 %v4485, 64
    %v4490 = vpop.permute.xlu0 %4489
    %4491 = vrot.lane.b32.xlu0 %v4486, 64
    %v4492 = vpop.permute.xlu0 %4491
    %v4495 = vmul.f32 %v4452, %v4490
    %v4496 = vmul.f32 %v4454, %v4492
    %v4499 = vrot.slane %v4495, 4
    %v4500 = vrot.slane %v4496, 3
    %v4501 = vsel %vm282, %v4500, %v4499
    %4502 = vrot.lane.b32.xlu0 %v4501, 32
    %v4503 = vpop.permute.xlu0 %4502
    %v4504 = vsel %vm151, %v4503, 0
    %4506 = vmatprep.subr.mxu0 0.0
    %4507 = vmatpush1.msra.mxu0 %v3812
    %4508 = vmatprep.subr.mxu0 0.0
    %4509 = vmatpush1.msra.mxu0 %v3813
    %4510 = vmatprep.subr.mxu0 0.0
    %4511 = vmatpush1.msra.mxu0 %v3814
    %4512 = vmatprep.subr.mxu0 0.0
    %4513 = vmatpush1.msra.mxu0 %v3815
    %4514 = vmatprep.subr.mxu0 0.0
    %4515 = vmatpush1.msra.mxu0 0.0
    %4516 = vmatprep.subr.mxu0 0.0
    %4517 = vmatpush1.msra.mxu0 0.0
    %4518 = vmatprep.subr.mxu0 0.0
    %4519 = vmatpush1.msra.mxu0 0.0
    %4520 = vmatprep.subr.mxu0 0.0
    %4521 = vmatpush1.msra.mxu0 0.0
    %4522 = vmatprep.subr.mxu0 0.0
    %4523 = vmatpush1.msra.mxu0 0.0
    %4524 = vmatprep.subr.mxu0 0.0
    %4525 = vmatpush1.msra.mxu0 0.0
    %4526 = vmatprep.subr.mxu0 0.0
    %4527 = vmatpush1.msra.mxu0 0.0
    %4528 = vmatprep.subr.mxu0 0.0
    %4529 = vmatpush1.msra.mxu0 0.0
    %4530 = vmatprep.subr.mxu0 0.0
    %4531 = vmatpush1.msra.mxu0 0.0
    %4532 = vmatprep.subr.mxu0 0.0
    %4533 = vmatpush1.msra.mxu0 0.0
    %4534 = vmatprep.subr.mxu0 0.0
    %4535 = vmatpush1.msra.mxu0 0.0
    %4536 = vmatprep.subr.mxu0 0.0
    %4537 = vmatpush1.msra.mxu0 0.0
    %4538 = vmatprep.subr.mxu0 0.0
    %4539 = vmatpush1.msra.mxu0 0.0
    %4540 = vmatprep.subr.mxu0 0.0
    %4541 = vmatpush1.msra.mxu0 0.0
    %4542 = vmatprep.subr.mxu0 0.0
    %4543 = vmatpush1.msra.mxu0 0.0
    %4544 = vmatprep.subr.mxu0 0.0
    %4545 = vmatpush1.msra.mxu0 0.0
    %4546 = vmatprep.subr.mxu0 0.0
    %4547 = vmatpush1.msra.mxu0 0.0
    %4548 = vmatprep.subr.mxu0 0.0
    %4549 = vmatpush1.msra.mxu0 0.0
    %4550 = vmatprep.subr.mxu0 0.0
    %4551 = vmatpush1.msra.mxu0 0.0
    %4552 = vmatprep.subr.mxu0 0.0
    %4553 = vmatpush1.msra.mxu0 0.0
    %4554 = vmatprep.subr.mxu0 0.0
    %4555 = vmatpush1.msra.mxu0 0.0
    %4556 = vmatprep.subr.mxu0 0.0
    %4557 = vmatpush1.msra.mxu0 0.0
    %4558 = vmatprep.subr.mxu0 0.0
    %4559 = vmatpush1.msra.mxu0 0.0
    %4560 = vmatprep.subr.mxu0 0.0
    %4561 = vmatpush1.msra.mxu0 0.0
    %4562 = vmatprep.subr.mxu0 0.0
    %4563 = vmatpush1.msra.mxu0 0.0
    %4564 = vmatprep.subr.mxu0 0.0
    %4565 = vmatpush1.msra.mxu0 0.0
    %4566 = vmatprep.subr.mxu0 0.0
    %4567 = vmatpush1.msra.mxu0 0.0
    %4568 = vmatprep.subr.mxu0 0.0
    %4569 = vmatpush1.msra.mxu0 0.0
    %4570 = vmatprep.mubr.f32.mxu0 0.0
    %4571 = vmatmul.mubr.f32.gmra.mrb[0].mxu0 %v4504
    %v4572 = vpop.f32.mrb[0].mxu0
    %v4573 = vadd.f32 0.0, %v4572
    %v4574 = vpop.f32.mrb[0].mxu0
    %4575 = vdwg.mxu0
    %v4577 = vrot.slane %v4573, 3
    %v4578 = vrot.slane %v4573, 4
    %v4581 = vadd.f32 %v3803, %v4577
    %v4582 = vadd.f32 %v3808, %v4578
    %v4583 = vxor.u32 %v4581, 2147483648
    %v4584 = vxor.u32 %v4582, 2147483648
    %v4585 = vmul.f32 %v4583, 1.442695
    %v4586 = vpow.pop %v4585
    %v4587 = vmul.f32 %v4584, 1.442695
    %v4588 = vpow.pop %v4587
    %v4589 = vadd.f32 %v4586, 1.0
    %v4590 = vadd.f32 %v4588, 1.0
    %v4591 = vrcp.pop %v4589
    %v4592 = vmul.f32 1.0, %v4591
    %v4593 = vrcp.pop %v4590
    %v4594 = vmul.f32 1.0, %v4593
    %v4595 = vtanh.pop %v4581
    %v4596 = vtanh.pop %v4582
    %v4599 = vrot.slane %v4483, 7
    %v4600 = vrot.slane %v4484, 7
    %v4603 = vmul.f32 %v4592, %v4599
    %v4604 = vmul.f32 %v4594, %v4600
    %4607 = vrot.lane.b32.xlu0 %v4595, 64
    %v4608 = vpop.permute.xlu0 %4607
    %4609 = vrot.lane.b32.xlu0 %v4596, 64
    %v4610 = vpop.permute.xlu0 %4609
    %v4613 = vmul.f32 %v4592, %v4608
    %v4614 = vmul.f32 %v4594, %v4610
    %4617 = vrot.lane.b32.xlu0 %v4613, 32
    %v4618 = vpop.permute.xlu0 %4617
    %4619 = vrot.lane.b32.xlu0 %v4614, 32
    %v4620 = vpop.permute.xlu0 %4619
    %v4623 = vadd.f32 %v4603, %v4618
    %v4624 = vadd.f32 %v4604, %v4620
    %v4625 = vtanh.pop %v4623
    %v4626 = vtanh.pop %v4624
    %4629 = vrot.lane.b32.xlu0 %v4625, 64
    %v4630 = vpop.permute.xlu0 %4629
    %4631 = vrot.lane.b32.xlu0 %v4626, 64
    %v4632 = vpop.permute.xlu0 %4631
    %v4635 = vmul.f32 %v4592, %v4630
    %v4636 = vmul.f32 %v4594, %v4632
    %v4639 = vrot.slane %v4635, 5
    %v4640 = vrot.slane %v4636, 4
    %v4641 = vsel %vm282, %v4640, %v4639
    %4642 = vrot.lane.b32.xlu0 %v4641, 32
    %v4643 = vpop.permute.xlu0 %4642
    %v4644 = vsel %vm151, %v4643, 0
    %4646 = vmatprep.subr.mxu0 0.0
    %4647 = vmatpush1.msra.mxu0 %v3812
    %4648 = vmatprep.subr.mxu0 0.0
    %4649 = vmatpush1.msra.mxu0 %v3813
    %4650 = vmatprep.subr.mxu0 0.0
    %4651 = vmatpush1.msra.mxu0 %v3814
    %4652 = vmatprep.subr.mxu0 0.0
    %4653 = vmatpush1.msra.mxu0 %v3815
    %4654 = vmatprep.subr.mxu0 0.0
    %4655 = vmatpush1.msra.mxu0 0.0
    %4656 = vmatprep.subr.mxu0 0.0
    %4657 = vmatpush1.msra.mxu0 0.0
    %4658 = vmatprep.subr.mxu0 0.0
    %4659 = vmatpush1.msra.mxu0 0.0
    %4660 = vmatprep.subr.mxu0 0.0
    %4661 = vmatpush1.msra.mxu0 0.0
    %4662 = vmatprep.subr.mxu0 0.0
    %4663 = vmatpush1.msra.mxu0 0.0
    %4664 = vmatprep.subr.mxu0 0.0
    %4665 = vmatpush1.msra.mxu0 0.0
    %4666 = vmatprep.subr.mxu0 0.0
    %4667 = vmatpush1.msra.mxu0 0.0
    %4668 = vmatprep.subr.mxu0 0.0
    %4669 = vmatpush1.msra.mxu0 0.0
    %4670 = vmatprep.subr.mxu0 0.0
    %4671 = vmatpush1.msra.mxu0 0.0
    %4672 = vmatprep.subr.mxu0 0.0
    %4673 = vmatpush1.msra.mxu0 0.0
    %4674 = vmatprep.subr.mxu0 0.0
    %4675 = vmatpush1.msra.mxu0 0.0
    %4676 = vmatprep.subr.mxu0 0.0
    %4677 = vmatpush1.msra.mxu0 0.0
    %4678 = vmatprep.subr.mxu0 0.0
    %4679 = vmatpush1.msra.mxu0 0.0
    %4680 = vmatprep.subr.mxu0 0.0
    %4681 = vmatpush1.msra.mxu0 0.0
    %4682 = vmatprep.subr.mxu0 0.0
    %4683 = vmatpush1.msra.mxu0 0.0
    %4684 = vmatprep.subr.mxu0 0.0
    %4685 = vmatpush1.msra.mxu0 0.0
    %4686 = vmatprep.subr.mxu0 0.0
    %4687 = vmatpush1.msra.mxu0 0.0
    %4688 = vmatprep.subr.mxu0 0.0
    %4689 = vmatpush1.msra.mxu0 0.0
    %4690 = vmatprep.subr.mxu0 0.0
    %4691 = vmatpush1.msra.mxu0 0.0
    %4692 = vmatprep.subr.mxu0 0.0
    %4693 = vmatpush1.msra.mxu0 0.0
    %4694 = vmatprep.subr.mxu0 0.0
    %4695 = vmatpush1.msra.mxu0 0.0
    %4696 = vmatprep.subr.mxu0 0.0
    %4697 = vmatpush1.msra.mxu0 0.0
    %4698 = vmatprep.subr.mxu0 0.0
    %4699 = vmatpush1.msra.mxu0 0.0
    %4700 = vmatprep.subr.mxu0 0.0
    %4701 = vmatpush1.msra.mxu0 0.0
    %4702 = vmatprep.subr.mxu0 0.0
    %4703 = vmatpush1.msra.mxu0 0.0
    %4704 = vmatprep.subr.mxu0 0.0
    %4705 = vmatpush1.msra.mxu0 0.0
    %4706 = vmatprep.subr.mxu0 0.0
    %4707 = vmatpush1.msra.mxu0 0.0
    %4708 = vmatprep.subr.mxu0 0.0
    %4709 = vmatpush1.msra.mxu0 0.0
    %4710 = vmatprep.mubr.f32.mxu0 0.0
    %4711 = vmatmul.mubr.f32.gmra.mrb[0].mxu0 %v4644
    %v4712 = vpop.f32.mrb[0].mxu0
    %v4713 = vadd.f32 0.0, %v4712
    %v4714 = vpop.f32.mrb[0].mxu0
    %4715 = vdwg.mxu0
    %v4717 = vrot.slane %v4713, 2
    %v4718 = vrot.slane %v4713, 3
    %v4721 = vadd.f32 %v3803, %v4717
    %v4722 = vadd.f32 %v3808, %v4718
    %v4723 = vxor.u32 %v4721, 2147483648
    %v4724 = vxor.u32 %v4722, 2147483648
    %v4725 = vmul.f32 %v4723, 1.442695
    %v4726 = vpow.pop %v4725
    %v4727 = vmul.f32 %v4724, 1.442695
    %v4728 = vpow.pop %v4727
    %v4729 = vadd.f32 %v4726, 1.0
    %v4730 = vadd.f32 %v4728, 1.0
    %v4731 = vrcp.pop %v4729
    %v4732 = vmul.f32 1.0, %v4731
    %v4733 = vrcp.pop %v4730
    %v4734 = vmul.f32 1.0, %v4733
    %v4735 = vtanh.pop %v4721
    %v4736 = vtanh.pop %v4722
    %v4739 = vrot.slane %v4623, 7
    %v4740 = vrot.slane %v4624, 7
    %v4743 = vmul.f32 %v4732, %v4739
    %v4744 = vmul.f32 %v4734, %v4740
    %4747 = vrot.lane.b32.xlu0 %v4735, 64
    %v4748 = vpop.permute.xlu0 %4747
    %4749 = vrot.lane.b32.xlu0 %v4736, 64
    %v4750 = vpop.permute.xlu0 %4749
    %v4753 = vmul.f32 %v4732, %v4748
    %v4754 = vmul.f32 %v4734, %v4750
    %4757 = vrot.lane.b32.xlu0 %v4753, 32
    %v4758 = vpop.permute.xlu0 %4757
    %4759 = vrot.lane.b32.xlu0 %v4754, 32
    %v4760 = vpop.permute.xlu0 %4759
    %v4763 = vadd.f32 %v4743, %v4758
    %v4764 = vadd.f32 %v4744, %v4760
    %v4765 = vtanh.pop %v4763
    %v4766 = vtanh.pop %v4764
    %4769 = vrot.lane.b32.xlu0 %v4765, 64
    %v4770 = vpop.permute.xlu0 %4769
    %4771 = vrot.lane.b32.xlu0 %v4766, 64
    %v4772 = vpop.permute.xlu0 %4771
    %v4775 = vmul.f32 %v4732, %v4770
    %v4776 = vmul.f32 %v4734, %v4772
    %v4779 = vrot.slane %v4775, 6
    %v4780 = vrot.slane %v4776, 5
    %v4781 = vsel %vm282, %v4780, %v4779
    %4782 = vrot.lane.b32.xlu0 %v4781, 32
    %v4783 = vpop.permute.xlu0 %4782
    %v4784 = vsel %vm151, %v4783, 0
    %4786 = vmatprep.subr.mxu0 0.0
    %4787 = vmatpush1.msra.mxu0 %v3812
    %4788 = vmatprep.subr.mxu0 0.0
    %4789 = vmatpush1.msra.mxu0 %v3813
    %4790 = vmatprep.subr.mxu0 0.0
    %4791 = vmatpush1.msra.mxu0 %v3814
    %4792 = vmatprep.subr.mxu0 0.0
    %4793 = vmatpush1.msra.mxu0 %v3815
    %4794 = vmatprep.subr.mxu0 0.0
    %4795 = vmatpush1.msra.mxu0 0.0
    %4796 = vmatprep.subr.mxu0 0.0
    %4797 = vmatpush1.msra.mxu0 0.0
    %4798 = vmatprep.subr.mxu0 0.0
    %4799 = vmatpush1.msra.mxu0 0.0
    %4800 = vmatprep.subr.mxu0 0.0
    %4801 = vmatpush1.msra.mxu0 0.0
    %4802 = vmatprep.subr.mxu0 0.0
    %4803 = vmatpush1.msra.mxu0 0.0
    %4804 = vmatprep.subr.mxu0 0.0
    %4805 = vmatpush1.msra.mxu0 0.0
    %4806 = vmatprep.subr.mxu0 0.0
    %4807 = vmatpush1.msra.mxu0 0.0
    %4808 = vmatprep.subr.mxu0 0.0
    %4809 = vmatpush1.msra.mxu0 0.0
    %4810 = vmatprep.subr.mxu0 0.0
    %4811 = vmatpush1.msra.mxu0 0.0
    %4812 = vmatprep.subr.mxu0 0.0
    %4813 = vmatpush1.msra.mxu0 0.0
    %4814 = vmatprep.subr.mxu0 0.0
    %4815 = vmatpush1.msra.mxu0 0.0
    %4816 = vmatprep.subr.mxu0 0.0
    %4817 = vmatpush1.msra.mxu0 0.0
    %4818 = vmatprep.subr.mxu0 0.0
    %4819 = vmatpush1.msra.mxu0 0.0
    %4820 = vmatprep.subr.mxu0 0.0
    %4821 = vmatpush1.msra.mxu0 0.0
    %4822 = vmatprep.subr.mxu0 0.0
    %4823 = vmatpush1.msra.mxu0 0.0
    %4824 = vmatprep.subr.mxu0 0.0
    %4825 = vmatpush1.msra.mxu0 0.0
    %4826 = vmatprep.subr.mxu0 0.0
    %4827 = vmatpush1.msra.mxu0 0.0
    %4828 = vmatprep.subr.mxu0 0.0
    %4829 = vmatpush1.msra.mxu0 0.0
    %4830 = vmatprep.subr.mxu0 0.0
    %4831 = vmatpush1.msra.mxu0 0.0
    %4832 = vmatprep.subr.mxu0 0.0
    %4833 = vmatpush1.msra.mxu0 0.0
    %4834 = vmatprep.subr.mxu0 0.0
    %4835 = vmatpush1.msra.mxu0 0.0
    %4836 = vmatprep.subr.mxu0 0.0
    %4837 = vmatpush1.msra.mxu0 0.0
    %4838 = vmatprep.subr.mxu0 0.0
    %4839 = vmatpush1.msra.mxu0 0.0
    %4840 = vmatprep.subr.mxu0 0.0
    %4841 = vmatpush1.msra.mxu0 0.0
    %4842 = vmatprep.subr.mxu0 0.0
    %4843 = vmatpush1.msra.mxu0 0.0
    %4844 = vmatprep.subr.mxu0 0.0
    %4845 = vmatpush1.msra.mxu0 0.0
    %4846 = vmatprep.subr.mxu0 0.0
    %4847 = vmatpush1.msra.mxu0 0.0
    %4848 = vmatprep.subr.mxu0 0.0
    %4849 = vmatpush1.msra.mxu0 0.0
    %4850 = vmatprep.mubr.f32.mxu0 0.0
    %4851 = vmatmul.mubr.f32.gmra.mrb[0].mxu0 %v4784
    %v4852 = vpop.f32.mrb[0].mxu0
    %v4853 = vadd.f32 0.0, %v4852
    %v4854 = vpop.f32.mrb[0].mxu0
    %4855 = vdwg.mxu0
    %v4857 = vrot.slane %v4853, 1
    %v4858 = vrot.slane %v4853, 2
    %v4861 = vadd.f32 %v3803, %v4857
    %v4862 = vadd.f32 %v3808, %v4858
    %v4863 = vxor.u32 %v4861, 2147483648
    %v4864 = vxor.u32 %v4862, 2147483648
    %v4865 = vmul.f32 %v4863, 1.442695
    %v4866 = vpow.pop %v4865
    %v4867 = vmul.f32 %v4864, 1.442695
    %v4868 = vpow.pop %v4867
    %v4869 = vadd.f32 %v4866, 1.0
    %v4870 = vadd.f32 %v4868, 1.0
    %v4871 = vrcp.pop %v4869
    %v4872 = vmul.f32 1.0, %v4871
    %v4873 = vrcp.pop %v4870
    %v4874 = vmul.f32 1.0, %v4873
    %v4875 = vtanh.pop %v4861
    %v4876 = vtanh.pop %v4862
    %v4879 = vrot.slane %v4763, 7
    %v4880 = vrot.slane %v4764, 7
    %v4883 = vmul.f32 %v4872, %v4879
    %v4884 = vmul.f32 %v4874, %v4880
    %4887 = vrot.lane.b32.xlu0 %v4875, 64
    %v4888 = vpop.permute.xlu0 %4887
    %4889 = vrot.lane.b32.xlu0 %v4876, 64
    %v4890 = vpop.permute.xlu0 %4889
    %v4893 = vmul.f32 %v4872, %v4888
    %v4894 = vmul.f32 %v4874, %v4890
    %4897 = vrot.lane.b32.xlu0 %v4893, 32
    %v4898 = vpop.permute.xlu0 %4897
    %4899 = vrot.lane.b32.xlu0 %v4894, 32
    %v4900 = vpop.permute.xlu0 %4899
    %v4903 = vadd.f32 %v4883, %v4898
    %v4904 = vadd.f32 %v4884, %v4900
    %v4905 = vtanh.pop %v4903
    %v4906 = vtanh.pop %v4904
    %4909 = vrot.lane.b32.xlu0 %v4905, 64
    %v4910 = vpop.permute.xlu0 %4909
    %4911 = vrot.lane.b32.xlu0 %v4906, 64
    %v4912 = vpop.permute.xlu0 %4911
    %v4915 = vmul.f32 %v4872, %v4910
    %v4916 = vmul.f32 %v4874, %v4912
    %v4917 = vsel %vm1257, %v3938, %v4076
    %v4918 = vsel %vm1257, %v3939, %v4077
    %v4919 = vsel %vm1260, %v4917, %v4215
    %v4920 = vsel %vm1260, %v4918, %v4216
    %v4921 = vsel %vm1263, %v4919, %v4355
    %v4922 = vsel %vm1263, %v4920, %v4356
    %v4923 = vsel %vm1266, %v4921, %v4495
    %v4924 = vsel %vm1266, %v4922, %v4496
    %v4925 = vsel %vm1269, %v4923, %v4635
    %v4926 = vsel %vm1269, %v4924, %v4636
    %v4927 = vsel %vm1272, %v4925, %v4775
    %v4928 = vsel %vm1272, %v4926, %v4776
    %v4929 = vsel %vm1275, %v4927, %v4915
    %v4930 = vsel %vm1275, %v4928, %v4916
    %s4931 = scalar_lea.vmem [#allocation2], 96
    %v4932 = vld [vmem:[%s4931] sm:$0xff]
    %v4933 = vld [vmem:[%s4931 + $0x8] sm:$0xff]
    %v4934 = vld [vmem:[%s4931 + $0x10] sm:$0xff]
    %v4935 = vld [vmem:[%s4931 + $0x18] sm:$0xff]
    %s4936 = scalar_lea.vmem %s4, 4
    %v4937 = vld [vmem:[%s4936] sm:$0x1]
    %v4939 = vlaneseq
    %v4940 = vshrl.u32 %v4939, 7
    %v4941 = vsub.s32 0, %v4940
    %v4942 = vrot.slane %v4937, %v4941
    %4946 = vrot.lane.b32.xlu0 %v4929, 32
    %v4947 = vpop.permute.xlu0 %4946
    %4948 = vrot.lane.b32.xlu0 %v4930, 32
    %v4949 = vpop.permute.xlu0 %4948
    %v4950 = vsel %vm151, %v4947, 0
    %v4952 = vsel %vm151, %v4949, 0
    %4954 = vmatprep.subr.mxu0 0.0
    %4955 = vmatpush1.msra.mxu0 %v4932
    %4956 = vmatprep.subr.mxu0 0.0
    %4957 = vmatpush1.msra.mxu0 %v4933
    %4958 = vmatprep.subr.mxu0 0.0
    %4959 = vmatpush1.msra.mxu0 %v4934
    %4960 = vmatprep.subr.mxu0 0.0
    %4961 = vmatpush1.msra.mxu0 %v4935
    %4962 = vmatprep.subr.mxu0 0.0
    %4963 = vmatpush1.msra.mxu0 0.0
    %4964 = vmatprep.subr.mxu0 0.0
    %4965 = vmatpush1.msra.mxu0 0.0
    %4966 = vmatprep.subr.mxu0 0.0
    %4967 = vmatpush1.msra.mxu0 0.0
    %4968 = vmatprep.subr.mxu0 0.0
    %4969 = vmatpush1.msra.mxu0 0.0
    %4970 = vmatprep.subr.mxu0 0.0
    %4971 = vmatpush1.msra.mxu0 0.0
    %4972 = vmatprep.subr.mxu0 0.0
    %4973 = vmatpush1.msra.mxu0 0.0
    %4974 = vmatprep.subr.mxu0 0.0
    %4975 = vmatpush1.msra.mxu0 0.0
    %4976 = vmatprep.subr.mxu0 0.0
    %4977 = vmatpush1.msra.mxu0 0.0
    %4978 = vmatprep.subr.mxu0 0.0
    %4979 = vmatpush1.msra.mxu0 0.0
    %4980 = vmatprep.subr.mxu0 0.0
    %4981 = vmatpush1.msra.mxu0 0.0
    %4982 = vmatprep.subr.mxu0 0.0
    %4983 = vmatpush1.msra.mxu0 0.0
    %4984 = vmatprep.subr.mxu0 0.0
    %4985 = vmatpush1.msra.mxu0 0.0
    %4986 = vmatprep.subr.mxu0 0.0
    %4987 = vmatpush1.msra.mxu0 0.0
    %4988 = vmatprep.subr.mxu0 0.0
    %4989 = vmatpush1.msra.mxu0 0.0
    %4990 = vmatprep.subr.mxu0 0.0
    %4991 = vmatpush1.msra.mxu0 0.0
    %4992 = vmatprep.subr.mxu0 0.0
    %4993 = vmatpush1.msra.mxu0 0.0
    %4994 = vmatprep.subr.mxu0 0.0
    %4995 = vmatpush1.msra.mxu0 0.0
    %4996 = vmatprep.subr.mxu0 0.0
    %4997 = vmatpush1.msra.mxu0 0.0
    %4998 = vmatprep.subr.mxu0 0.0
    %4999 = vmatpush1.msra.mxu0 0.0
    %5000 = vmatprep.subr.mxu0 0.0
    %5001 = vmatpush1.msra.mxu0 0.0
    %5002 = vmatprep.subr.mxu0 0.0
    %5003 = vmatpush1.msra.mxu0 0.0
    %5004 = vmatprep.subr.mxu0 0.0
    %5005 = vmatpush1.msra.mxu0 0.0
    %5006 = vmatprep.subr.mxu0 0.0
    %5007 = vmatpush1.msra.mxu0 0.0
    %5008 = vmatprep.subr.mxu0 0.0
    %5009 = vmatpush1.msra.mxu0 0.0
    %5010 = vmatprep.subr.mxu0 0.0
    %5011 = vmatpush1.msra.mxu0 0.0
    %5012 = vmatprep.subr.mxu0 0.0
    %5013 = vmatpush1.msra.mxu0 0.0
    %5014 = vmatprep.subr.mxu0 0.0
    %5015 = vmatpush1.msra.mxu0 0.0
    %5016 = vmatprep.subr.mxu0 0.0
    %5017 = vmatpush1.msra.mxu0 0.0
    %5018 = vmatprep.mubr.f32.mxu0 0.0
    %5019 = vmatmul.mubr.f32.gmra.mrb[0].mxu0 %v4950
    %v5020 = vpop.f32.mrb[0].mxu0
    %v5021 = vadd.f32 %v4942, %v5020
    %v5022 = vpop.f32.mrb[0].mxu0
    %5023 = vmatprep.mubr.f32.mxu0 0.0
    %5024 = vmatmul.mubr.f32.gmra.mrb[0].mxu0 %v4952
    %v5025 = vpop.f32.mrb[0].mxu0
    %v5026 = vadd.f32 %v4942, %v5025
    %v5027 = vpop.f32.mrb[0].mxu0
    %5028 = vdwg.mxu0
    %s5029 = scalar_lea.vmem [#allocation4], 128
    %v5030 = vld [vmem:[%s5029] sm:$0xff]
    %v5031 = vld [vmem:[%s5029 + $0x8] sm:$0xff]
    %v5032 = vld [vmem:[%s5029 + $0x10] sm:$0xff]
    %v5033 = vld [vmem:[%s5029 + $0x18] sm:$0xff]
    %5034 = vmatprep.subr.mxu0 0.0
    %5035 = vmatpush1.msra.mxu0 %v5030
    %5036 = vmatprep.subr.mxu0 0.0
    %5037 = vmatpush1.msra.mxu0 %v5031
    %5038 = vmatprep.subr.mxu0 0.0
    %5039 = vmatpush1.msra.mxu0 %v5032
    %5040 = vmatprep.subr.mxu0 0.0
    %5041 = vmatpush1.msra.mxu0 %v5033
    %5042 = vmatprep.subr.mxu0 0.0
    %5043 = vmatpush1.msra.mxu0 0.0
    %5044 = vmatprep.subr.mxu0 0.0
    %5045 = vmatpush1.msra.mxu0 0.0
    %5046 = vmatprep.subr.mxu0 0.0
    %5047 = vmatpush1.msra.mxu0 0.0
    %5048 = vmatprep.subr.mxu0 0.0
    %5049 = vmatpush1.msra.mxu0 0.0
    %5050 = vmatprep.subr.mxu0 0.0
    %5051 = vmatpush1.msra.mxu0 0.0
    %5052 = vmatprep.subr.mxu0 0.0
    %5053 = vmatpush1.msra.mxu0 0.0
    %5054 = vmatprep.subr.mxu0 0.0
    %5055 = vmatpush1.msra.mxu0 0.0
    %5056 = vmatprep.subr.mxu0 0.0
    %5057 = vmatpush1.msra.mxu0 0.0
    %5058 = vmatprep.subr.mxu0 0.0
    %5059 = vmatpush1.msra.mxu0 0.0
    %5060 = vmatprep.subr.mxu0 0.0
    %5061 = vmatpush1.msra.mxu0 0.0
    %5062 = vmatprep.subr.mxu0 0.0
    %5063 = vmatpush1.msra.mxu0 0.0
    %5064 = vmatprep.subr.mxu0 0.0
    %5065 = vmatpush1.msra.mxu0 0.0
    %5066 = vmatprep.subr.mxu0 0.0
    %5067 = vmatpush1.msra.mxu0 0.0
    %5068 = vmatprep.subr.mxu0 0.0
    %5069 = vmatpush1.msra.mxu0 0.0
    %5070 = vmatprep.subr.mxu0 0.0
    %5071 = vmatpush1.msra.mxu0 0.0
    %5072 = vmatprep.subr.mxu0 0.0
    %5073 = vmatpush1.msra.mxu0 0.0
    %5074 = vmatprep.subr.mxu0 0.0
    %5075 = vmatpush1.msra.mxu0 0.0
    %5076 = vmatprep.subr.mxu0 0.0
    %5077 = vmatpush1.msra.mxu0 0.0
    %5078 = vmatprep.subr.mxu0 0.0
    %5079 = vmatpush1.msra.mxu0 0.0
    %5080 = vmatprep.subr.mxu0 0.0
    %5081 = vmatpush1.msra.mxu0 0.0
    %5082 = vmatprep.subr.mxu0 0.0
    %5083 = vmatpush1.msra.mxu0 0.0
    %5084 = vmatprep.subr.mxu0 0.0
    %5085 = vmatpush1.msra.mxu0 0.0
    %5086 = vmatprep.subr.mxu0 0.0
    %5087 = vmatpush1.msra.mxu0 0.0
    %5088 = vmatprep.subr.mxu0 0.0
    %5089 = vmatpush1.msra.mxu0 0.0
    %5090 = vmatprep.subr.mxu0 0.0
    %5091 = vmatpush1.msra.mxu0 0.0
    %5092 = vmatprep.subr.mxu0 0.0
    %5093 = vmatpush1.msra.mxu0 0.0
    %5094 = vmatprep.subr.mxu0 0.0
    %5095 = vmatpush1.msra.mxu0 0.0
    %5096 = vmatprep.subr.mxu0 0.0
    %5097 = vmatpush1.msra.mxu0 0.0
    %5098 = vmatprep.mubr.f32.mxu0 0.0
    %5099 = vmatmul.mubr.f32.gmra.mrb[0].mxu0 %v153
    %v5100 = vpop.f32.mrb[0].mxu0
    %v5101 = vadd.f32 0.0, %v5100
    %v5102 = vpop.f32.mrb[0].mxu0
    %5103 = vdwg.mxu0
    %v5105 = vrot.slane %v5101, 1
    %v5108 = vadd.f32 %v5021, %v5101
    %v5109 = vadd.f32 %v5026, %v5105
    %v5110 = vxor.u32 %v5108, 2147483648
    %v5111 = vxor.u32 %v5109, 2147483648
    %v5112 = vmul.f32 %v5110, 1.442695
    %v5113 = vpow.pop %v5112
    %v5114 = vmul.f32 %v5111, 1.442695
    %v5115 = vpow.pop %v5114
    %v5116 = vadd.f32 %v5113, 1.0
    %v5117 = vadd.f32 %v5115, 1.0
    %v5118 = vrcp.pop %v5116
    %v5119 = vmul.f32 1.0, %v5118
    %v5120 = vrcp.pop %v5117
    %v5121 = vmul.f32 1.0, %v5120
    %v5122 = vtanh.pop %v5108
    %v5123 = vtanh.pop %v5109
    %v5124 = vmul.f32 %v5119, 0.0
    %v5125 = vmul.f32 %v5121, 0.0
    %5128 = vrot.lane.b32.xlu0 %v5122, 64
    %v5129 = vpop.permute.xlu0 %5128
    %5130 = vrot.lane.b32.xlu0 %v5123, 64
    %v5131 = vpop.permute.xlu0 %5130
    %v5134 = vmul.f32 %v5119, %v5129
    %v5135 = vmul.f32 %v5121, %v5131
    %5138 = vrot.lane.b32.xlu0 %v5134, 32
    %v5139 = vpop.permute.xlu0 %5138
    %5140 = vrot.lane.b32.xlu0 %v5135, 32
    %v5141 = vpop.permute.xlu0 %5140
    %v5144 = vadd.f32 %v5124, %v5139
    %v5145 = vadd.f32 %v5125, %v5141
    %v5146 = vtanh.pop %v5144
    %v5147 = vtanh.pop %v5145
    %5150 = vrot.lane.b32.xlu0 %v5146, 64
    %v5151 = vpop.permute.xlu0 %5150
    %5152 = vrot.lane.b32.xlu0 %v5147, 64
    %v5153 = vpop.permute.xlu0 %5152
    %v5156 = vmul.f32 %v5119, %v5151
    %v5157 = vmul.f32 %v5121, %v5153
    %v5160 = vrot.slane %v5157, 7
    %v5161 = vsel %vm282, %v5160, %v5156
    %5162 = vrot.lane.b32.xlu0 %v5161, 32
    %v5163 = vpop.permute.xlu0 %5162
    %v5164 = vsel %vm151, %v5163, 0
    %5166 = vmatprep.subr.mxu0 0.0
    %5167 = vmatpush1.msra.mxu0 %v5030
    %5168 = vmatprep.subr.mxu0 0.0
    %5169 = vmatpush1.msra.mxu0 %v5031
    %5170 = vmatprep.subr.mxu0 0.0
    %5171 = vmatpush1.msra.mxu0 %v5032
    %5172 = vmatprep.subr.mxu0 0.0
    %5173 = vmatpush1.msra.mxu0 %v5033
    %5174 = vmatprep.subr.mxu0 0.0
    %5175 = vmatpush1.msra.mxu0 0.0
    %5176 = vmatprep.subr.mxu0 0.0
    %5177 = vmatpush1.msra.mxu0 0.0
    %5178 = vmatprep.subr.mxu0 0.0
    %5179 = vmatpush1.msra.mxu0 0.0
    %5180 = vmatprep.subr.mxu0 0.0
    %5181 = vmatpush1.msra.mxu0 0.0
    %5182 = vmatprep.subr.mxu0 0.0
    %5183 = vmatpush1.msra.mxu0 0.0
    %5184 = vmatprep.subr.mxu0 0.0
    %5185 = vmatpush1.msra.mxu0 0.0
    %5186 = vmatprep.subr.mxu0 0.0
    %5187 = vmatpush1.msra.mxu0 0.0
    %5188 = vmatprep.subr.mxu0 0.0
    %5189 = vmatpush1.msra.mxu0 0.0
    %5190 = vmatprep.subr.mxu0 0.0
    %5191 = vmatpush1.msra.mxu0 0.0
    %5192 = vmatprep.subr.mxu0 0.0
    %5193 = vmatpush1.msra.mxu0 0.0
    %5194 = vmatprep.subr.mxu0 0.0
    %5195 = vmatpush1.msra.mxu0 0.0
    %5196 = vmatprep.subr.mxu0 0.0
    %5197 = vmatpush1.msra.mxu0 0.0
    %5198 = vmatprep.subr.mxu0 0.0
    %5199 = vmatpush1.msra.mxu0 0.0
    %5200 = vmatprep.subr.mxu0 0.0
    %5201 = vmatpush1.msra.mxu0 0.0
    %5202 = vmatprep.subr.mxu0 0.0
    %5203 = vmatpush1.msra.mxu0 0.0
    %5204 = vmatprep.subr.mxu0 0.0
    %5205 = vmatpush1.msra.mxu0 0.0
    %5206 = vmatprep.subr.mxu0 0.0
    %5207 = vmatpush1.msra.mxu0 0.0
    %5208 = vmatprep.subr.mxu0 0.0
    %5209 = vmatpush1.msra.mxu0 0.0
    %5210 = vmatprep.subr.mxu0 0.0
    %5211 = vmatpush1.msra.mxu0 0.0
    %5212 = vmatprep.subr.mxu0 0.0
    %5213 = vmatpush1.msra.mxu0 0.0
    %5214 = vmatprep.subr.mxu0 0.0
    %5215 = vmatpush1.msra.mxu0 0.0
    %5216 = vmatprep.subr.mxu0 0.0
    %5217 = vmatpush1.msra.mxu0 0.0
    %5218 = vmatprep.subr.mxu0 0.0
    %5219 = vmatpush1.msra.mxu0 0.0
    %5220 = vmatprep.subr.mxu0 0.0
    %5221 = vmatpush1.msra.mxu0 0.0
    %5222 = vmatprep.subr.mxu0 0.0
    %5223 = vmatpush1.msra.mxu0 0.0
    %5224 = vmatprep.subr.mxu0 0.0
    %5225 = vmatpush1.msra.mxu0 0.0
    %5226 = vmatprep.subr.mxu0 0.0
    %5227 = vmatpush1.msra.mxu0 0.0
    %5228 = vmatprep.subr.mxu0 0.0
    %5229 = vmatpush1.msra.mxu0 0.0
    %5230 = vmatprep.mubr.f32.mxu0 0.0
    %5231 = vmatmul.mubr.f32.gmra.mrb[0].mxu0 %v5164
    %v5232 = vpop.f32.mrb[0].mxu0
    %v5233 = vadd.f32 0.0, %v5232
    %v5234 = vpop.f32.mrb[0].mxu0
    %5235 = vdwg.mxu0
    %v5237 = vrot.slane %v5233, 7
    %v5240 = vadd.f32 %v5021, %v5237
    %v5241 = vadd.f32 %v5026, %v5233
    %v5242 = vxor.u32 %v5240, 2147483648
    %v5243 = vxor.u32 %v5241, 2147483648
    %v5244 = vmul.f32 %v5242, 1.442695
    %v5245 = vpow.pop %v5244
    %v5246 = vmul.f32 %v5243, 1.442695
    %v5247 = vpow.pop %v5246
    %v5248 = vadd.f32 %v5245, 1.0
    %v5249 = vadd.f32 %v5247, 1.0
    %v5250 = vrcp.pop %v5248
    %v5251 = vmul.f32 1.0, %v5250
    %v5252 = vrcp.pop %v5249
    %v5253 = vmul.f32 1.0, %v5252
    %v5254 = vtanh.pop %v5240
    %v5255 = vtanh.pop %v5241
    %v5258 = vrot.slane %v5144, 7
    %v5259 = vrot.slane %v5145, 7
    %v5262 = vmul.f32 %v5251, %v5258
    %v5263 = vmul.f32 %v5253, %v5259
    %5266 = vrot.lane.b32.xlu0 %v5254, 64
    %v5267 = vpop.permute.xlu0 %5266
    %5268 = vrot.lane.b32.xlu0 %v5255, 64
    %v5269 = vpop.permute.xlu0 %5268
    %v5272 = vmul.f32 %v5251, %v5267
    %v5273 = vmul.f32 %v5253, %v5269
    %5276 = vrot.lane.b32.xlu0 %v5272, 32
    %v5277 = vpop.permute.xlu0 %5276
    %5278 = vrot.lane.b32.xlu0 %v5273, 32
    %v5279 = vpop.permute.xlu0 %5278
    %v5282 = vadd.f32 %v5262, %v5277
    %v5283 = vadd.f32 %v5263, %v5279
    %v5284 = vtanh.pop %v5282
    %v5285 = vtanh.pop %v5283
    %5288 = vrot.lane.b32.xlu0 %v5284, 64
    %v5289 = vpop.permute.xlu0 %5288
    %5290 = vrot.lane.b32.xlu0 %v5285, 64
    %v5291 = vpop.permute.xlu0 %5290
    %v5294 = vmul.f32 %v5251, %v5289
    %v5295 = vmul.f32 %v5253, %v5291
    %v5298 = vrot.slane %v5294, 1
    %v5299 = vsel %vm282, %v5295, %v5298
    %5300 = vrot.lane.b32.xlu0 %v5299, 32
    %v5301 = vpop.permute.xlu0 %5300
    %v5302 = vsel %vm151, %v5301, 0
    %5304 = vmatprep.subr.mxu0 0.0
    %5305 = vmatpush1.msra.mxu0 %v5030
    %5306 = vmatprep.subr.mxu0 0.0
    %5307 = vmatpush1.msra.mxu0 %v5031
    %5308 = vmatprep.subr.mxu0 0.0
    %5309 = vmatpush1.msra.mxu0 %v5032
    %5310 = vmatprep.subr.mxu0 0.0
    %5311 = vmatpush1.msra.mxu0 %v5033
    %5312 = vmatprep.subr.mxu0 0.0
    %5313 = vmatpush1.msra.mxu0 0.0
    %5314 = vmatprep.subr.mxu0 0.0
    %5315 = vmatpush1.msra.mxu0 0.0
    %5316 = vmatprep.subr.mxu0 0.0
    %5317 = vmatpush1.msra.mxu0 0.0
    %5318 = vmatprep.subr.mxu0 0.0
    %5319 = vmatpush1.msra.mxu0 0.0
    %5320 = vmatprep.subr.mxu0 0.0
    %5321 = vmatpush1.msra.mxu0 0.0
    %5322 = vmatprep.subr.mxu0 0.0
    %5323 = vmatpush1.msra.mxu0 0.0
    %5324 = vmatprep.subr.mxu0 0.0
    %5325 = vmatpush1.msra.mxu0 0.0
    %5326 = vmatprep.subr.mxu0 0.0
    %5327 = vmatpush1.msra.mxu0 0.0
    %5328 = vmatprep.subr.mxu0 0.0
    %5329 = vmatpush1.msra.mxu0 0.0
    %5330 = vmatprep.subr.mxu0 0.0
    %5331 = vmatpush1.msra.mxu0 0.0
    %5332 = vmatprep.subr.mxu0 0.0
    %5333 = vmatpush1.msra.mxu0 0.0
    %5334 = vmatprep.subr.mxu0 0.0
    %5335 = vmatpush1.msra.mxu0 0.0
    %5336 = vmatprep.subr.mxu0 0.0
    %5337 = vmatpush1.msra.mxu0 0.0
    %5338 = vmatprep.subr.mxu0 0.0
    %5339 = vmatpush1.msra.mxu0 0.0
    %5340 = vmatprep.subr.mxu0 0.0
    %5341 = vmatpush1.msra.mxu0 0.0
    %5342 = vmatprep.subr.mxu0 0.0
    %5343 = vmatpush1.msra.mxu0 0.0
    %5344 = vmatprep.subr.mxu0 0.0
    %5345 = vmatpush1.msra.mxu0 0.0
    %5346 = vmatprep.subr.mxu0 0.0
    %5347 = vmatpush1.msra.mxu0 0.0
    %5348 = vmatprep.subr.mxu0 0.0
    %5349 = vmatpush1.msra.mxu0 0.0
    %5350 = vmatprep.subr.mxu0 0.0
    %5351 = vmatpush1.msra.mxu0 0.0
    %5352 = vmatprep.subr.mxu0 0.0
    %5353 = vmatpush1.msra.mxu0 0.0
    %5354 = vmatprep.subr.mxu0 0.0
    %5355 = vmatpush1.msra.mxu0 0.0
    %5356 = vmatprep.subr.mxu0 0.0
    %5357 = vmatpush1.msra.mxu0 0.0
    %5358 = vmatprep.subr.mxu0 0.0
    %5359 = vmatpush1.msra.mxu0 0.0
    %5360 = vmatprep.subr.mxu0 0.0
    %5361 = vmatpush1.msra.mxu0 0.0
    %5362 = vmatprep.subr.mxu0 0.0
    %5363 = vmatpush1.msra.mxu0 0.0
    %5364 = vmatprep.subr.mxu0 0.0
    %5365 = vmatpush1.msra.mxu0 0.0
    %5366 = vmatprep.subr.mxu0 0.0
    %5367 = vmatpush1.msra.mxu0 0.0
    %5368 = vmatprep.mubr.f32.mxu0 0.0
    %5369 = vmatmul.mubr.f32.gmra.mrb[0].mxu0 %v5302
    %v5370 = vpop.f32.mrb[0].mxu0
    %v5371 = vadd.f32 0.0, %v5370
    %v5372 = vpop.f32.mrb[0].mxu0
    %5373 = vdwg.mxu0
    %v5375 = vrot.slane %v5371, 6
    %v5376 = vrot.slane %v5371, 7
    %v5379 = vadd.f32 %v5021, %v5375
    %v5380 = vadd.f32 %v5026, %v5376
    %v5381 = vxor.u32 %v5379, 2147483648
    %v5382 = vxor.u32 %v5380, 2147483648
    %v5383 = vmul.f32 %v5381, 1.442695
    %v5384 = vpow.pop %v5383
    %v5385 = vmul.f32 %v5382, 1.442695
    %v5386 = vpow.pop %v5385
    %v5387 = vadd.f32 %v5384, 1.0
    %v5388 = vadd.f32 %v5386, 1.0
    %v5389 = vrcp.pop %v5387
    %v5390 = vmul.f32 1.0, %v5389
    %v5391 = vrcp.pop %v5388
    %v5392 = vmul.f32 1.0, %v5391
    %v5393 = vtanh.pop %v5379
    %v5394 = vtanh.pop %v5380
    %v5397 = vrot.slane %v5282, 7
    %v5398 = vrot.slane %v5283, 7
    %v5401 = vmul.f32 %v5390, %v5397
    %v5402 = vmul.f32 %v5392, %v5398
    %5405 = vrot.lane.b32.xlu0 %v5393, 64
    %v5406 = vpop.permute.xlu0 %5405
    %5407 = vrot.lane.b32.xlu0 %v5394, 64
    %v5408 = vpop.permute.xlu0 %5407
    %v5411 = vmul.f32 %v5390, %v5406
    %v5412 = vmul.f32 %v5392, %v5408
    %5415 = vrot.lane.b32.xlu0 %v5411, 32
    %v5416 = vpop.permute.xlu0 %5415
    %5417 = vrot.lane.b32.xlu0 %v5412, 32
    %v5418 = vpop.permute.xlu0 %5417
    %v5421 = vadd.f32 %v5401, %v5416
    %v5422 = vadd.f32 %v5402, %v5418
    %v5423 = vtanh.pop %v5421
    %v5424 = vtanh.pop %v5422
    %5427 = vrot.lane.b32.xlu0 %v5423, 64
    %v5428 = vpop.permute.xlu0 %5427
    %5429 = vrot.lane.b32.xlu0 %v5424, 64
    %v5430 = vpop.permute.xlu0 %5429
    %v5433 = vmul.f32 %v5390, %v5428
    %v5434 = vmul.f32 %v5392, %v5430
    %v5437 = vrot.slane %v5433, 2
    %v5438 = vrot.slane %v5434, 1
    %v5439 = vsel %vm282, %v5438, %v5437
    %5440 = vrot.lane.b32.xlu0 %v5439, 32
    %v5441 = vpop.permute.xlu0 %5440
    %v5442 = vsel %vm151, %v5441, 0
    %5444 = vmatprep.subr.mxu0 0.0
    %5445 = vmatpush1.msra.mxu0 %v5030
    %5446 = vmatprep.subr.mxu0 0.0
    %5447 = vmatpush1.msra.mxu0 %v5031
    %5448 = vmatprep.subr.mxu0 0.0
    %5449 = vmatpush1.msra.mxu0 %v5032
    %5450 = vmatprep.subr.mxu0 0.0
    %5451 = vmatpush1.msra.mxu0 %v5033
    %5452 = vmatprep.subr.mxu0 0.0
    %5453 = vmatpush1.msra.mxu0 0.0
    %5454 = vmatprep.subr.mxu0 0.0
    %5455 = vmatpush1.msra.mxu0 0.0
    %5456 = vmatprep.subr.mxu0 0.0
    %5457 = vmatpush1.msra.mxu0 0.0
    %5458 = vmatprep.subr.mxu0 0.0
    %5459 = vmatpush1.msra.mxu0 0.0
    %5460 = vmatprep.subr.mxu0 0.0
    %5461 = vmatpush1.msra.mxu0 0.0
    %5462 = vmatprep.subr.mxu0 0.0
    %5463 = vmatpush1.msra.mxu0 0.0
    %5464 = vmatprep.subr.mxu0 0.0
    %5465 = vmatpush1.msra.mxu0 0.0
    %5466 = vmatprep.subr.mxu0 0.0
    %5467 = vmatpush1.msra.mxu0 0.0
    %5468 = vmatprep.subr.mxu0 0.0
    %5469 = vmatpush1.msra.mxu0 0.0
    %5470 = vmatprep.subr.mxu0 0.0
    %5471 = vmatpush1.msra.mxu0 0.0
    %5472 = vmatprep.subr.mxu0 0.0
    %5473 = vmatpush1.msra.mxu0 0.0
    %5474 = vmatprep.subr.mxu0 0.0
    %5475 = vmatpush1.msra.mxu0 0.0
    %5476 = vmatprep.subr.mxu0 0.0
    %5477 = vmatpush1.msra.mxu0 0.0
    %5478 = vmatprep.subr.mxu0 0.0
    %5479 = vmatpush1.msra.mxu0 0.0
    %5480 = vmatprep.subr.mxu0 0.0
    %5481 = vmatpush1.msra.mxu0 0.0
    %5482 = vmatprep.subr.mxu0 0.0
    %5483 = vmatpush1.msra.mxu0 0.0
    %5484 = vmatprep.subr.mxu0 0.0
    %5485 = vmatpush1.msra.mxu0 0.0
    %5486 = vmatprep.subr.mxu0 0.0
    %5487 = vmatpush1.msra.mxu0 0.0
    %5488 = vmatprep.subr.mxu0 0.0
    %5489 = vmatpush1.msra.mxu0 0.0
    %5490 = vmatprep.subr.mxu0 0.0
    %5491 = vmatpush1.msra.mxu0 0.0
    %5492 = vmatprep.subr.mxu0 0.0
    %5493 = vmatpush1.msra.mxu0 0.0
    %5494 = vmatprep.subr.mxu0 0.0
    %5495 = vmatpush1.msra.mxu0 0.0
    %5496 = vmatprep.subr.mxu0 0.0
    %5497 = vmatpush1.msra.mxu0 0.0
    %5498 = vmatprep.subr.mxu0 0.0
    %5499 = vmatpush1.msra.mxu0 0.0
    %5500 = vmatprep.subr.mxu0 0.0
    %5501 = vmatpush1.msra.mxu0 0.0
    %5502 = vmatprep.subr.mxu0 0.0
    %5503 = vmatpush1.msra.mxu0 0.0
    %5504 = vmatprep.subr.mxu0 0.0
    %5505 = vmatpush1.msra.mxu0 0.0
    %5506 = vmatprep.subr.mxu0 0.0
    %5507 = vmatpush1.msra.mxu0 0.0
    %5508 = vmatprep.mubr.f32.mxu0 0.0
    %5509 = vmatmul.mubr.f32.gmra.mrb[0].mxu0 %v5442
    %v5510 = vpop.f32.mrb[0].mxu0
    %v5511 = vadd.f32 0.0, %v5510
    %v5512 = vpop.f32.mrb[0].mxu0
    %5513 = vdwg.mxu0
    %v5515 = vrot.slane %v5511, 5
    %v5516 = vrot.slane %v5511, 6
    %v5519 = vadd.f32 %v5021, %v5515
    %v5520 = vadd.f32 %v5026, %v5516
    %v5521 = vxor.u32 %v5519, 2147483648
    %v5522 = vxor.u32 %v5520, 2147483648
    %v5523 = vmul.f32 %v5521, 1.442695
    %v5524 = vpow.pop %v5523
    %v5525 = vmul.f32 %v5522, 1.442695
    %v5526 = vpow.pop %v5525
    %v5527 = vadd.f32 %v5524, 1.0
    %v5528 = vadd.f32 %v5526, 1.0
    %v5529 = vrcp.pop %v5527
    %v5530 = vmul.f32 1.0, %v5529
    %v5531 = vrcp.pop %v5528
    %v5532 = vmul.f32 1.0, %v5531
    %v5533 = vtanh.pop %v5519
    %v5534 = vtanh.pop %v5520
    %v5537 = vrot.slane %v5421, 7
    %v5538 = vrot.slane %v5422, 7
    %v5541 = vmul.f32 %v5530, %v5537
    %v5542 = vmul.f32 %v5532, %v5538
    %5545 = vrot.lane.b32.xlu0 %v5533, 64
    %v5546 = vpop.permute.xlu0 %5545
    %5547 = vrot.lane.b32.xlu0 %v5534, 64
    %v5548 = vpop.permute.xlu0 %5547
    %v5551 = vmul.f32 %v5530, %v5546
    %v5552 = vmul.f32 %v5532, %v5548
    %5555 = vrot.lane.b32.xlu0 %v5551, 32
    %v5556 = vpop.permute.xlu0 %5555
    %5557 = vrot.lane.b32.xlu0 %v5552, 32
    %v5558 = vpop.permute.xlu0 %5557
    %v5561 = vadd.f32 %v5541, %v5556
    %v5562 = vadd.f32 %v5542, %v5558
    %v5563 = vtanh.pop %v5561
    %v5564 = vtanh.pop %v5562
    %5567 = vrot.lane.b32.xlu0 %v5563, 64
    %v5568 = vpop.permute.xlu0 %5567
    %5569 = vrot.lane.b32.xlu0 %v5564, 64
    %v5570 = vpop.permute.xlu0 %5569
    %v5573 = vmul.f32 %v5530, %v5568
    %v5574 = vmul.f32 %v5532, %v5570
    %v5577 = vrot.slane %v5573, 3
    %v5578 = vrot.slane %v5574, 2
    %v5579 = vsel %vm282, %v5578, %v5577
    %5580 = vrot.lane.b32.xlu0 %v5579, 32
    %v5581 = vpop.permute.xlu0 %5580
    %v5582 = vsel %vm151, %v5581, 0
    %5584 = vmatprep.subr.mxu0 0.0
    %5585 = vmatpush1.msra.mxu0 %v5030
    %5586 = vmatprep.subr.mxu0 0.0
    %5587 = vmatpush1.msra.mxu0 %v5031
    %5588 = vmatprep.subr.mxu0 0.0
    %5589 = vmatpush1.msra.mxu0 %v5032
    %5590 = vmatprep.subr.mxu0 0.0
    %5591 = vmatpush1.msra.mxu0 %v5033
    %5592 = vmatprep.subr.mxu0 0.0
    %5593 = vmatpush1.msra.mxu0 0.0
    %5594 = vmatprep.subr.mxu0 0.0
    %5595 = vmatpush1.msra.mxu0 0.0
    %5596 = vmatprep.subr.mxu0 0.0
    %5597 = vmatpush1.msra.mxu0 0.0
    %5598 = vmatprep.subr.mxu0 0.0
    %5599 = vmatpush1.msra.mxu0 0.0
    %5600 = vmatprep.subr.mxu0 0.0
    %5601 = vmatpush1.msra.mxu0 0.0
    %5602 = vmatprep.subr.mxu0 0.0
    %5603 = vmatpush1.msra.mxu0 0.0
    %5604 = vmatprep.subr.mxu0 0.0
    %5605 = vmatpush1.msra.mxu0 0.0
    %5606 = vmatprep.subr.mxu0 0.0
    %5607 = vmatpush1.msra.mxu0 0.0
    %5608 = vmatprep.subr.mxu0 0.0
    %5609 = vmatpush1.msra.mxu0 0.0
    %5610 = vmatprep.subr.mxu0 0.0
    %5611 = vmatpush1.msra.mxu0 0.0
    %5612 = vmatprep.subr.mxu0 0.0
    %5613 = vmatpush1.msra.mxu0 0.0
    %5614 = vmatprep.subr.mxu0 0.0
    %5615 = vmatpush1.msra.mxu0 0.0
    %5616 = vmatprep.subr.mxu0 0.0
    %5617 = vmatpush1.msra.mxu0 0.0
    %5618 = vmatprep.subr.mxu0 0.0
    %5619 = vmatpush1.msra.mxu0 0.0
    %5620 = vmatprep.subr.mxu0 0.0
    %5621 = vmatpush1.msra.mxu0 0.0
    %5622 = vmatprep.subr.mxu0 0.0
    %5623 = vmatpush1.msra.mxu0 0.0
    %5624 = vmatprep.subr.mxu0 0.0
    %5625 = vmatpush1.msra.mxu0 0.0
    %5626 = vmatprep.subr.mxu0 0.0
    %5627 = vmatpush1.msra.mxu0 0.0
    %5628 = vmatprep.subr.mxu0 0.0
    %5629 = vmatpush1.msra.mxu0 0.0
    %5630 = vmatprep.subr.mxu0 0.0
    %5631 = vmatpush1.msra.mxu0 0.0
    %5632 = vmatprep.subr.mxu0 0.0
    %5633 = vmatpush1.msra.mxu0 0.0
    %5634 = vmatprep.subr.mxu0 0.0
    %5635 = vmatpush1.msra.mxu0 0.0
    %5636 = vmatprep.subr.mxu0 0.0
    %5637 = vmatpush1.msra.mxu0 0.0
    %5638 = vmatprep.subr.mxu0 0.0
    %5639 = vmatpush1.msra.mxu0 0.0
    %5640 = vmatprep.subr.mxu0 0.0
    %5641 = vmatpush1.msra.mxu0 0.0
    %5642 = vmatprep.subr.mxu0 0.0
    %5643 = vmatpush1.msra.mxu0 0.0
    %5644 = vmatprep.subr.mxu0 0.0
    %5645 = vmatpush1.msra.mxu0 0.0
    %5646 = vmatprep.subr.mxu0 0.0
    %5647 = vmatpush1.msra.mxu0 0.0
    %5648 = vmatprep.mubr.f32.mxu0 0.0
    %5649 = vmatmul.mubr.f32.gmra.mrb[0].mxu0 %v5582
    %v5650 = vpop.f32.mrb[0].mxu0
    %v5651 = vadd.f32 0.0, %v5650
    %v5652 = vpop.f32.mrb[0].mxu0
    %5653 = vdwg.mxu0
    %v5655 = vrot.slane %v5651, 4
    %v5656 = vrot.slane %v5651, 5
    %v5659 = vadd.f32 %v5021, %v5655
    %v5660 = vadd.f32 %v5026, %v5656
    %v5661 = vxor.u32 %v5659, 2147483648
    %v5662 = vxor.u32 %v5660, 2147483648
    %v5663 = vmul.f32 %v5661, 1.442695
    %v5664 = vpow.pop %v5663
    %v5665 = vmul.f32 %v5662, 1.442695
    %v5666 = vpow.pop %v5665
    %v5667 = vadd.f32 %v5664, 1.0
    %v5668 = vadd.f32 %v5666, 1.0
    %v5669 = vrcp.pop %v5667
    %v5670 = vmul.f32 1.0, %v5669
    %v5671 = vrcp.pop %v5668
    %v5672 = vmul.f32 1.0, %v5671
    %v5673 = vtanh.pop %v5659
    %v5674 = vtanh.pop %v5660
    %v5677 = vrot.slane %v5561, 7
    %v5678 = vrot.slane %v5562, 7
    %v5681 = vmul.f32 %v5670, %v5677
    %v5682 = vmul.f32 %v5672, %v5678
    %5685 = vrot.lane.b32.xlu0 %v5673, 64
    %v5686 = vpop.permute.xlu0 %5685
    %5687 = vrot.lane.b32.xlu0 %v5674, 64
    %v5688 = vpop.permute.xlu0 %5687
    %v5691 = vmul.f32 %v5670, %v5686
    %v5692 = vmul.f32 %v5672, %v5688
    %5695 = vrot.lane.b32.xlu0 %v5691, 32
    %v5696 = vpop.permute.xlu0 %5695
    %5697 = vrot.lane.b32.xlu0 %v5692, 32
    %v5698 = vpop.permute.xlu0 %5697
    %v5701 = vadd.f32 %v5681, %v5696
    %v5702 = vadd.f32 %v5682, %v5698
    %v5703 = vtanh.pop %v5701
    %v5704 = vtanh.pop %v5702
    %5707 = vrot.lane.b32.xlu0 %v5703, 64
    %v5708 = vpop.permute.xlu0 %5707
    %5709 = vrot.lane.b32.xlu0 %v5704, 64
    %v5710 = vpop.permute.xlu0 %5709
    %v5713 = vmul.f32 %v5670, %v5708
    %v5714 = vmul.f32 %v5672, %v5710
    %v5717 = vrot.slane %v5713, 4
    %v5718 = vrot.slane %v5714, 3
    %v5719 = vsel %vm282, %v5718, %v5717
    %5720 = vrot.lane.b32.xlu0 %v5719, 32
    %v5721 = vpop.permute.xlu0 %5720
    %v5722 = vsel %vm151, %v5721, 0
    %5724 = vmatprep.subr.mxu0 0.0
    %5725 = vmatpush1.msra.mxu0 %v5030
    %5726 = vmatprep.subr.mxu0 0.0
    %5727 = vmatpush1.msra.mxu0 %v5031
    %5728 = vmatprep.subr.mxu0 0.0
    %5729 = vmatpush1.msra.mxu0 %v5032
    %5730 = vmatprep.subr.mxu0 0.0
    %5731 = vmatpush1.msra.mxu0 %v5033
    %5732 = vmatprep.subr.mxu0 0.0
    %5733 = vmatpush1.msra.mxu0 0.0
    %5734 = vmatprep.subr.mxu0 0.0
    %5735 = vmatpush1.msra.mxu0 0.0
    %5736 = vmatprep.subr.mxu0 0.0
    %5737 = vmatpush1.msra.mxu0 0.0
    %5738 = vmatprep.subr.mxu0 0.0
    %5739 = vmatpush1.msra.mxu0 0.0
    %5740 = vmatprep.subr.mxu0 0.0
    %5741 = vmatpush1.msra.mxu0 0.0
    %5742 = vmatprep.subr.mxu0 0.0
    %5743 = vmatpush1.msra.mxu0 0.0
    %5744 = vmatprep.subr.mxu0 0.0
    %5745 = vmatpush1.msra.mxu0 0.0
    %5746 = vmatprep.subr.mxu0 0.0
    %5747 = vmatpush1.msra.mxu0 0.0
    %5748 = vmatprep.subr.mxu0 0.0
    %5749 = vmatpush1.msra.mxu0 0.0
    %5750 = vmatprep.subr.mxu0 0.0
    %5751 = vmatpush1.msra.mxu0 0.0
    %5752 = vmatprep.subr.mxu0 0.0
    %5753 = vmatpush1.msra.mxu0 0.0
    %5754 = vmatprep.subr.mxu0 0.0
    %5755 = vmatpush1.msra.mxu0 0.0
    %5756 = vmatprep.subr.mxu0 0.0
    %5757 = vmatpush1.msra.mxu0 0.0
    %5758 = vmatprep.subr.mxu0 0.0
    %5759 = vmatpush1.msra.mxu0 0.0
    %5760 = vmatprep.subr.mxu0 0.0
    %5761 = vmatpush1.msra.mxu0 0.0
    %5762 = vmatprep.subr.mxu0 0.0
    %5763 = vmatpush1.msra.mxu0 0.0
    %5764 = vmatprep.subr.mxu0 0.0
    %5765 = vmatpush1.msra.mxu0 0.0
    %5766 = vmatprep.subr.mxu0 0.0
    %5767 = vmatpush1.msra.mxu0 0.0
    %5768 = vmatprep.subr.mxu0 0.0
    %5769 = vmatpush1.msra.mxu0 0.0
    %5770 = vmatprep.subr.mxu0 0.0
    %5771 = vmatpush1.msra.mxu0 0.0
    %5772 = vmatprep.subr.mxu0 0.0
    %5773 = vmatpush1.msra.mxu0 0.0
    %5774 = vmatprep.subr.mxu0 0.0
    %5775 = vmatpush1.msra.mxu0 0.0
    %5776 = vmatprep.subr.mxu0 0.0
    %5777 = vmatpush1.msra.mxu0 0.0
    %5778 = vmatprep.subr.mxu0 0.0
    %5779 = vmatpush1.msra.mxu0 0.0
    %5780 = vmatprep.subr.mxu0 0.0
    %5781 = vmatpush1.msra.mxu0 0.0
    %5782 = vmatprep.subr.mxu0 0.0
    %5783 = vmatpush1.msra.mxu0 0.0
    %5784 = vmatprep.subr.mxu0 0.0
    %5785 = vmatpush1.msra.mxu0 0.0
    %5786 = vmatprep.subr.mxu0 0.0
    %5787 = vmatpush1.msra.mxu0 0.0
    %5788 = vmatprep.mubr.f32.mxu0 0.0
    %5789 = vmatmul.mubr.f32.gmra.mrb[0].mxu0 %v5722
    %v5790 = vpop.f32.mrb[0].mxu0
    %v5791 = vadd.f32 0.0, %v5790
    %v5792 = vpop.f32.mrb[0].mxu0
    %5793 = vdwg.mxu0
    %v5795 = vrot.slane %v5791, 3
    %v5796 = vrot.slane %v5791, 4
    %v5799 = vadd.f32 %v5021, %v5795
    %v5800 = vadd.f32 %v5026, %v5796
    %v5801 = vxor.u32 %v5799, 2147483648
    %v5802 = vxor.u32 %v5800, 2147483648
    %v5803 = vmul.f32 %v5801, 1.442695
    %v5804 = vpow.pop %v5803
    %v5805 = vmul.f32 %v5802, 1.442695
    %v5806 = vpow.pop %v5805
    %v5807 = vadd.f32 %v5804, 1.0
    %v5808 = vadd.f32 %v5806, 1.0
    %v5809 = vrcp.pop %v5807
    %v5810 = vmul.f32 1.0, %v5809
    %v5811 = vrcp.pop %v5808
    %v5812 = vmul.f32 1.0, %v5811
    %v5813 = vtanh.pop %v5799
    %v5814 = vtanh.pop %v5800
    %v5817 = vrot.slane %v5701, 7
    %v5818 = vrot.slane %v5702, 7
    %v5821 = vmul.f32 %v5810, %v5817
    %v5822 = vmul.f32 %v5812, %v5818
    %5825 = vrot.lane.b32.xlu0 %v5813, 64
    %v5826 = vpop.permute.xlu0 %5825
    %5827 = vrot.lane.b32.xlu0 %v5814, 64
    %v5828 = vpop.permute.xlu0 %5827
    %v5831 = vmul.f32 %v5810, %v5826
    %v5832 = vmul.f32 %v5812, %v5828
    %5835 = vrot.lane.b32.xlu0 %v5831, 32
    %v5836 = vpop.permute.xlu0 %5835
    %5837 = vrot.lane.b32.xlu0 %v5832, 32
    %v5838 = vpop.permute.xlu0 %5837
    %v5841 = vadd.f32 %v5821, %v5836
    %v5842 = vadd.f32 %v5822, %v5838
    %v5843 = vtanh.pop %v5841
    %v5844 = vtanh.pop %v5842
    %5847 = vrot.lane.b32.xlu0 %v5843, 64
    %v5848 = vpop.permute.xlu0 %5847
    %5849 = vrot.lane.b32.xlu0 %v5844, 64
    %v5850 = vpop.permute.xlu0 %5849
    %v5853 = vmul.f32 %v5810, %v5848
    %v5854 = vmul.f32 %v5812, %v5850
    %v5857 = vrot.slane %v5853, 5
    %v5858 = vrot.slane %v5854, 4
    %v5859 = vsel %vm282, %v5858, %v5857
    %5860 = vrot.lane.b32.xlu0 %v5859, 32
    %v5861 = vpop.permute.xlu0 %5860
    %v5862 = vsel %vm151, %v5861, 0
    %5864 = vmatprep.subr.mxu0 0.0
    %5865 = vmatpush1.msra.mxu0 %v5030
    %5866 = vmatprep.subr.mxu0 0.0
    %5867 = vmatpush1.msra.mxu0 %v5031
    %5868 = vmatprep.subr.mxu0 0.0
    %5869 = vmatpush1.msra.mxu0 %v5032
    %5870 = vmatprep.subr.mxu0 0.0
    %5871 = vmatpush1.msra.mxu0 %v5033
    %5872 = vmatprep.subr.mxu0 0.0
    %5873 = vmatpush1.msra.mxu0 0.0
    %5874 = vmatprep.subr.mxu0 0.0
    %5875 = vmatpush1.msra.mxu0 0.0
    %5876 = vmatprep.subr.mxu0 0.0
    %5877 = vmatpush1.msra.mxu0 0.0
    %5878 = vmatprep.subr.mxu0 0.0
    %5879 = vmatpush1.msra.mxu0 0.0
    %5880 = vmatprep.subr.mxu0 0.0
    %5881 = vmatpush1.msra.mxu0 0.0
    %5882 = vmatprep.subr.mxu0 0.0
    %5883 = vmatpush1.msra.mxu0 0.0
    %5884 = vmatprep.subr.mxu0 0.0
    %5885 = vmatpush1.msra.mxu0 0.0
    %5886 = vmatprep.subr.mxu0 0.0
    %5887 = vmatpush1.msra.mxu0 0.0
    %5888 = vmatprep.subr.mxu0 0.0
    %5889 = vmatpush1.msra.mxu0 0.0
    %5890 = vmatprep.subr.mxu0 0.0
    %5891 = vmatpush1.msra.mxu0 0.0
    %5892 = vmatprep.subr.mxu0 0.0
    %5893 = vmatpush1.msra.mxu0 0.0
    %5894 = vmatprep.subr.mxu0 0.0
    %5895 = vmatpush1.msra.mxu0 0.0
    %5896 = vmatprep.subr.mxu0 0.0
    %5897 = vmatpush1.msra.mxu0 0.0
    %5898 = vmatprep.subr.mxu0 0.0
    %5899 = vmatpush1.msra.mxu0 0.0
    %5900 = vmatprep.subr.mxu0 0.0
    %5901 = vmatpush1.msra.mxu0 0.0
    %5902 = vmatprep.subr.mxu0 0.0
    %5903 = vmatpush1.msra.mxu0 0.0
    %5904 = vmatprep.subr.mxu0 0.0
    %5905 = vmatpush1.msra.mxu0 0.0
    %5906 = vmatprep.subr.mxu0 0.0
    %5907 = vmatpush1.msra.mxu0 0.0
    %5908 = vmatprep.subr.mxu0 0.0
    %5909 = vmatpush1.msra.mxu0 0.0
    %5910 = vmatprep.subr.mxu0 0.0
    %5911 = vmatpush1.msra.mxu0 0.0
    %5912 = vmatprep.subr.mxu0 0.0
    %5913 = vmatpush1.msra.mxu0 0.0
    %5914 = vmatprep.subr.mxu0 0.0
    %5915 = vmatpush1.msra.mxu0 0.0
    %5916 = vmatprep.subr.mxu0 0.0
    %5917 = vmatpush1.msra.mxu0 0.0
    %5918 = vmatprep.subr.mxu0 0.0
    %5919 = vmatpush1.msra.mxu0 0.0
    %5920 = vmatprep.subr.mxu0 0.0
    %5921 = vmatpush1.msra.mxu0 0.0
    %5922 = vmatprep.subr.mxu0 0.0
    %5923 = vmatpush1.msra.mxu0 0.0
    %5924 = vmatprep.subr.mxu0 0.0
    %5925 = vmatpush1.msra.mxu0 0.0
    %5926 = vmatprep.subr.mxu0 0.0
    %5927 = vmatpush1.msra.mxu0 0.0
    %5928 = vmatprep.mubr.f32.mxu0 0.0
    %5929 = vmatmul.mubr.f32.gmra.mrb[0].mxu0 %v5862
    %v5930 = vpop.f32.mrb[0].mxu0
    %v5931 = vadd.f32 0.0, %v5930
    %v5932 = vpop.f32.mrb[0].mxu0
    %5933 = vdwg.mxu0
    %v5935 = vrot.slane %v5931, 2
    %v5936 = vrot.slane %v5931, 3
    %v5939 = vadd.f32 %v5021, %v5935
    %v5940 = vadd.f32 %v5026, %v5936
    %v5941 = vxor.u32 %v5939, 2147483648
    %v5942 = vxor.u32 %v5940, 2147483648
    %v5943 = vmul.f32 %v5941, 1.442695
    %v5944 = vpow.pop %v5943
    %v5945 = vmul.f32 %v5942, 1.442695
    %v5946 = vpow.pop %v5945
    %v5947 = vadd.f32 %v5944, 1.0
    %v5948 = vadd.f32 %v5946, 1.0
    %v5949 = vrcp.pop %v5947
    %v5950 = vmul.f32 1.0, %v5949
    %v5951 = vrcp.pop %v5948
    %v5952 = vmul.f32 1.0, %v5951
    %v5953 = vtanh.pop %v5939
    %v5954 = vtanh.pop %v5940
    %v5957 = vrot.slane %v5841, 7
    %v5958 = vrot.slane %v5842, 7
    %v5961 = vmul.f32 %v5950, %v5957
    %v5962 = vmul.f32 %v5952, %v5958
    %5965 = vrot.lane.b32.xlu0 %v5953, 64
    %v5966 = vpop.permute.xlu0 %5965
    %5967 = vrot.lane.b32.xlu0 %v5954, 64
    %v5968 = vpop.permute.xlu0 %5967
    %v5971 = vmul.f32 %v5950, %v5966
    %v5972 = vmul.f32 %v5952, %v5968
    %5975 = vrot.lane.b32.xlu0 %v5971, 32
    %v5976 = vpop.permute.xlu0 %5975
    %5977 = vrot.lane.b32.xlu0 %v5972, 32
    %v5978 = vpop.permute.xlu0 %5977
    %v5981 = vadd.f32 %v5961, %v5976
    %v5982 = vadd.f32 %v5962, %v5978
    %v5983 = vtanh.pop %v5981
    %v5984 = vtanh.pop %v5982
    %5987 = vrot.lane.b32.xlu0 %v5983, 64
    %v5988 = vpop.permute.xlu0 %5987
    %5989 = vrot.lane.b32.xlu0 %v5984, 64
    %v5990 = vpop.permute.xlu0 %5989
    %v5993 = vmul.f32 %v5950, %v5988
    %v5994 = vmul.f32 %v5952, %v5990
    %v5997 = vrot.slane %v5993, 6
    %v5998 = vrot.slane %v5994, 5
    %v5999 = vsel %vm282, %v5998, %v5997
    %6000 = vrot.lane.b32.xlu0 %v5999, 32
    %v6001 = vpop.permute.xlu0 %6000
    %v6002 = vsel %vm151, %v6001, 0
    %6004 = vmatprep.subr.mxu0 0.0
    %6005 = vmatpush1.msra.mxu0 %v5030
    %6006 = vmatprep.subr.mxu0 0.0
    %6007 = vmatpush1.msra.mxu0 %v5031
    %6008 = vmatprep.subr.mxu0 0.0
    %6009 = vmatpush1.msra.mxu0 %v5032
    %6010 = vmatprep.subr.mxu0 0.0
    %6011 = vmatpush1.msra.mxu0 %v5033
    %6012 = vmatprep.subr.mxu0 0.0
    %6013 = vmatpush1.msra.mxu0 0.0
    %6014 = vmatprep.subr.mxu0 0.0
    %6015 = vmatpush1.msra.mxu0 0.0
    %6016 = vmatprep.subr.mxu0 0.0
    %6017 = vmatpush1.msra.mxu0 0.0
    %6018 = vmatprep.subr.mxu0 0.0
    %6019 = vmatpush1.msra.mxu0 0.0
    %6020 = vmatprep.subr.mxu0 0.0
    %6021 = vmatpush1.msra.mxu0 0.0
    %6022 = vmatprep.subr.mxu0 0.0
    %6023 = vmatpush1.msra.mxu0 0.0
    %6024 = vmatprep.subr.mxu0 0.0
    %6025 = vmatpush1.msra.mxu0 0.0
    %6026 = vmatprep.subr.mxu0 0.0
    %6027 = vmatpush1.msra.mxu0 0.0
    %6028 = vmatprep.subr.mxu0 0.0
    %6029 = vmatpush1.msra.mxu0 0.0
    %6030 = vmatprep.subr.mxu0 0.0
    %6031 = vmatpush1.msra.mxu0 0.0
    %6032 = vmatprep.subr.mxu0 0.0
    %6033 = vmatpush1.msra.mxu0 0.0
    %6034 = vmatprep.subr.mxu0 0.0
    %6035 = vmatpush1.msra.mxu0 0.0
    %6036 = vmatprep.subr.mxu0 0.0
    %6037 = vmatpush1.msra.mxu0 0.0
    %6038 = vmatprep.subr.mxu0 0.0
    %6039 = vmatpush1.msra.mxu0 0.0
    %6040 = vmatprep.subr.mxu0 0.0
    %6041 = vmatpush1.msra.mxu0 0.0
    %6042 = vmatprep.subr.mxu0 0.0
    %6043 = vmatpush1.msra.mxu0 0.0
    %6044 = vmatprep.subr.mxu0 0.0
    %6045 = vmatpush1.msra.mxu0 0.0
    %6046 = vmatprep.subr.mxu0 0.0
    %6047 = vmatpush1.msra.mxu0 0.0
    %6048 = vmatprep.subr.mxu0 0.0
    %6049 = vmatpush1.msra.mxu0 0.0
    %6050 = vmatprep.subr.mxu0 0.0
    %6051 = vmatpush1.msra.mxu0 0.0
    %6052 = vmatprep.subr.mxu0 0.0
    %6053 = vmatpush1.msra.mxu0 0.0
    %6054 = vmatprep.subr.mxu0 0.0
    %6055 = vmatpush1.msra.mxu0 0.0
    %6056 = vmatprep.subr.mxu0 0.0
    %6057 = vmatpush1.msra.mxu0 0.0
    %6058 = vmatprep.subr.mxu0 0.0
    %6059 = vmatpush1.msra.mxu0 0.0
    %6060 = vmatprep.subr.mxu0 0.0
    %6061 = vmatpush1.msra.mxu0 0.0
    %6062 = vmatprep.subr.mxu0 0.0
    %6063 = vmatpush1.msra.mxu0 0.0
    %6064 = vmatprep.subr.mxu0 0.0
    %6065 = vmatpush1.msra.mxu0 0.0
    %6066 = vmatprep.subr.mxu0 0.0
    %6067 = vmatpush1.msra.mxu0 0.0
    %6068 = vmatprep.mubr.f32.mxu0 0.0
    %6069 = vmatmul.mubr.f32.gmra.mrb[0].mxu0 %v6002
    %v6070 = vpop.f32.mrb[0].mxu0
    %v6071 = vadd.f32 0.0, %v6070
    %v6072 = vpop.f32.mrb[0].mxu0
    %6073 = vdwg.mxu0
    %v6075 = vrot.slane %v6071, 1
    %v6076 = vrot.slane %v6071, 2
    %v6079 = vadd.f32 %v5021, %v6075
    %v6080 = vadd.f32 %v5026, %v6076
    %v6081 = vxor.u32 %v6079, 2147483648
    %v6082 = vxor.u32 %v6080, 2147483648
    %v6083 = vmul.f32 %v6081, 1.442695
    %v6084 = vpow.pop %v6083
    %v6085 = vmul.f32 %v6082, 1.442695
    %v6086 = vpow.pop %v6085
    %v6087 = vadd.f32 %v6084, 1.0
    %v6088 = vadd.f32 %v6086, 1.0
    %v6089 = vrcp.pop %v6087
    %v6090 = vmul.f32 1.0, %v6089
    %v6091 = vrcp.pop %v6088
    %v6092 = vmul.f32 1.0, %v6091
    %v6093 = vtanh.pop %v6079
    %v6094 = vtanh.pop %v6080
    %v6097 = vrot.slane %v5981, 7
    %v6098 = vrot.slane %v5982, 7
    %v6101 = vmul.f32 %v6090, %v6097
    %v6102 = vmul.f32 %v6092, %v6098
    %6105 = vrot.lane.b32.xlu0 %v6093, 64
    %v6106 = vpop.permute.xlu0 %6105
    %6107 = vrot.lane.b32.xlu0 %v6094, 64
    %v6108 = vpop.permute.xlu0 %6107
    %v6111 = vmul.f32 %v6090, %v6106
    %v6112 = vmul.f32 %v6092, %v6108
    %6115 = vrot.lane.b32.xlu0 %v6111, 32
    %v6116 = vpop.permute.xlu0 %6115
    %6117 = vrot.lane.b32.xlu0 %v6112, 32
    %v6118 = vpop.permute.xlu0 %6117
    %v6121 = vadd.f32 %v6101, %v6116
    %v6122 = vadd.f32 %v6102, %v6118
    %v6123 = vtanh.pop %v6121
    %v6124 = vtanh.pop %v6122
    %6127 = vrot.lane.b32.xlu0 %v6123, 64
    %v6128 = vpop.permute.xlu0 %6127
    %6129 = vrot.lane.b32.xlu0 %v6124, 64
    %v6130 = vpop.permute.xlu0 %6129
    %v6133 = vmul.f32 %v6090, %v6128
    %v6134 = vmul.f32 %v6092, %v6130
    %v6135 = vld [vmem:[%s5] sm:$0xff]
    %v6136 = vld [vmem:[%s5 + $0x8] sm:$0xff]
    %v6137 = vld [vmem:[%s5 + $0x10] sm:$0xff]
    %v6138 = vld [vmem:[%s5 + $0x18] sm:$0xff]
    %v6139 = vld [vmem:[%s6] sm:$0x1]
    %v6141 = vlaneseq
    %v6142 = vshrl.u32 %v6141, 7
    %v6143 = vsub.s32 0, %v6142
    %v6144 = vrot.slane %v6139, %v6143
    %v6148 = vrot.slane %v6133, 7
    %v6149 = vrot.slane %v6134, 6
    %v6150 = vsel %vm282, %v6149, %v6148
    %6151 = vrot.lane.b32.xlu0 %v6150, 32
    %v6152 = vpop.permute.xlu0 %6151
    %v6153 = vsel %vm151, %v6152, 0
    %6155 = vmatprep.subr.mxu0 0.0
    %6156 = vmatpush1.msra.mxu0 %v6135
    %6157 = vmatprep.subr.mxu0 0.0
    %6158 = vmatpush1.msra.mxu0 %v6136
    %6159 = vmatprep.subr.mxu0 0.0
    %6160 = vmatpush1.msra.mxu0 %v6137
    %6161 = vmatprep.subr.mxu0 0.0
    %6162 = vmatpush1.msra.mxu0 %v6138
    %6163 = vmatprep.subr.mxu0 0.0
    %6164 = vmatpush1.msra.mxu0 0.0
    %6165 = vmatprep.subr.mxu0 0.0
    %6166 = vmatpush1.msra.mxu0 0.0
    %6167 = vmatprep.subr.mxu0 0.0
    %6168 = vmatpush1.msra.mxu0 0.0
    %6169 = vmatprep.subr.mxu0 0.0
    %6170 = vmatpush1.msra.mxu0 0.0
    %6171 = vmatprep.subr.mxu0 0.0
    %6172 = vmatpush1.msra.mxu0 0.0
    %6173 = vmatprep.subr.mxu0 0.0
    %6174 = vmatpush1.msra.mxu0 0.0
    %6175 = vmatprep.subr.mxu0 0.0
    %6176 = vmatpush1.msra.mxu0 0.0
    %6177 = vmatprep.subr.mxu0 0.0
    %6178 = vmatpush1.msra.mxu0 0.0
    %6179 = vmatprep.subr.mxu0 0.0
    %6180 = vmatpush1.msra.mxu0 0.0
    %6181 = vmatprep.subr.mxu0 0.0
    %6182 = vmatpush1.msra.mxu0 0.0
    %6183 = vmatprep.subr.mxu0 0.0
    %6184 = vmatpush1.msra.mxu0 0.0
    %6185 = vmatprep.subr.mxu0 0.0
    %6186 = vmatpush1.msra.mxu0 0.0
    %6187 = vmatprep.subr.mxu0 0.0
    %6188 = vmatpush1.msra.mxu0 0.0
    %6189 = vmatprep.subr.mxu0 0.0
    %6190 = vmatpush1.msra.mxu0 0.0
    %6191 = vmatprep.subr.mxu0 0.0
    %6192 = vmatpush1.msra.mxu0 0.0
    %6193 = vmatprep.subr.mxu0 0.0
    %6194 = vmatpush1.msra.mxu0 0.0
    %6195 = vmatprep.subr.mxu0 0.0
    %6196 = vmatpush1.msra.mxu0 0.0
    %6197 = vmatprep.subr.mxu0 0.0
    %6198 = vmatpush1.msra.mxu0 0.0
    %6199 = vmatprep.subr.mxu0 0.0
    %6200 = vmatpush1.msra.mxu0 0.0
    %6201 = vmatprep.subr.mxu0 0.0
    %6202 = vmatpush1.msra.mxu0 0.0
    %6203 = vmatprep.subr.mxu0 0.0
    %6204 = vmatpush1.msra.mxu0 0.0
    %6205 = vmatprep.subr.mxu0 0.0
    %6206 = vmatpush1.msra.mxu0 0.0
    %6207 = vmatprep.subr.mxu0 0.0
    %6208 = vmatpush1.msra.mxu0 0.0
    %6209 = vmatprep.subr.mxu0 0.0
    %6210 = vmatpush1.msra.mxu0 0.0
    %6211 = vmatprep.subr.mxu0 0.0
    %6212 = vmatpush1.msra.mxu0 0.0
    %6213 = vmatprep.subr.mxu0 0.0
    %6214 = vmatpush1.msra.mxu0 0.0
    %6215 = vmatprep.subr.mxu0 0.0
    %6216 = vmatpush1.msra.mxu0 0.0
    %6217 = vmatprep.subr.mxu0 0.0
    %6218 = vmatpush1.msra.mxu0 0.0
    %6219 = vmatprep.mubr.f32.mxu0 0.0
    %6220 = vmatmul.mubr.f32.gmra.mrb[0].mxu0 %v6153
    %v6221 = vpop.f32.mrb[0].mxu0
    %v6222 = vadd.f32 %v6144, %v6221
    %v6223 = vpop.f32.mrb[0].mxu0
    %6224 = vdwg.mxu0
    %v6225 = vxor.u32 %v6222, 2147483648
    %v6226 = vmul.f32 %v6225, 1.442695
    %v6227 = vpow.pop %v6226
    %v6228 = vadd.f32 %v6227, 1.0
    %v6229 = vrcp.pop %v6228
    %v6230 = vmul.f32 1.0, %v6229
    %vm6231 = vcmask 58368
    %6232 = vst.msk [vmem:[%s7] sm:$0x3] %vm6231, %v6230
    // Predicated region
    $region38: #{blstm_forward.1} parent=1 // pred_check
      _
    $region39: #{blstm_forward.1} parent=1 // pred_check_branch
      %6234 = sbr.rel (0) target = $region41
    $region40: #{blstm_forward.1} parent=1 // pred_region
      _
    $region41: #{blstm_forward.1} parent=1 // pred_fallthru
      _
    // Predicated region
    $region42: #{blstm_forward.1} parent=1 // pred_check
      _
    $region43: #{blstm_forward.1} parent=1 // pred_check_branch
      %6236 = sbr.rel (0) target = $region45
    $region44: #{blstm_forward.1} parent=1 // pred_region
      _
    $region45: #{blstm_forward.1} parent=1 // pred_fallthru
      _
    %6237 = vsyncpa [#allocation3], 1
    %6238 = vsyncpa [#allocation5], 1

</llo_original>
